<compile_context>
chip_gen: v5e
topology: v5e:2x2
jax: 0.10.0
libtpu: 0.0.40
codegen_flags: <defaults>
</compile_context>

<pallas_src>
import functools

import jax
import jax.numpy as jnp
from jax import lax
from jax.experimental import pallas as pl
from jax.experimental.pallas import tpu as pltpu

# Static problem sizes.
H_IN, W_IN = 16, 16
C_IN, C1, C2 = 1, 32, 64
H1, W1 = H_IN - 2, W_IN - 2      # 14, 14  after 3x3 valid conv
H2, W2 = H1 - 2, W1 - 2          # 12, 12  after 3x3 valid conv
H_P, W_P = H2 // 2, W2 // 2      # 6, 6    after 2x2 max pool
BN_EPS = 1e-5
K5 = 25                          # 5x5 fused (conv1 o conv2) receptive field
T2 = 9                           # conv2 3x3 taps
KC = T2 * C1                     # 288: conv2-im2col columns per batch element


def _round_up(n, m):
    return ((n + m - 1) // m) * m


def _pick_bt(batch, block_b):
    """Batch tile (multiple of 16 so all in-kernel reshapes stay tile-aligned)."""
    if block_b is not None:
        return max(16, _round_up(block_b, 16))
    bt = min(64, _round_up(max(batch, 1), 16))
    # Prefer >= 2 grid steps once the batch allows it (v7x has 2 TensorCores).
    if bt > 16 and _round_up(batch, bt) // bt < 2:
        bt = max(16, _round_up(_round_up(batch, 2) // 2, 16))
    return bt


def mnist_features_kernel(x_ref, w5_ref, b1_ref, w2_ref, b2_ref,
                          scale_ref, shift_ref, o_ref, slab_ref, *, bth):
    """One batch tile. Rows are ordered ((y2*W2 + x2)*bth + batch_pair); lanes
    carry two batch elements (pair index e) interleaved with channels."""
    # ---- Conv1 (+ReLU), emitted directly in conv2-im2col ("slab") layout -----
    # slab[r, e*288 + t2*32 + c1] = ReLU(conv1 activation needed by conv2 tap t2)
    slab_ref[...] = jnp.maximum(
        jnp.dot(x_ref[...], w5_ref[...],
                preferred_element_type=jnp.float32) + b1_ref[...], 0.0)

    # ---- Conv2 (+bias, ReLU): one (rows, 576) @ (576, 128) matmul ------------
    h2 = jnp.maximum(
        jnp.dot(slab_ref[...], w2_ref[...],
                preferred_element_type=jnp.float32) + b2_ref[...], 0.0)

    # ---- MaxPool2d(2): two slice-max passes (rows: (y2*W2 + x2)*bth + bp) ----
    h2 = h2.reshape(H_P, 2 * W2 * bth, 2 * C2)
    ymax = jnp.maximum(h2[:, :W2 * bth, :], h2[:, W2 * bth:, :])   # y-pairs
    ymax = ymax.reshape(H_P * W_P, 2 * bth, 2 * C2)
    pooled = jnp.maximum(ymax[:, :bth, :], ymax[:, bth:, :])       # x-pairs

    # ---- BatchNorm2d (eval affine) + single lane-dense store -----------------
    out = pooled * scale_ref[...] + shift_ref[...]                 # (36, bth, 128)
    o_ref[...] = out.reshape(H_P * W_P * bth, 2 * C2)


def mnist_features(x_nchw, params, *, block_b=None):
    """x_nchw: (B, 1, 16, 16) float32 -> (B, 64, 6, 6) float32."""
    w1, b1, w2, b2, gamma, beta, r_mean, r_var = params
    B = x_nchw.shape[0]

    bt = _pick_bt(B, block_b)
    bth = bt // 2                       # two batch elements share one row
    b_pad = _round_up(B, bt)
    n_tiles = b_pad // bt
    m_in = H2 * W2 * bth                # rows per tile into conv1 / conv2
    m_out = H_P * W_P * bth             # rows per tile out of the pool

    x = x_nchw.astype(jnp.float32).reshape(B, H_IN, W_IN)
    if b_pad != B:
        x = jnp.pad(x, ((0, b_pad - B), (0, 0), (0, 0)))

    # --- 5x5 im2col (union of conv1+conv2 receptive fields), batch paired -----
    # p5[b, y2, x2, dy*5+dx] = x[b, y2+dy, x2+dx]
    p5 = jnp.stack([x[:, dy:dy + H2, dx:dx + W2]
                    for dy in range(5) for dx in range(5)], axis=-1)
    p5 = p5.reshape(n_tiles, bt, H2 * W2, K5)
    p5 = jnp.transpose(p5, (0, 2, 1, 3))              # (tiles, 144, bt, 25)
    x5 = p5.reshape(n_tiles * m_in, 2 * K5)           # pair two batch elems/row

    # --- Conv1 weights folded with the conv2-im2col gather --------------------
    # w5[(dy2+dy1)*5 + (dx2+dx1), t2*32 + c1] = w1[c1, 0, dy1, dx1]
    w1_t = jnp.transpose(w1, (2, 3, 1, 0)).reshape(T2, C1)        # (9, 32)
    w5 = jnp.zeros((K5, KC), jnp.float32)
    for dy2 in range(3):
        for dx2 in range(3):
            t2 = dy2 * 3 + dx2
            for dy1 in range(3):
                for dx1 in range(3):
                    k5 = (dy2 + dy1) * 5 + (dx2 + dx1)
                    w5 = w5.at[k5, t2 * C1:(t2 + 1) * C1].set(
                        w1_t[dy1 * 3 + dx1])
    zw5 = jnp.zeros_like(w5)
    w5p = jnp.concatenate([jnp.concatenate([w5, zw5], 1),
                           jnp.concatenate([zw5, w5], 1)], 0)      # (50, 576)
    b1p = jnp.tile(b1, 2 * T2).reshape(1, 2 * KC)                  # (1, 576)

    # --- Conv2 weights (tap-major), batch-pair block diagonal -----------------
    w2_flat = jnp.transpose(w2, (2, 3, 1, 0)).reshape(KC, C2)      # (288, 64)
    zw2 = jnp.zeros_like(w2_flat)
    w2p = jnp.concatenate([jnp.concatenate([w2_flat, zw2], 1),
                           jnp.concatenate([zw2, w2_flat], 1)], 0)  # (576, 128)
    b2p = jnp.tile(b2, 2).reshape(1, 2 * C2)

    # --- BatchNorm folded to scale & shift (eval mode) ------------------------
    bn_scale = gamma / jnp.sqrt(r_var + BN_EPS)
    bn_shift = beta - r_mean * bn_scale
    scale_p = jnp.tile(bn_scale, 2).reshape(1, 2 * C2)
    shift_p = jnp.tile(bn_shift, 2).reshape(1, 2 * C2)

    flops = 2 * n_tiles * m_in * (2 * K5 * 2 * KC + 2 * KC * 2 * C2)
    bytes_accessed = 4 * (x5.size + n_tiles * m_out * 2 * C2
                          + w5p.size + w2p.size + 5 * 2 * C2)

    out2d = pl.pallas_call(
        functools.partial(mnist_features_kernel, bth=bth),
        out_shape=jax.ShapeDtypeStruct((n_tiles * m_out, 2 * C2), jnp.float32),
        grid_spec=pltpu.PrefetchScalarGridSpec(
            num_scalar_prefetch=0,
            grid=(n_tiles,),
            in_specs=[
                pl.BlockSpec((m_in, 2 * K5), lambda g: (g, 0)),
                pl.BlockSpec((2 * K5, 2 * KC), lambda g: (0, 0)),
                pl.BlockSpec((1, 2 * KC), lambda g: (0, 0)),
                pl.BlockSpec((2 * KC, 2 * C2), lambda g: (0, 0)),
                pl.BlockSpec((1, 2 * C2), lambda g: (0, 0)),
                pl.BlockSpec((1, 2 * C2), lambda g: (0, 0)),
                pl.BlockSpec((1, 2 * C2), lambda g: (0, 0)),
            ],
            out_specs=pl.BlockSpec((m_out, 2 * C2), lambda g: (g, 0)),
            scratch_shapes=[pltpu.VMEM((m_in, 2 * KC), jnp.float32)],
        ),
        compiler_params=pltpu.CompilerParams(
            dimension_semantics=("parallel",),
            vmem_limit_bytes=48 * 1024 * 1024),
        cost_estimate=pl.CostEstimate(
            flops=flops, transcendentals=0, bytes_accessed=bytes_accessed),
    )(x5, w5p, b1p, w2p, b2p, scale_p, shift_p)

    # Rows within a tile are ((i*W_P + j)*bth + bp); lanes are (pair e, channel).
    out = out2d.reshape(n_tiles, H_P, W_P, bth, 2, C2)
    out = jnp.transpose(out, (0, 3, 4, 5, 1, 2)).reshape(b_pad, C2, H_P, W_P)
    return out[:B]


def reference(x_nchw, params):
    w1, b1, w2, b2, gamma, beta, r_mean, r_var = params
    dn = ("NCHW", "OIHW", "NCHW")
    y = lax.conv_general_dilated(x_nchw, w1, (1, 1), "VALID",
                                 dimension_numbers=dn)
    y = jnp.maximum(y + b1[None, :, None, None], 0.0)
    y = lax.conv_general_dilated(y, w2, (1, 1), "VALID",
                                 dimension_numbers=dn)
    y = jnp.maximum(y + b2[None, :, None, None], 0.0)
    y = lax.reduce_window(y, -jnp.inf, lax.max,
                          (1, 1, 2, 2), (1, 1, 2, 2), "VALID")
    y = ((y - r_mean[None, :, None, None])
         / jnp.sqrt(r_var[None, :, None, None] + BN_EPS)
         * gamma[None, :, None, None] + beta[None, :, None, None])
    return y


def init_params(key):
    ks = jax.random.split(key, 8)
    w1 = 0.1 * jax.random.normal(ks[0], (C1, C_IN, 3, 3), jnp.float32)
    b1 = 0.05 * jax.random.normal(ks[1], (C1,), jnp.float32)
    w2 = 0.05 * jax.random.normal(ks[2], (C2, C1, 3, 3), jnp.float32)
    b2 = 0.05 * jax.random.normal(ks[3], (C2,), jnp.float32)
    gamma = 1.0 + 0.1 * jax.random.normal(ks[4], (C2,), jnp.float32)
    beta = 0.1 * jax.random.normal(ks[5], (C2,), jnp.float32)
    r_mean = 0.1 * jax.random.normal(ks[6], (C2,), jnp.float32)
    r_var = 1.0 + 0.1 * jax.random.uniform(ks[7], (C2,), jnp.float32)
    return (w1, b1, w2, b2, gamma, beta, r_mean, r_var)


if __name__ == "__main__":
    key = jax.random.PRNGKey(0)
    k_x, k_p = jax.random.split(key)
    B = 2
    x = jax.random.normal(k_x, (B, C_IN, H_IN, W_IN), jnp.float32)  # NCHW
    params = init_params(k_p)

    out = jax.block_until_ready(mnist_features(x, params))
    ref = jax.block_until_ready(reference(x, params))

    assert out.shape == (B, C2, H_P, W_P), out.shape
    err = float(jnp.max(jnp.abs(out - ref)))
    assert jnp.allclose(out, ref, atol=1e-4, rtol=1e-4), err
    print("KERNEL_OK")
</pallas_src>

<mosaic_0001>
module attributes {stable_mosaic.version = 11 : i64} {
  func.func @mnist_features_kernel(%arg0: i32, %arg1: memref<1152x50xf32, #tpu.memory_space<vmem>>, %arg2: memref<50x576xf32, #tpu.memory_space<vmem>>, %arg3: memref<1x576xf32, #tpu.memory_space<vmem>>, %arg4: memref<576x128xf32, #tpu.memory_space<vmem>>, %arg5: memref<1x128xf32, #tpu.memory_space<vmem>>, %arg6: memref<1x128xf32, #tpu.memory_space<vmem>>, %arg7: memref<1x128xf32, #tpu.memory_space<vmem>>, %arg8: memref<288x128xf32, #tpu.memory_space<vmem>>, %arg9: memref<1152x576xf32, #tpu.memory_space<vmem>>) attributes {dimension_semantics = [#tpu.dimension_semantics<parallel>], iteration_bounds = array<i64: 1>, scalar_prefetch = 0 : i64, scratch_operands = 1 : i64, tpu.core_type = #tpu.core_type<tc>, window_params = [{transform_indices = @transform_0, window_bounds = array<i64: 1152, 50>}, {pipeline_mode = #tpu.pipeline_mode<synchronous>, transform_indices = @transform_1, window_bounds = array<i64: 50, 576>}, {pipeline_mode = #tpu.pipeline_mode<synchronous>, transform_indices = @transform_2, window_bounds = array<i64: 1, 576>}, {pipeline_mode = #tpu.pipeline_mode<synchronous>, transform_indices = @transform_3, window_bounds = array<i64: 576, 128>}, {pipeline_mode = #tpu.pipeline_mode<synchronous>, transform_indices = @transform_4, window_bounds = array<i64: 1, 128>}, {pipeline_mode = #tpu.pipeline_mode<synchronous>, transform_indices = @transform_5, window_bounds = array<i64: 1, 128>}, {pipeline_mode = #tpu.pipeline_mode<synchronous>, transform_indices = @transform_6, window_bounds = array<i64: 1, 128>}, {transform_indices = @transform_7, window_bounds = array<i64: 288, 128>}]} {
    %c0 = arith.constant 0 : index
    %c0_0 = arith.constant 0 : index
    %0 = vector.load %arg1[%c0, %c0_0] : memref<1152x50xf32, #tpu.memory_space<vmem>>, vector<1152x50xf32>
    %c0_1 = arith.constant 0 : index
    %c0_2 = arith.constant 0 : index
    %1 = vector.load %arg2[%c0_1, %c0_2] : memref<50x576xf32, #tpu.memory_space<vmem>>, vector<50x576xf32>
    %cst = arith.constant dense<0.000000e+00> : vector<1152x576xf32>
    %2 = tpu.matmul %0, %1, %cst {dimension_numbers = #tpu.dot_dimension_numbers<[1], [0], [0], [1], [0, 0, 1, 1], [], []>} : vector<1152x50xf32>, vector<50x576xf32>, vector<1152x576xf32> -> vector<1152x576xf32>
    %c0_3 = arith.constant 0 : index
    %c0_4 = arith.constant 0 : index
    %3 = vector.load %arg3[%c0_3, %c0_4] : memref<1x576xf32, #tpu.memory_space<vmem>>, vector<1x576xf32>
    %4 = vector.broadcast %3 : vector<1x576xf32> to vector<1152x576xf32>
    %5 = arith.addf %2, %4 : vector<1152x576xf32>
    %cst_5 = arith.constant 0.000000e+00 : f32
    %6 = vector.broadcast %cst_5 : f32 to vector<1152x576xf32>
    %7 = arith.maximumf %5, %6 : vector<1152x576xf32>
    %c0_6 = arith.constant 0 : index
    %c0_7 = arith.constant 0 : index
    %8 = vector.load %arg9[%c0_6, %c0_7] : memref<1152x576xf32, #tpu.memory_space<vmem>>, vector<1152x576xf32>
    tpu.vector_store %arg9[%c0_6, %c0_7], %7 {strides = array<i32>} : memref<1152x576xf32, #tpu.memory_space<vmem>>, vector<1152x576xf32>,
    %c0_8 = arith.constant 0 : index
    %c0_9 = arith.constant 0 : index
    %9 = vector.load %arg9[%c0_8, %c0_9] : memref<1152x576xf32, #tpu.memory_space<vmem>>, vector<1152x576xf32>
    %c0_10 = arith.constant 0 : index
    %c0_11 = arith.constant 0 : index
    %10 = vector.load %arg4[%c0_10, %c0_11] : memref<576x128xf32, #tpu.memory_space<vmem>>, vector<576x128xf32>
    %cst_12 = arith.constant dense<0.000000e+00> : vector<1152x128xf32>
    %11 = tpu.matmul %9, %10, %cst_12 {dimension_numbers = #tpu.dot_dimension_numbers<[1], [0], [0], [1], [0, 0, 1, 1], [], []>} : vector<1152x576xf32>, vector<576x128xf32>, vector<1152x128xf32> -> vector<1152x128xf32>
    %c0_13 = arith.constant 0 : index
    %c0_14 = arith.constant 0 : index
    %12 = vector.load %arg5[%c0_13, %c0_14] : memref<1x128xf32, #tpu.memory_space<vmem>>, vector<1x128xf32>
    %13 = vector.broadcast %12 : vector<1x128xf32> to vector<1152x128xf32>
    %14 = arith.addf %11, %13 : vector<1152x128xf32>
    %cst_15 = arith.constant 0.000000e+00 : f32
    %15 = vector.broadcast %cst_15 : f32 to vector<1152x128xf32>
    %16 = arith.maximumf %14, %15 : vector<1152x128xf32>
    %17 = vector.shape_cast %16 : vector<1152x128xf32> to vector<6x192x128xf32>
    %18 = vector.extract_strided_slice %17 {offsets = [0, 0, 0], sizes = [6, 96, 128], strides = [1, 1, 1]} : vector<6x192x128xf32> to vector<6x96x128xf32>
    %19 = vector.extract_strided_slice %17 {offsets = [0, 96, 0], sizes = [6, 96, 128], strides = [1, 1, 1]} : vector<6x192x128xf32> to vector<6x96x128xf32>
    %20 = arith.maximumf %18, %19 : vector<6x96x128xf32>
    %21 = vector.shape_cast %20 : vector<6x96x128xf32> to vector<36x16x128xf32>
    %22 = vector.extract_strided_slice %21 {offsets = [0, 0, 0], sizes = [36, 8, 128], strides = [1, 1, 1]} : vector<36x16x128xf32> to vector<36x8x128xf32>
    %23 = vector.extract_strided_slice %21 {offsets = [0, 8, 0], sizes = [36, 8, 128], strides = [1, 1, 1]} : vector<36x16x128xf32> to vector<36x8x128xf32>
    %24 = arith.maximumf %22, %23 : vector<36x8x128xf32>
    %c0_16 = arith.constant 0 : index
    %c0_17 = arith.constant 0 : index
    %25 = vector.load %arg6[%c0_16, %c0_17] : memref<1x128xf32, #tpu.memory_space<vmem>>, vector<1x128xf32>
    %26 = vector.shape_cast %25 : vector<1x128xf32> to vector<1x1x128xf32>
    %27 = vector.broadcast %26 : vector<1x1x128xf32> to vector<36x8x128xf32>
    %28 = arith.mulf %24, %27 : vector<36x8x128xf32>
    %c0_18 = arith.constant 0 : index
    %c0_19 = arith.constant 0 : index
    %29 = vector.load %arg7[%c0_18, %c0_19] : memref<1x128xf32, #tpu.memory_space<vmem>>, vector<1x128xf32>
    %30 = vector.shape_cast %29 : vector<1x128xf32> to vector<1x1x128xf32>
    %31 = vector.broadcast %30 : vector<1x1x128xf32> to vector<36x8x128xf32>
    %32 = arith.addf %28, %31 : vector<36x8x128xf32>
    %33 = vector.shape_cast %32 : vector<36x8x128xf32> to vector<288x128xf32>
    %c0_20 = arith.constant 0 : index
    %c0_21 = arith.constant 0 : index
    %34 = vector.load %arg8[%c0_20, %c0_21] : memref<288x128xf32, #tpu.memory_space<vmem>>, vector<288x128xf32>
    tpu.vector_store %arg8[%c0_20, %c0_21], %33 {strides = array<i32>} : memref<288x128xf32, #tpu.memory_space<vmem>>, vector<288x128xf32>,
    return
  }
  func.func @transform_0(%arg0: i32) -> (i32, i32) {
    %c0_i32 = arith.constant 0 : i32
    %c0_i32_0 = arith.constant 0 : i32
    return %arg0, %c0_i32 : i32, i32
  }
  func.func @transform_1(%arg0: i32) -> (i32, i32) {
    %c0_i32 = arith.constant 0 : i32
    %c0_i32_0 = arith.constant 0 : i32
    %c0_i32_1 = arith.constant 0 : i32
    return %c0_i32, %c0_i32_0 : i32, i32
  }
  func.func @transform_2(%arg0: i32) -> (i32, i32) {
    %c0_i32 = arith.constant 0 : i32
    %c0_i32_0 = arith.constant 0 : i32
    %c0_i32_1 = arith.constant 0 : i32
    return %c0_i32, %c0_i32_0 : i32, i32
  }
  func.func @transform_3(%arg0: i32) -> (i32, i32) {
    %c0_i32 = arith.constant 0 : i32
    %c0_i32_0 = arith.constant 0 : i32
    %c0_i32_1 = arith.constant 0 : i32
    return %c0_i32, %c0_i32_0 : i32, i32
  }
  func.func @transform_4(%arg0: i32) -> (i32, i32) {
    %c0_i32 = arith.constant 0 : i32
    %c0_i32_0 = arith.constant 0 : i32
    %c0_i32_1 = arith.constant 0 : i32
    return %c0_i32, %c0_i32_0 : i32, i32
  }
  func.func @transform_5(%arg0: i32) -> (i32, i32) {
    %c0_i32 = arith.constant 0 : i32
    %c0_i32_0 = arith.constant 0 : i32
    %c0_i32_1 = arith.constant 0 : i32
    return %c0_i32, %c0_i32_0 : i32, i32
  }
  func.func @transform_6(%arg0: i32) -> (i32, i32) {
    %c0_i32 = arith.constant 0 : i32
    %c0_i32_0 = arith.constant 0 : i32
    %c0_i32_1 = arith.constant 0 : i32
    return %c0_i32, %c0_i32_0 : i32, i32
  }
  func.func @transform_7(%arg0: i32) -> (i32, i32) {
    %c0_i32 = arith.constant 0 : i32
    %c0_i32_0 = arith.constant 0 : i32
    return %arg0, %c0_i32 : i32, i32
  }
}

</mosaic_0001>

<llo_original>
// kernel: tpu_custom_call.1
$region0: #{tpu_custom_call.1}
  #allocation0 [shape = 'u32[]', space=smem, size = 0x4, offset = 0x4, fixed_abs, tag = 'smem constant byte address 0x4 - core index']
  #allocation1 [shape = 'u32[72,128]{1,0:T(1,128)}', space=vmem, size = 0x9000, scoped, tag = 'internal scratch']
  #allocation2 [shape = 'f32[1152,576]{1,0:T(8,128)}', space=vmem, size = 0x2d0000, scoped, tag = 'scratch operand']
  %s0 = inlined_call_operand.vmem [shape: f32[1152,50], index: 0, kind: input, shape index: {}]
  %s1 = inlined_call_operand.vmem [shape: f32[50,576], index: 1, kind: input, shape index: {}]
  %s2 = inlined_call_operand.vmem [shape: f32[1,576], index: 2, kind: input, shape index: {}]
  %s3 = inlined_call_operand.vmem [shape: f32[576,128], index: 3, kind: input, shape index: {}]
  %s4 = inlined_call_operand.vmem [shape: f32[1,128], index: 4, kind: input, shape index: {}]
  %s5 = inlined_call_operand.vmem [shape: f32[1,128], index: 5, kind: input, shape index: {}]
  %s6 = inlined_call_operand.vmem [shape: f32[1,128], index: 6, kind: input, shape index: {}]
  %s7 = inlined_call_operand.hbm [shape: f32[288,128], index: 7, kind: output, shape index: {}]
  %s8 = sld [smem:[#allocation0]]
  $region38: #{tpu_custom_call.1} parent=0
    _
  %s10 = ssub.s32 1, %s8
  %s11 = scalar_select 0, %s10, %s8
  $region1: #{tpu_custom_call.1} parent=0
    #allocation3 [shape = 'u8[147456]{0}', space=vmem, size = 0x24000, scoped, tag = 'output window, operand 0, single buffered']
    #allocation4 [shape = 's32[1]{0}', space=sflag, size = 0x4, scoped, tag = 'scoped memory for tpu_custom_call.1']
    %12 = vsyncpa [#allocation4], 0
    // Predicated region
    $region2: #{tpu_custom_call.1} parent=1 // pred_check
      _
    $region3: #{tpu_custom_call.1} parent=1 // pred_check_branch
      %14 = sbr.rel (0) target = $region5
    $region4: #{tpu_custom_call.1} parent=1 // pred_region
      _
    $region5: #{tpu_custom_call.1} parent=1 // pred_fallthru
      _
    // Predicated region
    $region6: #{tpu_custom_call.1} parent=1 // pred_check
      _
    $region7: #{tpu_custom_call.1} parent=1 // pred_check_branch
      %16 = sbr.rel (0) target = $region9
    $region8: #{tpu_custom_call.1} parent=1 // pred_region
      _
    $region9: #{tpu_custom_call.1} parent=1 // pred_fallthru
      _
    // Predicated region
    $region10: #{tpu_custom_call.1} parent=1 // pred_check
      _
    $region11: #{tpu_custom_call.1} parent=1 // pred_check_branch
      %18 = sbr.rel (0) target = $region13
    $region12: #{tpu_custom_call.1} parent=1 // pred_region
      _
    $region13: #{tpu_custom_call.1} parent=1 // pred_fallthru
      _
    // Predicated region
    $region14: #{tpu_custom_call.1} parent=1 // pred_check
      _
    $region15: #{tpu_custom_call.1} parent=1 // pred_check_branch
      %20 = sbr.rel (0) target = $region17
    $region16: #{tpu_custom_call.1} parent=1 // pred_region
      _
    $region17: #{tpu_custom_call.1} parent=1 // pred_fallthru
      _
    // Predicated region
    $region18: #{tpu_custom_call.1} parent=1 // pred_check
      _
    $region19: #{tpu_custom_call.1} parent=1 // pred_check_branch
      %22 = sbr.rel (0) target = $region21
    $region20: #{tpu_custom_call.1} parent=1 // pred_region
      _
    $region21: #{tpu_custom_call.1} parent=1 // pred_fallthru
      _
    // Predicated region
    $region22: #{tpu_custom_call.1} parent=1 // pred_check
      _
    $region23: #{tpu_custom_call.1} parent=1 // pred_check_branch
      %24 = sbr.rel (0) target = $region25
    $region24: #{tpu_custom_call.1} parent=1 // pred_region
      _
    $region25: #{tpu_custom_call.1} parent=1 // pred_fallthru
      _
    // Predicated region
    $region26: #{tpu_custom_call.1} parent=1 // pred_check
      _
    $region27: #{tpu_custom_call.1} parent=1 // pred_check_branch
      %26 = sbr.rel (0) target = $region29
    $region28: #{tpu_custom_call.1} parent=1 // pred_region
      _
    $region29: #{tpu_custom_call.1} parent=1 // pred_fallthru
      _
    %v27 = vld [vmem:[%s0] sm:$0xff]
    %v28 = vld [vmem:[%s0 + $0x8] sm:$0xff]
    %v29 = vld [vmem:[%s0 + $0x10] sm:$0xff]
    %v30 = vld [vmem:[%s0 + $0x18] sm:$0xff]
    %v31 = vld [vmem:[%s0 + $0x20] sm:$0xff]
    %v32 = vld [vmem:[%s0 + $0x28] sm:$0xff]
    %v33 = vld [vmem:[%s0 + $0x30] sm:$0xff]
    %v34 = vld [vmem:[%s0 + $0x38] sm:$0xff]
    %v35 = vld [vmem:[%s0 + $0x40] sm:$0xff]
    %v36 = vld [vmem:[%s0 + $0x48] sm:$0xff]
    %v37 = vld [vmem:[%s0 + $0x50] sm:$0xff]
    %v38 = vld [vmem:[%s0 + $0x58] sm:$0xff]
    %v39 = vld [vmem:[%s0 + $0x60] sm:$0xff]
    %v40 = vld [vmem:[%s0 + $0x68] sm:$0xff]
    %v41 = vld [vmem:[%s0 + $0x70] sm:$0xff]
    %v42 = vld [vmem:[%s0 + $0x78] sm:$0xff]
    %v43 = vld [vmem:[%s0 + $0x80] sm:$0xff]
    %v44 = vld [vmem:[%s0 + $0x88] sm:$0xff]
    %v45 = vld [vmem:[%s0 + $0x90] sm:$0xff]
    %v46 = vld [vmem:[%s0 + $0x98] sm:$0xff]
    %v47 = vld [vmem:[%s0 + $0xa0] sm:$0xff]
    %v48 = vld [vmem:[%s0 + $0xa8] sm:$0xff]
    %v49 = vld [vmem:[%s0 + $0xb0] sm:$0xff]
    %v50 = vld [vmem:[%s0 + $0xb8] sm:$0xff]
    %v51 = vld [vmem:[%s0 + $0xc0] sm:$0xff]
    %v52 = vld [vmem:[%s0 + $0xc8] sm:$0xff]
    %v53 = vld [vmem:[%s0 + $0xd0] sm:$0xff]
    %v54 = vld [vmem:[%s0 + $0xd8] sm:$0xff]
    %v55 = vld [vmem:[%s0 + $0xe0] sm:$0xff]
    %v56 = vld [vmem:[%s0 + $0xe8] sm:$0xff]
    %v57 = vld [vmem:[%s0 + $0xf0] sm:$0xff]
    %v58 = vld [vmem:[%s0 + $0xf8] sm:$0xff]
    %v59 = vld [vmem:[%s0 + $0x100] sm:$0xff]
    %v60 = vld [vmem:[%s0 + $0x108] sm:$0xff]
    %v61 = vld [vmem:[%s0 + $0x110] sm:$0xff]
    %v62 = vld [vmem:[%s0 + $0x118] sm:$0xff]
    %v63 = vld [vmem:[%s0 + $0x120] sm:$0xff]
    %v64 = vld [vmem:[%s0 + $0x128] sm:$0xff]
    %v65 = vld [vmem:[%s0 + $0x130] sm:$0xff]
    %v66 = vld [vmem:[%s0 + $0x138] sm:$0xff]
    %v67 = vld [vmem:[%s0 + $0x140] sm:$0xff]
    %v68 = vld [vmem:[%s0 + $0x148] sm:$0xff]
    %v69 = vld [vmem:[%s0 + $0x150] sm:$0xff]
    %v70 = vld [vmem:[%s0 + $0x158] sm:$0xff]
    %v71 = vld [vmem:[%s0 + $0x160] sm:$0xff]
    %v72 = vld [vmem:[%s0 + $0x168] sm:$0xff]
    %v73 = vld [vmem:[%s0 + $0x170] sm:$0xff]
    %v74 = vld [vmem:[%s0 + $0x178] sm:$0xff]
    %v75 = vld [vmem:[%s0 + $0x180] sm:$0xff]
    %v76 = vld [vmem:[%s0 + $0x188] sm:$0xff]
    %v77 = vld [vmem:[%s0 + $0x190] sm:$0xff]
    %v78 = vld [vmem:[%s0 + $0x198] sm:$0xff]
    %v79 = vld [vmem:[%s0 + $0x1a0] sm:$0xff]
    %v80 = vld [vmem:[%s0 + $0x1a8] sm:$0xff]
    %v81 = vld [vmem:[%s0 + $0x1b0] sm:$0xff]
    %v82 = vld [vmem:[%s0 + $0x1b8] sm:$0xff]
    %v83 = vld [vmem:[%s0 + $0x1c0] sm:$0xff]
    %v84 = vld [vmem:[%s0 + $0x1c8] sm:$0xff]
    %v85 = vld [vmem:[%s0 + $0x1d0] sm:$0xff]
    %v86 = vld [vmem:[%s0 + $0x1d8] sm:$0xff]
    %v87 = vld [vmem:[%s0 + $0x1e0] sm:$0xff]
    %v88 = vld [vmem:[%s0 + $0x1e8] sm:$0xff]
    %v89 = vld [vmem:[%s0 + $0x1f0] sm:$0xff]
    %v90 = vld [vmem:[%s0 + $0x1f8] sm:$0xff]
    %v91 = vld [vmem:[%s0 + $0x200] sm:$0xff]
    %v92 = vld [vmem:[%s0 + $0x208] sm:$0xff]
    %v93 = vld [vmem:[%s0 + $0x210] sm:$0xff]
    %v94 = vld [vmem:[%s0 + $0x218] sm:$0xff]
    %v95 = vld [vmem:[%s0 + $0x220] sm:$0xff]
    %v96 = vld [vmem:[%s0 + $0x228] sm:$0xff]
    %v97 = vld [vmem:[%s0 + $0x230] sm:$0xff]
    %v98 = vld [vmem:[%s0 + $0x238] sm:$0xff]
    %v99 = vld [vmem:[%s0 + $0x240] sm:$0xff]
    %v100 = vld [vmem:[%s0 + $0x248] sm:$0xff]
    %v101 = vld [vmem:[%s0 + $0x250] sm:$0xff]
    %v102 = vld [vmem:[%s0 + $0x258] sm:$0xff]
    %v103 = vld [vmem:[%s0 + $0x260] sm:$0xff]
    %v104 = vld [vmem:[%s0 + $0x268] sm:$0xff]
    %v105 = vld [vmem:[%s0 + $0x270] sm:$0xff]
    %v106 = vld [vmem:[%s0 + $0x278] sm:$0xff]
    %v107 = vld [vmem:[%s0 + $0x280] sm:$0xff]
    %v108 = vld [vmem:[%s0 + $0x288] sm:$0xff]
    %v109 = vld [vmem:[%s0 + $0x290] sm:$0xff]
    %v110 = vld [vmem:[%s0 + $0x298] sm:$0xff]
    %v111 = vld [vmem:[%s0 + $0x2a0] sm:$0xff]
    %v112 = vld [vmem:[%s0 + $0x2a8] sm:$0xff]
    %v113 = vld [vmem:[%s0 + $0x2b0] sm:$0xff]
    %v114 = vld [vmem:[%s0 + $0x2b8] sm:$0xff]
    %v115 = vld [vmem:[%s0 + $0x2c0] sm:$0xff]
    %v116 = vld [vmem:[%s0 + $0x2c8] sm:$0xff]
    %v117 = vld [vmem:[%s0 + $0x2d0] sm:$0xff]
    %v118 = vld [vmem:[%s0 + $0x2d8] sm:$0xff]
    %v119 = vld [vmem:[%s0 + $0x2e0] sm:$0xff]
    %v120 = vld [vmem:[%s0 + $0x2e8] sm:$0xff]
    %v121 = vld [vmem:[%s0 + $0x2f0] sm:$0xff]
    %v122 = vld [vmem:[%s0 + $0x2f8] sm:$0xff]
    %v123 = vld [vmem:[%s0 + $0x300] sm:$0xff]
    %v124 = vld [vmem:[%s0 + $0x308] sm:$0xff]
    %v125 = vld [vmem:[%s0 + $0x310] sm:$0xff]
    %v126 = vld [vmem:[%s0 + $0x318] sm:$0xff]
    %v127 = vld [vmem:[%s0 + $0x320] sm:$0xff]
    %v128 = vld [vmem:[%s0 + $0x328] sm:$0xff]
    %v129 = vld [vmem:[%s0 + $0x330] sm:$0xff]
    %v130 = vld [vmem:[%s0 + $0x338] sm:$0xff]
    %v131 = vld [vmem:[%s0 + $0x340] sm:$0xff]
    %v132 = vld [vmem:[%s0 + $0x348] sm:$0xff]
    %v133 = vld [vmem:[%s0 + $0x350] sm:$0xff]
    %v134 = vld [vmem:[%s0 + $0x358] sm:$0xff]
    %v135 = vld [vmem:[%s0 + $0x360] sm:$0xff]
    %v136 = vld [vmem:[%s0 + $0x368] sm:$0xff]
    %v137 = vld [vmem:[%s0 + $0x370] sm:$0xff]
    %v138 = vld [vmem:[%s0 + $0x378] sm:$0xff]
    %v139 = vld [vmem:[%s0 + $0x380] sm:$0xff]
    %v140 = vld [vmem:[%s0 + $0x388] sm:$0xff]
    %v141 = vld [vmem:[%s0 + $0x390] sm:$0xff]
    %v142 = vld [vmem:[%s0 + $0x398] sm:$0xff]
    %v143 = vld [vmem:[%s0 + $0x3a0] sm:$0xff]
    %v144 = vld [vmem:[%s0 + $0x3a8] sm:$0xff]
    %v145 = vld [vmem:[%s0 + $0x3b0] sm:$0xff]
    %v146 = vld [vmem:[%s0 + $0x3b8] sm:$0xff]
    %v147 = vld [vmem:[%s0 + $0x3c0] sm:$0xff]
    %v148 = vld [vmem:[%s0 + $0x3c8] sm:$0xff]
    %v149 = vld [vmem:[%s0 + $0x3d0] sm:$0xff]
    %v150 = vld [vmem:[%s0 + $0x3d8] sm:$0xff]
    %v151 = vld [vmem:[%s0 + $0x3e0] sm:$0xff]
    %v152 = vld [vmem:[%s0 + $0x3e8] sm:$0xff]
    %v153 = vld [vmem:[%s0 + $0x3f0] sm:$0xff]
    %v154 = vld [vmem:[%s0 + $0x3f8] sm:$0xff]
    %v155 = vld [vmem:[%s0 + $0x400] sm:$0xff]
    %v156 = vld [vmem:[%s0 + $0x408] sm:$0xff]
    %v157 = vld [vmem:[%s0 + $0x410] sm:$0xff]
    %v158 = vld [vmem:[%s0 + $0x418] sm:$0xff]
    %v159 = vld [vmem:[%s0 + $0x420] sm:$0xff]
    %v160 = vld [vmem:[%s0 + $0x428] sm:$0xff]
    %v161 = vld [vmem:[%s0 + $0x430] sm:$0xff]
    %v162 = vld [vmem:[%s0 + $0x438] sm:$0xff]
    %v163 = vld [vmem:[%s0 + $0x440] sm:$0xff]
    %v164 = vld [vmem:[%s0 + $0x448] sm:$0xff]
    %v165 = vld [vmem:[%s0 + $0x450] sm:$0xff]
    %v166 = vld [vmem:[%s0 + $0x458] sm:$0xff]
    %v167 = vld [vmem:[%s0 + $0x460] sm:$0xff]
    %v168 = vld [vmem:[%s0 + $0x468] sm:$0xff]
    %v169 = vld [vmem:[%s0 + $0x470] sm:$0xff]
    %v170 = vld [vmem:[%s0 + $0x478] sm:$0xff]
    %v171 = vld [vmem:[%s1] sm:$0xff]
    %v172 = vld [vmem:[%s1 + $0x8] sm:$0xff]
    %v173 = vld [vmem:[%s1 + $0x10] sm:$0xff]
    %v174 = vld [vmem:[%s1 + $0x18] sm:$0xff]
    %v175 = vld [vmem:[%s1 + $0x20] sm:$0xff]
    %v176 = vld [vmem:[%s1 + $0x28] sm:$0xff]
    %v177 = vld [vmem:[%s1 + $0x30] sm:$0xff]
    %v178 = vld [vmem:[%s1 + $0x38] sm:$0xff]
    %v179 = vld [vmem:[%s1 + $0x40] sm:$0xff]
    %v180 = vld [vmem:[%s1 + $0x48] sm:$0xff]
    %v181 = vld [vmem:[%s1 + $0x50] sm:$0xff]
    %v182 = vld [vmem:[%s1 + $0x58] sm:$0xff]
    %v183 = vld [vmem:[%s1 + $0x60] sm:$0xff]
    %v184 = vld [vmem:[%s1 + $0x68] sm:$0xff]
    %v185 = vld [vmem:[%s1 + $0x70] sm:$0xff]
    %v186 = vld [vmem:[%s1 + $0x78] sm:$0xff]
    %v187 = vld [vmem:[%s1 + $0x80] sm:$0xff]
    %v188 = vld [vmem:[%s1 + $0x88] sm:$0xff]
    %v189 = vld [vmem:[%s1 + $0x90] sm:$0xff]
    %v190 = vld [vmem:[%s1 + $0x98] sm:$0xff]
    %v191 = vld [vmem:[%s1 + $0xa0] sm:$0xff]
    %v192 = vld [vmem:[%s1 + $0xa8] sm:$0xff]
    %v193 = vld [vmem:[%s1 + $0xb0] sm:$0xff]
    %v194 = vld [vmem:[%s1 + $0xb8] sm:$0xff]
    %v195 = vld [vmem:[%s1 + $0xc0] sm:$0xff]
    %v196 = vld [vmem:[%s1 + $0xc8] sm:$0xff]
    %v197 = vld [vmem:[%s1 + $0xd0] sm:$0xff]
    %v198 = vld [vmem:[%s1 + $0xd8] sm:$0xff]
    %v199 = vld [vmem:[%s1 + $0xe0] sm:$0xff]
    %v200 = vld [vmem:[%s1 + $0xe8] sm:$0xff]
    %v201 = vld [vmem:[%s1 + $0xf0] sm:$0x3]
    %v202 = vld [vmem:[%s1 + $0xf8] sm:$0x3]
    %v203 = vld [vmem:[%s1 + $0x100] sm:$0x3]
    %v204 = vld [vmem:[%s1 + $0x108] sm:$0x3]
    %v205 = vld [vmem:[%s1 + $0x110] sm:$0x3]
    %v206 = vld [vmem:[%s2] sm:$0x1f]
    %v208 = vperm.slane %v206, 0
    %v209 = vperm.slane %v206, 1
    %v210 = vperm.slane %v206, 2
    %v211 = vperm.slane %v206, 3
    %v212 = vperm.slane %v206, 4
    %vm218 = vcmask 408576
    %v220 = vsel %vm218, %v27, 0
    %v223 = vsel %vm218, %v28, 0
    %v226 = vsel %vm218, %v29, 0
    %v229 = vsel %vm218, %v30, 0
    %v232 = vsel %vm218, %v31, 0
    %v235 = vsel %vm218, %v32, 0
    %v238 = vsel %vm218, %v33, 0
    %v241 = vsel %vm218, %v34, 0
    %v244 = vsel %vm218, %v35, 0
    %v247 = vsel %vm218, %v36, 0
    %v250 = vsel %vm218, %v37, 0
    %v253 = vsel %vm218, %v38, 0
    %v256 = vsel %vm218, %v39, 0
    %v259 = vsel %vm218, %v40, 0
    %v262 = vsel %vm218, %v41, 0
    %v265 = vsel %vm218, %v42, 0
    %v268 = vsel %vm218, %v43, 0
    %v271 = vsel %vm218, %v44, 0
    %v274 = vsel %vm218, %v45, 0
    %v277 = vsel %vm218, %v46, 0
    %v280 = vsel %vm218, %v47, 0
    %v283 = vsel %vm218, %v48, 0
    %v286 = vsel %vm218, %v49, 0
    %v289 = vsel %vm218, %v50, 0
    %v292 = vsel %vm218, %v51, 0
    %v295 = vsel %vm218, %v52, 0
    %v298 = vsel %vm218, %v53, 0
    %v301 = vsel %vm218, %v54, 0
    %v304 = vsel %vm218, %v55, 0
    %v307 = vsel %vm218, %v56, 0
    %v310 = vsel %vm218, %v57, 0
    %v313 = vsel %vm218, %v58, 0
    %v316 = vsel %vm218, %v59, 0
    %v319 = vsel %vm218, %v60, 0
    %v322 = vsel %vm218, %v61, 0
    %v325 = vsel %vm218, %v62, 0
    %v328 = vsel %vm218, %v63, 0
    %v331 = vsel %vm218, %v64, 0
    %v334 = vsel %vm218, %v65, 0
    %v337 = vsel %vm218, %v66, 0
    %v340 = vsel %vm218, %v67, 0
    %v343 = vsel %vm218, %v68, 0
    %v346 = vsel %vm218, %v69, 0
    %v349 = vsel %vm218, %v70, 0
    %v352 = vsel %vm218, %v71, 0
    %v355 = vsel %vm218, %v72, 0
    %v358 = vsel %vm218, %v73, 0
    %v361 = vsel %vm218, %v74, 0
    %v364 = vsel %vm218, %v75, 0
    %v367 = vsel %vm218, %v76, 0
    %v370 = vsel %vm218, %v77, 0
    %v373 = vsel %vm218, %v78, 0
    %v376 = vsel %vm218, %v79, 0
    %v379 = vsel %vm218, %v80, 0
    %v382 = vsel %vm218, %v81, 0
    %v385 = vsel %vm218, %v82, 0
    %v388 = vsel %vm218, %v83, 0
    %v391 = vsel %vm218, %v84, 0
    %v394 = vsel %vm218, %v85, 0
    %v397 = vsel %vm218, %v86, 0
    %v400 = vsel %vm218, %v87, 0
    %v403 = vsel %vm218, %v88, 0
    %v406 = vsel %vm218, %v89, 0
    %v409 = vsel %vm218, %v90, 0
    %v412 = vsel %vm218, %v91, 0
    %v415 = vsel %vm218, %v92, 0
    %v418 = vsel %vm218, %v93, 0
    %v421 = vsel %vm218, %v94, 0
    %v424 = vsel %vm218, %v95, 0
    %v427 = vsel %vm218, %v96, 0
    %v430 = vsel %vm218, %v97, 0
    %v433 = vsel %vm218, %v98, 0
    %v436 = vsel %vm218, %v99, 0
    %v439 = vsel %vm218, %v100, 0
    %v442 = vsel %vm218, %v101, 0
    %v445 = vsel %vm218, %v102, 0
    %v448 = vsel %vm218, %v103, 0
    %v451 = vsel %vm218, %v104, 0
    %v454 = vsel %vm218, %v105, 0
    %v457 = vsel %vm218, %v106, 0
    %v460 = vsel %vm218, %v107, 0
    %v463 = vsel %vm218, %v108, 0
    %v466 = vsel %vm218, %v109, 0
    %v469 = vsel %vm218, %v110, 0
    %v472 = vsel %vm218, %v111, 0
    %v475 = vsel %vm218, %v112, 0
    %v478 = vsel %vm218, %v113, 0
    %v481 = vsel %vm218, %v114, 0
    %v484 = vsel %vm218, %v115, 0
    %v487 = vsel %vm218, %v116, 0
    %v490 = vsel %vm218, %v117, 0
    %v493 = vsel %vm218, %v118, 0
    %v496 = vsel %vm218, %v119, 0
    %v499 = vsel %vm218, %v120, 0
    %v502 = vsel %vm218, %v121, 0
    %v505 = vsel %vm218, %v122, 0
    %v508 = vsel %vm218, %v123, 0
    %v511 = vsel %vm218, %v124, 0
    %v514 = vsel %vm218, %v125, 0
    %v517 = vsel %vm218, %v126, 0
    %v520 = vsel %vm218, %v127, 0
    %v523 = vsel %vm218, %v128, 0
    %v526 = vsel %vm218, %v129, 0
    %v529 = vsel %vm218, %v130, 0
    %v532 = vsel %vm218, %v131, 0
    %v535 = vsel %vm218, %v132, 0
    %v538 = vsel %vm218, %v133, 0
    %v541 = vsel %vm218, %v134, 0
    %v544 = vsel %vm218, %v135, 0
    %v547 = vsel %vm218, %v136, 0
    %v550 = vsel %vm218, %v137, 0
    %v553 = vsel %vm218, %v138, 0
    %v556 = vsel %vm218, %v139, 0
    %v559 = vsel %vm218, %v140, 0
    %v562 = vsel %vm218, %v141, 0
    %v565 = vsel %vm218, %v142, 0
    %v568 = vsel %vm218, %v143, 0
    %v571 = vsel %vm218, %v144, 0
    %v574 = vsel %vm218, %v145, 0
    %v577 = vsel %vm218, %v146, 0
    %v580 = vsel %vm218, %v147, 0
    %v583 = vsel %vm218, %v148, 0
    %v586 = vsel %vm218, %v149, 0
    %v589 = vsel %vm218, %v150, 0
    %v592 = vsel %vm218, %v151, 0
    %v595 = vsel %vm218, %v152, 0
    %v598 = vsel %vm218, %v153, 0
    %v601 = vsel %vm218, %v154, 0
    %v604 = vsel %vm218, %v155, 0
    %v607 = vsel %vm218, %v156, 0
    %v610 = vsel %vm218, %v157, 0
    %v613 = vsel %vm218, %v158, 0
    %v616 = vsel %vm218, %v159, 0
    %v619 = vsel %vm218, %v160, 0
    %v622 = vsel %vm218, %v161, 0
    %v625 = vsel %vm218, %v162, 0
    %v628 = vsel %vm218, %v163, 0
    %v631 = vsel %vm218, %v164, 0
    %v634 = vsel %vm218, %v165, 0
    %v637 = vsel %vm218, %v166, 0
    %v640 = vsel %vm218, %v167, 0
    %v643 = vsel %vm218, %v168, 0
    %v646 = vsel %vm218, %v169, 0
    %v649 = vsel %vm218, %v170, 0
    %vm651 = vcmask 1041408
    %v653 = vsel %vm651, %v201, 0
    %v656 = vsel %vm651, %v202, 0
    %v659 = vsel %vm651, %v203, 0
    %v662 = vsel %vm651, %v204, 0
    %v665 = vsel %vm651, %v205, 0
    %667 = vmatpush.msra.mxu0 0.0
    %668 = vmatpush.msra.mxu0 0.0
    %669 = vmatpush.msra.mxu0 0.0
    %670 = vmatpush.msra.mxu0 0.0
    %671 = vmatpush.msra.mxu0 0.0
    %672 = vmatpush.msra.mxu0 0.0
    %673 = vmatpush.msra.mxu0 0.0
    %674 = vmatpush.msra.mxu0 0.0
    %675 = vmatpush.msra.mxu0 0.0
    %676 = vmatpush.msra.mxu0 %v653
    %677 = vmatpush.msra.mxu0 %v196
    %678 = vmatpush.msra.mxu0 %v191
    %679 = vmatpush.msra.mxu0 %v186
    %680 = vmatpush.msra.mxu0 %v181
    %681 = vmatpush.msra.mxu0 %v176
    %682 = vmatpush.msra.mxu0 %v171
    %683 = vmatmul.f32.gmra.mxu0 %v220
    %v684 = vpop.f32.mrf.mxu0
    %v685 = vadd.f32 %v208, %v684
    %686 = vmatmul.f32.gmra.mxu0 %v223
    %v687 = vpop.f32.mrf.mxu0
    %v688 = vadd.f32 %v208, %v687
    %689 = vmatmul.f32.gmra.mxu0 %v226
    %v690 = vpop.f32.mrf.mxu0
    %v691 = vadd.f32 %v208, %v690
    %692 = vmatmul.f32.gmra.mxu0 %v229
    %v693 = vpop.f32.mrf.mxu0
    %v694 = vadd.f32 %v208, %v693
    %695 = vmatmul.f32.gmra.mxu0 %v232
    %v696 = vpop.f32.mrf.mxu0
    %v697 = vadd.f32 %v208, %v696
    %698 = vmatmul.f32.gmra.mxu0 %v235
    %v699 = vpop.f32.mrf.mxu0
    %v700 = vadd.f32 %v208, %v699
    %701 = vmatmul.f32.gmra.mxu0 %v238
    %v702 = vpop.f32.mrf.mxu0
    %v703 = vadd.f32 %v208, %v702
    %704 = vmatmul.f32.gmra.mxu0 %v241
    %v705 = vpop.f32.mrf.mxu0
    %v706 = vadd.f32 %v208, %v705
    %707 = vmatmul.f32.gmra.mxu0 %v244
    %v708 = vpop.f32.mrf.mxu0
    %v709 = vadd.f32 %v208, %v708
    %710 = vmatmul.f32.gmra.mxu0 %v247
    %v711 = vpop.f32.mrf.mxu0
    %v712 = vadd.f32 %v208, %v711
    %713 = vmatmul.f32.gmra.mxu0 %v250
    %v714 = vpop.f32.mrf.mxu0
    %v715 = vadd.f32 %v208, %v714
    %716 = vmatmul.f32.gmra.mxu0 %v253
    %v717 = vpop.f32.mrf.mxu0
    %v718 = vadd.f32 %v208, %v717
    %719 = vmatmul.f32.gmra.mxu0 %v256
    %v720 = vpop.f32.mrf.mxu0
    %v721 = vadd.f32 %v208, %v720
    %722 = vmatmul.f32.gmra.mxu0 %v259
    %v723 = vpop.f32.mrf.mxu0
    %v724 = vadd.f32 %v208, %v723
    %725 = vmatmul.f32.gmra.mxu0 %v262
    %v726 = vpop.f32.mrf.mxu0
    %v727 = vadd.f32 %v208, %v726
    %728 = vmatmul.f32.gmra.mxu0 %v265
    %v729 = vpop.f32.mrf.mxu0
    %v730 = vadd.f32 %v208, %v729
    %731 = vmatmul.f32.gmra.mxu0 %v268
    %v732 = vpop.f32.mrf.mxu0
    %v733 = vadd.f32 %v208, %v732
    %734 = vmatmul.f32.gmra.mxu0 %v271
    %v735 = vpop.f32.mrf.mxu0
    %v736 = vadd.f32 %v208, %v735
    %737 = vmatmul.f32.gmra.mxu0 %v274
    %v738 = vpop.f32.mrf.mxu0
    %v739 = vadd.f32 %v208, %v738
    %740 = vmatmul.f32.gmra.mxu0 %v277
    %v741 = vpop.f32.mrf.mxu0
    %v742 = vadd.f32 %v208, %v741
    %743 = vmatmul.f32.gmra.mxu0 %v280
    %v744 = vpop.f32.mrf.mxu0
    %v745 = vadd.f32 %v208, %v744
    %746 = vmatmul.f32.gmra.mxu0 %v283
    %v747 = vpop.f32.mrf.mxu0
    %v748 = vadd.f32 %v208, %v747
    %749 = vmatmul.f32.gmra.mxu0 %v286
    %v750 = vpop.f32.mrf.mxu0
    %v751 = vadd.f32 %v208, %v750
    %752 = vmatmul.f32.gmra.mxu0 %v289
    %v753 = vpop.f32.mrf.mxu0
    %v754 = vadd.f32 %v208, %v753
    %755 = vmatmul.f32.gmra.mxu0 %v292
    %v756 = vpop.f32.mrf.mxu0
    %v757 = vadd.f32 %v208, %v756
    %758 = vmatmul.f32.gmra.mxu0 %v295
    %v759 = vpop.f32.mrf.mxu0
    %v760 = vadd.f32 %v208, %v759
    %761 = vmatmul.f32.gmra.mxu0 %v298
    %v762 = vpop.f32.mrf.mxu0
    %v763 = vadd.f32 %v208, %v762
    %764 = vmatmul.f32.gmra.mxu0 %v301
    %v765 = vpop.f32.mrf.mxu0
    %v766 = vadd.f32 %v208, %v765
    %767 = vmatmul.f32.gmra.mxu0 %v304
    %v768 = vpop.f32.mrf.mxu0
    %v769 = vadd.f32 %v208, %v768
    %770 = vmatmul.f32.gmra.mxu0 %v307
    %v771 = vpop.f32.mrf.mxu0
    %v772 = vadd.f32 %v208, %v771
    %773 = vmatmul.f32.gmra.mxu0 %v310
    %v774 = vpop.f32.mrf.mxu0
    %v775 = vadd.f32 %v208, %v774
    %776 = vmatmul.f32.gmra.mxu0 %v313
    %v777 = vpop.f32.mrf.mxu0
    %v778 = vadd.f32 %v208, %v777
    %779 = vmatmul.f32.gmra.mxu0 %v316
    %v780 = vpop.f32.mrf.mxu0
    %v781 = vadd.f32 %v208, %v780
    %782 = vmatmul.f32.gmra.mxu0 %v319
    %v783 = vpop.f32.mrf.mxu0
    %v784 = vadd.f32 %v208, %v783
    %785 = vmatmul.f32.gmra.mxu0 %v322
    %v786 = vpop.f32.mrf.mxu0
    %v787 = vadd.f32 %v208, %v786
    %788 = vmatmul.f32.gmra.mxu0 %v325
    %v789 = vpop.f32.mrf.mxu0
    %v790 = vadd.f32 %v208, %v789
    %791 = vmatmul.f32.gmra.mxu0 %v328
    %v792 = vpop.f32.mrf.mxu0
    %v793 = vadd.f32 %v208, %v792
    %794 = vmatmul.f32.gmra.mxu0 %v331
    %v795 = vpop.f32.mrf.mxu0
    %v796 = vadd.f32 %v208, %v795
    %797 = vmatmul.f32.gmra.mxu0 %v334
    %v798 = vpop.f32.mrf.mxu0
    %v799 = vadd.f32 %v208, %v798
    %800 = vmatmul.f32.gmra.mxu0 %v337
    %v801 = vpop.f32.mrf.mxu0
    %v802 = vadd.f32 %v208, %v801
    %803 = vmatmul.f32.gmra.mxu0 %v340
    %v804 = vpop.f32.mrf.mxu0
    %v805 = vadd.f32 %v208, %v804
    %806 = vmatmul.f32.gmra.mxu0 %v343
    %v807 = vpop.f32.mrf.mxu0
    %v808 = vadd.f32 %v208, %v807
    %809 = vmatmul.f32.gmra.mxu0 %v346
    %v810 = vpop.f32.mrf.mxu0
    %v811 = vadd.f32 %v208, %v810
    %812 = vmatmul.f32.gmra.mxu0 %v349
    %v813 = vpop.f32.mrf.mxu0
    %v814 = vadd.f32 %v208, %v813
    %815 = vmatmul.f32.gmra.mxu0 %v352
    %v816 = vpop.f32.mrf.mxu0
    %v817 = vadd.f32 %v208, %v816
    %818 = vmatmul.f32.gmra.mxu0 %v355
    %v819 = vpop.f32.mrf.mxu0
    %v820 = vadd.f32 %v208, %v819
    %821 = vmatmul.f32.gmra.mxu0 %v358
    %v822 = vpop.f32.mrf.mxu0
    %v823 = vadd.f32 %v208, %v822
    %824 = vmatmul.f32.gmra.mxu0 %v361
    %v825 = vpop.f32.mrf.mxu0
    %v826 = vadd.f32 %v208, %v825
    %827 = vmatmul.f32.gmra.mxu0 %v364
    %v828 = vpop.f32.mrf.mxu0
    %v829 = vadd.f32 %v208, %v828
    %830 = vmatmul.f32.gmra.mxu0 %v367
    %v831 = vpop.f32.mrf.mxu0
    %v832 = vadd.f32 %v208, %v831
    %833 = vmatmul.f32.gmra.mxu0 %v370
    %v834 = vpop.f32.mrf.mxu0
    %v835 = vadd.f32 %v208, %v834
    %836 = vmatmul.f32.gmra.mxu0 %v373
    %v837 = vpop.f32.mrf.mxu0
    %v838 = vadd.f32 %v208, %v837
    %839 = vmatmul.f32.gmra.mxu0 %v376
    %v840 = vpop.f32.mrf.mxu0
    %v841 = vadd.f32 %v208, %v840
    %842 = vmatmul.f32.gmra.mxu0 %v379
    %v843 = vpop.f32.mrf.mxu0
    %v844 = vadd.f32 %v208, %v843
    %845 = vmatmul.f32.gmra.mxu0 %v382
    %v846 = vpop.f32.mrf.mxu0
    %v847 = vadd.f32 %v208, %v846
    %848 = vmatmul.f32.gmra.mxu0 %v385
    %v849 = vpop.f32.mrf.mxu0
    %v850 = vadd.f32 %v208, %v849
    %851 = vmatmul.f32.gmra.mxu0 %v388
    %v852 = vpop.f32.mrf.mxu0
    %v853 = vadd.f32 %v208, %v852
    %854 = vmatmul.f32.gmra.mxu0 %v391
    %v855 = vpop.f32.mrf.mxu0
    %v856 = vadd.f32 %v208, %v855
    %857 = vmatmul.f32.gmra.mxu0 %v394
    %v858 = vpop.f32.mrf.mxu0
    %v859 = vadd.f32 %v208, %v858
    %860 = vmatmul.f32.gmra.mxu0 %v397
    %v861 = vpop.f32.mrf.mxu0
    %v862 = vadd.f32 %v208, %v861
    %863 = vmatmul.f32.gmra.mxu0 %v400
    %v864 = vpop.f32.mrf.mxu0
    %v865 = vadd.f32 %v208, %v864
    %866 = vmatmul.f32.gmra.mxu0 %v403
    %v867 = vpop.f32.mrf.mxu0
    %v868 = vadd.f32 %v208, %v867
    %869 = vmatmul.f32.gmra.mxu0 %v406
    %v870 = vpop.f32.mrf.mxu0
    %v871 = vadd.f32 %v208, %v870
    %872 = vmatmul.f32.gmra.mxu0 %v409
    %v873 = vpop.f32.mrf.mxu0
    %v874 = vadd.f32 %v208, %v873
    %875 = vmatmul.f32.gmra.mxu0 %v412
    %v876 = vpop.f32.mrf.mxu0
    %v877 = vadd.f32 %v208, %v876
    %878 = vmatmul.f32.gmra.mxu0 %v415
    %v879 = vpop.f32.mrf.mxu0
    %v880 = vadd.f32 %v208, %v879
    %881 = vmatmul.f32.gmra.mxu0 %v418
    %v882 = vpop.f32.mrf.mxu0
    %v883 = vadd.f32 %v208, %v882
    %884 = vmatmul.f32.gmra.mxu0 %v421
    %v885 = vpop.f32.mrf.mxu0
    %v886 = vadd.f32 %v208, %v885
    %887 = vmatmul.f32.gmra.mxu0 %v424
    %v888 = vpop.f32.mrf.mxu0
    %v889 = vadd.f32 %v208, %v888
    %890 = vmatmul.f32.gmra.mxu0 %v427
    %v891 = vpop.f32.mrf.mxu0
    %v892 = vadd.f32 %v208, %v891
    %893 = vmatmul.f32.gmra.mxu0 %v430
    %v894 = vpop.f32.mrf.mxu0
    %v895 = vadd.f32 %v208, %v894
    %896 = vmatmul.f32.gmra.mxu0 %v433
    %v897 = vpop.f32.mrf.mxu0
    %v898 = vadd.f32 %v208, %v897
    %899 = vmatmul.f32.gmra.mxu0 %v436
    %v900 = vpop.f32.mrf.mxu0
    %v901 = vadd.f32 %v208, %v900
    %902 = vmatmul.f32.gmra.mxu0 %v439
    %v903 = vpop.f32.mrf.mxu0
    %v904 = vadd.f32 %v208, %v903
    %905 = vmatmul.f32.gmra.mxu0 %v442
    %v906 = vpop.f32.mrf.mxu0
    %v907 = vadd.f32 %v208, %v906
    %908 = vmatmul.f32.gmra.mxu0 %v445
    %v909 = vpop.f32.mrf.mxu0
    %v910 = vadd.f32 %v208, %v909
    %911 = vmatmul.f32.gmra.mxu0 %v448
    %v912 = vpop.f32.mrf.mxu0
    %v913 = vadd.f32 %v208, %v912
    %914 = vmatmul.f32.gmra.mxu0 %v451
    %v915 = vpop.f32.mrf.mxu0
    %v916 = vadd.f32 %v208, %v915
    %917 = vmatmul.f32.gmra.mxu0 %v454
    %v918 = vpop.f32.mrf.mxu0
    %v919 = vadd.f32 %v208, %v918
    %920 = vmatmul.f32.gmra.mxu0 %v457
    %v921 = vpop.f32.mrf.mxu0
    %v922 = vadd.f32 %v208, %v921
    %923 = vmatmul.f32.gmra.mxu0 %v460
    %v924 = vpop.f32.mrf.mxu0
    %v925 = vadd.f32 %v208, %v924
    %926 = vmatmul.f32.gmra.mxu0 %v463
    %v927 = vpop.f32.mrf.mxu0
    %v928 = vadd.f32 %v208, %v927
    %929 = vmatmul.f32.gmra.mxu0 %v466
    %v930 = vpop.f32.mrf.mxu0
    %v931 = vadd.f32 %v208, %v930
    %932 = vmatmul.f32.gmra.mxu0 %v469
    %v933 = vpop.f32.mrf.mxu0
    %v934 = vadd.f32 %v208, %v933
    %935 = vmatmul.f32.gmra.mxu0 %v472
    %v936 = vpop.f32.mrf.mxu0
    %v937 = vadd.f32 %v208, %v936
    %938 = vmatmul.f32.gmra.mxu0 %v475
    %v939 = vpop.f32.mrf.mxu0
    %v940 = vadd.f32 %v208, %v939
    %941 = vmatmul.f32.gmra.mxu0 %v478
    %v942 = vpop.f32.mrf.mxu0
    %v943 = vadd.f32 %v208, %v942
    %944 = vmatmul.f32.gmra.mxu0 %v481
    %v945 = vpop.f32.mrf.mxu0
    %v946 = vadd.f32 %v208, %v945
    %947 = vmatmul.f32.gmra.mxu0 %v484
    %v948 = vpop.f32.mrf.mxu0
    %v949 = vadd.f32 %v208, %v948
    %950 = vmatmul.f32.gmra.mxu0 %v487
    %v951 = vpop.f32.mrf.mxu0
    %v952 = vadd.f32 %v208, %v951
    %953 = vmatmul.f32.gmra.mxu0 %v490
    %v954 = vpop.f32.mrf.mxu0
    %v955 = vadd.f32 %v208, %v954
    %956 = vmatmul.f32.gmra.mxu0 %v493
    %v957 = vpop.f32.mrf.mxu0
    %v958 = vadd.f32 %v208, %v957
    %959 = vmatmul.f32.gmra.mxu0 %v496
    %v960 = vpop.f32.mrf.mxu0
    %v961 = vadd.f32 %v208, %v960
    %962 = vmatmul.f32.gmra.mxu0 %v499
    %v963 = vpop.f32.mrf.mxu0
    %v964 = vadd.f32 %v208, %v963
    %965 = vmatmul.f32.gmra.mxu0 %v502
    %v966 = vpop.f32.mrf.mxu0
    %v967 = vadd.f32 %v208, %v966
    %968 = vmatmul.f32.gmra.mxu0 %v505
    %v969 = vpop.f32.mrf.mxu0
    %v970 = vadd.f32 %v208, %v969
    %971 = vmatmul.f32.gmra.mxu0 %v508
    %v972 = vpop.f32.mrf.mxu0
    %v973 = vadd.f32 %v208, %v972
    %974 = vmatmul.f32.gmra.mxu0 %v511
    %v975 = vpop.f32.mrf.mxu0
    %v976 = vadd.f32 %v208, %v975
    %977 = vmatmul.f32.gmra.mxu0 %v514
    %v978 = vpop.f32.mrf.mxu0
    %v979 = vadd.f32 %v208, %v978
    %980 = vmatmul.f32.gmra.mxu0 %v517
    %v981 = vpop.f32.mrf.mxu0
    %v982 = vadd.f32 %v208, %v981
    %983 = vmatmul.f32.gmra.mxu0 %v520
    %v984 = vpop.f32.mrf.mxu0
    %v985 = vadd.f32 %v208, %v984
    %986 = vmatmul.f32.gmra.mxu0 %v523
    %v987 = vpop.f32.mrf.mxu0
    %v988 = vadd.f32 %v208, %v987
    %989 = vmatmul.f32.gmra.mxu0 %v526
    %v990 = vpop.f32.mrf.mxu0
    %v991 = vadd.f32 %v208, %v990
    %992 = vmatmul.f32.gmra.mxu0 %v529
    %v993 = vpop.f32.mrf.mxu0
    %v994 = vadd.f32 %v208, %v993
    %995 = vmatmul.f32.gmra.mxu0 %v532
    %v996 = vpop.f32.mrf.mxu0
    %v997 = vadd.f32 %v208, %v996
    %998 = vmatmul.f32.gmra.mxu0 %v535
    %v999 = vpop.f32.mrf.mxu0
    %v1000 = vadd.f32 %v208, %v999
    %1001 = vmatmul.f32.gmra.mxu0 %v538
    %v1002 = vpop.f32.mrf.mxu0
    %v1003 = vadd.f32 %v208, %v1002
    %1004 = vmatmul.f32.gmra.mxu0 %v541
    %v1005 = vpop.f32.mrf.mxu0
    %v1006 = vadd.f32 %v208, %v1005
    %1007 = vmatmul.f32.gmra.mxu0 %v544
    %v1008 = vpop.f32.mrf.mxu0
    %v1009 = vadd.f32 %v208, %v1008
    %1010 = vmatmul.f32.gmra.mxu0 %v547
    %v1011 = vpop.f32.mrf.mxu0
    %v1012 = vadd.f32 %v208, %v1011
    %1013 = vmatmul.f32.gmra.mxu0 %v550
    %v1014 = vpop.f32.mrf.mxu0
    %v1015 = vadd.f32 %v208, %v1014
    %1016 = vmatmul.f32.gmra.mxu0 %v553
    %v1017 = vpop.f32.mrf.mxu0
    %v1018 = vadd.f32 %v208, %v1017
    %1019 = vmatmul.f32.gmra.mxu0 %v556
    %v1020 = vpop.f32.mrf.mxu0
    %v1021 = vadd.f32 %v208, %v1020
    %1022 = vmatmul.f32.gmra.mxu0 %v559
    %v1023 = vpop.f32.mrf.mxu0
    %v1024 = vadd.f32 %v208, %v1023
    %1025 = vmatmul.f32.gmra.mxu0 %v562
    %v1026 = vpop.f32.mrf.mxu0
    %v1027 = vadd.f32 %v208, %v1026
    %1028 = vmatmul.f32.gmra.mxu0 %v565
    %v1029 = vpop.f32.mrf.mxu0
    %v1030 = vadd.f32 %v208, %v1029
    %1031 = vmatmul.f32.gmra.mxu0 %v568
    %v1032 = vpop.f32.mrf.mxu0
    %v1033 = vadd.f32 %v208, %v1032
    %1034 = vmatmul.f32.gmra.mxu0 %v571
    %v1035 = vpop.f32.mrf.mxu0
    %v1036 = vadd.f32 %v208, %v1035
    %1037 = vmatmul.f32.gmra.mxu0 %v574
    %v1038 = vpop.f32.mrf.mxu0
    %v1039 = vadd.f32 %v208, %v1038
    %1040 = vmatmul.f32.gmra.mxu0 %v577
    %v1041 = vpop.f32.mrf.mxu0
    %v1042 = vadd.f32 %v208, %v1041
    %1043 = vmatmul.f32.gmra.mxu0 %v580
    %v1044 = vpop.f32.mrf.mxu0
    %v1045 = vadd.f32 %v208, %v1044
    %1046 = vmatmul.f32.gmra.mxu0 %v583
    %v1047 = vpop.f32.mrf.mxu0
    %v1048 = vadd.f32 %v208, %v1047
    %1049 = vmatmul.f32.gmra.mxu0 %v586
    %v1050 = vpop.f32.mrf.mxu0
    %v1051 = vadd.f32 %v208, %v1050
    %1052 = vmatmul.f32.gmra.mxu0 %v589
    %v1053 = vpop.f32.mrf.mxu0
    %v1054 = vadd.f32 %v208, %v1053
    %1055 = vmatmul.f32.gmra.mxu0 %v592
    %v1056 = vpop.f32.mrf.mxu0
    %v1057 = vadd.f32 %v208, %v1056
    %1058 = vmatmul.f32.gmra.mxu0 %v595
    %v1059 = vpop.f32.mrf.mxu0
    %v1060 = vadd.f32 %v208, %v1059
    %1061 = vmatmul.f32.gmra.mxu0 %v598
    %v1062 = vpop.f32.mrf.mxu0
    %v1063 = vadd.f32 %v208, %v1062
    %1064 = vmatmul.f32.gmra.mxu0 %v601
    %v1065 = vpop.f32.mrf.mxu0
    %v1066 = vadd.f32 %v208, %v1065
    %1067 = vmatmul.f32.gmra.mxu0 %v604
    %v1068 = vpop.f32.mrf.mxu0
    %v1069 = vadd.f32 %v208, %v1068
    %1070 = vmatmul.f32.gmra.mxu0 %v607
    %v1071 = vpop.f32.mrf.mxu0
    %v1072 = vadd.f32 %v208, %v1071
    %1073 = vmatmul.f32.gmra.mxu0 %v610
    %v1074 = vpop.f32.mrf.mxu0
    %v1075 = vadd.f32 %v208, %v1074
    %1076 = vmatmul.f32.gmra.mxu0 %v613
    %v1077 = vpop.f32.mrf.mxu0
    %v1078 = vadd.f32 %v208, %v1077
    %1079 = vmatmul.f32.gmra.mxu0 %v616
    %v1080 = vpop.f32.mrf.mxu0
    %v1081 = vadd.f32 %v208, %v1080
    %1082 = vmatmul.f32.gmra.mxu0 %v619
    %v1083 = vpop.f32.mrf.mxu0
    %v1084 = vadd.f32 %v208, %v1083
    %1085 = vmatmul.f32.gmra.mxu0 %v622
    %v1086 = vpop.f32.mrf.mxu0
    %v1087 = vadd.f32 %v208, %v1086
    %1088 = vmatmul.f32.gmra.mxu0 %v625
    %v1089 = vpop.f32.mrf.mxu0
    %v1090 = vadd.f32 %v208, %v1089
    %1091 = vmatmul.f32.gmra.mxu0 %v628
    %v1092 = vpop.f32.mrf.mxu0
    %v1093 = vadd.f32 %v208, %v1092
    %1094 = vmatmul.f32.gmra.mxu0 %v631
    %v1095 = vpop.f32.mrf.mxu0
    %v1096 = vadd.f32 %v208, %v1095
    %1097 = vmatmul.f32.gmra.mxu0 %v634
    %v1098 = vpop.f32.mrf.mxu0
    %v1099 = vadd.f32 %v208, %v1098
    %1100 = vmatmul.f32.gmra.mxu0 %v637
    %v1101 = vpop.f32.mrf.mxu0
    %v1102 = vadd.f32 %v208, %v1101
    %1103 = vmatmul.f32.gmra.mxu0 %v640
    %v1104 = vpop.f32.mrf.mxu0
    %v1105 = vadd.f32 %v208, %v1104
    %1106 = vmatmul.f32.gmra.mxu0 %v643
    %v1107 = vpop.f32.mrf.mxu0
    %v1108 = vadd.f32 %v208, %v1107
    %1109 = vmatmul.f32.gmra.mxu0 %v646
    %v1110 = vpop.f32.mrf.mxu0
    %v1111 = vadd.f32 %v208, %v1110
    %1112 = vmatmul.f32.gmra.mxu0 %v649
    %v1113 = vpop.f32.mrf.mxu0
    %v1114 = vadd.f32 %v208, %v1113
    %1115 = vdwg.mxu0
    %1116 = vmatpush.msra.mxu0 0.0
    %1117 = vmatpush.msra.mxu0 0.0
    %1118 = vmatpush.msra.mxu0 0.0
    %1119 = vmatpush.msra.mxu0 0.0
    %1120 = vmatpush.msra.mxu0 0.0
    %1121 = vmatpush.msra.mxu0 0.0
    %1122 = vmatpush.msra.mxu0 0.0
    %1123 = vmatpush.msra.mxu0 0.0
    %1124 = vmatpush.msra.mxu0 0.0
    %1125 = vmatpush.msra.mxu0 %v656
    %1126 = vmatpush.msra.mxu0 %v197
    %1127 = vmatpush.msra.mxu0 %v192
    %1128 = vmatpush.msra.mxu0 %v187
    %1129 = vmatpush.msra.mxu0 %v182
    %1130 = vmatpush.msra.mxu0 %v177
    %1131 = vmatpush.msra.mxu0 %v172
    %1132 = vmatmul.f32.gmra.mxu0 %v220
    %v1133 = vpop.f32.mrf.mxu0
    %v1134 = vadd.f32 %v209, %v1133
    %1135 = vmatmul.f32.gmra.mxu0 %v223
    %v1136 = vpop.f32.mrf.mxu0
    %v1137 = vadd.f32 %v209, %v1136
    %1138 = vmatmul.f32.gmra.mxu0 %v226
    %v1139 = vpop.f32.mrf.mxu0
    %v1140 = vadd.f32 %v209, %v1139
    %1141 = vmatmul.f32.gmra.mxu0 %v229
    %v1142 = vpop.f32.mrf.mxu0
    %v1143 = vadd.f32 %v209, %v1142
    %1144 = vmatmul.f32.gmra.mxu0 %v232
    %v1145 = vpop.f32.mrf.mxu0
    %v1146 = vadd.f32 %v209, %v1145
    %1147 = vmatmul.f32.gmra.mxu0 %v235
    %v1148 = vpop.f32.mrf.mxu0
    %v1149 = vadd.f32 %v209, %v1148
    %1150 = vmatmul.f32.gmra.mxu0 %v238
    %v1151 = vpop.f32.mrf.mxu0
    %v1152 = vadd.f32 %v209, %v1151
    %1153 = vmatmul.f32.gmra.mxu0 %v241
    %v1154 = vpop.f32.mrf.mxu0
    %v1155 = vadd.f32 %v209, %v1154
    %1156 = vmatmul.f32.gmra.mxu0 %v244
    %v1157 = vpop.f32.mrf.mxu0
    %v1158 = vadd.f32 %v209, %v1157
    %1159 = vmatmul.f32.gmra.mxu0 %v247
    %v1160 = vpop.f32.mrf.mxu0
    %v1161 = vadd.f32 %v209, %v1160
    %1162 = vmatmul.f32.gmra.mxu0 %v250
    %v1163 = vpop.f32.mrf.mxu0
    %v1164 = vadd.f32 %v209, %v1163
    %1165 = vmatmul.f32.gmra.mxu0 %v253
    %v1166 = vpop.f32.mrf.mxu0
    %v1167 = vadd.f32 %v209, %v1166
    %1168 = vmatmul.f32.gmra.mxu0 %v256
    %v1169 = vpop.f32.mrf.mxu0
    %v1170 = vadd.f32 %v209, %v1169
    %1171 = vmatmul.f32.gmra.mxu0 %v259
    %v1172 = vpop.f32.mrf.mxu0
    %v1173 = vadd.f32 %v209, %v1172
    %1174 = vmatmul.f32.gmra.mxu0 %v262
    %v1175 = vpop.f32.mrf.mxu0
    %v1176 = vadd.f32 %v209, %v1175
    %1177 = vmatmul.f32.gmra.mxu0 %v265
    %v1178 = vpop.f32.mrf.mxu0
    %v1179 = vadd.f32 %v209, %v1178
    %1180 = vmatmul.f32.gmra.mxu0 %v268
    %v1181 = vpop.f32.mrf.mxu0
    %v1182 = vadd.f32 %v209, %v1181
    %1183 = vmatmul.f32.gmra.mxu0 %v271
    %v1184 = vpop.f32.mrf.mxu0
    %v1185 = vadd.f32 %v209, %v1184
    %1186 = vmatmul.f32.gmra.mxu0 %v274
    %v1187 = vpop.f32.mrf.mxu0
    %v1188 = vadd.f32 %v209, %v1187
    %1189 = vmatmul.f32.gmra.mxu0 %v277
    %v1190 = vpop.f32.mrf.mxu0
    %v1191 = vadd.f32 %v209, %v1190
    %1192 = vmatmul.f32.gmra.mxu0 %v280
    %v1193 = vpop.f32.mrf.mxu0
    %v1194 = vadd.f32 %v209, %v1193
    %1195 = vmatmul.f32.gmra.mxu0 %v283
    %v1196 = vpop.f32.mrf.mxu0
    %v1197 = vadd.f32 %v209, %v1196
    %1198 = vmatmul.f32.gmra.mxu0 %v286
    %v1199 = vpop.f32.mrf.mxu0
    %v1200 = vadd.f32 %v209, %v1199
    %1201 = vmatmul.f32.gmra.mxu0 %v289
    %v1202 = vpop.f32.mrf.mxu0
    %v1203 = vadd.f32 %v209, %v1202
    %1204 = vmatmul.f32.gmra.mxu0 %v292
    %v1205 = vpop.f32.mrf.mxu0
    %v1206 = vadd.f32 %v209, %v1205
    %1207 = vmatmul.f32.gmra.mxu0 %v295
    %v1208 = vpop.f32.mrf.mxu0
    %v1209 = vadd.f32 %v209, %v1208
    %1210 = vmatmul.f32.gmra.mxu0 %v298
    %v1211 = vpop.f32.mrf.mxu0
    %v1212 = vadd.f32 %v209, %v1211
    %1213 = vmatmul.f32.gmra.mxu0 %v301
    %v1214 = vpop.f32.mrf.mxu0
    %v1215 = vadd.f32 %v209, %v1214
    %1216 = vmatmul.f32.gmra.mxu0 %v304
    %v1217 = vpop.f32.mrf.mxu0
    %v1218 = vadd.f32 %v209, %v1217
    %1219 = vmatmul.f32.gmra.mxu0 %v307
    %v1220 = vpop.f32.mrf.mxu0
    %v1221 = vadd.f32 %v209, %v1220
    %1222 = vmatmul.f32.gmra.mxu0 %v310
    %v1223 = vpop.f32.mrf.mxu0
    %v1224 = vadd.f32 %v209, %v1223
    %1225 = vmatmul.f32.gmra.mxu0 %v313
    %v1226 = vpop.f32.mrf.mxu0
    %v1227 = vadd.f32 %v209, %v1226
    %1228 = vmatmul.f32.gmra.mxu0 %v316
    %v1229 = vpop.f32.mrf.mxu0
    %v1230 = vadd.f32 %v209, %v1229
    %1231 = vmatmul.f32.gmra.mxu0 %v319
    %v1232 = vpop.f32.mrf.mxu0
    %v1233 = vadd.f32 %v209, %v1232
    %1234 = vmatmul.f32.gmra.mxu0 %v322
    %v1235 = vpop.f32.mrf.mxu0
    %v1236 = vadd.f32 %v209, %v1235
    %1237 = vmatmul.f32.gmra.mxu0 %v325
    %v1238 = vpop.f32.mrf.mxu0
    %v1239 = vadd.f32 %v209, %v1238
    %1240 = vmatmul.f32.gmra.mxu0 %v328
    %v1241 = vpop.f32.mrf.mxu0
    %v1242 = vadd.f32 %v209, %v1241
    %1243 = vmatmul.f32.gmra.mxu0 %v331
    %v1244 = vpop.f32.mrf.mxu0
    %v1245 = vadd.f32 %v209, %v1244
    %1246 = vmatmul.f32.gmra.mxu0 %v334
    %v1247 = vpop.f32.mrf.mxu0
    %v1248 = vadd.f32 %v209, %v1247
    %1249 = vmatmul.f32.gmra.mxu0 %v337
    %v1250 = vpop.f32.mrf.mxu0
    %v1251 = vadd.f32 %v209, %v1250
    %1252 = vmatmul.f32.gmra.mxu0 %v340
    %v1253 = vpop.f32.mrf.mxu0
    %v1254 = vadd.f32 %v209, %v1253
    %1255 = vmatmul.f32.gmra.mxu0 %v343
    %v1256 = vpop.f32.mrf.mxu0
    %v1257 = vadd.f32 %v209, %v1256
    %1258 = vmatmul.f32.gmra.mxu0 %v346
    %v1259 = vpop.f32.mrf.mxu0
    %v1260 = vadd.f32 %v209, %v1259
    %1261 = vmatmul.f32.gmra.mxu0 %v349
    %v1262 = vpop.f32.mrf.mxu0
    %v1263 = vadd.f32 %v209, %v1262
    %1264 = vmatmul.f32.gmra.mxu0 %v352
    %v1265 = vpop.f32.mrf.mxu0
    %v1266 = vadd.f32 %v209, %v1265
    %1267 = vmatmul.f32.gmra.mxu0 %v355
    %v1268 = vpop.f32.mrf.mxu0
    %v1269 = vadd.f32 %v209, %v1268
    %1270 = vmatmul.f32.gmra.mxu0 %v358
    %v1271 = vpop.f32.mrf.mxu0
    %v1272 = vadd.f32 %v209, %v1271
    %1273 = vmatmul.f32.gmra.mxu0 %v361
    %v1274 = vpop.f32.mrf.mxu0
    %v1275 = vadd.f32 %v209, %v1274
    %1276 = vmatmul.f32.gmra.mxu0 %v364
    %v1277 = vpop.f32.mrf.mxu0
    %v1278 = vadd.f32 %v209, %v1277
    %1279 = vmatmul.f32.gmra.mxu0 %v367
    %v1280 = vpop.f32.mrf.mxu0
    %v1281 = vadd.f32 %v209, %v1280
    %1282 = vmatmul.f32.gmra.mxu0 %v370
    %v1283 = vpop.f32.mrf.mxu0
    %v1284 = vadd.f32 %v209, %v1283
    %1285 = vmatmul.f32.gmra.mxu0 %v373
    %v1286 = vpop.f32.mrf.mxu0
    %v1287 = vadd.f32 %v209, %v1286
    %1288 = vmatmul.f32.gmra.mxu0 %v376
    %v1289 = vpop.f32.mrf.mxu0
    %v1290 = vadd.f32 %v209, %v1289
    %1291 = vmatmul.f32.gmra.mxu0 %v379
    %v1292 = vpop.f32.mrf.mxu0
    %v1293 = vadd.f32 %v209, %v1292
    %1294 = vmatmul.f32.gmra.mxu0 %v382
    %v1295 = vpop.f32.mrf.mxu0
    %v1296 = vadd.f32 %v209, %v1295
    %1297 = vmatmul.f32.gmra.mxu0 %v385
    %v1298 = vpop.f32.mrf.mxu0
    %v1299 = vadd.f32 %v209, %v1298
    %1300 = vmatmul.f32.gmra.mxu0 %v388
    %v1301 = vpop.f32.mrf.mxu0
    %v1302 = vadd.f32 %v209, %v1301
    %1303 = vmatmul.f32.gmra.mxu0 %v391
    %v1304 = vpop.f32.mrf.mxu0
    %v1305 = vadd.f32 %v209, %v1304
    %1306 = vmatmul.f32.gmra.mxu0 %v394
    %v1307 = vpop.f32.mrf.mxu0
    %v1308 = vadd.f32 %v209, %v1307
    %1309 = vmatmul.f32.gmra.mxu0 %v397
    %v1310 = vpop.f32.mrf.mxu0
    %v1311 = vadd.f32 %v209, %v1310
    %1312 = vmatmul.f32.gmra.mxu0 %v400
    %v1313 = vpop.f32.mrf.mxu0
    %v1314 = vadd.f32 %v209, %v1313
    %1315 = vmatmul.f32.gmra.mxu0 %v403
    %v1316 = vpop.f32.mrf.mxu0
    %v1317 = vadd.f32 %v209, %v1316
    %1318 = vmatmul.f32.gmra.mxu0 %v406
    %v1319 = vpop.f32.mrf.mxu0
    %v1320 = vadd.f32 %v209, %v1319
    %1321 = vmatmul.f32.gmra.mxu0 %v409
    %v1322 = vpop.f32.mrf.mxu0
    %v1323 = vadd.f32 %v209, %v1322
    %1324 = vmatmul.f32.gmra.mxu0 %v412
    %v1325 = vpop.f32.mrf.mxu0
    %v1326 = vadd.f32 %v209, %v1325
    %1327 = vmatmul.f32.gmra.mxu0 %v415
    %v1328 = vpop.f32.mrf.mxu0
    %v1329 = vadd.f32 %v209, %v1328
    %1330 = vmatmul.f32.gmra.mxu0 %v418
    %v1331 = vpop.f32.mrf.mxu0
    %v1332 = vadd.f32 %v209, %v1331
    %1333 = vmatmul.f32.gmra.mxu0 %v421
    %v1334 = vpop.f32.mrf.mxu0
    %v1335 = vadd.f32 %v209, %v1334
    %1336 = vmatmul.f32.gmra.mxu0 %v424
    %v1337 = vpop.f32.mrf.mxu0
    %v1338 = vadd.f32 %v209, %v1337
    %1339 = vmatmul.f32.gmra.mxu0 %v427
    %v1340 = vpop.f32.mrf.mxu0
    %v1341 = vadd.f32 %v209, %v1340
    %1342 = vmatmul.f32.gmra.mxu0 %v430
    %v1343 = vpop.f32.mrf.mxu0
    %v1344 = vadd.f32 %v209, %v1343
    %1345 = vmatmul.f32.gmra.mxu0 %v433
    %v1346 = vpop.f32.mrf.mxu0
    %v1347 = vadd.f32 %v209, %v1346
    %1348 = vmatmul.f32.gmra.mxu0 %v436
    %v1349 = vpop.f32.mrf.mxu0
    %v1350 = vadd.f32 %v209, %v1349
    %1351 = vmatmul.f32.gmra.mxu0 %v439
    %v1352 = vpop.f32.mrf.mxu0
    %v1353 = vadd.f32 %v209, %v1352
    %1354 = vmatmul.f32.gmra.mxu0 %v442
    %v1355 = vpop.f32.mrf.mxu0
    %v1356 = vadd.f32 %v209, %v1355
    %1357 = vmatmul.f32.gmra.mxu0 %v445
    %v1358 = vpop.f32.mrf.mxu0
    %v1359 = vadd.f32 %v209, %v1358
    %1360 = vmatmul.f32.gmra.mxu0 %v448
    %v1361 = vpop.f32.mrf.mxu0
    %v1362 = vadd.f32 %v209, %v1361
    %1363 = vmatmul.f32.gmra.mxu0 %v451
    %v1364 = vpop.f32.mrf.mxu0
    %v1365 = vadd.f32 %v209, %v1364
    %1366 = vmatmul.f32.gmra.mxu0 %v454
    %v1367 = vpop.f32.mrf.mxu0
    %v1368 = vadd.f32 %v209, %v1367
    %1369 = vmatmul.f32.gmra.mxu0 %v457
    %v1370 = vpop.f32.mrf.mxu0
    %v1371 = vadd.f32 %v209, %v1370
    %1372 = vmatmul.f32.gmra.mxu0 %v460
    %v1373 = vpop.f32.mrf.mxu0
    %v1374 = vadd.f32 %v209, %v1373
    %1375 = vmatmul.f32.gmra.mxu0 %v463
    %v1376 = vpop.f32.mrf.mxu0
    %v1377 = vadd.f32 %v209, %v1376
    %1378 = vmatmul.f32.gmra.mxu0 %v466
    %v1379 = vpop.f32.mrf.mxu0
    %v1380 = vadd.f32 %v209, %v1379
    %1381 = vmatmul.f32.gmra.mxu0 %v469
    %v1382 = vpop.f32.mrf.mxu0
    %v1383 = vadd.f32 %v209, %v1382
    %1384 = vmatmul.f32.gmra.mxu0 %v472
    %v1385 = vpop.f32.mrf.mxu0
    %v1386 = vadd.f32 %v209, %v1385
    %1387 = vmatmul.f32.gmra.mxu0 %v475
    %v1388 = vpop.f32.mrf.mxu0
    %v1389 = vadd.f32 %v209, %v1388
    %1390 = vmatmul.f32.gmra.mxu0 %v478
    %v1391 = vpop.f32.mrf.mxu0
    %v1392 = vadd.f32 %v209, %v1391
    %1393 = vmatmul.f32.gmra.mxu0 %v481
    %v1394 = vpop.f32.mrf.mxu0
    %v1395 = vadd.f32 %v209, %v1394
    %1396 = vmatmul.f32.gmra.mxu0 %v484
    %v1397 = vpop.f32.mrf.mxu0
    %v1398 = vadd.f32 %v209, %v1397
    %1399 = vmatmul.f32.gmra.mxu0 %v487
    %v1400 = vpop.f32.mrf.mxu0
    %v1401 = vadd.f32 %v209, %v1400
    %1402 = vmatmul.f32.gmra.mxu0 %v490
    %v1403 = vpop.f32.mrf.mxu0
    %v1404 = vadd.f32 %v209, %v1403
    %1405 = vmatmul.f32.gmra.mxu0 %v493
    %v1406 = vpop.f32.mrf.mxu0
    %v1407 = vadd.f32 %v209, %v1406
    %1408 = vmatmul.f32.gmra.mxu0 %v496
    %v1409 = vpop.f32.mrf.mxu0
    %v1410 = vadd.f32 %v209, %v1409
    %1411 = vmatmul.f32.gmra.mxu0 %v499
    %v1412 = vpop.f32.mrf.mxu0
    %v1413 = vadd.f32 %v209, %v1412
    %1414 = vmatmul.f32.gmra.mxu0 %v502
    %v1415 = vpop.f32.mrf.mxu0
    %v1416 = vadd.f32 %v209, %v1415
    %1417 = vmatmul.f32.gmra.mxu0 %v505
    %v1418 = vpop.f32.mrf.mxu0
    %v1419 = vadd.f32 %v209, %v1418
    %1420 = vmatmul.f32.gmra.mxu0 %v508
    %v1421 = vpop.f32.mrf.mxu0
    %v1422 = vadd.f32 %v209, %v1421
    %1423 = vmatmul.f32.gmra.mxu0 %v511
    %v1424 = vpop.f32.mrf.mxu0
    %v1425 = vadd.f32 %v209, %v1424
    %1426 = vmatmul.f32.gmra.mxu0 %v514
    %v1427 = vpop.f32.mrf.mxu0
    %v1428 = vadd.f32 %v209, %v1427
    %1429 = vmatmul.f32.gmra.mxu0 %v517
    %v1430 = vpop.f32.mrf.mxu0
    %v1431 = vadd.f32 %v209, %v1430
    %1432 = vmatmul.f32.gmra.mxu0 %v520
    %v1433 = vpop.f32.mrf.mxu0
    %v1434 = vadd.f32 %v209, %v1433
    %1435 = vmatmul.f32.gmra.mxu0 %v523
    %v1436 = vpop.f32.mrf.mxu0
    %v1437 = vadd.f32 %v209, %v1436
    %1438 = vmatmul.f32.gmra.mxu0 %v526
    %v1439 = vpop.f32.mrf.mxu0
    %v1440 = vadd.f32 %v209, %v1439
    %1441 = vmatmul.f32.gmra.mxu0 %v529
    %v1442 = vpop.f32.mrf.mxu0
    %v1443 = vadd.f32 %v209, %v1442
    %1444 = vmatmul.f32.gmra.mxu0 %v532
    %v1445 = vpop.f32.mrf.mxu0
    %v1446 = vadd.f32 %v209, %v1445
    %1447 = vmatmul.f32.gmra.mxu0 %v535
    %v1448 = vpop.f32.mrf.mxu0
    %v1449 = vadd.f32 %v209, %v1448
    %1450 = vmatmul.f32.gmra.mxu0 %v538
    %v1451 = vpop.f32.mrf.mxu0
    %v1452 = vadd.f32 %v209, %v1451
    %1453 = vmatmul.f32.gmra.mxu0 %v541
    %v1454 = vpop.f32.mrf.mxu0
    %v1455 = vadd.f32 %v209, %v1454
    %1456 = vmatmul.f32.gmra.mxu0 %v544
    %v1457 = vpop.f32.mrf.mxu0
    %v1458 = vadd.f32 %v209, %v1457
    %1459 = vmatmul.f32.gmra.mxu0 %v547
    %v1460 = vpop.f32.mrf.mxu0
    %v1461 = vadd.f32 %v209, %v1460
    %1462 = vmatmul.f32.gmra.mxu0 %v550
    %v1463 = vpop.f32.mrf.mxu0
    %v1464 = vadd.f32 %v209, %v1463
    %1465 = vmatmul.f32.gmra.mxu0 %v553
    %v1466 = vpop.f32.mrf.mxu0
    %v1467 = vadd.f32 %v209, %v1466
    %1468 = vmatmul.f32.gmra.mxu0 %v556
    %v1469 = vpop.f32.mrf.mxu0
    %v1470 = vadd.f32 %v209, %v1469
    %1471 = vmatmul.f32.gmra.mxu0 %v559
    %v1472 = vpop.f32.mrf.mxu0
    %v1473 = vadd.f32 %v209, %v1472
    %1474 = vmatmul.f32.gmra.mxu0 %v562
    %v1475 = vpop.f32.mrf.mxu0
    %v1476 = vadd.f32 %v209, %v1475
    %1477 = vmatmul.f32.gmra.mxu0 %v565
    %v1478 = vpop.f32.mrf.mxu0
    %v1479 = vadd.f32 %v209, %v1478
    %1480 = vmatmul.f32.gmra.mxu0 %v568
    %v1481 = vpop.f32.mrf.mxu0
    %v1482 = vadd.f32 %v209, %v1481
    %1483 = vmatmul.f32.gmra.mxu0 %v571
    %v1484 = vpop.f32.mrf.mxu0
    %v1485 = vadd.f32 %v209, %v1484
    %1486 = vmatmul.f32.gmra.mxu0 %v574
    %v1487 = vpop.f32.mrf.mxu0
    %v1488 = vadd.f32 %v209, %v1487
    %1489 = vmatmul.f32.gmra.mxu0 %v577
    %v1490 = vpop.f32.mrf.mxu0
    %v1491 = vadd.f32 %v209, %v1490
    %1492 = vmatmul.f32.gmra.mxu0 %v580
    %v1493 = vpop.f32.mrf.mxu0
    %v1494 = vadd.f32 %v209, %v1493
    %1495 = vmatmul.f32.gmra.mxu0 %v583
    %v1496 = vpop.f32.mrf.mxu0
    %v1497 = vadd.f32 %v209, %v1496
    %1498 = vmatmul.f32.gmra.mxu0 %v586
    %v1499 = vpop.f32.mrf.mxu0
    %v1500 = vadd.f32 %v209, %v1499
    %1501 = vmatmul.f32.gmra.mxu0 %v589
    %v1502 = vpop.f32.mrf.mxu0
    %v1503 = vadd.f32 %v209, %v1502
    %1504 = vmatmul.f32.gmra.mxu0 %v592
    %v1505 = vpop.f32.mrf.mxu0
    %v1506 = vadd.f32 %v209, %v1505
    %1507 = vmatmul.f32.gmra.mxu0 %v595
    %v1508 = vpop.f32.mrf.mxu0
    %v1509 = vadd.f32 %v209, %v1508
    %1510 = vmatmul.f32.gmra.mxu0 %v598
    %v1511 = vpop.f32.mrf.mxu0
    %v1512 = vadd.f32 %v209, %v1511
    %1513 = vmatmul.f32.gmra.mxu0 %v601
    %v1514 = vpop.f32.mrf.mxu0
    %v1515 = vadd.f32 %v209, %v1514
    %1516 = vmatmul.f32.gmra.mxu0 %v604
    %v1517 = vpop.f32.mrf.mxu0
    %v1518 = vadd.f32 %v209, %v1517
    %1519 = vmatmul.f32.gmra.mxu0 %v607
    %v1520 = vpop.f32.mrf.mxu0
    %v1521 = vadd.f32 %v209, %v1520
    %1522 = vmatmul.f32.gmra.mxu0 %v610
    %v1523 = vpop.f32.mrf.mxu0
    %v1524 = vadd.f32 %v209, %v1523
    %1525 = vmatmul.f32.gmra.mxu0 %v613
    %v1526 = vpop.f32.mrf.mxu0
    %v1527 = vadd.f32 %v209, %v1526
    %1528 = vmatmul.f32.gmra.mxu0 %v616
    %v1529 = vpop.f32.mrf.mxu0
    %v1530 = vadd.f32 %v209, %v1529
    %1531 = vmatmul.f32.gmra.mxu0 %v619
    %v1532 = vpop.f32.mrf.mxu0
    %v1533 = vadd.f32 %v209, %v1532
    %1534 = vmatmul.f32.gmra.mxu0 %v622
    %v1535 = vpop.f32.mrf.mxu0
    %v1536 = vadd.f32 %v209, %v1535
    %1537 = vmatmul.f32.gmra.mxu0 %v625
    %v1538 = vpop.f32.mrf.mxu0
    %v1539 = vadd.f32 %v209, %v1538
    %1540 = vmatmul.f32.gmra.mxu0 %v628
    %v1541 = vpop.f32.mrf.mxu0
    %v1542 = vadd.f32 %v209, %v1541
    %1543 = vmatmul.f32.gmra.mxu0 %v631
    %v1544 = vpop.f32.mrf.mxu0
    %v1545 = vadd.f32 %v209, %v1544
    %1546 = vmatmul.f32.gmra.mxu0 %v634
    %v1547 = vpop.f32.mrf.mxu0
    %v1548 = vadd.f32 %v209, %v1547
    %1549 = vmatmul.f32.gmra.mxu0 %v637
    %v1550 = vpop.f32.mrf.mxu0
    %v1551 = vadd.f32 %v209, %v1550
    %1552 = vmatmul.f32.gmra.mxu0 %v640
    %v1553 = vpop.f32.mrf.mxu0
    %v1554 = vadd.f32 %v209, %v1553
    %1555 = vmatmul.f32.gmra.mxu0 %v643
    %v1556 = vpop.f32.mrf.mxu0
    %v1557 = vadd.f32 %v209, %v1556
    %1558 = vmatmul.f32.gmra.mxu0 %v646
    %v1559 = vpop.f32.mrf.mxu0
    %v1560 = vadd.f32 %v209, %v1559
    %1561 = vmatmul.f32.gmra.mxu0 %v649
    %v1562 = vpop.f32.mrf.mxu0
    %v1563 = vadd.f32 %v209, %v1562
    %1564 = vdwg.mxu0
    %1565 = vmatpush.msra.mxu0 0.0
    %1566 = vmatpush.msra.mxu0 0.0
    %1567 = vmatpush.msra.mxu0 0.0
    %1568 = vmatpush.msra.mxu0 0.0
    %1569 = vmatpush.msra.mxu0 0.0
    %1570 = vmatpush.msra.mxu0 0.0
    %1571 = vmatpush.msra.mxu0 0.0
    %1572 = vmatpush.msra.mxu0 0.0
    %1573 = vmatpush.msra.mxu0 0.0
    %1574 = vmatpush.msra.mxu0 %v659
    %1575 = vmatpush.msra.mxu0 %v198
    %1576 = vmatpush.msra.mxu0 %v193
    %1577 = vmatpush.msra.mxu0 %v188
    %1578 = vmatpush.msra.mxu0 %v183
    %1579 = vmatpush.msra.mxu0 %v178
    %1580 = vmatpush.msra.mxu0 %v173
    %1581 = vmatmul.f32.gmra.mxu0 %v220
    %v1582 = vpop.f32.mrf.mxu0
    %v1583 = vadd.f32 %v210, %v1582
    %1584 = vmatmul.f32.gmra.mxu0 %v223
    %v1585 = vpop.f32.mrf.mxu0
    %v1586 = vadd.f32 %v210, %v1585
    %1587 = vmatmul.f32.gmra.mxu0 %v226
    %v1588 = vpop.f32.mrf.mxu0
    %v1589 = vadd.f32 %v210, %v1588
    %1590 = vmatmul.f32.gmra.mxu0 %v229
    %v1591 = vpop.f32.mrf.mxu0
    %v1592 = vadd.f32 %v210, %v1591
    %1593 = vmatmul.f32.gmra.mxu0 %v232
    %v1594 = vpop.f32.mrf.mxu0
    %v1595 = vadd.f32 %v210, %v1594
    %1596 = vmatmul.f32.gmra.mxu0 %v235
    %v1597 = vpop.f32.mrf.mxu0
    %v1598 = vadd.f32 %v210, %v1597
    %1599 = vmatmul.f32.gmra.mxu0 %v238
    %v1600 = vpop.f32.mrf.mxu0
    %v1601 = vadd.f32 %v210, %v1600
    %1602 = vmatmul.f32.gmra.mxu0 %v241
    %v1603 = vpop.f32.mrf.mxu0
    %v1604 = vadd.f32 %v210, %v1603
    %1605 = vmatmul.f32.gmra.mxu0 %v244
    %v1606 = vpop.f32.mrf.mxu0
    %v1607 = vadd.f32 %v210, %v1606
    %1608 = vmatmul.f32.gmra.mxu0 %v247
    %v1609 = vpop.f32.mrf.mxu0
    %v1610 = vadd.f32 %v210, %v1609
    %1611 = vmatmul.f32.gmra.mxu0 %v250
    %v1612 = vpop.f32.mrf.mxu0
    %v1613 = vadd.f32 %v210, %v1612
    %1614 = vmatmul.f32.gmra.mxu0 %v253
    %v1615 = vpop.f32.mrf.mxu0
    %v1616 = vadd.f32 %v210, %v1615
    %1617 = vmatmul.f32.gmra.mxu0 %v256
    %v1618 = vpop.f32.mrf.mxu0
    %v1619 = vadd.f32 %v210, %v1618
    %1620 = vmatmul.f32.gmra.mxu0 %v259
    %v1621 = vpop.f32.mrf.mxu0
    %v1622 = vadd.f32 %v210, %v1621
    %1623 = vmatmul.f32.gmra.mxu0 %v262
    %v1624 = vpop.f32.mrf.mxu0
    %v1625 = vadd.f32 %v210, %v1624
    %1626 = vmatmul.f32.gmra.mxu0 %v265
    %v1627 = vpop.f32.mrf.mxu0
    %v1628 = vadd.f32 %v210, %v1627
    %1629 = vmatmul.f32.gmra.mxu0 %v268
    %v1630 = vpop.f32.mrf.mxu0
    %v1631 = vadd.f32 %v210, %v1630
    %1632 = vmatmul.f32.gmra.mxu0 %v271
    %v1633 = vpop.f32.mrf.mxu0
    %v1634 = vadd.f32 %v210, %v1633
    %1635 = vmatmul.f32.gmra.mxu0 %v274
    %v1636 = vpop.f32.mrf.mxu0
    %v1637 = vadd.f32 %v210, %v1636
    %1638 = vmatmul.f32.gmra.mxu0 %v277
    %v1639 = vpop.f32.mrf.mxu0
    %v1640 = vadd.f32 %v210, %v1639
    %1641 = vmatmul.f32.gmra.mxu0 %v280
    %v1642 = vpop.f32.mrf.mxu0
    %v1643 = vadd.f32 %v210, %v1642
    %1644 = vmatmul.f32.gmra.mxu0 %v283
    %v1645 = vpop.f32.mrf.mxu0
    %v1646 = vadd.f32 %v210, %v1645
    %1647 = vmatmul.f32.gmra.mxu0 %v286
    %v1648 = vpop.f32.mrf.mxu0
    %v1649 = vadd.f32 %v210, %v1648
    %1650 = vmatmul.f32.gmra.mxu0 %v289
    %v1651 = vpop.f32.mrf.mxu0
    %v1652 = vadd.f32 %v210, %v1651
    %1653 = vmatmul.f32.gmra.mxu0 %v292
    %v1654 = vpop.f32.mrf.mxu0
    %v1655 = vadd.f32 %v210, %v1654
    %1656 = vmatmul.f32.gmra.mxu0 %v295
    %v1657 = vpop.f32.mrf.mxu0
    %v1658 = vadd.f32 %v210, %v1657
    %1659 = vmatmul.f32.gmra.mxu0 %v298
    %v1660 = vpop.f32.mrf.mxu0
    %v1661 = vadd.f32 %v210, %v1660
    %1662 = vmatmul.f32.gmra.mxu0 %v301
    %v1663 = vpop.f32.mrf.mxu0
    %v1664 = vadd.f32 %v210, %v1663
    %1665 = vmatmul.f32.gmra.mxu0 %v304
    %v1666 = vpop.f32.mrf.mxu0
    %v1667 = vadd.f32 %v210, %v1666
    %1668 = vmatmul.f32.gmra.mxu0 %v307
    %v1669 = vpop.f32.mrf.mxu0
    %v1670 = vadd.f32 %v210, %v1669
    %1671 = vmatmul.f32.gmra.mxu0 %v310
    %v1672 = vpop.f32.mrf.mxu0
    %v1673 = vadd.f32 %v210, %v1672
    %1674 = vmatmul.f32.gmra.mxu0 %v313
    %v1675 = vpop.f32.mrf.mxu0
    %v1676 = vadd.f32 %v210, %v1675
    %1677 = vmatmul.f32.gmra.mxu0 %v316
    %v1678 = vpop.f32.mrf.mxu0
    %v1679 = vadd.f32 %v210, %v1678
    %1680 = vmatmul.f32.gmra.mxu0 %v319
    %v1681 = vpop.f32.mrf.mxu0
    %v1682 = vadd.f32 %v210, %v1681
    %1683 = vmatmul.f32.gmra.mxu0 %v322
    %v1684 = vpop.f32.mrf.mxu0
    %v1685 = vadd.f32 %v210, %v1684
    %1686 = vmatmul.f32.gmra.mxu0 %v325
    %v1687 = vpop.f32.mrf.mxu0
    %v1688 = vadd.f32 %v210, %v1687
    %1689 = vmatmul.f32.gmra.mxu0 %v328
    %v1690 = vpop.f32.mrf.mxu0
    %v1691 = vadd.f32 %v210, %v1690
    %1692 = vmatmul.f32.gmra.mxu0 %v331
    %v1693 = vpop.f32.mrf.mxu0
    %v1694 = vadd.f32 %v210, %v1693
    %1695 = vmatmul.f32.gmra.mxu0 %v334
    %v1696 = vpop.f32.mrf.mxu0
    %v1697 = vadd.f32 %v210, %v1696
    %1698 = vmatmul.f32.gmra.mxu0 %v337
    %v1699 = vpop.f32.mrf.mxu0
    %v1700 = vadd.f32 %v210, %v1699
    %1701 = vmatmul.f32.gmra.mxu0 %v340
    %v1702 = vpop.f32.mrf.mxu0
    %v1703 = vadd.f32 %v210, %v1702
    %1704 = vmatmul.f32.gmra.mxu0 %v343
    %v1705 = vpop.f32.mrf.mxu0
    %v1706 = vadd.f32 %v210, %v1705
    %1707 = vmatmul.f32.gmra.mxu0 %v346
    %v1708 = vpop.f32.mrf.mxu0
    %v1709 = vadd.f32 %v210, %v1708
    %1710 = vmatmul.f32.gmra.mxu0 %v349
    %v1711 = vpop.f32.mrf.mxu0
    %v1712 = vadd.f32 %v210, %v1711
    %1713 = vmatmul.f32.gmra.mxu0 %v352
    %v1714 = vpop.f32.mrf.mxu0
    %v1715 = vadd.f32 %v210, %v1714
    %1716 = vmatmul.f32.gmra.mxu0 %v355
    %v1717 = vpop.f32.mrf.mxu0
    %v1718 = vadd.f32 %v210, %v1717
    %1719 = vmatmul.f32.gmra.mxu0 %v358
    %v1720 = vpop.f32.mrf.mxu0
    %v1721 = vadd.f32 %v210, %v1720
    %1722 = vmatmul.f32.gmra.mxu0 %v361
    %v1723 = vpop.f32.mrf.mxu0
    %v1724 = vadd.f32 %v210, %v1723
    %1725 = vmatmul.f32.gmra.mxu0 %v364
    %v1726 = vpop.f32.mrf.mxu0
    %v1727 = vadd.f32 %v210, %v1726
    %1728 = vmatmul.f32.gmra.mxu0 %v367
    %v1729 = vpop.f32.mrf.mxu0
    %v1730 = vadd.f32 %v210, %v1729
    %1731 = vmatmul.f32.gmra.mxu0 %v370
    %v1732 = vpop.f32.mrf.mxu0
    %v1733 = vadd.f32 %v210, %v1732
    %1734 = vmatmul.f32.gmra.mxu0 %v373
    %v1735 = vpop.f32.mrf.mxu0
    %v1736 = vadd.f32 %v210, %v1735
    %1737 = vmatmul.f32.gmra.mxu0 %v376
    %v1738 = vpop.f32.mrf.mxu0
    %v1739 = vadd.f32 %v210, %v1738
    %1740 = vmatmul.f32.gmra.mxu0 %v379
    %v1741 = vpop.f32.mrf.mxu0
    %v1742 = vadd.f32 %v210, %v1741
    %1743 = vmatmul.f32.gmra.mxu0 %v382
    %v1744 = vpop.f32.mrf.mxu0
    %v1745 = vadd.f32 %v210, %v1744
    %1746 = vmatmul.f32.gmra.mxu0 %v385
    %v1747 = vpop.f32.mrf.mxu0
    %v1748 = vadd.f32 %v210, %v1747
    %1749 = vmatmul.f32.gmra.mxu0 %v388
    %v1750 = vpop.f32.mrf.mxu0
    %v1751 = vadd.f32 %v210, %v1750
    %1752 = vmatmul.f32.gmra.mxu0 %v391
    %v1753 = vpop.f32.mrf.mxu0
    %v1754 = vadd.f32 %v210, %v1753
    %1755 = vmatmul.f32.gmra.mxu0 %v394
    %v1756 = vpop.f32.mrf.mxu0
    %v1757 = vadd.f32 %v210, %v1756
    %1758 = vmatmul.f32.gmra.mxu0 %v397
    %v1759 = vpop.f32.mrf.mxu0
    %v1760 = vadd.f32 %v210, %v1759
    %1761 = vmatmul.f32.gmra.mxu0 %v400
    %v1762 = vpop.f32.mrf.mxu0
    %v1763 = vadd.f32 %v210, %v1762
    %1764 = vmatmul.f32.gmra.mxu0 %v403
    %v1765 = vpop.f32.mrf.mxu0
    %v1766 = vadd.f32 %v210, %v1765
    %1767 = vmatmul.f32.gmra.mxu0 %v406
    %v1768 = vpop.f32.mrf.mxu0
    %v1769 = vadd.f32 %v210, %v1768
    %1770 = vmatmul.f32.gmra.mxu0 %v409
    %v1771 = vpop.f32.mrf.mxu0
    %v1772 = vadd.f32 %v210, %v1771
    %1773 = vmatmul.f32.gmra.mxu0 %v412
    %v1774 = vpop.f32.mrf.mxu0
    %v1775 = vadd.f32 %v210, %v1774
    %1776 = vmatmul.f32.gmra.mxu0 %v415
    %v1777 = vpop.f32.mrf.mxu0
    %v1778 = vadd.f32 %v210, %v1777
    %1779 = vmatmul.f32.gmra.mxu0 %v418
    %v1780 = vpop.f32.mrf.mxu0
    %v1781 = vadd.f32 %v210, %v1780
    %1782 = vmatmul.f32.gmra.mxu0 %v421
    %v1783 = vpop.f32.mrf.mxu0
    %v1784 = vadd.f32 %v210, %v1783
    %1785 = vmatmul.f32.gmra.mxu0 %v424
    %v1786 = vpop.f32.mrf.mxu0
    %v1787 = vadd.f32 %v210, %v1786
    %1788 = vmatmul.f32.gmra.mxu0 %v427
    %v1789 = vpop.f32.mrf.mxu0
    %v1790 = vadd.f32 %v210, %v1789
    %1791 = vmatmul.f32.gmra.mxu0 %v430
    %v1792 = vpop.f32.mrf.mxu0
    %v1793 = vadd.f32 %v210, %v1792
    %1794 = vmatmul.f32.gmra.mxu0 %v433
    %v1795 = vpop.f32.mrf.mxu0
    %v1796 = vadd.f32 %v210, %v1795
    %1797 = vmatmul.f32.gmra.mxu0 %v436
    %v1798 = vpop.f32.mrf.mxu0
    %v1799 = vadd.f32 %v210, %v1798
    %1800 = vmatmul.f32.gmra.mxu0 %v439
    %v1801 = vpop.f32.mrf.mxu0
    %v1802 = vadd.f32 %v210, %v1801
    %1803 = vmatmul.f32.gmra.mxu0 %v442
    %v1804 = vpop.f32.mrf.mxu0
    %v1805 = vadd.f32 %v210, %v1804
    %1806 = vmatmul.f32.gmra.mxu0 %v445
    %v1807 = vpop.f32.mrf.mxu0
    %v1808 = vadd.f32 %v210, %v1807
    %1809 = vmatmul.f32.gmra.mxu0 %v448
    %v1810 = vpop.f32.mrf.mxu0
    %v1811 = vadd.f32 %v210, %v1810
    %1812 = vmatmul.f32.gmra.mxu0 %v451
    %v1813 = vpop.f32.mrf.mxu0
    %v1814 = vadd.f32 %v210, %v1813
    %1815 = vmatmul.f32.gmra.mxu0 %v454
    %v1816 = vpop.f32.mrf.mxu0
    %v1817 = vadd.f32 %v210, %v1816
    %1818 = vmatmul.f32.gmra.mxu0 %v457
    %v1819 = vpop.f32.mrf.mxu0
    %v1820 = vadd.f32 %v210, %v1819
    %1821 = vmatmul.f32.gmra.mxu0 %v460
    %v1822 = vpop.f32.mrf.mxu0
    %v1823 = vadd.f32 %v210, %v1822
    %1824 = vmatmul.f32.gmra.mxu0 %v463
    %v1825 = vpop.f32.mrf.mxu0
    %v1826 = vadd.f32 %v210, %v1825
    %1827 = vmatmul.f32.gmra.mxu0 %v466
    %v1828 = vpop.f32.mrf.mxu0
    %v1829 = vadd.f32 %v210, %v1828
    %1830 = vmatmul.f32.gmra.mxu0 %v469
    %v1831 = vpop.f32.mrf.mxu0
    %v1832 = vadd.f32 %v210, %v1831
    %1833 = vmatmul.f32.gmra.mxu0 %v472
    %v1834 = vpop.f32.mrf.mxu0
    %v1835 = vadd.f32 %v210, %v1834
    %1836 = vmatmul.f32.gmra.mxu0 %v475
    %v1837 = vpop.f32.mrf.mxu0
    %v1838 = vadd.f32 %v210, %v1837
    %1839 = vmatmul.f32.gmra.mxu0 %v478
    %v1840 = vpop.f32.mrf.mxu0
    %v1841 = vadd.f32 %v210, %v1840
    %1842 = vmatmul.f32.gmra.mxu0 %v481
    %v1843 = vpop.f32.mrf.mxu0
    %v1844 = vadd.f32 %v210, %v1843
    %1845 = vmatmul.f32.gmra.mxu0 %v484
    %v1846 = vpop.f32.mrf.mxu0
    %v1847 = vadd.f32 %v210, %v1846
    %1848 = vmatmul.f32.gmra.mxu0 %v487
    %v1849 = vpop.f32.mrf.mxu0
    %v1850 = vadd.f32 %v210, %v1849
    %1851 = vmatmul.f32.gmra.mxu0 %v490
    %v1852 = vpop.f32.mrf.mxu0
    %v1853 = vadd.f32 %v210, %v1852
    %1854 = vmatmul.f32.gmra.mxu0 %v493
    %v1855 = vpop.f32.mrf.mxu0
    %v1856 = vadd.f32 %v210, %v1855
    %1857 = vmatmul.f32.gmra.mxu0 %v496
    %v1858 = vpop.f32.mrf.mxu0
    %v1859 = vadd.f32 %v210, %v1858
    %1860 = vmatmul.f32.gmra.mxu0 %v499
    %v1861 = vpop.f32.mrf.mxu0
    %v1862 = vadd.f32 %v210, %v1861
    %1863 = vmatmul.f32.gmra.mxu0 %v502
    %v1864 = vpop.f32.mrf.mxu0
    %v1865 = vadd.f32 %v210, %v1864
    %1866 = vmatmul.f32.gmra.mxu0 %v505
    %v1867 = vpop.f32.mrf.mxu0
    %v1868 = vadd.f32 %v210, %v1867
    %1869 = vmatmul.f32.gmra.mxu0 %v508
    %v1870 = vpop.f32.mrf.mxu0
    %v1871 = vadd.f32 %v210, %v1870
    %1872 = vmatmul.f32.gmra.mxu0 %v511
    %v1873 = vpop.f32.mrf.mxu0
    %v1874 = vadd.f32 %v210, %v1873
    %1875 = vmatmul.f32.gmra.mxu0 %v514
    %v1876 = vpop.f32.mrf.mxu0
    %v1877 = vadd.f32 %v210, %v1876
    %1878 = vmatmul.f32.gmra.mxu0 %v517
    %v1879 = vpop.f32.mrf.mxu0
    %v1880 = vadd.f32 %v210, %v1879
    %1881 = vmatmul.f32.gmra.mxu0 %v520
    %v1882 = vpop.f32.mrf.mxu0
    %v1883 = vadd.f32 %v210, %v1882
    %1884 = vmatmul.f32.gmra.mxu0 %v523
    %v1885 = vpop.f32.mrf.mxu0
    %v1886 = vadd.f32 %v210, %v1885
    %1887 = vmatmul.f32.gmra.mxu0 %v526
    %v1888 = vpop.f32.mrf.mxu0
    %v1889 = vadd.f32 %v210, %v1888
    %1890 = vmatmul.f32.gmra.mxu0 %v529
    %v1891 = vpop.f32.mrf.mxu0
    %v1892 = vadd.f32 %v210, %v1891
    %1893 = vmatmul.f32.gmra.mxu0 %v532
    %v1894 = vpop.f32.mrf.mxu0
    %v1895 = vadd.f32 %v210, %v1894
    %1896 = vmatmul.f32.gmra.mxu0 %v535
    %v1897 = vpop.f32.mrf.mxu0
    %v1898 = vadd.f32 %v210, %v1897
    %1899 = vmatmul.f32.gmra.mxu0 %v538
    %v1900 = vpop.f32.mrf.mxu0
    %v1901 = vadd.f32 %v210, %v1900
    %1902 = vmatmul.f32.gmra.mxu0 %v541
    %v1903 = vpop.f32.mrf.mxu0
    %v1904 = vadd.f32 %v210, %v1903
    %1905 = vmatmul.f32.gmra.mxu0 %v544
    %v1906 = vpop.f32.mrf.mxu0
    %v1907 = vadd.f32 %v210, %v1906
    %1908 = vmatmul.f32.gmra.mxu0 %v547
    %v1909 = vpop.f32.mrf.mxu0
    %v1910 = vadd.f32 %v210, %v1909
    %1911 = vmatmul.f32.gmra.mxu0 %v550
    %v1912 = vpop.f32.mrf.mxu0
    %v1913 = vadd.f32 %v210, %v1912
    %1914 = vmatmul.f32.gmra.mxu0 %v553
    %v1915 = vpop.f32.mrf.mxu0
    %v1916 = vadd.f32 %v210, %v1915
    %1917 = vmatmul.f32.gmra.mxu0 %v556
    %v1918 = vpop.f32.mrf.mxu0
    %v1919 = vadd.f32 %v210, %v1918
    %1920 = vmatmul.f32.gmra.mxu0 %v559
    %v1921 = vpop.f32.mrf.mxu0
    %v1922 = vadd.f32 %v210, %v1921
    %1923 = vmatmul.f32.gmra.mxu0 %v562
    %v1924 = vpop.f32.mrf.mxu0
    %v1925 = vadd.f32 %v210, %v1924
    %1926 = vmatmul.f32.gmra.mxu0 %v565
    %v1927 = vpop.f32.mrf.mxu0
    %v1928 = vadd.f32 %v210, %v1927
    %1929 = vmatmul.f32.gmra.mxu0 %v568
    %v1930 = vpop.f32.mrf.mxu0
    %v1931 = vadd.f32 %v210, %v1930
    %1932 = vmatmul.f32.gmra.mxu0 %v571
    %v1933 = vpop.f32.mrf.mxu0
    %v1934 = vadd.f32 %v210, %v1933
    %1935 = vmatmul.f32.gmra.mxu0 %v574
    %v1936 = vpop.f32.mrf.mxu0
    %v1937 = vadd.f32 %v210, %v1936
    %1938 = vmatmul.f32.gmra.mxu0 %v577
    %v1939 = vpop.f32.mrf.mxu0
    %v1940 = vadd.f32 %v210, %v1939
    %1941 = vmatmul.f32.gmra.mxu0 %v580
    %v1942 = vpop.f32.mrf.mxu0
    %v1943 = vadd.f32 %v210, %v1942
    %1944 = vmatmul.f32.gmra.mxu0 %v583
    %v1945 = vpop.f32.mrf.mxu0
    %v1946 = vadd.f32 %v210, %v1945
    %1947 = vmatmul.f32.gmra.mxu0 %v586
    %v1948 = vpop.f32.mrf.mxu0
    %v1949 = vadd.f32 %v210, %v1948
    %1950 = vmatmul.f32.gmra.mxu0 %v589
    %v1951 = vpop.f32.mrf.mxu0
    %v1952 = vadd.f32 %v210, %v1951
    %1953 = vmatmul.f32.gmra.mxu0 %v592
    %v1954 = vpop.f32.mrf.mxu0
    %v1955 = vadd.f32 %v210, %v1954
    %1956 = vmatmul.f32.gmra.mxu0 %v595
    %v1957 = vpop.f32.mrf.mxu0
    %v1958 = vadd.f32 %v210, %v1957
    %1959 = vmatmul.f32.gmra.mxu0 %v598
    %v1960 = vpop.f32.mrf.mxu0
    %v1961 = vadd.f32 %v210, %v1960
    %1962 = vmatmul.f32.gmra.mxu0 %v601
    %v1963 = vpop.f32.mrf.mxu0
    %v1964 = vadd.f32 %v210, %v1963
    %1965 = vmatmul.f32.gmra.mxu0 %v604
    %v1966 = vpop.f32.mrf.mxu0
    %v1967 = vadd.f32 %v210, %v1966
    %1968 = vmatmul.f32.gmra.mxu0 %v607
    %v1969 = vpop.f32.mrf.mxu0
    %v1970 = vadd.f32 %v210, %v1969
    %1971 = vmatmul.f32.gmra.mxu0 %v610
    %v1972 = vpop.f32.mrf.mxu0
    %v1973 = vadd.f32 %v210, %v1972
    %1974 = vmatmul.f32.gmra.mxu0 %v613
    %v1975 = vpop.f32.mrf.mxu0
    %v1976 = vadd.f32 %v210, %v1975
    %1977 = vmatmul.f32.gmra.mxu0 %v616
    %v1978 = vpop.f32.mrf.mxu0
    %v1979 = vadd.f32 %v210, %v1978
    %1980 = vmatmul.f32.gmra.mxu0 %v619
    %v1981 = vpop.f32.mrf.mxu0
    %v1982 = vadd.f32 %v210, %v1981
    %1983 = vmatmul.f32.gmra.mxu0 %v622
    %v1984 = vpop.f32.mrf.mxu0
    %v1985 = vadd.f32 %v210, %v1984
    %1986 = vmatmul.f32.gmra.mxu0 %v625
    %v1987 = vpop.f32.mrf.mxu0
    %v1988 = vadd.f32 %v210, %v1987
    %1989 = vmatmul.f32.gmra.mxu0 %v628
    %v1990 = vpop.f32.mrf.mxu0
    %v1991 = vadd.f32 %v210, %v1990
    %1992 = vmatmul.f32.gmra.mxu0 %v631
    %v1993 = vpop.f32.mrf.mxu0
    %v1994 = vadd.f32 %v210, %v1993
    %1995 = vmatmul.f32.gmra.mxu0 %v634
    %v1996 = vpop.f32.mrf.mxu0
    %v1997 = vadd.f32 %v210, %v1996
    %1998 = vmatmul.f32.gmra.mxu0 %v637
    %v1999 = vpop.f32.mrf.mxu0
    %v2000 = vadd.f32 %v210, %v1999
    %2001 = vmatmul.f32.gmra.mxu0 %v640
    %v2002 = vpop.f32.mrf.mxu0
    %v2003 = vadd.f32 %v210, %v2002
    %2004 = vmatmul.f32.gmra.mxu0 %v643
    %v2005 = vpop.f32.mrf.mxu0
    %v2006 = vadd.f32 %v210, %v2005
    %2007 = vmatmul.f32.gmra.mxu0 %v646
    %v2008 = vpop.f32.mrf.mxu0
    %v2009 = vadd.f32 %v210, %v2008
    %2010 = vmatmul.f32.gmra.mxu0 %v649
    %v2011 = vpop.f32.mrf.mxu0
    %v2012 = vadd.f32 %v210, %v2011
    %2013 = vdwg.mxu0
    %2014 = vmatpush.msra.mxu0 0.0
    %2015 = vmatpush.msra.mxu0 0.0
    %2016 = vmatpush.msra.mxu0 0.0
    %2017 = vmatpush.msra.mxu0 0.0
    %2018 = vmatpush.msra.mxu0 0.0
    %2019 = vmatpush.msra.mxu0 0.0
    %2020 = vmatpush.msra.mxu0 0.0
    %2021 = vmatpush.msra.mxu0 0.0
    %2022 = vmatpush.msra.mxu0 0.0
    %2023 = vmatpush.msra.mxu0 %v662
    %2024 = vmatpush.msra.mxu0 %v199
    %2025 = vmatpush.msra.mxu0 %v194
    %2026 = vmatpush.msra.mxu0 %v189
    %2027 = vmatpush.msra.mxu0 %v184
    %2028 = vmatpush.msra.mxu0 %v179
    %2029 = vmatpush.msra.mxu0 %v174
    %2030 = vmatmul.f32.gmra.mxu0 %v220
    %v2031 = vpop.f32.mrf.mxu0
    %v2032 = vadd.f32 %v211, %v2031
    %2033 = vmatmul.f32.gmra.mxu0 %v223
    %v2034 = vpop.f32.mrf.mxu0
    %v2035 = vadd.f32 %v211, %v2034
    %2036 = vmatmul.f32.gmra.mxu0 %v226
    %v2037 = vpop.f32.mrf.mxu0
    %v2038 = vadd.f32 %v211, %v2037
    %2039 = vmatmul.f32.gmra.mxu0 %v229
    %v2040 = vpop.f32.mrf.mxu0
    %v2041 = vadd.f32 %v211, %v2040
    %2042 = vmatmul.f32.gmra.mxu0 %v232
    %v2043 = vpop.f32.mrf.mxu0
    %v2044 = vadd.f32 %v211, %v2043
    %2045 = vmatmul.f32.gmra.mxu0 %v235
    %v2046 = vpop.f32.mrf.mxu0
    %v2047 = vadd.f32 %v211, %v2046
    %2048 = vmatmul.f32.gmra.mxu0 %v238
    %v2049 = vpop.f32.mrf.mxu0
    %v2050 = vadd.f32 %v211, %v2049
    %2051 = vmatmul.f32.gmra.mxu0 %v241
    %v2052 = vpop.f32.mrf.mxu0
    %v2053 = vadd.f32 %v211, %v2052
    %2054 = vmatmul.f32.gmra.mxu0 %v244
    %v2055 = vpop.f32.mrf.mxu0
    %v2056 = vadd.f32 %v211, %v2055
    %2057 = vmatmul.f32.gmra.mxu0 %v247
    %v2058 = vpop.f32.mrf.mxu0
    %v2059 = vadd.f32 %v211, %v2058
    %2060 = vmatmul.f32.gmra.mxu0 %v250
    %v2061 = vpop.f32.mrf.mxu0
    %v2062 = vadd.f32 %v211, %v2061
    %2063 = vmatmul.f32.gmra.mxu0 %v253
    %v2064 = vpop.f32.mrf.mxu0
    %v2065 = vadd.f32 %v211, %v2064
    %2066 = vmatmul.f32.gmra.mxu0 %v256
    %v2067 = vpop.f32.mrf.mxu0
    %v2068 = vadd.f32 %v211, %v2067
    %2069 = vmatmul.f32.gmra.mxu0 %v259
    %v2070 = vpop.f32.mrf.mxu0
    %v2071 = vadd.f32 %v211, %v2070
    %2072 = vmatmul.f32.gmra.mxu0 %v262
    %v2073 = vpop.f32.mrf.mxu0
    %v2074 = vadd.f32 %v211, %v2073
    %2075 = vmatmul.f32.gmra.mxu0 %v265
    %v2076 = vpop.f32.mrf.mxu0
    %v2077 = vadd.f32 %v211, %v2076
    %2078 = vmatmul.f32.gmra.mxu0 %v268
    %v2079 = vpop.f32.mrf.mxu0
    %v2080 = vadd.f32 %v211, %v2079
    %2081 = vmatmul.f32.gmra.mxu0 %v271
    %v2082 = vpop.f32.mrf.mxu0
    %v2083 = vadd.f32 %v211, %v2082
    %2084 = vmatmul.f32.gmra.mxu0 %v274
    %v2085 = vpop.f32.mrf.mxu0
    %v2086 = vadd.f32 %v211, %v2085
    %2087 = vmatmul.f32.gmra.mxu0 %v277
    %v2088 = vpop.f32.mrf.mxu0
    %v2089 = vadd.f32 %v211, %v2088
    %2090 = vmatmul.f32.gmra.mxu0 %v280
    %v2091 = vpop.f32.mrf.mxu0
    %v2092 = vadd.f32 %v211, %v2091
    %2093 = vmatmul.f32.gmra.mxu0 %v283
    %v2094 = vpop.f32.mrf.mxu0
    %v2095 = vadd.f32 %v211, %v2094
    %2096 = vmatmul.f32.gmra.mxu0 %v286
    %v2097 = vpop.f32.mrf.mxu0
    %v2098 = vadd.f32 %v211, %v2097
    %2099 = vmatmul.f32.gmra.mxu0 %v289
    %v2100 = vpop.f32.mrf.mxu0
    %v2101 = vadd.f32 %v211, %v2100
    %2102 = vmatmul.f32.gmra.mxu0 %v292
    %v2103 = vpop.f32.mrf.mxu0
    %v2104 = vadd.f32 %v211, %v2103
    %2105 = vmatmul.f32.gmra.mxu0 %v295
    %v2106 = vpop.f32.mrf.mxu0
    %v2107 = vadd.f32 %v211, %v2106
    %2108 = vmatmul.f32.gmra.mxu0 %v298
    %v2109 = vpop.f32.mrf.mxu0
    %v2110 = vadd.f32 %v211, %v2109
    %2111 = vmatmul.f32.gmra.mxu0 %v301
    %v2112 = vpop.f32.mrf.mxu0
    %v2113 = vadd.f32 %v211, %v2112
    %2114 = vmatmul.f32.gmra.mxu0 %v304
    %v2115 = vpop.f32.mrf.mxu0
    %v2116 = vadd.f32 %v211, %v2115
    %2117 = vmatmul.f32.gmra.mxu0 %v307
    %v2118 = vpop.f32.mrf.mxu0
    %v2119 = vadd.f32 %v211, %v2118
    %2120 = vmatmul.f32.gmra.mxu0 %v310
    %v2121 = vpop.f32.mrf.mxu0
    %v2122 = vadd.f32 %v211, %v2121
    %2123 = vmatmul.f32.gmra.mxu0 %v313
    %v2124 = vpop.f32.mrf.mxu0
    %v2125 = vadd.f32 %v211, %v2124
    %2126 = vmatmul.f32.gmra.mxu0 %v316
    %v2127 = vpop.f32.mrf.mxu0
    %v2128 = vadd.f32 %v211, %v2127
    %2129 = vmatmul.f32.gmra.mxu0 %v319
    %v2130 = vpop.f32.mrf.mxu0
    %v2131 = vadd.f32 %v211, %v2130
    %2132 = vmatmul.f32.gmra.mxu0 %v322
    %v2133 = vpop.f32.mrf.mxu0
    %v2134 = vadd.f32 %v211, %v2133
    %2135 = vmatmul.f32.gmra.mxu0 %v325
    %v2136 = vpop.f32.mrf.mxu0
    %v2137 = vadd.f32 %v211, %v2136
    %2138 = vmatmul.f32.gmra.mxu0 %v328
    %v2139 = vpop.f32.mrf.mxu0
    %v2140 = vadd.f32 %v211, %v2139
    %2141 = vmatmul.f32.gmra.mxu0 %v331
    %v2142 = vpop.f32.mrf.mxu0
    %v2143 = vadd.f32 %v211, %v2142
    %2144 = vmatmul.f32.gmra.mxu0 %v334
    %v2145 = vpop.f32.mrf.mxu0
    %v2146 = vadd.f32 %v211, %v2145
    %2147 = vmatmul.f32.gmra.mxu0 %v337
    %v2148 = vpop.f32.mrf.mxu0
    %v2149 = vadd.f32 %v211, %v2148
    %2150 = vmatmul.f32.gmra.mxu0 %v340
    %v2151 = vpop.f32.mrf.mxu0
    %v2152 = vadd.f32 %v211, %v2151
    %2153 = vmatmul.f32.gmra.mxu0 %v343
    %v2154 = vpop.f32.mrf.mxu0
    %v2155 = vadd.f32 %v211, %v2154
    %2156 = vmatmul.f32.gmra.mxu0 %v346
    %v2157 = vpop.f32.mrf.mxu0
    %v2158 = vadd.f32 %v211, %v2157
    %2159 = vmatmul.f32.gmra.mxu0 %v349
    %v2160 = vpop.f32.mrf.mxu0
    %v2161 = vadd.f32 %v211, %v2160
    %2162 = vmatmul.f32.gmra.mxu0 %v352
    %v2163 = vpop.f32.mrf.mxu0
    %v2164 = vadd.f32 %v211, %v2163
    %2165 = vmatmul.f32.gmra.mxu0 %v355
    %v2166 = vpop.f32.mrf.mxu0
    %v2167 = vadd.f32 %v211, %v2166
    %2168 = vmatmul.f32.gmra.mxu0 %v358
    %v2169 = vpop.f32.mrf.mxu0
    %v2170 = vadd.f32 %v211, %v2169
    %2171 = vmatmul.f32.gmra.mxu0 %v361
    %v2172 = vpop.f32.mrf.mxu0
    %v2173 = vadd.f32 %v211, %v2172
    %2174 = vmatmul.f32.gmra.mxu0 %v364
    %v2175 = vpop.f32.mrf.mxu0
    %v2176 = vadd.f32 %v211, %v2175
    %2177 = vmatmul.f32.gmra.mxu0 %v367
    %v2178 = vpop.f32.mrf.mxu0
    %v2179 = vadd.f32 %v211, %v2178
    %2180 = vmatmul.f32.gmra.mxu0 %v370
    %v2181 = vpop.f32.mrf.mxu0
    %v2182 = vadd.f32 %v211, %v2181
    %2183 = vmatmul.f32.gmra.mxu0 %v373
    %v2184 = vpop.f32.mrf.mxu0
    %v2185 = vadd.f32 %v211, %v2184
    %2186 = vmatmul.f32.gmra.mxu0 %v376
    %v2187 = vpop.f32.mrf.mxu0
    %v2188 = vadd.f32 %v211, %v2187
    %2189 = vmatmul.f32.gmra.mxu0 %v379
    %v2190 = vpop.f32.mrf.mxu0
    %v2191 = vadd.f32 %v211, %v2190
    %2192 = vmatmul.f32.gmra.mxu0 %v382
    %v2193 = vpop.f32.mrf.mxu0
    %v2194 = vadd.f32 %v211, %v2193
    %2195 = vmatmul.f32.gmra.mxu0 %v385
    %v2196 = vpop.f32.mrf.mxu0
    %v2197 = vadd.f32 %v211, %v2196
    %2198 = vmatmul.f32.gmra.mxu0 %v388
    %v2199 = vpop.f32.mrf.mxu0
    %v2200 = vadd.f32 %v211, %v2199
    %2201 = vmatmul.f32.gmra.mxu0 %v391
    %v2202 = vpop.f32.mrf.mxu0
    %v2203 = vadd.f32 %v211, %v2202
    %2204 = vmatmul.f32.gmra.mxu0 %v394
    %v2205 = vpop.f32.mrf.mxu0
    %v2206 = vadd.f32 %v211, %v2205
    %2207 = vmatmul.f32.gmra.mxu0 %v397
    %v2208 = vpop.f32.mrf.mxu0
    %v2209 = vadd.f32 %v211, %v2208
    %2210 = vmatmul.f32.gmra.mxu0 %v400
    %v2211 = vpop.f32.mrf.mxu0
    %v2212 = vadd.f32 %v211, %v2211
    %2213 = vmatmul.f32.gmra.mxu0 %v403
    %v2214 = vpop.f32.mrf.mxu0
    %v2215 = vadd.f32 %v211, %v2214
    %2216 = vmatmul.f32.gmra.mxu0 %v406
    %v2217 = vpop.f32.mrf.mxu0
    %v2218 = vadd.f32 %v211, %v2217
    %2219 = vmatmul.f32.gmra.mxu0 %v409
    %v2220 = vpop.f32.mrf.mxu0
    %v2221 = vadd.f32 %v211, %v2220
    %2222 = vmatmul.f32.gmra.mxu0 %v412
    %v2223 = vpop.f32.mrf.mxu0
    %v2224 = vadd.f32 %v211, %v2223
    %2225 = vmatmul.f32.gmra.mxu0 %v415
    %v2226 = vpop.f32.mrf.mxu0
    %v2227 = vadd.f32 %v211, %v2226
    %2228 = vmatmul.f32.gmra.mxu0 %v418
    %v2229 = vpop.f32.mrf.mxu0
    %v2230 = vadd.f32 %v211, %v2229
    %2231 = vmatmul.f32.gmra.mxu0 %v421
    %v2232 = vpop.f32.mrf.mxu0
    %v2233 = vadd.f32 %v211, %v2232
    %2234 = vmatmul.f32.gmra.mxu0 %v424
    %v2235 = vpop.f32.mrf.mxu0
    %v2236 = vadd.f32 %v211, %v2235
    %2237 = vmatmul.f32.gmra.mxu0 %v427
    %v2238 = vpop.f32.mrf.mxu0
    %v2239 = vadd.f32 %v211, %v2238
    %2240 = vmatmul.f32.gmra.mxu0 %v430
    %v2241 = vpop.f32.mrf.mxu0
    %v2242 = vadd.f32 %v211, %v2241
    %2243 = vmatmul.f32.gmra.mxu0 %v433
    %v2244 = vpop.f32.mrf.mxu0
    %v2245 = vadd.f32 %v211, %v2244
    %2246 = vmatmul.f32.gmra.mxu0 %v436
    %v2247 = vpop.f32.mrf.mxu0
    %v2248 = vadd.f32 %v211, %v2247
    %2249 = vmatmul.f32.gmra.mxu0 %v439
    %v2250 = vpop.f32.mrf.mxu0
    %v2251 = vadd.f32 %v211, %v2250
    %2252 = vmatmul.f32.gmra.mxu0 %v442
    %v2253 = vpop.f32.mrf.mxu0
    %v2254 = vadd.f32 %v211, %v2253
    %2255 = vmatmul.f32.gmra.mxu0 %v445
    %v2256 = vpop.f32.mrf.mxu0
    %v2257 = vadd.f32 %v211, %v2256
    %2258 = vmatmul.f32.gmra.mxu0 %v448
    %v2259 = vpop.f32.mrf.mxu0
    %v2260 = vadd.f32 %v211, %v2259
    %2261 = vmatmul.f32.gmra.mxu0 %v451
    %v2262 = vpop.f32.mrf.mxu0
    %v2263 = vadd.f32 %v211, %v2262
    %2264 = vmatmul.f32.gmra.mxu0 %v454
    %v2265 = vpop.f32.mrf.mxu0
    %v2266 = vadd.f32 %v211, %v2265
    %2267 = vmatmul.f32.gmra.mxu0 %v457
    %v2268 = vpop.f32.mrf.mxu0
    %v2269 = vadd.f32 %v211, %v2268
    %2270 = vmatmul.f32.gmra.mxu0 %v460
    %v2271 = vpop.f32.mrf.mxu0
    %v2272 = vadd.f32 %v211, %v2271
    %2273 = vmatmul.f32.gmra.mxu0 %v463
    %v2274 = vpop.f32.mrf.mxu0
    %v2275 = vadd.f32 %v211, %v2274
    %2276 = vmatmul.f32.gmra.mxu0 %v466
    %v2277 = vpop.f32.mrf.mxu0
    %v2278 = vadd.f32 %v211, %v2277
    %2279 = vmatmul.f32.gmra.mxu0 %v469
    %v2280 = vpop.f32.mrf.mxu0
    %v2281 = vadd.f32 %v211, %v2280
    %2282 = vmatmul.f32.gmra.mxu0 %v472
    %v2283 = vpop.f32.mrf.mxu0
    %v2284 = vadd.f32 %v211, %v2283
    %2285 = vmatmul.f32.gmra.mxu0 %v475
    %v2286 = vpop.f32.mrf.mxu0
    %v2287 = vadd.f32 %v211, %v2286
    %2288 = vmatmul.f32.gmra.mxu0 %v478
    %v2289 = vpop.f32.mrf.mxu0
    %v2290 = vadd.f32 %v211, %v2289
    %2291 = vmatmul.f32.gmra.mxu0 %v481
    %v2292 = vpop.f32.mrf.mxu0
    %v2293 = vadd.f32 %v211, %v2292
    %2294 = vmatmul.f32.gmra.mxu0 %v484
    %v2295 = vpop.f32.mrf.mxu0
    %v2296 = vadd.f32 %v211, %v2295
    %2297 = vmatmul.f32.gmra.mxu0 %v487
    %v2298 = vpop.f32.mrf.mxu0
    %v2299 = vadd.f32 %v211, %v2298
    %2300 = vmatmul.f32.gmra.mxu0 %v490
    %v2301 = vpop.f32.mrf.mxu0
    %v2302 = vadd.f32 %v211, %v2301
    %2303 = vmatmul.f32.gmra.mxu0 %v493
    %v2304 = vpop.f32.mrf.mxu0
    %v2305 = vadd.f32 %v211, %v2304
    %2306 = vmatmul.f32.gmra.mxu0 %v496
    %v2307 = vpop.f32.mrf.mxu0
    %v2308 = vadd.f32 %v211, %v2307
    %2309 = vmatmul.f32.gmra.mxu0 %v499
    %v2310 = vpop.f32.mrf.mxu0
    %v2311 = vadd.f32 %v211, %v2310
    %2312 = vmatmul.f32.gmra.mxu0 %v502
    %v2313 = vpop.f32.mrf.mxu0
    %v2314 = vadd.f32 %v211, %v2313
    %2315 = vmatmul.f32.gmra.mxu0 %v505
    %v2316 = vpop.f32.mrf.mxu0
    %v2317 = vadd.f32 %v211, %v2316
    %2318 = vmatmul.f32.gmra.mxu0 %v508
    %v2319 = vpop.f32.mrf.mxu0
    %v2320 = vadd.f32 %v211, %v2319
    %2321 = vmatmul.f32.gmra.mxu0 %v511
    %v2322 = vpop.f32.mrf.mxu0
    %v2323 = vadd.f32 %v211, %v2322
    %2324 = vmatmul.f32.gmra.mxu0 %v514
    %v2325 = vpop.f32.mrf.mxu0
    %v2326 = vadd.f32 %v211, %v2325
    %2327 = vmatmul.f32.gmra.mxu0 %v517
    %v2328 = vpop.f32.mrf.mxu0
    %v2329 = vadd.f32 %v211, %v2328
    %2330 = vmatmul.f32.gmra.mxu0 %v520
    %v2331 = vpop.f32.mrf.mxu0
    %v2332 = vadd.f32 %v211, %v2331
    %2333 = vmatmul.f32.gmra.mxu0 %v523
    %v2334 = vpop.f32.mrf.mxu0
    %v2335 = vadd.f32 %v211, %v2334
    %2336 = vmatmul.f32.gmra.mxu0 %v526
    %v2337 = vpop.f32.mrf.mxu0
    %v2338 = vadd.f32 %v211, %v2337
    %2339 = vmatmul.f32.gmra.mxu0 %v529
    %v2340 = vpop.f32.mrf.mxu0
    %v2341 = vadd.f32 %v211, %v2340
    %2342 = vmatmul.f32.gmra.mxu0 %v532
    %v2343 = vpop.f32.mrf.mxu0
    %v2344 = vadd.f32 %v211, %v2343
    %2345 = vmatmul.f32.gmra.mxu0 %v535
    %v2346 = vpop.f32.mrf.mxu0
    %v2347 = vadd.f32 %v211, %v2346
    %2348 = vmatmul.f32.gmra.mxu0 %v538
    %v2349 = vpop.f32.mrf.mxu0
    %v2350 = vadd.f32 %v211, %v2349
    %2351 = vmatmul.f32.gmra.mxu0 %v541
    %v2352 = vpop.f32.mrf.mxu0
    %v2353 = vadd.f32 %v211, %v2352
    %2354 = vmatmul.f32.gmra.mxu0 %v544
    %v2355 = vpop.f32.mrf.mxu0
    %v2356 = vadd.f32 %v211, %v2355
    %2357 = vmatmul.f32.gmra.mxu0 %v547
    %v2358 = vpop.f32.mrf.mxu0
    %v2359 = vadd.f32 %v211, %v2358
    %2360 = vmatmul.f32.gmra.mxu0 %v550
    %v2361 = vpop.f32.mrf.mxu0
    %v2362 = vadd.f32 %v211, %v2361
    %2363 = vmatmul.f32.gmra.mxu0 %v553
    %v2364 = vpop.f32.mrf.mxu0
    %v2365 = vadd.f32 %v211, %v2364
    %2366 = vmatmul.f32.gmra.mxu0 %v556
    %v2367 = vpop.f32.mrf.mxu0
    %v2368 = vadd.f32 %v211, %v2367
    %2369 = vmatmul.f32.gmra.mxu0 %v559
    %v2370 = vpop.f32.mrf.mxu0
    %v2371 = vadd.f32 %v211, %v2370
    %2372 = vmatmul.f32.gmra.mxu0 %v562
    %v2373 = vpop.f32.mrf.mxu0
    %v2374 = vadd.f32 %v211, %v2373
    %2375 = vmatmul.f32.gmra.mxu0 %v565
    %v2376 = vpop.f32.mrf.mxu0
    %v2377 = vadd.f32 %v211, %v2376
    %2378 = vmatmul.f32.gmra.mxu0 %v568
    %v2379 = vpop.f32.mrf.mxu0
    %v2380 = vadd.f32 %v211, %v2379
    %2381 = vmatmul.f32.gmra.mxu0 %v571
    %v2382 = vpop.f32.mrf.mxu0
    %v2383 = vadd.f32 %v211, %v2382
    %2384 = vmatmul.f32.gmra.mxu0 %v574
    %v2385 = vpop.f32.mrf.mxu0
    %v2386 = vadd.f32 %v211, %v2385
    %2387 = vmatmul.f32.gmra.mxu0 %v577
    %v2388 = vpop.f32.mrf.mxu0
    %v2389 = vadd.f32 %v211, %v2388
    %2390 = vmatmul.f32.gmra.mxu0 %v580
    %v2391 = vpop.f32.mrf.mxu0
    %v2392 = vadd.f32 %v211, %v2391
    %2393 = vmatmul.f32.gmra.mxu0 %v583
    %v2394 = vpop.f32.mrf.mxu0
    %v2395 = vadd.f32 %v211, %v2394
    %2396 = vmatmul.f32.gmra.mxu0 %v586
    %v2397 = vpop.f32.mrf.mxu0
    %v2398 = vadd.f32 %v211, %v2397
    %2399 = vmatmul.f32.gmra.mxu0 %v589
    %v2400 = vpop.f32.mrf.mxu0
    %v2401 = vadd.f32 %v211, %v2400
    %2402 = vmatmul.f32.gmra.mxu0 %v592
    %v2403 = vpop.f32.mrf.mxu0
    %v2404 = vadd.f32 %v211, %v2403
    %2405 = vmatmul.f32.gmra.mxu0 %v595
    %v2406 = vpop.f32.mrf.mxu0
    %v2407 = vadd.f32 %v211, %v2406
    %2408 = vmatmul.f32.gmra.mxu0 %v598
    %v2409 = vpop.f32.mrf.mxu0
    %v2410 = vadd.f32 %v211, %v2409
    %2411 = vmatmul.f32.gmra.mxu0 %v601
    %v2412 = vpop.f32.mrf.mxu0
    %v2413 = vadd.f32 %v211, %v2412
    %2414 = vmatmul.f32.gmra.mxu0 %v604
    %v2415 = vpop.f32.mrf.mxu0
    %v2416 = vadd.f32 %v211, %v2415
    %2417 = vmatmul.f32.gmra.mxu0 %v607
    %v2418 = vpop.f32.mrf.mxu0
    %v2419 = vadd.f32 %v211, %v2418
    %2420 = vmatmul.f32.gmra.mxu0 %v610
    %v2421 = vpop.f32.mrf.mxu0
    %v2422 = vadd.f32 %v211, %v2421
    %2423 = vmatmul.f32.gmra.mxu0 %v613
    %v2424 = vpop.f32.mrf.mxu0
    %v2425 = vadd.f32 %v211, %v2424
    %2426 = vmatmul.f32.gmra.mxu0 %v616
    %v2427 = vpop.f32.mrf.mxu0
    %v2428 = vadd.f32 %v211, %v2427
    %2429 = vmatmul.f32.gmra.mxu0 %v619
    %v2430 = vpop.f32.mrf.mxu0
    %v2431 = vadd.f32 %v211, %v2430
    %2432 = vmatmul.f32.gmra.mxu0 %v622
    %v2433 = vpop.f32.mrf.mxu0
    %v2434 = vadd.f32 %v211, %v2433
    %2435 = vmatmul.f32.gmra.mxu0 %v625
    %v2436 = vpop.f32.mrf.mxu0
    %v2437 = vadd.f32 %v211, %v2436
    %2438 = vmatmul.f32.gmra.mxu0 %v628
    %v2439 = vpop.f32.mrf.mxu0
    %v2440 = vadd.f32 %v211, %v2439
    %2441 = vmatmul.f32.gmra.mxu0 %v631
    %v2442 = vpop.f32.mrf.mxu0
    %v2443 = vadd.f32 %v211, %v2442
    %2444 = vmatmul.f32.gmra.mxu0 %v634
    %v2445 = vpop.f32.mrf.mxu0
    %v2446 = vadd.f32 %v211, %v2445
    %2447 = vmatmul.f32.gmra.mxu0 %v637
    %v2448 = vpop.f32.mrf.mxu0
    %v2449 = vadd.f32 %v211, %v2448
    %2450 = vmatmul.f32.gmra.mxu0 %v640
    %v2451 = vpop.f32.mrf.mxu0
    %v2452 = vadd.f32 %v211, %v2451
    %2453 = vmatmul.f32.gmra.mxu0 %v643
    %v2454 = vpop.f32.mrf.mxu0
    %v2455 = vadd.f32 %v211, %v2454
    %2456 = vmatmul.f32.gmra.mxu0 %v646
    %v2457 = vpop.f32.mrf.mxu0
    %v2458 = vadd.f32 %v211, %v2457
    %2459 = vmatmul.f32.gmra.mxu0 %v649
    %v2460 = vpop.f32.mrf.mxu0
    %v2461 = vadd.f32 %v211, %v2460
    %2462 = vdwg.mxu0
    %2463 = vmatpush.msra.mxu0 0.0
    %2464 = vmatpush.msra.mxu0 0.0
    %2465 = vmatpush.msra.mxu0 0.0
    %2466 = vmatpush.msra.mxu0 0.0
    %2467 = vmatpush.msra.mxu0 0.0
    %2468 = vmatpush.msra.mxu0 0.0
    %2469 = vmatpush.msra.mxu0 0.0
    %2470 = vmatpush.msra.mxu0 0.0
    %2471 = vmatpush.msra.mxu0 0.0
    %2472 = vmatpush.msra.mxu0 %v665
    %2473 = vmatpush.msra.mxu0 %v200
    %2474 = vmatpush.msra.mxu0 %v195
    %2475 = vmatpush.msra.mxu0 %v190
    %2476 = vmatpush.msra.mxu0 %v185
    %2477 = vmatpush.msra.mxu0 %v180
    %2478 = vmatpush.msra.mxu0 %v175
    %2479 = vmatmul.f32.gmra.mxu0 %v220
    %v2480 = vpop.f32.mrf.mxu0
    %v2481 = vadd.f32 %v212, %v2480
    %2482 = vmatmul.f32.gmra.mxu0 %v223
    %v2483 = vpop.f32.mrf.mxu0
    %v2484 = vadd.f32 %v212, %v2483
    %2485 = vmatmul.f32.gmra.mxu0 %v226
    %v2486 = vpop.f32.mrf.mxu0
    %v2487 = vadd.f32 %v212, %v2486
    %2488 = vmatmul.f32.gmra.mxu0 %v229
    %v2489 = vpop.f32.mrf.mxu0
    %v2490 = vadd.f32 %v212, %v2489
    %2491 = vmatmul.f32.gmra.mxu0 %v232
    %v2492 = vpop.f32.mrf.mxu0
    %v2493 = vadd.f32 %v212, %v2492
    %2494 = vmatmul.f32.gmra.mxu0 %v235
    %v2495 = vpop.f32.mrf.mxu0
    %v2496 = vadd.f32 %v212, %v2495
    %2497 = vmatmul.f32.gmra.mxu0 %v238
    %v2498 = vpop.f32.mrf.mxu0
    %v2499 = vadd.f32 %v212, %v2498
    %2500 = vmatmul.f32.gmra.mxu0 %v241
    %v2501 = vpop.f32.mrf.mxu0
    %v2502 = vadd.f32 %v212, %v2501
    %2503 = vmatmul.f32.gmra.mxu0 %v244
    %v2504 = vpop.f32.mrf.mxu0
    %v2505 = vadd.f32 %v212, %v2504
    %2506 = vmatmul.f32.gmra.mxu0 %v247
    %v2507 = vpop.f32.mrf.mxu0
    %v2508 = vadd.f32 %v212, %v2507
    %2509 = vmatmul.f32.gmra.mxu0 %v250
    %v2510 = vpop.f32.mrf.mxu0
    %v2511 = vadd.f32 %v212, %v2510
    %2512 = vmatmul.f32.gmra.mxu0 %v253
    %v2513 = vpop.f32.mrf.mxu0
    %v2514 = vadd.f32 %v212, %v2513
    %2515 = vmatmul.f32.gmra.mxu0 %v256
    %v2516 = vpop.f32.mrf.mxu0
    %v2517 = vadd.f32 %v212, %v2516
    %2518 = vmatmul.f32.gmra.mxu0 %v259
    %v2519 = vpop.f32.mrf.mxu0
    %v2520 = vadd.f32 %v212, %v2519
    %2521 = vmatmul.f32.gmra.mxu0 %v262
    %v2522 = vpop.f32.mrf.mxu0
    %v2523 = vadd.f32 %v212, %v2522
    %2524 = vmatmul.f32.gmra.mxu0 %v265
    %v2525 = vpop.f32.mrf.mxu0
    %v2526 = vadd.f32 %v212, %v2525
    %2527 = vmatmul.f32.gmra.mxu0 %v268
    %v2528 = vpop.f32.mrf.mxu0
    %v2529 = vadd.f32 %v212, %v2528
    %2530 = vmatmul.f32.gmra.mxu0 %v271
    %v2531 = vpop.f32.mrf.mxu0
    %v2532 = vadd.f32 %v212, %v2531
    %2533 = vmatmul.f32.gmra.mxu0 %v274
    %v2534 = vpop.f32.mrf.mxu0
    %v2535 = vadd.f32 %v212, %v2534
    %2536 = vmatmul.f32.gmra.mxu0 %v277
    %v2537 = vpop.f32.mrf.mxu0
    %v2538 = vadd.f32 %v212, %v2537
    %2539 = vmatmul.f32.gmra.mxu0 %v280
    %v2540 = vpop.f32.mrf.mxu0
    %v2541 = vadd.f32 %v212, %v2540
    %2542 = vmatmul.f32.gmra.mxu0 %v283
    %v2543 = vpop.f32.mrf.mxu0
    %v2544 = vadd.f32 %v212, %v2543
    %2545 = vmatmul.f32.gmra.mxu0 %v286
    %v2546 = vpop.f32.mrf.mxu0
    %v2547 = vadd.f32 %v212, %v2546
    %2548 = vmatmul.f32.gmra.mxu0 %v289
    %v2549 = vpop.f32.mrf.mxu0
    %v2550 = vadd.f32 %v212, %v2549
    %2551 = vmatmul.f32.gmra.mxu0 %v292
    %v2552 = vpop.f32.mrf.mxu0
    %v2553 = vadd.f32 %v212, %v2552
    %2554 = vmatmul.f32.gmra.mxu0 %v295
    %v2555 = vpop.f32.mrf.mxu0
    %v2556 = vadd.f32 %v212, %v2555
    %2557 = vmatmul.f32.gmra.mxu0 %v298
    %v2558 = vpop.f32.mrf.mxu0
    %v2559 = vadd.f32 %v212, %v2558
    %2560 = vmatmul.f32.gmra.mxu0 %v301
    %v2561 = vpop.f32.mrf.mxu0
    %v2562 = vadd.f32 %v212, %v2561
    %2563 = vmatmul.f32.gmra.mxu0 %v304
    %v2564 = vpop.f32.mrf.mxu0
    %v2565 = vadd.f32 %v212, %v2564
    %2566 = vmatmul.f32.gmra.mxu0 %v307
    %v2567 = vpop.f32.mrf.mxu0
    %v2568 = vadd.f32 %v212, %v2567
    %2569 = vmatmul.f32.gmra.mxu0 %v310
    %v2570 = vpop.f32.mrf.mxu0
    %v2571 = vadd.f32 %v212, %v2570
    %2572 = vmatmul.f32.gmra.mxu0 %v313
    %v2573 = vpop.f32.mrf.mxu0
    %v2574 = vadd.f32 %v212, %v2573
    %2575 = vmatmul.f32.gmra.mxu0 %v316
    %v2576 = vpop.f32.mrf.mxu0
    %v2577 = vadd.f32 %v212, %v2576
    %2578 = vmatmul.f32.gmra.mxu0 %v319
    %v2579 = vpop.f32.mrf.mxu0
    %v2580 = vadd.f32 %v212, %v2579
    %2581 = vmatmul.f32.gmra.mxu0 %v322
    %v2582 = vpop.f32.mrf.mxu0
    %v2583 = vadd.f32 %v212, %v2582
    %2584 = vmatmul.f32.gmra.mxu0 %v325
    %v2585 = vpop.f32.mrf.mxu0
    %v2586 = vadd.f32 %v212, %v2585
    %2587 = vmatmul.f32.gmra.mxu0 %v328
    %v2588 = vpop.f32.mrf.mxu0
    %v2589 = vadd.f32 %v212, %v2588
    %2590 = vmatmul.f32.gmra.mxu0 %v331
    %v2591 = vpop.f32.mrf.mxu0
    %v2592 = vadd.f32 %v212, %v2591
    %2593 = vmatmul.f32.gmra.mxu0 %v334
    %v2594 = vpop.f32.mrf.mxu0
    %v2595 = vadd.f32 %v212, %v2594
    %2596 = vmatmul.f32.gmra.mxu0 %v337
    %v2597 = vpop.f32.mrf.mxu0
    %v2598 = vadd.f32 %v212, %v2597
    %2599 = vmatmul.f32.gmra.mxu0 %v340
    %v2600 = vpop.f32.mrf.mxu0
    %v2601 = vadd.f32 %v212, %v2600
    %2602 = vmatmul.f32.gmra.mxu0 %v343
    %v2603 = vpop.f32.mrf.mxu0
    %v2604 = vadd.f32 %v212, %v2603
    %2605 = vmatmul.f32.gmra.mxu0 %v346
    %v2606 = vpop.f32.mrf.mxu0
    %v2607 = vadd.f32 %v212, %v2606
    %2608 = vmatmul.f32.gmra.mxu0 %v349
    %v2609 = vpop.f32.mrf.mxu0
    %v2610 = vadd.f32 %v212, %v2609
    %2611 = vmatmul.f32.gmra.mxu0 %v352
    %v2612 = vpop.f32.mrf.mxu0
    %v2613 = vadd.f32 %v212, %v2612
    %2614 = vmatmul.f32.gmra.mxu0 %v355
    %v2615 = vpop.f32.mrf.mxu0
    %v2616 = vadd.f32 %v212, %v2615
    %2617 = vmatmul.f32.gmra.mxu0 %v358
    %v2618 = vpop.f32.mrf.mxu0
    %v2619 = vadd.f32 %v212, %v2618
    %2620 = vmatmul.f32.gmra.mxu0 %v361
    %v2621 = vpop.f32.mrf.mxu0
    %v2622 = vadd.f32 %v212, %v2621
    %2623 = vmatmul.f32.gmra.mxu0 %v364
    %v2624 = vpop.f32.mrf.mxu0
    %v2625 = vadd.f32 %v212, %v2624
    %2626 = vmatmul.f32.gmra.mxu0 %v367
    %v2627 = vpop.f32.mrf.mxu0
    %v2628 = vadd.f32 %v212, %v2627
    %2629 = vmatmul.f32.gmra.mxu0 %v370
    %v2630 = vpop.f32.mrf.mxu0
    %v2631 = vadd.f32 %v212, %v2630
    %2632 = vmatmul.f32.gmra.mxu0 %v373
    %v2633 = vpop.f32.mrf.mxu0
    %v2634 = vadd.f32 %v212, %v2633
    %2635 = vmatmul.f32.gmra.mxu0 %v376
    %v2636 = vpop.f32.mrf.mxu0
    %v2637 = vadd.f32 %v212, %v2636
    %2638 = vmatmul.f32.gmra.mxu0 %v379
    %v2639 = vpop.f32.mrf.mxu0
    %v2640 = vadd.f32 %v212, %v2639
    %2641 = vmatmul.f32.gmra.mxu0 %v382
    %v2642 = vpop.f32.mrf.mxu0
    %v2643 = vadd.f32 %v212, %v2642
    %2644 = vmatmul.f32.gmra.mxu0 %v385
    %v2645 = vpop.f32.mrf.mxu0
    %v2646 = vadd.f32 %v212, %v2645
    %2647 = vmatmul.f32.gmra.mxu0 %v388
    %v2648 = vpop.f32.mrf.mxu0
    %v2649 = vadd.f32 %v212, %v2648
    %2650 = vmatmul.f32.gmra.mxu0 %v391
    %v2651 = vpop.f32.mrf.mxu0
    %v2652 = vadd.f32 %v212, %v2651
    %2653 = vmatmul.f32.gmra.mxu0 %v394
    %v2654 = vpop.f32.mrf.mxu0
    %v2655 = vadd.f32 %v212, %v2654
    %2656 = vmatmul.f32.gmra.mxu0 %v397
    %v2657 = vpop.f32.mrf.mxu0
    %v2658 = vadd.f32 %v212, %v2657
    %2659 = vmatmul.f32.gmra.mxu0 %v400
    %v2660 = vpop.f32.mrf.mxu0
    %v2661 = vadd.f32 %v212, %v2660
    %2662 = vmatmul.f32.gmra.mxu0 %v403
    %v2663 = vpop.f32.mrf.mxu0
    %v2664 = vadd.f32 %v212, %v2663
    %2665 = vmatmul.f32.gmra.mxu0 %v406
    %v2666 = vpop.f32.mrf.mxu0
    %v2667 = vadd.f32 %v212, %v2666
    %2668 = vmatmul.f32.gmra.mxu0 %v409
    %v2669 = vpop.f32.mrf.mxu0
    %v2670 = vadd.f32 %v212, %v2669
    %2671 = vmatmul.f32.gmra.mxu0 %v412
    %v2672 = vpop.f32.mrf.mxu0
    %v2673 = vadd.f32 %v212, %v2672
    %2674 = vmatmul.f32.gmra.mxu0 %v415
    %v2675 = vpop.f32.mrf.mxu0
    %v2676 = vadd.f32 %v212, %v2675
    %2677 = vmatmul.f32.gmra.mxu0 %v418
    %v2678 = vpop.f32.mrf.mxu0
    %v2679 = vadd.f32 %v212, %v2678
    %2680 = vmatmul.f32.gmra.mxu0 %v421
    %v2681 = vpop.f32.mrf.mxu0
    %v2682 = vadd.f32 %v212, %v2681
    %2683 = vmatmul.f32.gmra.mxu0 %v424
    %v2684 = vpop.f32.mrf.mxu0
    %v2685 = vadd.f32 %v212, %v2684
    %2686 = vmatmul.f32.gmra.mxu0 %v427
    %v2687 = vpop.f32.mrf.mxu0
    %v2688 = vadd.f32 %v212, %v2687
    %2689 = vmatmul.f32.gmra.mxu0 %v430
    %v2690 = vpop.f32.mrf.mxu0
    %v2691 = vadd.f32 %v212, %v2690
    %2692 = vmatmul.f32.gmra.mxu0 %v433
    %v2693 = vpop.f32.mrf.mxu0
    %v2694 = vadd.f32 %v212, %v2693
    %2695 = vmatmul.f32.gmra.mxu0 %v436
    %v2696 = vpop.f32.mrf.mxu0
    %v2697 = vadd.f32 %v212, %v2696
    %2698 = vmatmul.f32.gmra.mxu0 %v439
    %v2699 = vpop.f32.mrf.mxu0
    %v2700 = vadd.f32 %v212, %v2699
    %2701 = vmatmul.f32.gmra.mxu0 %v442
    %v2702 = vpop.f32.mrf.mxu0
    %v2703 = vadd.f32 %v212, %v2702
    %2704 = vmatmul.f32.gmra.mxu0 %v445
    %v2705 = vpop.f32.mrf.mxu0
    %v2706 = vadd.f32 %v212, %v2705
    %2707 = vmatmul.f32.gmra.mxu0 %v448
    %v2708 = vpop.f32.mrf.mxu0
    %v2709 = vadd.f32 %v212, %v2708
    %2710 = vmatmul.f32.gmra.mxu0 %v451
    %v2711 = vpop.f32.mrf.mxu0
    %v2712 = vadd.f32 %v212, %v2711
    %2713 = vmatmul.f32.gmra.mxu0 %v454
    %v2714 = vpop.f32.mrf.mxu0
    %v2715 = vadd.f32 %v212, %v2714
    %2716 = vmatmul.f32.gmra.mxu0 %v457
    %v2717 = vpop.f32.mrf.mxu0
    %v2718 = vadd.f32 %v212, %v2717
    %2719 = vmatmul.f32.gmra.mxu0 %v460
    %v2720 = vpop.f32.mrf.mxu0
    %v2721 = vadd.f32 %v212, %v2720
    %2722 = vmatmul.f32.gmra.mxu0 %v463
    %v2723 = vpop.f32.mrf.mxu0
    %v2724 = vadd.f32 %v212, %v2723
    %2725 = vmatmul.f32.gmra.mxu0 %v466
    %v2726 = vpop.f32.mrf.mxu0
    %v2727 = vadd.f32 %v212, %v2726
    %2728 = vmatmul.f32.gmra.mxu0 %v469
    %v2729 = vpop.f32.mrf.mxu0
    %v2730 = vadd.f32 %v212, %v2729
    %2731 = vmatmul.f32.gmra.mxu0 %v472
    %v2732 = vpop.f32.mrf.mxu0
    %v2733 = vadd.f32 %v212, %v2732
    %2734 = vmatmul.f32.gmra.mxu0 %v475
    %v2735 = vpop.f32.mrf.mxu0
    %v2736 = vadd.f32 %v212, %v2735
    %2737 = vmatmul.f32.gmra.mxu0 %v478
    %v2738 = vpop.f32.mrf.mxu0
    %v2739 = vadd.f32 %v212, %v2738
    %2740 = vmatmul.f32.gmra.mxu0 %v481
    %v2741 = vpop.f32.mrf.mxu0
    %v2742 = vadd.f32 %v212, %v2741
    %2743 = vmatmul.f32.gmra.mxu0 %v484
    %v2744 = vpop.f32.mrf.mxu0
    %v2745 = vadd.f32 %v212, %v2744
    %2746 = vmatmul.f32.gmra.mxu0 %v487
    %v2747 = vpop.f32.mrf.mxu0
    %v2748 = vadd.f32 %v212, %v2747
    %2749 = vmatmul.f32.gmra.mxu0 %v490
    %v2750 = vpop.f32.mrf.mxu0
    %v2751 = vadd.f32 %v212, %v2750
    %2752 = vmatmul.f32.gmra.mxu0 %v493
    %v2753 = vpop.f32.mrf.mxu0
    %v2754 = vadd.f32 %v212, %v2753
    %2755 = vmatmul.f32.gmra.mxu0 %v496
    %v2756 = vpop.f32.mrf.mxu0
    %v2757 = vadd.f32 %v212, %v2756
    %2758 = vmatmul.f32.gmra.mxu0 %v499
    %v2759 = vpop.f32.mrf.mxu0
    %v2760 = vadd.f32 %v212, %v2759
    %2761 = vmatmul.f32.gmra.mxu0 %v502
    %v2762 = vpop.f32.mrf.mxu0
    %v2763 = vadd.f32 %v212, %v2762
    %2764 = vmatmul.f32.gmra.mxu0 %v505
    %v2765 = vpop.f32.mrf.mxu0
    %v2766 = vadd.f32 %v212, %v2765
    %2767 = vmatmul.f32.gmra.mxu0 %v508
    %v2768 = vpop.f32.mrf.mxu0
    %v2769 = vadd.f32 %v212, %v2768
    %2770 = vmatmul.f32.gmra.mxu0 %v511
    %v2771 = vpop.f32.mrf.mxu0
    %v2772 = vadd.f32 %v212, %v2771
    %2773 = vmatmul.f32.gmra.mxu0 %v514
    %v2774 = vpop.f32.mrf.mxu0
    %v2775 = vadd.f32 %v212, %v2774
    %2776 = vmatmul.f32.gmra.mxu0 %v517
    %v2777 = vpop.f32.mrf.mxu0
    %v2778 = vadd.f32 %v212, %v2777
    %2779 = vmatmul.f32.gmra.mxu0 %v520
    %v2780 = vpop.f32.mrf.mxu0
    %v2781 = vadd.f32 %v212, %v2780
    %2782 = vmatmul.f32.gmra.mxu0 %v523
    %v2783 = vpop.f32.mrf.mxu0
    %v2784 = vadd.f32 %v212, %v2783
    %2785 = vmatmul.f32.gmra.mxu0 %v526
    %v2786 = vpop.f32.mrf.mxu0
    %v2787 = vadd.f32 %v212, %v2786
    %2788 = vmatmul.f32.gmra.mxu0 %v529
    %v2789 = vpop.f32.mrf.mxu0
    %v2790 = vadd.f32 %v212, %v2789
    %2791 = vmatmul.f32.gmra.mxu0 %v532
    %v2792 = vpop.f32.mrf.mxu0
    %v2793 = vadd.f32 %v212, %v2792
    %2794 = vmatmul.f32.gmra.mxu0 %v535
    %v2795 = vpop.f32.mrf.mxu0
    %v2796 = vadd.f32 %v212, %v2795
    %2797 = vmatmul.f32.gmra.mxu0 %v538
    %v2798 = vpop.f32.mrf.mxu0
    %v2799 = vadd.f32 %v212, %v2798
    %2800 = vmatmul.f32.gmra.mxu0 %v541
    %v2801 = vpop.f32.mrf.mxu0
    %v2802 = vadd.f32 %v212, %v2801
    %2803 = vmatmul.f32.gmra.mxu0 %v544
    %v2804 = vpop.f32.mrf.mxu0
    %v2805 = vadd.f32 %v212, %v2804
    %2806 = vmatmul.f32.gmra.mxu0 %v547
    %v2807 = vpop.f32.mrf.mxu0
    %v2808 = vadd.f32 %v212, %v2807
    %2809 = vmatmul.f32.gmra.mxu0 %v550
    %v2810 = vpop.f32.mrf.mxu0
    %v2811 = vadd.f32 %v212, %v2810
    %2812 = vmatmul.f32.gmra.mxu0 %v553
    %v2813 = vpop.f32.mrf.mxu0
    %v2814 = vadd.f32 %v212, %v2813
    %2815 = vmatmul.f32.gmra.mxu0 %v556
    %v2816 = vpop.f32.mrf.mxu0
    %v2817 = vadd.f32 %v212, %v2816
    %2818 = vmatmul.f32.gmra.mxu0 %v559
    %v2819 = vpop.f32.mrf.mxu0
    %v2820 = vadd.f32 %v212, %v2819
    %2821 = vmatmul.f32.gmra.mxu0 %v562
    %v2822 = vpop.f32.mrf.mxu0
    %v2823 = vadd.f32 %v212, %v2822
    %2824 = vmatmul.f32.gmra.mxu0 %v565
    %v2825 = vpop.f32.mrf.mxu0
    %v2826 = vadd.f32 %v212, %v2825
    %2827 = vmatmul.f32.gmra.mxu0 %v568
    %v2828 = vpop.f32.mrf.mxu0
    %v2829 = vadd.f32 %v212, %v2828
    %2830 = vmatmul.f32.gmra.mxu0 %v571
    %v2831 = vpop.f32.mrf.mxu0
    %v2832 = vadd.f32 %v212, %v2831
    %2833 = vmatmul.f32.gmra.mxu0 %v574
    %v2834 = vpop.f32.mrf.mxu0
    %v2835 = vadd.f32 %v212, %v2834
    %2836 = vmatmul.f32.gmra.mxu0 %v577
    %v2837 = vpop.f32.mrf.mxu0
    %v2838 = vadd.f32 %v212, %v2837
    %2839 = vmatmul.f32.gmra.mxu0 %v580
    %v2840 = vpop.f32.mrf.mxu0
    %v2841 = vadd.f32 %v212, %v2840
    %2842 = vmatmul.f32.gmra.mxu0 %v583
    %v2843 = vpop.f32.mrf.mxu0
    %v2844 = vadd.f32 %v212, %v2843
    %2845 = vmatmul.f32.gmra.mxu0 %v586
    %v2846 = vpop.f32.mrf.mxu0
    %v2847 = vadd.f32 %v212, %v2846
    %2848 = vmatmul.f32.gmra.mxu0 %v589
    %v2849 = vpop.f32.mrf.mxu0
    %v2850 = vadd.f32 %v212, %v2849
    %2851 = vmatmul.f32.gmra.mxu0 %v592
    %v2852 = vpop.f32.mrf.mxu0
    %v2853 = vadd.f32 %v212, %v2852
    %2854 = vmatmul.f32.gmra.mxu0 %v595
    %v2855 = vpop.f32.mrf.mxu0
    %v2856 = vadd.f32 %v212, %v2855
    %2857 = vmatmul.f32.gmra.mxu0 %v598
    %v2858 = vpop.f32.mrf.mxu0
    %v2859 = vadd.f32 %v212, %v2858
    %2860 = vmatmul.f32.gmra.mxu0 %v601
    %v2861 = vpop.f32.mrf.mxu0
    %v2862 = vadd.f32 %v212, %v2861
    %2863 = vmatmul.f32.gmra.mxu0 %v604
    %v2864 = vpop.f32.mrf.mxu0
    %v2865 = vadd.f32 %v212, %v2864
    %2866 = vmatmul.f32.gmra.mxu0 %v607
    %v2867 = vpop.f32.mrf.mxu0
    %v2868 = vadd.f32 %v212, %v2867
    %2869 = vmatmul.f32.gmra.mxu0 %v610
    %v2870 = vpop.f32.mrf.mxu0
    %v2871 = vadd.f32 %v212, %v2870
    %2872 = vmatmul.f32.gmra.mxu0 %v613
    %v2873 = vpop.f32.mrf.mxu0
    %v2874 = vadd.f32 %v212, %v2873
    %2875 = vmatmul.f32.gmra.mxu0 %v616
    %v2876 = vpop.f32.mrf.mxu0
    %v2877 = vadd.f32 %v212, %v2876
    %2878 = vmatmul.f32.gmra.mxu0 %v619
    %v2879 = vpop.f32.mrf.mxu0
    %v2880 = vadd.f32 %v212, %v2879
    %2881 = vmatmul.f32.gmra.mxu0 %v622
    %v2882 = vpop.f32.mrf.mxu0
    %v2883 = vadd.f32 %v212, %v2882
    %2884 = vmatmul.f32.gmra.mxu0 %v625
    %v2885 = vpop.f32.mrf.mxu0
    %v2886 = vadd.f32 %v212, %v2885
    %2887 = vmatmul.f32.gmra.mxu0 %v628
    %v2888 = vpop.f32.mrf.mxu0
    %v2889 = vadd.f32 %v212, %v2888
    %2890 = vmatmul.f32.gmra.mxu0 %v631
    %v2891 = vpop.f32.mrf.mxu0
    %v2892 = vadd.f32 %v212, %v2891
    %2893 = vmatmul.f32.gmra.mxu0 %v634
    %v2894 = vpop.f32.mrf.mxu0
    %v2895 = vadd.f32 %v212, %v2894
    %2896 = vmatmul.f32.gmra.mxu0 %v637
    %v2897 = vpop.f32.mrf.mxu0
    %v2898 = vadd.f32 %v212, %v2897
    %2899 = vmatmul.f32.gmra.mxu0 %v640
    %v2900 = vpop.f32.mrf.mxu0
    %v2901 = vadd.f32 %v212, %v2900
    %2902 = vmatmul.f32.gmra.mxu0 %v643
    %v2903 = vpop.f32.mrf.mxu0
    %v2904 = vadd.f32 %v212, %v2903
    %2905 = vmatmul.f32.gmra.mxu0 %v646
    %v2906 = vpop.f32.mrf.mxu0
    %v2907 = vadd.f32 %v212, %v2906
    %2908 = vmatmul.f32.gmra.mxu0 %v649
    %v2909 = vpop.f32.mrf.mxu0
    %v2910 = vadd.f32 %v212, %v2909
    %2911 = vdwg.mxu0
    %v2912 = vmax.f32 %v685, 0.0
    %v2913 = vmax.f32 %v1134, 0.0
    %v2914 = vmax.f32 %v1583, 0.0
    %v2915 = vmax.f32 %v2032, 0.0
    %v2916 = vmax.f32 %v2481, 0.0
    %v2917 = vmax.f32 %v688, 0.0
    %v2918 = vmax.f32 %v1137, 0.0
    %v2919 = vmax.f32 %v1586, 0.0
    %v2920 = vmax.f32 %v2035, 0.0
    %v2921 = vmax.f32 %v2484, 0.0
    %v2922 = vmax.f32 %v691, 0.0
    %v2923 = vmax.f32 %v1140, 0.0
    %v2924 = vmax.f32 %v1589, 0.0
    %v2925 = vmax.f32 %v2038, 0.0
    %v2926 = vmax.f32 %v2487, 0.0
    %v2927 = vmax.f32 %v694, 0.0
    %v2928 = vmax.f32 %v1143, 0.0
    %v2929 = vmax.f32 %v1592, 0.0
    %v2930 = vmax.f32 %v2041, 0.0
    %v2931 = vmax.f32 %v2490, 0.0
    %v2932 = vmax.f32 %v697, 0.0
    %v2933 = vmax.f32 %v1146, 0.0
    %v2934 = vmax.f32 %v1595, 0.0
    %v2935 = vmax.f32 %v2044, 0.0
    %v2936 = vmax.f32 %v2493, 0.0
    %v2937 = vmax.f32 %v700, 0.0
    %v2938 = vmax.f32 %v1149, 0.0
    %v2939 = vmax.f32 %v1598, 0.0
    %v2940 = vmax.f32 %v2047, 0.0
    %v2941 = vmax.f32 %v2496, 0.0
    %v2942 = vmax.f32 %v703, 0.0
    %v2943 = vmax.f32 %v1152, 0.0
    %v2944 = vmax.f32 %v1601, 0.0
    %v2945 = vmax.f32 %v2050, 0.0
    %v2946 = vmax.f32 %v2499, 0.0
    %v2947 = vmax.f32 %v706, 0.0
    %v2948 = vmax.f32 %v1155, 0.0
    %v2949 = vmax.f32 %v1604, 0.0
    %v2950 = vmax.f32 %v2053, 0.0
    %v2951 = vmax.f32 %v2502, 0.0
    %v2952 = vmax.f32 %v709, 0.0
    %v2953 = vmax.f32 %v1158, 0.0
    %v2954 = vmax.f32 %v1607, 0.0
    %v2955 = vmax.f32 %v2056, 0.0
    %v2956 = vmax.f32 %v2505, 0.0
    %v2957 = vmax.f32 %v712, 0.0
    %v2958 = vmax.f32 %v1161, 0.0
    %v2959 = vmax.f32 %v1610, 0.0
    %v2960 = vmax.f32 %v2059, 0.0
    %v2961 = vmax.f32 %v2508, 0.0
    %v2962 = vmax.f32 %v715, 0.0
    %v2963 = vmax.f32 %v1164, 0.0
    %v2964 = vmax.f32 %v1613, 0.0
    %v2965 = vmax.f32 %v2062, 0.0
    %v2966 = vmax.f32 %v2511, 0.0
    %v2967 = vmax.f32 %v718, 0.0
    %v2968 = vmax.f32 %v1167, 0.0
    %v2969 = vmax.f32 %v1616, 0.0
    %v2970 = vmax.f32 %v2065, 0.0
    %v2971 = vmax.f32 %v2514, 0.0
    %v2972 = vmax.f32 %v721, 0.0
    %v2973 = vmax.f32 %v1170, 0.0
    %v2974 = vmax.f32 %v1619, 0.0
    %v2975 = vmax.f32 %v2068, 0.0
    %v2976 = vmax.f32 %v2517, 0.0
    %v2977 = vmax.f32 %v724, 0.0
    %v2978 = vmax.f32 %v1173, 0.0
    %v2979 = vmax.f32 %v1622, 0.0
    %v2980 = vmax.f32 %v2071, 0.0
    %v2981 = vmax.f32 %v2520, 0.0
    %v2982 = vmax.f32 %v727, 0.0
    %v2983 = vmax.f32 %v1176, 0.0
    %v2984 = vmax.f32 %v1625, 0.0
    %v2985 = vmax.f32 %v2074, 0.0
    %v2986 = vmax.f32 %v2523, 0.0
    %v2987 = vmax.f32 %v730, 0.0
    %v2988 = vmax.f32 %v1179, 0.0
    %v2989 = vmax.f32 %v1628, 0.0
    %v2990 = vmax.f32 %v2077, 0.0
    %v2991 = vmax.f32 %v2526, 0.0
    %v2992 = vmax.f32 %v733, 0.0
    %v2993 = vmax.f32 %v1182, 0.0
    %v2994 = vmax.f32 %v1631, 0.0
    %v2995 = vmax.f32 %v2080, 0.0
    %v2996 = vmax.f32 %v2529, 0.0
    %v2997 = vmax.f32 %v736, 0.0
    %v2998 = vmax.f32 %v1185, 0.0
    %v2999 = vmax.f32 %v1634, 0.0
    %v3000 = vmax.f32 %v2083, 0.0
    %v3001 = vmax.f32 %v2532, 0.0
    %v3002 = vmax.f32 %v739, 0.0
    %v3003 = vmax.f32 %v1188, 0.0
    %v3004 = vmax.f32 %v1637, 0.0
    %v3005 = vmax.f32 %v2086, 0.0
    %v3006 = vmax.f32 %v2535, 0.0
    %v3007 = vmax.f32 %v742, 0.0
    %v3008 = vmax.f32 %v1191, 0.0
    %v3009 = vmax.f32 %v1640, 0.0
    %v3010 = vmax.f32 %v2089, 0.0
    %v3011 = vmax.f32 %v2538, 0.0
    %v3012 = vmax.f32 %v745, 0.0
    %v3013 = vmax.f32 %v1194, 0.0
    %v3014 = vmax.f32 %v1643, 0.0
    %v3015 = vmax.f32 %v2092, 0.0
    %v3016 = vmax.f32 %v2541, 0.0
    %v3017 = vmax.f32 %v748, 0.0
    %v3018 = vmax.f32 %v1197, 0.0
    %v3019 = vmax.f32 %v1646, 0.0
    %v3020 = vmax.f32 %v2095, 0.0
    %v3021 = vmax.f32 %v2544, 0.0
    %v3022 = vmax.f32 %v751, 0.0
    %v3023 = vmax.f32 %v1200, 0.0
    %v3024 = vmax.f32 %v1649, 0.0
    %v3025 = vmax.f32 %v2098, 0.0
    %v3026 = vmax.f32 %v2547, 0.0
    %v3027 = vmax.f32 %v754, 0.0
    %v3028 = vmax.f32 %v1203, 0.0
    %v3029 = vmax.f32 %v1652, 0.0
    %v3030 = vmax.f32 %v2101, 0.0
    %v3031 = vmax.f32 %v2550, 0.0
    %v3032 = vmax.f32 %v757, 0.0
    %v3033 = vmax.f32 %v1206, 0.0
    %v3034 = vmax.f32 %v1655, 0.0
    %v3035 = vmax.f32 %v2104, 0.0
    %v3036 = vmax.f32 %v2553, 0.0
    %v3037 = vmax.f32 %v760, 0.0
    %v3038 = vmax.f32 %v1209, 0.0
    %v3039 = vmax.f32 %v1658, 0.0
    %v3040 = vmax.f32 %v2107, 0.0
    %v3041 = vmax.f32 %v2556, 0.0
    %v3042 = vmax.f32 %v763, 0.0
    %v3043 = vmax.f32 %v1212, 0.0
    %v3044 = vmax.f32 %v1661, 0.0
    %v3045 = vmax.f32 %v2110, 0.0
    %v3046 = vmax.f32 %v2559, 0.0
    %v3047 = vmax.f32 %v766, 0.0
    %v3048 = vmax.f32 %v1215, 0.0
    %v3049 = vmax.f32 %v1664, 0.0
    %v3050 = vmax.f32 %v2113, 0.0
    %v3051 = vmax.f32 %v2562, 0.0
    %v3052 = vmax.f32 %v769, 0.0
    %v3053 = vmax.f32 %v1218, 0.0
    %v3054 = vmax.f32 %v1667, 0.0
    %v3055 = vmax.f32 %v2116, 0.0
    %v3056 = vmax.f32 %v2565, 0.0
    %v3057 = vmax.f32 %v772, 0.0
    %v3058 = vmax.f32 %v1221, 0.0
    %v3059 = vmax.f32 %v1670, 0.0
    %v3060 = vmax.f32 %v2119, 0.0
    %v3061 = vmax.f32 %v2568, 0.0
    %v3062 = vmax.f32 %v775, 0.0
    %v3063 = vmax.f32 %v1224, 0.0
    %v3064 = vmax.f32 %v1673, 0.0
    %v3065 = vmax.f32 %v2122, 0.0
    %v3066 = vmax.f32 %v2571, 0.0
    %v3067 = vmax.f32 %v778, 0.0
    %v3068 = vmax.f32 %v1227, 0.0
    %v3069 = vmax.f32 %v1676, 0.0
    %v3070 = vmax.f32 %v2125, 0.0
    %v3071 = vmax.f32 %v2574, 0.0
    %v3072 = vmax.f32 %v781, 0.0
    %v3073 = vmax.f32 %v1230, 0.0
    %v3074 = vmax.f32 %v1679, 0.0
    %v3075 = vmax.f32 %v2128, 0.0
    %v3076 = vmax.f32 %v2577, 0.0
    %v3077 = vmax.f32 %v784, 0.0
    %v3078 = vmax.f32 %v1233, 0.0
    %v3079 = vmax.f32 %v1682, 0.0
    %v3080 = vmax.f32 %v2131, 0.0
    %v3081 = vmax.f32 %v2580, 0.0
    %v3082 = vmax.f32 %v787, 0.0
    %v3083 = vmax.f32 %v1236, 0.0
    %v3084 = vmax.f32 %v1685, 0.0
    %v3085 = vmax.f32 %v2134, 0.0
    %v3086 = vmax.f32 %v2583, 0.0
    %v3087 = vmax.f32 %v790, 0.0
    %v3088 = vmax.f32 %v1239, 0.0
    %v3089 = vmax.f32 %v1688, 0.0
    %v3090 = vmax.f32 %v2137, 0.0
    %v3091 = vmax.f32 %v2586, 0.0
    %v3092 = vmax.f32 %v793, 0.0
    %v3093 = vmax.f32 %v1242, 0.0
    %v3094 = vmax.f32 %v1691, 0.0
    %v3095 = vmax.f32 %v2140, 0.0
    %v3096 = vmax.f32 %v2589, 0.0
    %v3097 = vmax.f32 %v796, 0.0
    %v3098 = vmax.f32 %v1245, 0.0
    %v3099 = vmax.f32 %v1694, 0.0
    %v3100 = vmax.f32 %v2143, 0.0
    %v3101 = vmax.f32 %v2592, 0.0
    %v3102 = vmax.f32 %v799, 0.0
    %v3103 = vmax.f32 %v1248, 0.0
    %v3104 = vmax.f32 %v1697, 0.0
    %v3105 = vmax.f32 %v2146, 0.0
    %v3106 = vmax.f32 %v2595, 0.0
    %v3107 = vmax.f32 %v802, 0.0
    %v3108 = vmax.f32 %v1251, 0.0
    %v3109 = vmax.f32 %v1700, 0.0
    %v3110 = vmax.f32 %v2149, 0.0
    %v3111 = vmax.f32 %v2598, 0.0
    %v3112 = vmax.f32 %v805, 0.0
    %v3113 = vmax.f32 %v1254, 0.0
    %v3114 = vmax.f32 %v1703, 0.0
    %v3115 = vmax.f32 %v2152, 0.0
    %v3116 = vmax.f32 %v2601, 0.0
    %v3117 = vmax.f32 %v808, 0.0
    %v3118 = vmax.f32 %v1257, 0.0
    %v3119 = vmax.f32 %v1706, 0.0
    %v3120 = vmax.f32 %v2155, 0.0
    %v3121 = vmax.f32 %v2604, 0.0
    %v3122 = vmax.f32 %v811, 0.0
    %v3123 = vmax.f32 %v1260, 0.0
    %v3124 = vmax.f32 %v1709, 0.0
    %v3125 = vmax.f32 %v2158, 0.0
    %v3126 = vmax.f32 %v2607, 0.0
    %v3127 = vmax.f32 %v814, 0.0
    %v3128 = vmax.f32 %v1263, 0.0
    %v3129 = vmax.f32 %v1712, 0.0
    %v3130 = vmax.f32 %v2161, 0.0
    %v3131 = vmax.f32 %v2610, 0.0
    %v3132 = vmax.f32 %v817, 0.0
    %v3133 = vmax.f32 %v1266, 0.0
    %v3134 = vmax.f32 %v1715, 0.0
    %v3135 = vmax.f32 %v2164, 0.0
    %v3136 = vmax.f32 %v2613, 0.0
    %v3137 = vmax.f32 %v820, 0.0
    %v3138 = vmax.f32 %v1269, 0.0
    %v3139 = vmax.f32 %v1718, 0.0
    %v3140 = vmax.f32 %v2167, 0.0
    %v3141 = vmax.f32 %v2616, 0.0
    %v3142 = vmax.f32 %v823, 0.0
    %v3143 = vmax.f32 %v1272, 0.0
    %v3144 = vmax.f32 %v1721, 0.0
    %v3145 = vmax.f32 %v2170, 0.0
    %v3146 = vmax.f32 %v2619, 0.0
    %v3147 = vmax.f32 %v826, 0.0
    %v3148 = vmax.f32 %v1275, 0.0
    %v3149 = vmax.f32 %v1724, 0.0
    %v3150 = vmax.f32 %v2173, 0.0
    %v3151 = vmax.f32 %v2622, 0.0
    %v3152 = vmax.f32 %v829, 0.0
    %v3153 = vmax.f32 %v1278, 0.0
    %v3154 = vmax.f32 %v1727, 0.0
    %v3155 = vmax.f32 %v2176, 0.0
    %v3156 = vmax.f32 %v2625, 0.0
    %v3157 = vmax.f32 %v832, 0.0
    %v3158 = vmax.f32 %v1281, 0.0
    %v3159 = vmax.f32 %v1730, 0.0
    %v3160 = vmax.f32 %v2179, 0.0
    %v3161 = vmax.f32 %v2628, 0.0
    %v3162 = vmax.f32 %v835, 0.0
    %v3163 = vmax.f32 %v1284, 0.0
    %v3164 = vmax.f32 %v1733, 0.0
    %v3165 = vmax.f32 %v2182, 0.0
    %v3166 = vmax.f32 %v2631, 0.0
    %v3167 = vmax.f32 %v838, 0.0
    %v3168 = vmax.f32 %v1287, 0.0
    %v3169 = vmax.f32 %v1736, 0.0
    %v3170 = vmax.f32 %v2185, 0.0
    %v3171 = vmax.f32 %v2634, 0.0
    %v3172 = vmax.f32 %v841, 0.0
    %v3173 = vmax.f32 %v1290, 0.0
    %v3174 = vmax.f32 %v1739, 0.0
    %v3175 = vmax.f32 %v2188, 0.0
    %v3176 = vmax.f32 %v2637, 0.0
    %v3177 = vmax.f32 %v844, 0.0
    %v3178 = vmax.f32 %v1293, 0.0
    %v3179 = vmax.f32 %v1742, 0.0
    %v3180 = vmax.f32 %v2191, 0.0
    %v3181 = vmax.f32 %v2640, 0.0
    %v3182 = vmax.f32 %v847, 0.0
    %v3183 = vmax.f32 %v1296, 0.0
    %v3184 = vmax.f32 %v1745, 0.0
    %v3185 = vmax.f32 %v2194, 0.0
    %v3186 = vmax.f32 %v2643, 0.0
    %v3187 = vmax.f32 %v850, 0.0
    %v3188 = vmax.f32 %v1299, 0.0
    %v3189 = vmax.f32 %v1748, 0.0
    %v3190 = vmax.f32 %v2197, 0.0
    %v3191 = vmax.f32 %v2646, 0.0
    %v3192 = vmax.f32 %v853, 0.0
    %v3193 = vmax.f32 %v1302, 0.0
    %v3194 = vmax.f32 %v1751, 0.0
    %v3195 = vmax.f32 %v2200, 0.0
    %v3196 = vmax.f32 %v2649, 0.0
    %v3197 = vmax.f32 %v856, 0.0
    %v3198 = vmax.f32 %v1305, 0.0
    %v3199 = vmax.f32 %v1754, 0.0
    %v3200 = vmax.f32 %v2203, 0.0
    %v3201 = vmax.f32 %v2652, 0.0
    %v3202 = vmax.f32 %v859, 0.0
    %v3203 = vmax.f32 %v1308, 0.0
    %v3204 = vmax.f32 %v1757, 0.0
    %v3205 = vmax.f32 %v2206, 0.0
    %v3206 = vmax.f32 %v2655, 0.0
    %v3207 = vmax.f32 %v862, 0.0
    %v3208 = vmax.f32 %v1311, 0.0
    %v3209 = vmax.f32 %v1760, 0.0
    %v3210 = vmax.f32 %v2209, 0.0
    %v3211 = vmax.f32 %v2658, 0.0
    %v3212 = vmax.f32 %v865, 0.0
    %v3213 = vmax.f32 %v1314, 0.0
    %v3214 = vmax.f32 %v1763, 0.0
    %v3215 = vmax.f32 %v2212, 0.0
    %v3216 = vmax.f32 %v2661, 0.0
    %v3217 = vmax.f32 %v868, 0.0
    %v3218 = vmax.f32 %v1317, 0.0
    %v3219 = vmax.f32 %v1766, 0.0
    %v3220 = vmax.f32 %v2215, 0.0
    %v3221 = vmax.f32 %v2664, 0.0
    %v3222 = vmax.f32 %v871, 0.0
    %v3223 = vmax.f32 %v1320, 0.0
    %v3224 = vmax.f32 %v1769, 0.0
    %v3225 = vmax.f32 %v2218, 0.0
    %v3226 = vmax.f32 %v2667, 0.0
    %v3227 = vmax.f32 %v874, 0.0
    %v3228 = vmax.f32 %v1323, 0.0
    %v3229 = vmax.f32 %v1772, 0.0
    %v3230 = vmax.f32 %v2221, 0.0
    %v3231 = vmax.f32 %v2670, 0.0
    %v3232 = vmax.f32 %v877, 0.0
    %v3233 = vmax.f32 %v1326, 0.0
    %v3234 = vmax.f32 %v1775, 0.0
    %v3235 = vmax.f32 %v2224, 0.0
    %v3236 = vmax.f32 %v2673, 0.0
    %v3237 = vmax.f32 %v880, 0.0
    %v3238 = vmax.f32 %v1329, 0.0
    %v3239 = vmax.f32 %v1778, 0.0
    %v3240 = vmax.f32 %v2227, 0.0
    %v3241 = vmax.f32 %v2676, 0.0
    %v3242 = vmax.f32 %v883, 0.0
    %v3243 = vmax.f32 %v1332, 0.0
    %v3244 = vmax.f32 %v1781, 0.0
    %v3245 = vmax.f32 %v2230, 0.0
    %v3246 = vmax.f32 %v2679, 0.0
    %v3247 = vmax.f32 %v886, 0.0
    %v3248 = vmax.f32 %v1335, 0.0
    %v3249 = vmax.f32 %v1784, 0.0
    %v3250 = vmax.f32 %v2233, 0.0
    %v3251 = vmax.f32 %v2682, 0.0
    %v3252 = vmax.f32 %v889, 0.0
    %v3253 = vmax.f32 %v1338, 0.0
    %v3254 = vmax.f32 %v1787, 0.0
    %v3255 = vmax.f32 %v2236, 0.0
    %v3256 = vmax.f32 %v2685, 0.0
    %v3257 = vmax.f32 %v892, 0.0
    %v3258 = vmax.f32 %v1341, 0.0
    %v3259 = vmax.f32 %v1790, 0.0
    %v3260 = vmax.f32 %v2239, 0.0
    %v3261 = vmax.f32 %v2688, 0.0
    %v3262 = vmax.f32 %v895, 0.0
    %v3263 = vmax.f32 %v1344, 0.0
    %v3264 = vmax.f32 %v1793, 0.0
    %v3265 = vmax.f32 %v2242, 0.0
    %v3266 = vmax.f32 %v2691, 0.0
    %v3267 = vmax.f32 %v898, 0.0
    %v3268 = vmax.f32 %v1347, 0.0
    %v3269 = vmax.f32 %v1796, 0.0
    %v3270 = vmax.f32 %v2245, 0.0
    %v3271 = vmax.f32 %v2694, 0.0
    %v3272 = vmax.f32 %v901, 0.0
    %v3273 = vmax.f32 %v1350, 0.0
    %v3274 = vmax.f32 %v1799, 0.0
    %v3275 = vmax.f32 %v2248, 0.0
    %v3276 = vmax.f32 %v2697, 0.0
    %v3277 = vmax.f32 %v904, 0.0
    %v3278 = vmax.f32 %v1353, 0.0
    %v3279 = vmax.f32 %v1802, 0.0
    %v3280 = vmax.f32 %v2251, 0.0
    %v3281 = vmax.f32 %v2700, 0.0
    %v3282 = vmax.f32 %v907, 0.0
    %v3283 = vmax.f32 %v1356, 0.0
    %v3284 = vmax.f32 %v1805, 0.0
    %v3285 = vmax.f32 %v2254, 0.0
    %v3286 = vmax.f32 %v2703, 0.0
    %v3287 = vmax.f32 %v910, 0.0
    %v3288 = vmax.f32 %v1359, 0.0
    %v3289 = vmax.f32 %v1808, 0.0
    %v3290 = vmax.f32 %v2257, 0.0
    %v3291 = vmax.f32 %v2706, 0.0
    %v3292 = vmax.f32 %v913, 0.0
    %v3293 = vmax.f32 %v1362, 0.0
    %v3294 = vmax.f32 %v1811, 0.0
    %v3295 = vmax.f32 %v2260, 0.0
    %v3296 = vmax.f32 %v2709, 0.0
    %v3297 = vmax.f32 %v916, 0.0
    %v3298 = vmax.f32 %v1365, 0.0
    %v3299 = vmax.f32 %v1814, 0.0
    %v3300 = vmax.f32 %v2263, 0.0
    %v3301 = vmax.f32 %v2712, 0.0
    %v3302 = vmax.f32 %v919, 0.0
    %v3303 = vmax.f32 %v1368, 0.0
    %v3304 = vmax.f32 %v1817, 0.0
    %v3305 = vmax.f32 %v2266, 0.0
    %v3306 = vmax.f32 %v2715, 0.0
    %v3307 = vmax.f32 %v922, 0.0
    %v3308 = vmax.f32 %v1371, 0.0
    %v3309 = vmax.f32 %v1820, 0.0
    %v3310 = vmax.f32 %v2269, 0.0
    %v3311 = vmax.f32 %v2718, 0.0
    %v3312 = vmax.f32 %v925, 0.0
    %v3313 = vmax.f32 %v1374, 0.0
    %v3314 = vmax.f32 %v1823, 0.0
    %v3315 = vmax.f32 %v2272, 0.0
    %v3316 = vmax.f32 %v2721, 0.0
    %v3317 = vmax.f32 %v928, 0.0
    %v3318 = vmax.f32 %v1377, 0.0
    %v3319 = vmax.f32 %v1826, 0.0
    %v3320 = vmax.f32 %v2275, 0.0
    %v3321 = vmax.f32 %v2724, 0.0
    %v3322 = vmax.f32 %v931, 0.0
    %v3323 = vmax.f32 %v1380, 0.0
    %v3324 = vmax.f32 %v1829, 0.0
    %v3325 = vmax.f32 %v2278, 0.0
    %v3326 = vmax.f32 %v2727, 0.0
    %v3327 = vmax.f32 %v934, 0.0
    %v3328 = vmax.f32 %v1383, 0.0
    %v3329 = vmax.f32 %v1832, 0.0
    %v3330 = vmax.f32 %v2281, 0.0
    %v3331 = vmax.f32 %v2730, 0.0
    %v3332 = vmax.f32 %v937, 0.0
    %v3333 = vmax.f32 %v1386, 0.0
    %v3334 = vmax.f32 %v1835, 0.0
    %v3335 = vmax.f32 %v2284, 0.0
    %v3336 = vmax.f32 %v2733, 0.0
    %v3337 = vmax.f32 %v940, 0.0
    %v3338 = vmax.f32 %v1389, 0.0
    %v3339 = vmax.f32 %v1838, 0.0
    %v3340 = vmax.f32 %v2287, 0.0
    %v3341 = vmax.f32 %v2736, 0.0
    %v3342 = vmax.f32 %v943, 0.0
    %v3343 = vmax.f32 %v1392, 0.0
    %v3344 = vmax.f32 %v1841, 0.0
    %v3345 = vmax.f32 %v2290, 0.0
    %v3346 = vmax.f32 %v2739, 0.0
    %v3347 = vmax.f32 %v946, 0.0
    %v3348 = vmax.f32 %v1395, 0.0
    %v3349 = vmax.f32 %v1844, 0.0
    %v3350 = vmax.f32 %v2293, 0.0
    %v3351 = vmax.f32 %v2742, 0.0
    %v3352 = vmax.f32 %v949, 0.0
    %v3353 = vmax.f32 %v1398, 0.0
    %v3354 = vmax.f32 %v1847, 0.0
    %v3355 = vmax.f32 %v2296, 0.0
    %v3356 = vmax.f32 %v2745, 0.0
    %v3357 = vmax.f32 %v952, 0.0
    %v3358 = vmax.f32 %v1401, 0.0
    %v3359 = vmax.f32 %v1850, 0.0
    %v3360 = vmax.f32 %v2299, 0.0
    %v3361 = vmax.f32 %v2748, 0.0
    %v3362 = vmax.f32 %v955, 0.0
    %v3363 = vmax.f32 %v1404, 0.0
    %v3364 = vmax.f32 %v1853, 0.0
    %v3365 = vmax.f32 %v2302, 0.0
    %v3366 = vmax.f32 %v2751, 0.0
    %v3367 = vmax.f32 %v958, 0.0
    %v3368 = vmax.f32 %v1407, 0.0
    %v3369 = vmax.f32 %v1856, 0.0
    %v3370 = vmax.f32 %v2305, 0.0
    %v3371 = vmax.f32 %v2754, 0.0
    %v3372 = vmax.f32 %v961, 0.0
    %v3373 = vmax.f32 %v1410, 0.0
    %v3374 = vmax.f32 %v1859, 0.0
    %v3375 = vmax.f32 %v2308, 0.0
    %v3376 = vmax.f32 %v2757, 0.0
    %v3377 = vmax.f32 %v964, 0.0
    %v3378 = vmax.f32 %v1413, 0.0
    %v3379 = vmax.f32 %v1862, 0.0
    %v3380 = vmax.f32 %v2311, 0.0
    %v3381 = vmax.f32 %v2760, 0.0
    %v3382 = vmax.f32 %v967, 0.0
    %v3383 = vmax.f32 %v1416, 0.0
    %v3384 = vmax.f32 %v1865, 0.0
    %v3385 = vmax.f32 %v2314, 0.0
    %v3386 = vmax.f32 %v2763, 0.0
    %v3387 = vmax.f32 %v970, 0.0
    %v3388 = vmax.f32 %v1419, 0.0
    %v3389 = vmax.f32 %v1868, 0.0
    %v3390 = vmax.f32 %v2317, 0.0
    %v3391 = vmax.f32 %v2766, 0.0
    %v3392 = vmax.f32 %v973, 0.0
    %v3393 = vmax.f32 %v1422, 0.0
    %v3394 = vmax.f32 %v1871, 0.0
    %v3395 = vmax.f32 %v2320, 0.0
    %v3396 = vmax.f32 %v2769, 0.0
    %v3397 = vmax.f32 %v976, 0.0
    %v3398 = vmax.f32 %v1425, 0.0
    %v3399 = vmax.f32 %v1874, 0.0
    %v3400 = vmax.f32 %v2323, 0.0
    %v3401 = vmax.f32 %v2772, 0.0
    %v3402 = vmax.f32 %v979, 0.0
    %v3403 = vmax.f32 %v1428, 0.0
    %v3404 = vmax.f32 %v1877, 0.0
    %v3405 = vmax.f32 %v2326, 0.0
    %v3406 = vmax.f32 %v2775, 0.0
    %v3407 = vmax.f32 %v982, 0.0
    %v3408 = vmax.f32 %v1431, 0.0
    %v3409 = vmax.f32 %v1880, 0.0
    %v3410 = vmax.f32 %v2329, 0.0
    %v3411 = vmax.f32 %v2778, 0.0
    %v3412 = vmax.f32 %v985, 0.0
    %v3413 = vmax.f32 %v1434, 0.0
    %v3414 = vmax.f32 %v1883, 0.0
    %v3415 = vmax.f32 %v2332, 0.0
    %v3416 = vmax.f32 %v2781, 0.0
    %v3417 = vmax.f32 %v988, 0.0
    %v3418 = vmax.f32 %v1437, 0.0
    %v3419 = vmax.f32 %v1886, 0.0
    %v3420 = vmax.f32 %v2335, 0.0
    %v3421 = vmax.f32 %v2784, 0.0
    %v3422 = vmax.f32 %v991, 0.0
    %v3423 = vmax.f32 %v1440, 0.0
    %v3424 = vmax.f32 %v1889, 0.0
    %v3425 = vmax.f32 %v2338, 0.0
    %v3426 = vmax.f32 %v2787, 0.0
    %v3427 = vmax.f32 %v994, 0.0
    %v3428 = vmax.f32 %v1443, 0.0
    %v3429 = vmax.f32 %v1892, 0.0
    %v3430 = vmax.f32 %v2341, 0.0
    %v3431 = vmax.f32 %v2790, 0.0
    %v3432 = vmax.f32 %v997, 0.0
    %v3433 = vmax.f32 %v1446, 0.0
    %v3434 = vmax.f32 %v1895, 0.0
    %v3435 = vmax.f32 %v2344, 0.0
    %v3436 = vmax.f32 %v2793, 0.0
    %v3437 = vmax.f32 %v1000, 0.0
    %v3438 = vmax.f32 %v1449, 0.0
    %v3439 = vmax.f32 %v1898, 0.0
    %v3440 = vmax.f32 %v2347, 0.0
    %v3441 = vmax.f32 %v2796, 0.0
    %v3442 = vmax.f32 %v1003, 0.0
    %v3443 = vmax.f32 %v1452, 0.0
    %v3444 = vmax.f32 %v1901, 0.0
    %v3445 = vmax.f32 %v2350, 0.0
    %v3446 = vmax.f32 %v2799, 0.0
    %v3447 = vmax.f32 %v1006, 0.0
    %v3448 = vmax.f32 %v1455, 0.0
    %v3449 = vmax.f32 %v1904, 0.0
    %v3450 = vmax.f32 %v2353, 0.0
    %v3451 = vmax.f32 %v2802, 0.0
    %v3452 = vmax.f32 %v1009, 0.0
    %v3453 = vmax.f32 %v1458, 0.0
    %v3454 = vmax.f32 %v1907, 0.0
    %v3455 = vmax.f32 %v2356, 0.0
    %v3456 = vmax.f32 %v2805, 0.0
    %v3457 = vmax.f32 %v1012, 0.0
    %v3458 = vmax.f32 %v1461, 0.0
    %v3459 = vmax.f32 %v1910, 0.0
    %v3460 = vmax.f32 %v2359, 0.0
    %v3461 = vmax.f32 %v2808, 0.0
    %v3462 = vmax.f32 %v1015, 0.0
    %v3463 = vmax.f32 %v1464, 0.0
    %v3464 = vmax.f32 %v1913, 0.0
    %v3465 = vmax.f32 %v2362, 0.0
    %v3466 = vmax.f32 %v2811, 0.0
    %v3467 = vmax.f32 %v1018, 0.0
    %v3468 = vmax.f32 %v1467, 0.0
    %v3469 = vmax.f32 %v1916, 0.0
    %v3470 = vmax.f32 %v2365, 0.0
    %v3471 = vmax.f32 %v2814, 0.0
    %v3472 = vmax.f32 %v1021, 0.0
    %v3473 = vmax.f32 %v1470, 0.0
    %v3474 = vmax.f32 %v1919, 0.0
    %v3475 = vmax.f32 %v2368, 0.0
    %v3476 = vmax.f32 %v2817, 0.0
    %v3477 = vmax.f32 %v1024, 0.0
    %v3478 = vmax.f32 %v1473, 0.0
    %v3479 = vmax.f32 %v1922, 0.0
    %v3480 = vmax.f32 %v2371, 0.0
    %v3481 = vmax.f32 %v2820, 0.0
    %v3482 = vmax.f32 %v1027, 0.0
    %v3483 = vmax.f32 %v1476, 0.0
    %v3484 = vmax.f32 %v1925, 0.0
    %v3485 = vmax.f32 %v2374, 0.0
    %v3486 = vmax.f32 %v2823, 0.0
    %v3487 = vmax.f32 %v1030, 0.0
    %v3488 = vmax.f32 %v1479, 0.0
    %v3489 = vmax.f32 %v1928, 0.0
    %v3490 = vmax.f32 %v2377, 0.0
    %v3491 = vmax.f32 %v2826, 0.0
    %v3492 = vmax.f32 %v1033, 0.0
    %v3493 = vmax.f32 %v1482, 0.0
    %v3494 = vmax.f32 %v1931, 0.0
    %v3495 = vmax.f32 %v2380, 0.0
    %v3496 = vmax.f32 %v2829, 0.0
    %v3497 = vmax.f32 %v1036, 0.0
    %v3498 = vmax.f32 %v1485, 0.0
    %v3499 = vmax.f32 %v1934, 0.0
    %v3500 = vmax.f32 %v2383, 0.0
    %v3501 = vmax.f32 %v2832, 0.0
    %v3502 = vmax.f32 %v1039, 0.0
    %v3503 = vmax.f32 %v1488, 0.0
    %v3504 = vmax.f32 %v1937, 0.0
    %v3505 = vmax.f32 %v2386, 0.0
    %v3506 = vmax.f32 %v2835, 0.0
    %v3507 = vmax.f32 %v1042, 0.0
    %v3508 = vmax.f32 %v1491, 0.0
    %v3509 = vmax.f32 %v1940, 0.0
    %v3510 = vmax.f32 %v2389, 0.0
    %v3511 = vmax.f32 %v2838, 0.0
    %v3512 = vmax.f32 %v1045, 0.0
    %v3513 = vmax.f32 %v1494, 0.0
    %v3514 = vmax.f32 %v1943, 0.0
    %v3515 = vmax.f32 %v2392, 0.0
    %v3516 = vmax.f32 %v2841, 0.0
    %v3517 = vmax.f32 %v1048, 0.0
    %v3518 = vmax.f32 %v1497, 0.0
    %v3519 = vmax.f32 %v1946, 0.0
    %v3520 = vmax.f32 %v2395, 0.0
    %v3521 = vmax.f32 %v2844, 0.0
    %v3522 = vmax.f32 %v1051, 0.0
    %v3523 = vmax.f32 %v1500, 0.0
    %v3524 = vmax.f32 %v1949, 0.0
    %v3525 = vmax.f32 %v2398, 0.0
    %v3526 = vmax.f32 %v2847, 0.0
    %v3527 = vmax.f32 %v1054, 0.0
    %v3528 = vmax.f32 %v1503, 0.0
    %v3529 = vmax.f32 %v1952, 0.0
    %v3530 = vmax.f32 %v2401, 0.0
    %v3531 = vmax.f32 %v2850, 0.0
    %v3532 = vmax.f32 %v1057, 0.0
    %v3533 = vmax.f32 %v1506, 0.0
    %v3534 = vmax.f32 %v1955, 0.0
    %v3535 = vmax.f32 %v2404, 0.0
    %v3536 = vmax.f32 %v2853, 0.0
    %v3537 = vmax.f32 %v1060, 0.0
    %v3538 = vmax.f32 %v1509, 0.0
    %v3539 = vmax.f32 %v1958, 0.0
    %v3540 = vmax.f32 %v2407, 0.0
    %v3541 = vmax.f32 %v2856, 0.0
    %v3542 = vmax.f32 %v1063, 0.0
    %v3543 = vmax.f32 %v1512, 0.0
    %v3544 = vmax.f32 %v1961, 0.0
    %v3545 = vmax.f32 %v2410, 0.0
    %v3546 = vmax.f32 %v2859, 0.0
    %v3547 = vmax.f32 %v1066, 0.0
    %v3548 = vmax.f32 %v1515, 0.0
    %v3549 = vmax.f32 %v1964, 0.0
    %v3550 = vmax.f32 %v2413, 0.0
    %v3551 = vmax.f32 %v2862, 0.0
    %v3552 = vmax.f32 %v1069, 0.0
    %v3553 = vmax.f32 %v1518, 0.0
    %v3554 = vmax.f32 %v1967, 0.0
    %v3555 = vmax.f32 %v2416, 0.0
    %v3556 = vmax.f32 %v2865, 0.0
    %v3557 = vmax.f32 %v1072, 0.0
    %v3558 = vmax.f32 %v1521, 0.0
    %v3559 = vmax.f32 %v1970, 0.0
    %v3560 = vmax.f32 %v2419, 0.0
    %v3561 = vmax.f32 %v2868, 0.0
    %v3562 = vmax.f32 %v1075, 0.0
    %v3563 = vmax.f32 %v1524, 0.0
    %v3564 = vmax.f32 %v1973, 0.0
    %v3565 = vmax.f32 %v2422, 0.0
    %v3566 = vmax.f32 %v2871, 0.0
    %v3567 = vmax.f32 %v1078, 0.0
    %v3568 = vmax.f32 %v1527, 0.0
    %v3569 = vmax.f32 %v1976, 0.0
    %v3570 = vmax.f32 %v2425, 0.0
    %v3571 = vmax.f32 %v2874, 0.0
    %v3572 = vmax.f32 %v1081, 0.0
    %v3573 = vmax.f32 %v1530, 0.0
    %v3574 = vmax.f32 %v1979, 0.0
    %v3575 = vmax.f32 %v2428, 0.0
    %v3576 = vmax.f32 %v2877, 0.0
    %v3577 = vmax.f32 %v1084, 0.0
    %v3578 = vmax.f32 %v1533, 0.0
    %v3579 = vmax.f32 %v1982, 0.0
    %v3580 = vmax.f32 %v2431, 0.0
    %v3581 = vmax.f32 %v2880, 0.0
    %v3582 = vmax.f32 %v1087, 0.0
    %v3583 = vmax.f32 %v1536, 0.0
    %v3584 = vmax.f32 %v1985, 0.0
    %v3585 = vmax.f32 %v2434, 0.0
    %v3586 = vmax.f32 %v2883, 0.0
    %v3587 = vmax.f32 %v1090, 0.0
    %v3588 = vmax.f32 %v1539, 0.0
    %v3589 = vmax.f32 %v1988, 0.0
    %v3590 = vmax.f32 %v2437, 0.0
    %v3591 = vmax.f32 %v2886, 0.0
    %v3592 = vmax.f32 %v1093, 0.0
    %v3593 = vmax.f32 %v1542, 0.0
    %v3594 = vmax.f32 %v1991, 0.0
    %v3595 = vmax.f32 %v2440, 0.0
    %v3596 = vmax.f32 %v2889, 0.0
    %v3597 = vmax.f32 %v1096, 0.0
    %v3598 = vmax.f32 %v1545, 0.0
    %v3599 = vmax.f32 %v1994, 0.0
    %v3600 = vmax.f32 %v2443, 0.0
    %v3601 = vmax.f32 %v2892, 0.0
    %v3602 = vmax.f32 %v1099, 0.0
    %v3603 = vmax.f32 %v1548, 0.0
    %v3604 = vmax.f32 %v1997, 0.0
    %v3605 = vmax.f32 %v2446, 0.0
    %v3606 = vmax.f32 %v2895, 0.0
    %v3607 = vmax.f32 %v1102, 0.0
    %v3608 = vmax.f32 %v1551, 0.0
    %v3609 = vmax.f32 %v2000, 0.0
    %v3610 = vmax.f32 %v2449, 0.0
    %v3611 = vmax.f32 %v2898, 0.0
    %v3612 = vmax.f32 %v1105, 0.0
    %v3613 = vmax.f32 %v1554, 0.0
    %v3614 = vmax.f32 %v2003, 0.0
    %v3615 = vmax.f32 %v2452, 0.0
    %v3616 = vmax.f32 %v2901, 0.0
    %v3617 = vmax.f32 %v1108, 0.0
    %v3618 = vmax.f32 %v1557, 0.0
    %v3619 = vmax.f32 %v2006, 0.0
    %v3620 = vmax.f32 %v2455, 0.0
    %v3621 = vmax.f32 %v2904, 0.0
    %v3622 = vmax.f32 %v1111, 0.0
    %v3623 = vmax.f32 %v1560, 0.0
    %v3624 = vmax.f32 %v2009, 0.0
    %v3625 = vmax.f32 %v2458, 0.0
    %v3626 = vmax.f32 %v2907, 0.0
    %v3627 = vmax.f32 %v1114, 0.0
    %v3628 = vmax.f32 %v1563, 0.0
    %v3629 = vmax.f32 %v2012, 0.0
    %v3630 = vmax.f32 %v2461, 0.0
    %v3631 = vmax.f32 %v2910, 0.0
    %3632 = vst [vmem:[#allocation2] sm:$0xff] %v2912
    %3633 = vst [vmem:[#allocation2 + $0x8] sm:$0xff] %v2913
    %3634 = vst [vmem:[#allocation2 + $0x10] sm:$0xff] %v2914
    %3635 = vst [vmem:[#allocation2 + $0x18] sm:$0xff] %v2915
    %vm3636 = vcmask 523264
    %3637 = vst.msk [vmem:[#allocation2 + $0x20] sm:$0xff] %vm3636, %v2916
    %3638 = vst [vmem:[#allocation2 + $0x28] sm:$0xff] %v2917
    %3639 = vst [vmem:[#allocation2 + $0x30] sm:$0xff] %v2918
    %3640 = vst [vmem:[#allocation2 + $0x38] sm:$0xff] %v2919
    %3641 = vst [vmem:[#allocation2 + $0x40] sm:$0xff] %v2920
    %3642 = vst.msk [vmem:[#allocation2 + $0x48] sm:$0xff] %vm3636, %v2921
    %3643 = vst [vmem:[#allocation2 + $0x50] sm:$0xff] %v2922
    %3644 = vst [vmem:[#allocation2 + $0x58] sm:$0xff] %v2923
    %3645 = vst [vmem:[#allocation2 + $0x60] sm:$0xff] %v2924
    %3646 = vst [vmem:[#allocation2 + $0x68] sm:$0xff] %v2925
    %3647 = vst.msk [vmem:[#allocation2 + $0x70] sm:$0xff] %vm3636, %v2926
    %3648 = vst [vmem:[#allocation2 + $0x78] sm:$0xff] %v2927
    %3649 = vst [vmem:[#allocation2 + $0x80] sm:$0xff] %v2928
    %3650 = vst [vmem:[#allocation2 + $0x88] sm:$0xff] %v2929
    %3651 = vst [vmem:[#allocation2 + $0x90] sm:$0xff] %v2930
    %3652 = vst.msk [vmem:[#allocation2 + $0x98] sm:$0xff] %vm3636, %v2931
    %3653 = vst [vmem:[#allocation2 + $0xa0] sm:$0xff] %v2932
    %3654 = vst [vmem:[#allocation2 + $0xa8] sm:$0xff] %v2933
    %3655 = vst [vmem:[#allocation2 + $0xb0] sm:$0xff] %v2934
    %3656 = vst [vmem:[#allocation2 + $0xb8] sm:$0xff] %v2935
    %3657 = vst.msk [vmem:[#allocation2 + $0xc0] sm:$0xff] %vm3636, %v2936
    %3658 = vst [vmem:[#allocation2 + $0xc8] sm:$0xff] %v2937
    %3659 = vst [vmem:[#allocation2 + $0xd0] sm:$0xff] %v2938
    %3660 = vst [vmem:[#allocation2 + $0xd8] sm:$0xff] %v2939
    %3661 = vst [vmem:[#allocation2 + $0xe0] sm:$0xff] %v2940
    %3662 = vst.msk [vmem:[#allocation2 + $0xe8] sm:$0xff] %vm3636, %v2941
    %3663 = vst [vmem:[#allocation2 + $0xf0] sm:$0xff] %v2942
    %3664 = vst [vmem:[#allocation2 + $0xf8] sm:$0xff] %v2943
    %3665 = vst [vmem:[#allocation2 + $0x100] sm:$0xff] %v2944
    %3666 = vst [vmem:[#allocation2 + $0x108] sm:$0xff] %v2945
    %3667 = vst.msk [vmem:[#allocation2 + $0x110] sm:$0xff] %vm3636, %v2946
    %3668 = vst [vmem:[#allocation2 + $0x118] sm:$0xff] %v2947
    %3669 = vst [vmem:[#allocation2 + $0x120] sm:$0xff] %v2948
    %3670 = vst [vmem:[#allocation2 + $0x128] sm:$0xff] %v2949
    %3671 = vst [vmem:[#allocation2 + $0x130] sm:$0xff] %v2950
    %3672 = vst.msk [vmem:[#allocation2 + $0x138] sm:$0xff] %vm3636, %v2951
    %3673 = vst [vmem:[#allocation2 + $0x140] sm:$0xff] %v2952
    %3674 = vst [vmem:[#allocation2 + $0x148] sm:$0xff] %v2953
    %3675 = vst [vmem:[#allocation2 + $0x150] sm:$0xff] %v2954
    %3676 = vst [vmem:[#allocation2 + $0x158] sm:$0xff] %v2955
    %3677 = vst.msk [vmem:[#allocation2 + $0x160] sm:$0xff] %vm3636, %v2956
    %3678 = vst [vmem:[#allocation2 + $0x168] sm:$0xff] %v2957
    %3679 = vst [vmem:[#allocation2 + $0x170] sm:$0xff] %v2958
    %3680 = vst [vmem:[#allocation2 + $0x178] sm:$0xff] %v2959
    %3681 = vst [vmem:[#allocation2 + $0x180] sm:$0xff] %v2960
    %3682 = vst.msk [vmem:[#allocation2 + $0x188] sm:$0xff] %vm3636, %v2961
    %3683 = vst [vmem:[#allocation2 + $0x190] sm:$0xff] %v2962
    %3684 = vst [vmem:[#allocation2 + $0x198] sm:$0xff] %v2963
    %3685 = vst [vmem:[#allocation2 + $0x1a0] sm:$0xff] %v2964
    %3686 = vst [vmem:[#allocation2 + $0x1a8] sm:$0xff] %v2965
    %3687 = vst.msk [vmem:[#allocation2 + $0x1b0] sm:$0xff] %vm3636, %v2966
    %3688 = vst [vmem:[#allocation2 + $0x1b8] sm:$0xff] %v2967
    %3689 = vst [vmem:[#allocation2 + $0x1c0] sm:$0xff] %v2968
    %3690 = vst [vmem:[#allocation2 + $0x1c8] sm:$0xff] %v2969
    %3691 = vst [vmem:[#allocation2 + $0x1d0] sm:$0xff] %v2970
    %3692 = vst.msk [vmem:[#allocation2 + $0x1d8] sm:$0xff] %vm3636, %v2971
    %3693 = vst [vmem:[#allocation2 + $0x1e0] sm:$0xff] %v2972
    %3694 = vst [vmem:[#allocation2 + $0x1e8] sm:$0xff] %v2973
    %3695 = vst [vmem:[#allocation2 + $0x1f0] sm:$0xff] %v2974
    %3696 = vst [vmem:[#allocation2 + $0x1f8] sm:$0xff] %v2975
    %3697 = vst.msk [vmem:[#allocation2 + $0x200] sm:$0xff] %vm3636, %v2976
    %3698 = vst [vmem:[#allocation2 + $0x208] sm:$0xff] %v2977
    %3699 = vst [vmem:[#allocation2 + $0x210] sm:$0xff] %v2978
    %3700 = vst [vmem:[#allocation2 + $0x218] sm:$0xff] %v2979
    %3701 = vst [vmem:[#allocation2 + $0x220] sm:$0xff] %v2980
    %3702 = vst.msk [vmem:[#allocation2 + $0x228] sm:$0xff] %vm3636, %v2981
    %3703 = vst [vmem:[#allocation2 + $0x230] sm:$0xff] %v2982
    %3704 = vst [vmem:[#allocation2 + $0x238] sm:$0xff] %v2983
    %3705 = vst [vmem:[#allocation2 + $0x240] sm:$0xff] %v2984
    %3706 = vst [vmem:[#allocation2 + $0x248] sm:$0xff] %v2985
    %3707 = vst.msk [vmem:[#allocation2 + $0x250] sm:$0xff] %vm3636, %v2986
    %3708 = vst [vmem:[#allocation2 + $0x258] sm:$0xff] %v2987
    %3709 = vst [vmem:[#allocation2 + $0x260] sm:$0xff] %v2988
    %3710 = vst [vmem:[#allocation2 + $0x268] sm:$0xff] %v2989
    %3711 = vst [vmem:[#allocation2 + $0x270] sm:$0xff] %v2990
    %3712 = vst.msk [vmem:[#allocation2 + $0x278] sm:$0xff] %vm3636, %v2991
    %3713 = vst [vmem:[#allocation2 + $0x280] sm:$0xff] %v2992
    %3714 = vst [vmem:[#allocation2 + $0x288] sm:$0xff] %v2993
    %3715 = vst [vmem:[#allocation2 + $0x290] sm:$0xff] %v2994
    %3716 = vst [vmem:[#allocation2 + $0x298] sm:$0xff] %v2995
    %3717 = vst.msk [vmem:[#allocation2 + $0x2a0] sm:$0xff] %vm3636, %v2996
    %3718 = vst [vmem:[#allocation2 + $0x2a8] sm:$0xff] %v2997
    %3719 = vst [vmem:[#allocation2 + $0x2b0] sm:$0xff] %v2998
    %3720 = vst [vmem:[#allocation2 + $0x2b8] sm:$0xff] %v2999
    %3721 = vst [vmem:[#allocation2 + $0x2c0] sm:$0xff] %v3000
    %3722 = vst.msk [vmem:[#allocation2 + $0x2c8] sm:$0xff] %vm3636, %v3001
    %3723 = vst [vmem:[#allocation2 + $0x2d0] sm:$0xff] %v3002
    %3724 = vst [vmem:[#allocation2 + $0x2d8] sm:$0xff] %v3003
    %3725 = vst [vmem:[#allocation2 + $0x2e0] sm:$0xff] %v3004
    %3726 = vst [vmem:[#allocation2 + $0x2e8] sm:$0xff] %v3005
    %3727 = vst.msk [vmem:[#allocation2 + $0x2f0] sm:$0xff] %vm3636, %v3006
    %3728 = vst [vmem:[#allocation2 + $0x2f8] sm:$0xff] %v3007
    %3729 = vst [vmem:[#allocation2 + $0x300] sm:$0xff] %v3008
    %3730 = vst [vmem:[#allocation2 + $0x308] sm:$0xff] %v3009
    %3731 = vst [vmem:[#allocation2 + $0x310] sm:$0xff] %v3010
    %3732 = vst.msk [vmem:[#allocation2 + $0x318] sm:$0xff] %vm3636, %v3011
    %3733 = vst [vmem:[#allocation2 + $0x320] sm:$0xff] %v3012
    %3734 = vst [vmem:[#allocation2 + $0x328] sm:$0xff] %v3013
    %3735 = vst [vmem:[#allocation2 + $0x330] sm:$0xff] %v3014
    %3736 = vst [vmem:[#allocation2 + $0x338] sm:$0xff] %v3015
    %3737 = vst.msk [vmem:[#allocation2 + $0x340] sm:$0xff] %vm3636, %v3016
    %3738 = vst [vmem:[#allocation2 + $0x348] sm:$0xff] %v3017
    %3739 = vst [vmem:[#allocation2 + $0x350] sm:$0xff] %v3018
    %3740 = vst [vmem:[#allocation2 + $0x358] sm:$0xff] %v3019
    %3741 = vst [vmem:[#allocation2 + $0x360] sm:$0xff] %v3020
    %3742 = vst.msk [vmem:[#allocation2 + $0x368] sm:$0xff] %vm3636, %v3021
    %3743 = vst [vmem:[#allocation2 + $0x370] sm:$0xff] %v3022
    %3744 = vst [vmem:[#allocation2 + $0x378] sm:$0xff] %v3023
    %3745 = vst [vmem:[#allocation2 + $0x380] sm:$0xff] %v3024
    %3746 = vst [vmem:[#allocation2 + $0x388] sm:$0xff] %v3025
    %3747 = vst.msk [vmem:[#allocation2 + $0x390] sm:$0xff] %vm3636, %v3026
    %3748 = vst [vmem:[#allocation2 + $0x398] sm:$0xff] %v3027
    %3749 = vst [vmem:[#allocation2 + $0x3a0] sm:$0xff] %v3028
    %3750 = vst [vmem:[#allocation2 + $0x3a8] sm:$0xff] %v3029
    %3751 = vst [vmem:[#allocation2 + $0x3b0] sm:$0xff] %v3030
    %3752 = vst.msk [vmem:[#allocation2 + $0x3b8] sm:$0xff] %vm3636, %v3031
    %3753 = vst [vmem:[#allocation2 + $0x3c0] sm:$0xff] %v3032
    %3754 = vst [vmem:[#allocation2 + $0x3c8] sm:$0xff] %v3033
    %3755 = vst [vmem:[#allocation2 + $0x3d0] sm:$0xff] %v3034
    %3756 = vst [vmem:[#allocation2 + $0x3d8] sm:$0xff] %v3035
    %3757 = vst.msk [vmem:[#allocation2 + $0x3e0] sm:$0xff] %vm3636, %v3036
    %3758 = vst [vmem:[#allocation2 + $0x3e8] sm:$0xff] %v3037
    %3759 = vst [vmem:[#allocation2 + $0x3f0] sm:$0xff] %v3038
    %3760 = vst [vmem:[#allocation2 + $0x3f8] sm:$0xff] %v3039
    %3761 = vst [vmem:[#allocation2 + $0x400] sm:$0xff] %v3040
    %3762 = vst.msk [vmem:[#allocation2 + $0x408] sm:$0xff] %vm3636, %v3041
    %3763 = vst [vmem:[#allocation2 + $0x410] sm:$0xff] %v3042
    %3764 = vst [vmem:[#allocation2 + $0x418] sm:$0xff] %v3043
    %3765 = vst [vmem:[#allocation2 + $0x420] sm:$0xff] %v3044
    %3766 = vst [vmem:[#allocation2 + $0x428] sm:$0xff] %v3045
    %3767 = vst.msk [vmem:[#allocation2 + $0x430] sm:$0xff] %vm3636, %v3046
    %3768 = vst [vmem:[#allocation2 + $0x438] sm:$0xff] %v3047
    %3769 = vst [vmem:[#allocation2 + $0x440] sm:$0xff] %v3048
    %3770 = vst [vmem:[#allocation2 + $0x448] sm:$0xff] %v3049
    %3771 = vst [vmem:[#allocation2 + $0x450] sm:$0xff] %v3050
    %3772 = vst.msk [vmem:[#allocation2 + $0x458] sm:$0xff] %vm3636, %v3051
    %3773 = vst [vmem:[#allocation2 + $0x460] sm:$0xff] %v3052
    %3774 = vst [vmem:[#allocation2 + $0x468] sm:$0xff] %v3053
    %3775 = vst [vmem:[#allocation2 + $0x470] sm:$0xff] %v3054
    %3776 = vst [vmem:[#allocation2 + $0x478] sm:$0xff] %v3055
    %3777 = vst.msk [vmem:[#allocation2 + $0x480] sm:$0xff] %vm3636, %v3056
    %3778 = vst [vmem:[#allocation2 + $0x488] sm:$0xff] %v3057
    %3779 = vst [vmem:[#allocation2 + $0x490] sm:$0xff] %v3058
    %3780 = vst [vmem:[#allocation2 + $0x498] sm:$0xff] %v3059
    %3781 = vst [vmem:[#allocation2 + $0x4a0] sm:$0xff] %v3060
    %3782 = vst.msk [vmem:[#allocation2 + $0x4a8] sm:$0xff] %vm3636, %v3061
    %3783 = vst [vmem:[#allocation2 + $0x4b0] sm:$0xff] %v3062
    %3784 = vst [vmem:[#allocation2 + $0x4b8] sm:$0xff] %v3063
    %3785 = vst [vmem:[#allocation2 + $0x4c0] sm:$0xff] %v3064
    %3786 = vst [vmem:[#allocation2 + $0x4c8] sm:$0xff] %v3065
    %3787 = vst.msk [vmem:[#allocation2 + $0x4d0] sm:$0xff] %vm3636, %v3066
    %3788 = vst [vmem:[#allocation2 + $0x4d8] sm:$0xff] %v3067
    %3789 = vst [vmem:[#allocation2 + $0x4e0] sm:$0xff] %v3068
    %3790 = vst [vmem:[#allocation2 + $0x4e8] sm:$0xff] %v3069
    %3791 = vst [vmem:[#allocation2 + $0x4f0] sm:$0xff] %v3070
    %3792 = vst.msk [vmem:[#allocation2 + $0x4f8] sm:$0xff] %vm3636, %v3071
    %3793 = vst [vmem:[#allocation2 + $0x500] sm:$0xff] %v3072
    %3794 = vst [vmem:[#allocation2 + $0x508] sm:$0xff] %v3073
    %3795 = vst [vmem:[#allocation2 + $0x510] sm:$0xff] %v3074
    %3796 = vst [vmem:[#allocation2 + $0x518] sm:$0xff] %v3075
    %3797 = vst.msk [vmem:[#allocation2 + $0x520] sm:$0xff] %vm3636, %v3076
    %3798 = vst [vmem:[#allocation2 + $0x528] sm:$0xff] %v3077
    %3799 = vst [vmem:[#allocation2 + $0x530] sm:$0xff] %v3078
    %3800 = vst [vmem:[#allocation2 + $0x538] sm:$0xff] %v3079
    %3801 = vst [vmem:[#allocation2 + $0x540] sm:$0xff] %v3080
    %3802 = vst.msk [vmem:[#allocation2 + $0x548] sm:$0xff] %vm3636, %v3081
    %3803 = vst [vmem:[#allocation2 + $0x550] sm:$0xff] %v3082
    %3804 = vst [vmem:[#allocation2 + $0x558] sm:$0xff] %v3083
    %3805 = vst [vmem:[#allocation2 + $0x560] sm:$0xff] %v3084
    %3806 = vst [vmem:[#allocation2 + $0x568] sm:$0xff] %v3085
    %3807 = vst.msk [vmem:[#allocation2 + $0x570] sm:$0xff] %vm3636, %v3086
    %3808 = vst [vmem:[#allocation2 + $0x578] sm:$0xff] %v3087
    %3809 = vst [vmem:[#allocation2 + $0x580] sm:$0xff] %v3088
    %3810 = vst [vmem:[#allocation2 + $0x588] sm:$0xff] %v3089
    %3811 = vst [vmem:[#allocation2 + $0x590] sm:$0xff] %v3090
    %3812 = vst.msk [vmem:[#allocation2 + $0x598] sm:$0xff] %vm3636, %v3091
    %3813 = vst [vmem:[#allocation2 + $0x5a0] sm:$0xff] %v3092
    %3814 = vst [vmem:[#allocation2 + $0x5a8] sm:$0xff] %v3093
    %3815 = vst [vmem:[#allocation2 + $0x5b0] sm:$0xff] %v3094
    %3816 = vst [vmem:[#allocation2 + $0x5b8] sm:$0xff] %v3095
    %3817 = vst.msk [vmem:[#allocation2 + $0x5c0] sm:$0xff] %vm3636, %v3096
    %3818 = vst [vmem:[#allocation2 + $0x5c8] sm:$0xff] %v3097
    %3819 = vst [vmem:[#allocation2 + $0x5d0] sm:$0xff] %v3098
    %3820 = vst [vmem:[#allocation2 + $0x5d8] sm:$0xff] %v3099
    %3821 = vst [vmem:[#allocation2 + $0x5e0] sm:$0xff] %v3100
    %3822 = vst.msk [vmem:[#allocation2 + $0x5e8] sm:$0xff] %vm3636, %v3101
    %3823 = vst [vmem:[#allocation2 + $0x5f0] sm:$0xff] %v3102
    %3824 = vst [vmem:[#allocation2 + $0x5f8] sm:$0xff] %v3103
    %3825 = vst [vmem:[#allocation2 + $0x600] sm:$0xff] %v3104
    %3826 = vst [vmem:[#allocation2 + $0x608] sm:$0xff] %v3105
    %3827 = vst.msk [vmem:[#allocation2 + $0x610] sm:$0xff] %vm3636, %v3106
    %3828 = vst [vmem:[#allocation2 + $0x618] sm:$0xff] %v3107
    %3829 = vst [vmem:[#allocation2 + $0x620] sm:$0xff] %v3108
    %3830 = vst [vmem:[#allocation2 + $0x628] sm:$0xff] %v3109
    %3831 = vst [vmem:[#allocation2 + $0x630] sm:$0xff] %v3110
    %3832 = vst.msk [vmem:[#allocation2 + $0x638] sm:$0xff] %vm3636, %v3111
    %3833 = vst [vmem:[#allocation2 + $0x640] sm:$0xff] %v3112
    %3834 = vst [vmem:[#allocation2 + $0x648] sm:$0xff] %v3113
    %3835 = vst [vmem:[#allocation2 + $0x650] sm:$0xff] %v3114
    %3836 = vst [vmem:[#allocation2 + $0x658] sm:$0xff] %v3115
    %3837 = vst.msk [vmem:[#allocation2 + $0x660] sm:$0xff] %vm3636, %v3116
    %3838 = vst [vmem:[#allocation2 + $0x668] sm:$0xff] %v3117
    %3839 = vst [vmem:[#allocation2 + $0x670] sm:$0xff] %v3118
    %3840 = vst [vmem:[#allocation2 + $0x678] sm:$0xff] %v3119
    %3841 = vst [vmem:[#allocation2 + $0x680] sm:$0xff] %v3120
    %3842 = vst.msk [vmem:[#allocation2 + $0x688] sm:$0xff] %vm3636, %v3121
    %3843 = vst [vmem:[#allocation2 + $0x690] sm:$0xff] %v3122
    %3844 = vst [vmem:[#allocation2 + $0x698] sm:$0xff] %v3123
    %3845 = vst [vmem:[#allocation2 + $0x6a0] sm:$0xff] %v3124
    %3846 = vst [vmem:[#allocation2 + $0x6a8] sm:$0xff] %v3125
    %3847 = vst.msk [vmem:[#allocation2 + $0x6b0] sm:$0xff] %vm3636, %v3126
    %3848 = vst [vmem:[#allocation2 + $0x6b8] sm:$0xff] %v3127
    %3849 = vst [vmem:[#allocation2 + $0x6c0] sm:$0xff] %v3128
    %3850 = vst [vmem:[#allocation2 + $0x6c8] sm:$0xff] %v3129
    %3851 = vst [vmem:[#allocation2 + $0x6d0] sm:$0xff] %v3130
    %3852 = vst.msk [vmem:[#allocation2 + $0x6d8] sm:$0xff] %vm3636, %v3131
    %3853 = vst [vmem:[#allocation2 + $0x6e0] sm:$0xff] %v3132
    %3854 = vst [vmem:[#allocation2 + $0x6e8] sm:$0xff] %v3133
    %3855 = vst [vmem:[#allocation2 + $0x6f0] sm:$0xff] %v3134
    %3856 = vst [vmem:[#allocation2 + $0x6f8] sm:$0xff] %v3135
    %3857 = vst.msk [vmem:[#allocation2 + $0x700] sm:$0xff] %vm3636, %v3136
    %3858 = vst [vmem:[#allocation2 + $0x708] sm:$0xff] %v3137
    %3859 = vst [vmem:[#allocation2 + $0x710] sm:$0xff] %v3138
    %3860 = vst [vmem:[#allocation2 + $0x718] sm:$0xff] %v3139
    %3861 = vst [vmem:[#allocation2 + $0x720] sm:$0xff] %v3140
    %3862 = vst.msk [vmem:[#allocation2 + $0x728] sm:$0xff] %vm3636, %v3141
    %3863 = vst [vmem:[#allocation2 + $0x730] sm:$0xff] %v3142
    %3864 = vst [vmem:[#allocation2 + $0x738] sm:$0xff] %v3143
    %3865 = vst [vmem:[#allocation2 + $0x740] sm:$0xff] %v3144
    %3866 = vst [vmem:[#allocation2 + $0x748] sm:$0xff] %v3145
    %3867 = vst.msk [vmem:[#allocation2 + $0x750] sm:$0xff] %vm3636, %v3146
    %3868 = vst [vmem:[#allocation2 + $0x758] sm:$0xff] %v3147
    %3869 = vst [vmem:[#allocation2 + $0x760] sm:$0xff] %v3148
    %3870 = vst [vmem:[#allocation2 + $0x768] sm:$0xff] %v3149
    %3871 = vst [vmem:[#allocation2 + $0x770] sm:$0xff] %v3150
    %3872 = vst.msk [vmem:[#allocation2 + $0x778] sm:$0xff] %vm3636, %v3151
    %3873 = vst [vmem:[#allocation2 + $0x780] sm:$0xff] %v3152
    %3874 = vst [vmem:[#allocation2 + $0x788] sm:$0xff] %v3153
    %3875 = vst [vmem:[#allocation2 + $0x790] sm:$0xff] %v3154
    %3876 = vst [vmem:[#allocation2 + $0x798] sm:$0xff] %v3155
    %3877 = vst.msk [vmem:[#allocation2 + $0x7a0] sm:$0xff] %vm3636, %v3156
    %3878 = vst [vmem:[#allocation2 + $0x7a8] sm:$0xff] %v3157
    %3879 = vst [vmem:[#allocation2 + $0x7b0] sm:$0xff] %v3158
    %3880 = vst [vmem:[#allocation2 + $0x7b8] sm:$0xff] %v3159
    %3881 = vst [vmem:[#allocation2 + $0x7c0] sm:$0xff] %v3160
    %3882 = vst.msk [vmem:[#allocation2 + $0x7c8] sm:$0xff] %vm3636, %v3161
    %3883 = vst [vmem:[#allocation2 + $0x7d0] sm:$0xff] %v3162
    %3884 = vst [vmem:[#allocation2 + $0x7d8] sm:$0xff] %v3163
    %3885 = vst [vmem:[#allocation2 + $0x7e0] sm:$0xff] %v3164
    %3886 = vst [vmem:[#allocation2 + $0x7e8] sm:$0xff] %v3165
    %3887 = vst.msk [vmem:[#allocation2 + $0x7f0] sm:$0xff] %vm3636, %v3166
    %3888 = vst [vmem:[#allocation2 + $0x7f8] sm:$0xff] %v3167
    %3889 = vst [vmem:[#allocation2 + $0x800] sm:$0xff] %v3168
    %3890 = vst [vmem:[#allocation2 + $0x808] sm:$0xff] %v3169
    %3891 = vst [vmem:[#allocation2 + $0x810] sm:$0xff] %v3170
    %3892 = vst.msk [vmem:[#allocation2 + $0x818] sm:$0xff] %vm3636, %v3171
    %3893 = vst [vmem:[#allocation2 + $0x820] sm:$0xff] %v3172
    %3894 = vst [vmem:[#allocation2 + $0x828] sm:$0xff] %v3173
    %3895 = vst [vmem:[#allocation2 + $0x830] sm:$0xff] %v3174
    %3896 = vst [vmem:[#allocation2 + $0x838] sm:$0xff] %v3175
    %3897 = vst.msk [vmem:[#allocation2 + $0x840] sm:$0xff] %vm3636, %v3176
    %3898 = vst [vmem:[#allocation2 + $0x848] sm:$0xff] %v3177
    %3899 = vst [vmem:[#allocation2 + $0x850] sm:$0xff] %v3178
    %3900 = vst [vmem:[#allocation2 + $0x858] sm:$0xff] %v3179
    %3901 = vst [vmem:[#allocation2 + $0x860] sm:$0xff] %v3180
    %3902 = vst.msk [vmem:[#allocation2 + $0x868] sm:$0xff] %vm3636, %v3181
    %3903 = vst [vmem:[#allocation2 + $0x870] sm:$0xff] %v3182
    %3904 = vst [vmem:[#allocation2 + $0x878] sm:$0xff] %v3183
    %3905 = vst [vmem:[#allocation2 + $0x880] sm:$0xff] %v3184
    %3906 = vst [vmem:[#allocation2 + $0x888] sm:$0xff] %v3185
    %3907 = vst.msk [vmem:[#allocation2 + $0x890] sm:$0xff] %vm3636, %v3186
    %3908 = vst [vmem:[#allocation2 + $0x898] sm:$0xff] %v3187
    %3909 = vst [vmem:[#allocation2 + $0x8a0] sm:$0xff] %v3188
    %3910 = vst [vmem:[#allocation2 + $0x8a8] sm:$0xff] %v3189
    %3911 = vst [vmem:[#allocation2 + $0x8b0] sm:$0xff] %v3190
    %3912 = vst.msk [vmem:[#allocation2 + $0x8b8] sm:$0xff] %vm3636, %v3191
    %3913 = vst [vmem:[#allocation2 + $0x8c0] sm:$0xff] %v3192
    %3914 = vst [vmem:[#allocation2 + $0x8c8] sm:$0xff] %v3193
    %3915 = vst [vmem:[#allocation2 + $0x8d0] sm:$0xff] %v3194
    %3916 = vst [vmem:[#allocation2 + $0x8d8] sm:$0xff] %v3195
    %3917 = vst.msk [vmem:[#allocation2 + $0x8e0] sm:$0xff] %vm3636, %v3196
    %3918 = vst [vmem:[#allocation2 + $0x8e8] sm:$0xff] %v3197
    %3919 = vst [vmem:[#allocation2 + $0x8f0] sm:$0xff] %v3198
    %3920 = vst [vmem:[#allocation2 + $0x8f8] sm:$0xff] %v3199
    %3921 = vst [vmem:[#allocation2 + $0x900] sm:$0xff] %v3200
    %3922 = vst.msk [vmem:[#allocation2 + $0x908] sm:$0xff] %vm3636, %v3201
    %3923 = vst [vmem:[#allocation2 + $0x910] sm:$0xff] %v3202
    %3924 = vst [vmem:[#allocation2 + $0x918] sm:$0xff] %v3203
    %3925 = vst [vmem:[#allocation2 + $0x920] sm:$0xff] %v3204
    %3926 = vst [vmem:[#allocation2 + $0x928] sm:$0xff] %v3205
    %3927 = vst.msk [vmem:[#allocation2 + $0x930] sm:$0xff] %vm3636, %v3206
    %3928 = vst [vmem:[#allocation2 + $0x938] sm:$0xff] %v3207
    %3929 = vst [vmem:[#allocation2 + $0x940] sm:$0xff] %v3208
    %3930 = vst [vmem:[#allocation2 + $0x948] sm:$0xff] %v3209
    %3931 = vst [vmem:[#allocation2 + $0x950] sm:$0xff] %v3210
    %3932 = vst.msk [vmem:[#allocation2 + $0x958] sm:$0xff] %vm3636, %v3211
    %3933 = vst [vmem:[#allocation2 + $0x960] sm:$0xff] %v3212
    %3934 = vst [vmem:[#allocation2 + $0x968] sm:$0xff] %v3213
    %3935 = vst [vmem:[#allocation2 + $0x970] sm:$0xff] %v3214
    %3936 = vst [vmem:[#allocation2 + $0x978] sm:$0xff] %v3215
    %3937 = vst.msk [vmem:[#allocation2 + $0x980] sm:$0xff] %vm3636, %v3216
    %3938 = vst [vmem:[#allocation2 + $0x988] sm:$0xff] %v3217
    %3939 = vst [vmem:[#allocation2 + $0x990] sm:$0xff] %v3218
    %3940 = vst [vmem:[#allocation2 + $0x998] sm:$0xff] %v3219
    %3941 = vst [vmem:[#allocation2 + $0x9a0] sm:$0xff] %v3220
    %3942 = vst.msk [vmem:[#allocation2 + $0x9a8] sm:$0xff] %vm3636, %v3221
    %3943 = vst [vmem:[#allocation2 + $0x9b0] sm:$0xff] %v3222
    %3944 = vst [vmem:[#allocation2 + $0x9b8] sm:$0xff] %v3223
    %3945 = vst [vmem:[#allocation2 + $0x9c0] sm:$0xff] %v3224
    %3946 = vst [vmem:[#allocation2 + $0x9c8] sm:$0xff] %v3225
    %3947 = vst.msk [vmem:[#allocation2 + $0x9d0] sm:$0xff] %vm3636, %v3226
    %3948 = vst [vmem:[#allocation2 + $0x9d8] sm:$0xff] %v3227
    %3949 = vst [vmem:[#allocation2 + $0x9e0] sm:$0xff] %v3228
    %3950 = vst [vmem:[#allocation2 + $0x9e8] sm:$0xff] %v3229
    %3951 = vst [vmem:[#allocation2 + $0x9f0] sm:$0xff] %v3230
    %3952 = vst.msk [vmem:[#allocation2 + $0x9f8] sm:$0xff] %vm3636, %v3231
    %3953 = vst [vmem:[#allocation2 + $0xa00] sm:$0xff] %v3232
    %3954 = vst [vmem:[#allocation2 + $0xa08] sm:$0xff] %v3233
    %3955 = vst [vmem:[#allocation2 + $0xa10] sm:$0xff] %v3234
    %3956 = vst [vmem:[#allocation2 + $0xa18] sm:$0xff] %v3235
    %3957 = vst.msk [vmem:[#allocation2 + $0xa20] sm:$0xff] %vm3636, %v3236
    %3958 = vst [vmem:[#allocation2 + $0xa28] sm:$0xff] %v3237
    %3959 = vst [vmem:[#allocation2 + $0xa30] sm:$0xff] %v3238
    %3960 = vst [vmem:[#allocation2 + $0xa38] sm:$0xff] %v3239
    %3961 = vst [vmem:[#allocation2 + $0xa40] sm:$0xff] %v3240
    %3962 = vst.msk [vmem:[#allocation2 + $0xa48] sm:$0xff] %vm3636, %v3241
    %3963 = vst [vmem:[#allocation2 + $0xa50] sm:$0xff] %v3242
    %3964 = vst [vmem:[#allocation2 + $0xa58] sm:$0xff] %v3243
    %3965 = vst [vmem:[#allocation2 + $0xa60] sm:$0xff] %v3244
    %3966 = vst [vmem:[#allocation2 + $0xa68] sm:$0xff] %v3245
    %3967 = vst.msk [vmem:[#allocation2 + $0xa70] sm:$0xff] %vm3636, %v3246
    %3968 = vst [vmem:[#allocation2 + $0xa78] sm:$0xff] %v3247
    %3969 = vst [vmem:[#allocation2 + $0xa80] sm:$0xff] %v3248
    %3970 = vst [vmem:[#allocation2 + $0xa88] sm:$0xff] %v3249
    %3971 = vst [vmem:[#allocation2 + $0xa90] sm:$0xff] %v3250
    %3972 = vst.msk [vmem:[#allocation2 + $0xa98] sm:$0xff] %vm3636, %v3251
    %3973 = vst [vmem:[#allocation2 + $0xaa0] sm:$0xff] %v3252
    %3974 = vst [vmem:[#allocation2 + $0xaa8] sm:$0xff] %v3253
    %3975 = vst [vmem:[#allocation2 + $0xab0] sm:$0xff] %v3254
    %3976 = vst [vmem:[#allocation2 + $0xab8] sm:$0xff] %v3255
    %3977 = vst.msk [vmem:[#allocation2 + $0xac0] sm:$0xff] %vm3636, %v3256
    %3978 = vst [vmem:[#allocation2 + $0xac8] sm:$0xff] %v3257
    %3979 = vst [vmem:[#allocation2 + $0xad0] sm:$0xff] %v3258
    %3980 = vst [vmem:[#allocation2 + $0xad8] sm:$0xff] %v3259
    %3981 = vst [vmem:[#allocation2 + $0xae0] sm:$0xff] %v3260
    %3982 = vst.msk [vmem:[#allocation2 + $0xae8] sm:$0xff] %vm3636, %v3261
    %3983 = vst [vmem:[#allocation2 + $0xaf0] sm:$0xff] %v3262
    %3984 = vst [vmem:[#allocation2 + $0xaf8] sm:$0xff] %v3263
    %3985 = vst [vmem:[#allocation2 + $0xb00] sm:$0xff] %v3264
    %3986 = vst [vmem:[#allocation2 + $0xb08] sm:$0xff] %v3265
    %3987 = vst.msk [vmem:[#allocation2 + $0xb10] sm:$0xff] %vm3636, %v3266
    %3988 = vst [vmem:[#allocation2 + $0xb18] sm:$0xff] %v3267
    %3989 = vst [vmem:[#allocation2 + $0xb20] sm:$0xff] %v3268
    %3990 = vst [vmem:[#allocation2 + $0xb28] sm:$0xff] %v3269
    %3991 = vst [vmem:[#allocation2 + $0xb30] sm:$0xff] %v3270
    %3992 = vst.msk [vmem:[#allocation2 + $0xb38] sm:$0xff] %vm3636, %v3271
    %3993 = vst [vmem:[#allocation2 + $0xb40] sm:$0xff] %v3272
    %3994 = vst [vmem:[#allocation2 + $0xb48] sm:$0xff] %v3273
    %3995 = vst [vmem:[#allocation2 + $0xb50] sm:$0xff] %v3274
    %3996 = vst [vmem:[#allocation2 + $0xb58] sm:$0xff] %v3275
    %3997 = vst.msk [vmem:[#allocation2 + $0xb60] sm:$0xff] %vm3636, %v3276
    %3998 = vst [vmem:[#allocation2 + $0xb68] sm:$0xff] %v3277
    %3999 = vst [vmem:[#allocation2 + $0xb70] sm:$0xff] %v3278
    %4000 = vst [vmem:[#allocation2 + $0xb78] sm:$0xff] %v3279
    %4001 = vst [vmem:[#allocation2 + $0xb80] sm:$0xff] %v3280
    %4002 = vst.msk [vmem:[#allocation2 + $0xb88] sm:$0xff] %vm3636, %v3281
    %4003 = vst [vmem:[#allocation2 + $0xb90] sm:$0xff] %v3282
    %4004 = vst [vmem:[#allocation2 + $0xb98] sm:$0xff] %v3283
    %4005 = vst [vmem:[#allocation2 + $0xba0] sm:$0xff] %v3284
    %4006 = vst [vmem:[#allocation2 + $0xba8] sm:$0xff] %v3285
    %4007 = vst.msk [vmem:[#allocation2 + $0xbb0] sm:$0xff] %vm3636, %v3286
    %4008 = vst [vmem:[#allocation2 + $0xbb8] sm:$0xff] %v3287
    %4009 = vst [vmem:[#allocation2 + $0xbc0] sm:$0xff] %v3288
    %4010 = vst [vmem:[#allocation2 + $0xbc8] sm:$0xff] %v3289
    %4011 = vst [vmem:[#allocation2 + $0xbd0] sm:$0xff] %v3290
    %4012 = vst.msk [vmem:[#allocation2 + $0xbd8] sm:$0xff] %vm3636, %v3291
    %4013 = vst [vmem:[#allocation2 + $0xbe0] sm:$0xff] %v3292
    %4014 = vst [vmem:[#allocation2 + $0xbe8] sm:$0xff] %v3293
    %4015 = vst [vmem:[#allocation2 + $0xbf0] sm:$0xff] %v3294
    %4016 = vst [vmem:[#allocation2 + $0xbf8] sm:$0xff] %v3295
    %4017 = vst.msk [vmem:[#allocation2 + $0xc00] sm:$0xff] %vm3636, %v3296
    %4018 = vst [vmem:[#allocation2 + $0xc08] sm:$0xff] %v3297
    %4019 = vst [vmem:[#allocation2 + $0xc10] sm:$0xff] %v3298
    %4020 = vst [vmem:[#allocation2 + $0xc18] sm:$0xff] %v3299
    %4021 = vst [vmem:[#allocation2 + $0xc20] sm:$0xff] %v3300
    %4022 = vst.msk [vmem:[#allocation2 + $0xc28] sm:$0xff] %vm3636, %v3301
    %4023 = vst [vmem:[#allocation2 + $0xc30] sm:$0xff] %v3302
    %4024 = vst [vmem:[#allocation2 + $0xc38] sm:$0xff] %v3303
    %4025 = vst [vmem:[#allocation2 + $0xc40] sm:$0xff] %v3304
    %4026 = vst [vmem:[#allocation2 + $0xc48] sm:$0xff] %v3305
    %4027 = vst.msk [vmem:[#allocation2 + $0xc50] sm:$0xff] %vm3636, %v3306
    %4028 = vst [vmem:[#allocation2 + $0xc58] sm:$0xff] %v3307
    %4029 = vst [vmem:[#allocation2 + $0xc60] sm:$0xff] %v3308
    %4030 = vst [vmem:[#allocation2 + $0xc68] sm:$0xff] %v3309
    %4031 = vst [vmem:[#allocation2 + $0xc70] sm:$0xff] %v3310
    %4032 = vst.msk [vmem:[#allocation2 + $0xc78] sm:$0xff] %vm3636, %v3311
    %4033 = vst [vmem:[#allocation2 + $0xc80] sm:$0xff] %v3312
    %4034 = vst [vmem:[#allocation2 + $0xc88] sm:$0xff] %v3313
    %4035 = vst [vmem:[#allocation2 + $0xc90] sm:$0xff] %v3314
    %4036 = vst [vmem:[#allocation2 + $0xc98] sm:$0xff] %v3315
    %4037 = vst.msk [vmem:[#allocation2 + $0xca0] sm:$0xff] %vm3636, %v3316
    %4038 = vst [vmem:[#allocation2 + $0xca8] sm:$0xff] %v3317
    %4039 = vst [vmem:[#allocation2 + $0xcb0] sm:$0xff] %v3318
    %4040 = vst [vmem:[#allocation2 + $0xcb8] sm:$0xff] %v3319
    %4041 = vst [vmem:[#allocation2 + $0xcc0] sm:$0xff] %v3320
    %4042 = vst.msk [vmem:[#allocation2 + $0xcc8] sm:$0xff] %vm3636, %v3321
    %4043 = vst [vmem:[#allocation2 + $0xcd0] sm:$0xff] %v3322
    %4044 = vst [vmem:[#allocation2 + $0xcd8] sm:$0xff] %v3323
    %4045 = vst [vmem:[#allocation2 + $0xce0] sm:$0xff] %v3324
    %4046 = vst [vmem:[#allocation2 + $0xce8] sm:$0xff] %v3325
    %4047 = vst.msk [vmem:[#allocation2 + $0xcf0] sm:$0xff] %vm3636, %v3326
    %4048 = vst [vmem:[#allocation2 + $0xcf8] sm:$0xff] %v3327
    %4049 = vst [vmem:[#allocation2 + $0xd00] sm:$0xff] %v3328
    %4050 = vst [vmem:[#allocation2 + $0xd08] sm:$0xff] %v3329
    %4051 = vst [vmem:[#allocation2 + $0xd10] sm:$0xff] %v3330
    %4052 = vst.msk [vmem:[#allocation2 + $0xd18] sm:$0xff] %vm3636, %v3331
    %4053 = vst [vmem:[#allocation2 + $0xd20] sm:$0xff] %v3332
    %4054 = vst [vmem:[#allocation2 + $0xd28] sm:$0xff] %v3333
    %4055 = vst [vmem:[#allocation2 + $0xd30] sm:$0xff] %v3334
    %4056 = vst [vmem:[#allocation2 + $0xd38] sm:$0xff] %v3335
    %4057 = vst.msk [vmem:[#allocation2 + $0xd40] sm:$0xff] %vm3636, %v3336
    %4058 = vst [vmem:[#allocation2 + $0xd48] sm:$0xff] %v3337
    %4059 = vst [vmem:[#allocation2 + $0xd50] sm:$0xff] %v3338
    %4060 = vst [vmem:[#allocation2 + $0xd58] sm:$0xff] %v3339
    %4061 = vst [vmem:[#allocation2 + $0xd60] sm:$0xff] %v3340
    %4062 = vst.msk [vmem:[#allocation2 + $0xd68] sm:$0xff] %vm3636, %v3341
    %4063 = vst [vmem:[#allocation2 + $0xd70] sm:$0xff] %v3342
    %4064 = vst [vmem:[#allocation2 + $0xd78] sm:$0xff] %v3343
    %4065 = vst [vmem:[#allocation2 + $0xd80] sm:$0xff] %v3344
    %4066 = vst [vmem:[#allocation2 + $0xd88] sm:$0xff] %v3345
    %4067 = vst.msk [vmem:[#allocation2 + $0xd90] sm:$0xff] %vm3636, %v3346
    %4068 = vst [vmem:[#allocation2 + $0xd98] sm:$0xff] %v3347
    %4069 = vst [vmem:[#allocation2 + $0xda0] sm:$0xff] %v3348
    %4070 = vst [vmem:[#allocation2 + $0xda8] sm:$0xff] %v3349
    %4071 = vst [vmem:[#allocation2 + $0xdb0] sm:$0xff] %v3350
    %4072 = vst.msk [vmem:[#allocation2 + $0xdb8] sm:$0xff] %vm3636, %v3351
    %4073 = vst [vmem:[#allocation2 + $0xdc0] sm:$0xff] %v3352
    %4074 = vst [vmem:[#allocation2 + $0xdc8] sm:$0xff] %v3353
    %4075 = vst [vmem:[#allocation2 + $0xdd0] sm:$0xff] %v3354
    %4076 = vst [vmem:[#allocation2 + $0xdd8] sm:$0xff] %v3355
    %4077 = vst.msk [vmem:[#allocation2 + $0xde0] sm:$0xff] %vm3636, %v3356
    %4078 = vst [vmem:[#allocation2 + $0xde8] sm:$0xff] %v3357
    %4079 = vst [vmem:[#allocation2 + $0xdf0] sm:$0xff] %v3358
    %4080 = vst [vmem:[#allocation2 + $0xdf8] sm:$0xff] %v3359
    %4081 = vst [vmem:[#allocation2 + $0xe00] sm:$0xff] %v3360
    %4082 = vst.msk [vmem:[#allocation2 + $0xe08] sm:$0xff] %vm3636, %v3361
    %4083 = vst [vmem:[#allocation2 + $0xe10] sm:$0xff] %v3362
    %4084 = vst [vmem:[#allocation2 + $0xe18] sm:$0xff] %v3363
    %4085 = vst [vmem:[#allocation2 + $0xe20] sm:$0xff] %v3364
    %4086 = vst [vmem:[#allocation2 + $0xe28] sm:$0xff] %v3365
    %4087 = vst.msk [vmem:[#allocation2 + $0xe30] sm:$0xff] %vm3636, %v3366
    %4088 = vst [vmem:[#allocation2 + $0xe38] sm:$0xff] %v3367
    %4089 = vst [vmem:[#allocation2 + $0xe40] sm:$0xff] %v3368
    %4090 = vst [vmem:[#allocation2 + $0xe48] sm:$0xff] %v3369
    %4091 = vst [vmem:[#allocation2 + $0xe50] sm:$0xff] %v3370
    %4092 = vst.msk [vmem:[#allocation2 + $0xe58] sm:$0xff] %vm3636, %v3371
    %4093 = vst [vmem:[#allocation2 + $0xe60] sm:$0xff] %v3372
    %4094 = vst [vmem:[#allocation2 + $0xe68] sm:$0xff] %v3373
    %4095 = vst [vmem:[#allocation2 + $0xe70] sm:$0xff] %v3374
    %4096 = vst [vmem:[#allocation2 + $0xe78] sm:$0xff] %v3375
    %4097 = vst.msk [vmem:[#allocation2 + $0xe80] sm:$0xff] %vm3636, %v3376
    %4098 = vst [vmem:[#allocation2 + $0xe88] sm:$0xff] %v3377
    %4099 = vst [vmem:[#allocation2 + $0xe90] sm:$0xff] %v3378
    %4100 = vst [vmem:[#allocation2 + $0xe98] sm:$0xff] %v3379
    %4101 = vst [vmem:[#allocation2 + $0xea0] sm:$0xff] %v3380
    %4102 = vst.msk [vmem:[#allocation2 + $0xea8] sm:$0xff] %vm3636, %v3381
    %4103 = vst [vmem:[#allocation2 + $0xeb0] sm:$0xff] %v3382
    %4104 = vst [vmem:[#allocation2 + $0xeb8] sm:$0xff] %v3383
    %4105 = vst [vmem:[#allocation2 + $0xec0] sm:$0xff] %v3384
    %4106 = vst [vmem:[#allocation2 + $0xec8] sm:$0xff] %v3385
    %4107 = vst.msk [vmem:[#allocation2 + $0xed0] sm:$0xff] %vm3636, %v3386
    %4108 = vst [vmem:[#allocation2 + $0xed8] sm:$0xff] %v3387
    %4109 = vst [vmem:[#allocation2 + $0xee0] sm:$0xff] %v3388
    %4110 = vst [vmem:[#allocation2 + $0xee8] sm:$0xff] %v3389
    %4111 = vst [vmem:[#allocation2 + $0xef0] sm:$0xff] %v3390
    %4112 = vst.msk [vmem:[#allocation2 + $0xef8] sm:$0xff] %vm3636, %v3391
    %4113 = vst [vmem:[#allocation2 + $0xf00] sm:$0xff] %v3392
    %4114 = vst [vmem:[#allocation2 + $0xf08] sm:$0xff] %v3393
    %4115 = vst [vmem:[#allocation2 + $0xf10] sm:$0xff] %v3394
    %4116 = vst [vmem:[#allocation2 + $0xf18] sm:$0xff] %v3395
    %4117 = vst.msk [vmem:[#allocation2 + $0xf20] sm:$0xff] %vm3636, %v3396
    %4118 = vst [vmem:[#allocation2 + $0xf28] sm:$0xff] %v3397
    %4119 = vst [vmem:[#allocation2 + $0xf30] sm:$0xff] %v3398
    %4120 = vst [vmem:[#allocation2 + $0xf38] sm:$0xff] %v3399
    %4121 = vst [vmem:[#allocation2 + $0xf40] sm:$0xff] %v3400
    %4122 = vst.msk [vmem:[#allocation2 + $0xf48] sm:$0xff] %vm3636, %v3401
    %4123 = vst [vmem:[#allocation2 + $0xf50] sm:$0xff] %v3402
    %4124 = vst [vmem:[#allocation2 + $0xf58] sm:$0xff] %v3403
    %4125 = vst [vmem:[#allocation2 + $0xf60] sm:$0xff] %v3404
    %4126 = vst [vmem:[#allocation2 + $0xf68] sm:$0xff] %v3405
    %4127 = vst.msk [vmem:[#allocation2 + $0xf70] sm:$0xff] %vm3636, %v3406
    %4128 = vst [vmem:[#allocation2 + $0xf78] sm:$0xff] %v3407
    %4129 = vst [vmem:[#allocation2 + $0xf80] sm:$0xff] %v3408
    %4130 = vst [vmem:[#allocation2 + $0xf88] sm:$0xff] %v3409
    %4131 = vst [vmem:[#allocation2 + $0xf90] sm:$0xff] %v3410
    %4132 = vst.msk [vmem:[#allocation2 + $0xf98] sm:$0xff] %vm3636, %v3411
    %4133 = vst [vmem:[#allocation2 + $0xfa0] sm:$0xff] %v3412
    %4134 = vst [vmem:[#allocation2 + $0xfa8] sm:$0xff] %v3413
    %4135 = vst [vmem:[#allocation2 + $0xfb0] sm:$0xff] %v3414
    %4136 = vst [vmem:[#allocation2 + $0xfb8] sm:$0xff] %v3415
    %4137 = vst.msk [vmem:[#allocation2 + $0xfc0] sm:$0xff] %vm3636, %v3416
    %4138 = vst [vmem:[#allocation2 + $0xfc8] sm:$0xff] %v3417
    %4139 = vst [vmem:[#allocation2 + $0xfd0] sm:$0xff] %v3418
    %4140 = vst [vmem:[#allocation2 + $0xfd8] sm:$0xff] %v3419
    %4141 = vst [vmem:[#allocation2 + $0xfe0] sm:$0xff] %v3420
    %4142 = vst.msk [vmem:[#allocation2 + $0xfe8] sm:$0xff] %vm3636, %v3421
    %4143 = vst [vmem:[#allocation2 + $0xff0] sm:$0xff] %v3422
    %4144 = vst [vmem:[#allocation2 + $0xff8] sm:$0xff] %v3423
    %4145 = vst [vmem:[#allocation2 + $0x1000] sm:$0xff] %v3424
    %4146 = vst [vmem:[#allocation2 + $0x1008] sm:$0xff] %v3425
    %4147 = vst.msk [vmem:[#allocation2 + $0x1010] sm:$0xff] %vm3636, %v3426
    %4148 = vst [vmem:[#allocation2 + $0x1018] sm:$0xff] %v3427
    %4149 = vst [vmem:[#allocation2 + $0x1020] sm:$0xff] %v3428
    %4150 = vst [vmem:[#allocation2 + $0x1028] sm:$0xff] %v3429
    %4151 = vst [vmem:[#allocation2 + $0x1030] sm:$0xff] %v3430
    %4152 = vst.msk [vmem:[#allocation2 + $0x1038] sm:$0xff] %vm3636, %v3431
    %4153 = vst [vmem:[#allocation2 + $0x1040] sm:$0xff] %v3432
    %4154 = vst [vmem:[#allocation2 + $0x1048] sm:$0xff] %v3433
    %4155 = vst [vmem:[#allocation2 + $0x1050] sm:$0xff] %v3434
    %4156 = vst [vmem:[#allocation2 + $0x1058] sm:$0xff] %v3435
    %4157 = vst.msk [vmem:[#allocation2 + $0x1060] sm:$0xff] %vm3636, %v3436
    %4158 = vst [vmem:[#allocation2 + $0x1068] sm:$0xff] %v3437
    %4159 = vst [vmem:[#allocation2 + $0x1070] sm:$0xff] %v3438
    %4160 = vst [vmem:[#allocation2 + $0x1078] sm:$0xff] %v3439
    %4161 = vst [vmem:[#allocation2 + $0x1080] sm:$0xff] %v3440
    %4162 = vst.msk [vmem:[#allocation2 + $0x1088] sm:$0xff] %vm3636, %v3441
    %4163 = vst [vmem:[#allocation2 + $0x1090] sm:$0xff] %v3442
    %4164 = vst [vmem:[#allocation2 + $0x1098] sm:$0xff] %v3443
    %4165 = vst [vmem:[#allocation2 + $0x10a0] sm:$0xff] %v3444
    %4166 = vst [vmem:[#allocation2 + $0x10a8] sm:$0xff] %v3445
    %4167 = vst.msk [vmem:[#allocation2 + $0x10b0] sm:$0xff] %vm3636, %v3446
    %4168 = vst [vmem:[#allocation2 + $0x10b8] sm:$0xff] %v3447
    %4169 = vst [vmem:[#allocation2 + $0x10c0] sm:$0xff] %v3448
    %4170 = vst [vmem:[#allocation2 + $0x10c8] sm:$0xff] %v3449
    %4171 = vst [vmem:[#allocation2 + $0x10d0] sm:$0xff] %v3450
    %4172 = vst.msk [vmem:[#allocation2 + $0x10d8] sm:$0xff] %vm3636, %v3451
    %4173 = vst [vmem:[#allocation2 + $0x10e0] sm:$0xff] %v3452
    %4174 = vst [vmem:[#allocation2 + $0x10e8] sm:$0xff] %v3453
    %4175 = vst [vmem:[#allocation2 + $0x10f0] sm:$0xff] %v3454
    %4176 = vst [vmem:[#allocation2 + $0x10f8] sm:$0xff] %v3455
    %4177 = vst.msk [vmem:[#allocation2 + $0x1100] sm:$0xff] %vm3636, %v3456
    %4178 = vst [vmem:[#allocation2 + $0x1108] sm:$0xff] %v3457
    %4179 = vst [vmem:[#allocation2 + $0x1110] sm:$0xff] %v3458
    %4180 = vst [vmem:[#allocation2 + $0x1118] sm:$0xff] %v3459
    %4181 = vst [vmem:[#allocation2 + $0x1120] sm:$0xff] %v3460
    %4182 = vst.msk [vmem:[#allocation2 + $0x1128] sm:$0xff] %vm3636, %v3461
    %4183 = vst [vmem:[#allocation2 + $0x1130] sm:$0xff] %v3462
    %4184 = vst [vmem:[#allocation2 + $0x1138] sm:$0xff] %v3463
    %4185 = vst [vmem:[#allocation2 + $0x1140] sm:$0xff] %v3464
    %4186 = vst [vmem:[#allocation2 + $0x1148] sm:$0xff] %v3465
    %4187 = vst.msk [vmem:[#allocation2 + $0x1150] sm:$0xff] %vm3636, %v3466
    %4188 = vst [vmem:[#allocation2 + $0x1158] sm:$0xff] %v3467
    %4189 = vst [vmem:[#allocation2 + $0x1160] sm:$0xff] %v3468
    %4190 = vst [vmem:[#allocation2 + $0x1168] sm:$0xff] %v3469
    %4191 = vst [vmem:[#allocation2 + $0x1170] sm:$0xff] %v3470
    %4192 = vst.msk [vmem:[#allocation2 + $0x1178] sm:$0xff] %vm3636, %v3471
    %4193 = vst [vmem:[#allocation2 + $0x1180] sm:$0xff] %v3472
    %4194 = vst [vmem:[#allocation2 + $0x1188] sm:$0xff] %v3473
    %4195 = vst [vmem:[#allocation2 + $0x1190] sm:$0xff] %v3474
    %4196 = vst [vmem:[#allocation2 + $0x1198] sm:$0xff] %v3475
    %4197 = vst.msk [vmem:[#allocation2 + $0x11a0] sm:$0xff] %vm3636, %v3476
    %4198 = vst [vmem:[#allocation2 + $0x11a8] sm:$0xff] %v3477
    %4199 = vst [vmem:[#allocation2 + $0x11b0] sm:$0xff] %v3478
    %4200 = vst [vmem:[#allocation2 + $0x11b8] sm:$0xff] %v3479
    %4201 = vst [vmem:[#allocation2 + $0x11c0] sm:$0xff] %v3480
    %4202 = vst.msk [vmem:[#allocation2 + $0x11c8] sm:$0xff] %vm3636, %v3481
    %4203 = vst [vmem:[#allocation2 + $0x11d0] sm:$0xff] %v3482
    %4204 = vst [vmem:[#allocation2 + $0x11d8] sm:$0xff] %v3483
    %4205 = vst [vmem:[#allocation2 + $0x11e0] sm:$0xff] %v3484
    %4206 = vst [vmem:[#allocation2 + $0x11e8] sm:$0xff] %v3485
    %4207 = vst.msk [vmem:[#allocation2 + $0x11f0] sm:$0xff] %vm3636, %v3486
    %4208 = vst [vmem:[#allocation2 + $0x11f8] sm:$0xff] %v3487
    %4209 = vst [vmem:[#allocation2 + $0x1200] sm:$0xff] %v3488
    %4210 = vst [vmem:[#allocation2 + $0x1208] sm:$0xff] %v3489
    %4211 = vst [vmem:[#allocation2 + $0x1210] sm:$0xff] %v3490
    %4212 = vst.msk [vmem:[#allocation2 + $0x1218] sm:$0xff] %vm3636, %v3491
    %4213 = vst [vmem:[#allocation2 + $0x1220] sm:$0xff] %v3492
    %4214 = vst [vmem:[#allocation2 + $0x1228] sm:$0xff] %v3493
    %4215 = vst [vmem:[#allocation2 + $0x1230] sm:$0xff] %v3494
    %4216 = vst [vmem:[#allocation2 + $0x1238] sm:$0xff] %v3495
    %4217 = vst.msk [vmem:[#allocation2 + $0x1240] sm:$0xff] %vm3636, %v3496
    %4218 = vst [vmem:[#allocation2 + $0x1248] sm:$0xff] %v3497
    %4219 = vst [vmem:[#allocation2 + $0x1250] sm:$0xff] %v3498
    %4220 = vst [vmem:[#allocation2 + $0x1258] sm:$0xff] %v3499
    %4221 = vst [vmem:[#allocation2 + $0x1260] sm:$0xff] %v3500
    %4222 = vst.msk [vmem:[#allocation2 + $0x1268] sm:$0xff] %vm3636, %v3501
    %4223 = vst [vmem:[#allocation2 + $0x1270] sm:$0xff] %v3502
    %4224 = vst [vmem:[#allocation2 + $0x1278] sm:$0xff] %v3503
    %4225 = vst [vmem:[#allocation2 + $0x1280] sm:$0xff] %v3504
    %4226 = vst [vmem:[#allocation2 + $0x1288] sm:$0xff] %v3505
    %4227 = vst.msk [vmem:[#allocation2 + $0x1290] sm:$0xff] %vm3636, %v3506
    %4228 = vst [vmem:[#allocation2 + $0x1298] sm:$0xff] %v3507
    %4229 = vst [vmem:[#allocation2 + $0x12a0] sm:$0xff] %v3508
    %4230 = vst [vmem:[#allocation2 + $0x12a8] sm:$0xff] %v3509
    %4231 = vst [vmem:[#allocation2 + $0x12b0] sm:$0xff] %v3510
    %4232 = vst.msk [vmem:[#allocation2 + $0x12b8] sm:$0xff] %vm3636, %v3511
    %4233 = vst [vmem:[#allocation2 + $0x12c0] sm:$0xff] %v3512
    %4234 = vst [vmem:[#allocation2 + $0x12c8] sm:$0xff] %v3513
    %4235 = vst [vmem:[#allocation2 + $0x12d0] sm:$0xff] %v3514
    %4236 = vst [vmem:[#allocation2 + $0x12d8] sm:$0xff] %v3515
    %4237 = vst.msk [vmem:[#allocation2 + $0x12e0] sm:$0xff] %vm3636, %v3516
    %4238 = vst [vmem:[#allocation2 + $0x12e8] sm:$0xff] %v3517
    %4239 = vst [vmem:[#allocation2 + $0x12f0] sm:$0xff] %v3518
    %4240 = vst [vmem:[#allocation2 + $0x12f8] sm:$0xff] %v3519
    %4241 = vst [vmem:[#allocation2 + $0x1300] sm:$0xff] %v3520
    %4242 = vst.msk [vmem:[#allocation2 + $0x1308] sm:$0xff] %vm3636, %v3521
    %4243 = vst [vmem:[#allocation2 + $0x1310] sm:$0xff] %v3522
    %4244 = vst [vmem:[#allocation2 + $0x1318] sm:$0xff] %v3523
    %4245 = vst [vmem:[#allocation2 + $0x1320] sm:$0xff] %v3524
    %4246 = vst [vmem:[#allocation2 + $0x1328] sm:$0xff] %v3525
    %4247 = vst.msk [vmem:[#allocation2 + $0x1330] sm:$0xff] %vm3636, %v3526
    %4248 = vst [vmem:[#allocation2 + $0x1338] sm:$0xff] %v3527
    %4249 = vst [vmem:[#allocation2 + $0x1340] sm:$0xff] %v3528
    %4250 = vst [vmem:[#allocation2 + $0x1348] sm:$0xff] %v3529
    %4251 = vst [vmem:[#allocation2 + $0x1350] sm:$0xff] %v3530
    %4252 = vst.msk [vmem:[#allocation2 + $0x1358] sm:$0xff] %vm3636, %v3531
    %4253 = vst [vmem:[#allocation2 + $0x1360] sm:$0xff] %v3532
    %4254 = vst [vmem:[#allocation2 + $0x1368] sm:$0xff] %v3533
    %4255 = vst [vmem:[#allocation2 + $0x1370] sm:$0xff] %v3534
    %4256 = vst [vmem:[#allocation2 + $0x1378] sm:$0xff] %v3535
    %4257 = vst.msk [vmem:[#allocation2 + $0x1380] sm:$0xff] %vm3636, %v3536
    %4258 = vst [vmem:[#allocation2 + $0x1388] sm:$0xff] %v3537
    %4259 = vst [vmem:[#allocation2 + $0x1390] sm:$0xff] %v3538
    %4260 = vst [vmem:[#allocation2 + $0x1398] sm:$0xff] %v3539
    %4261 = vst [vmem:[#allocation2 + $0x13a0] sm:$0xff] %v3540
    %4262 = vst.msk [vmem:[#allocation2 + $0x13a8] sm:$0xff] %vm3636, %v3541
    %4263 = vst [vmem:[#allocation2 + $0x13b0] sm:$0xff] %v3542
    %4264 = vst [vmem:[#allocation2 + $0x13b8] sm:$0xff] %v3543
    %4265 = vst [vmem:[#allocation2 + $0x13c0] sm:$0xff] %v3544
    %4266 = vst [vmem:[#allocation2 + $0x13c8] sm:$0xff] %v3545
    %4267 = vst.msk [vmem:[#allocation2 + $0x13d0] sm:$0xff] %vm3636, %v3546
    %4268 = vst [vmem:[#allocation2 + $0x13d8] sm:$0xff] %v3547
    %4269 = vst [vmem:[#allocation2 + $0x13e0] sm:$0xff] %v3548
    %4270 = vst [vmem:[#allocation2 + $0x13e8] sm:$0xff] %v3549
    %4271 = vst [vmem:[#allocation2 + $0x13f0] sm:$0xff] %v3550
    %4272 = vst.msk [vmem:[#allocation2 + $0x13f8] sm:$0xff] %vm3636, %v3551
    %4273 = vst [vmem:[#allocation2 + $0x1400] sm:$0xff] %v3552
    %4274 = vst [vmem:[#allocation2 + $0x1408] sm:$0xff] %v3553
    %4275 = vst [vmem:[#allocation2 + $0x1410] sm:$0xff] %v3554
    %4276 = vst [vmem:[#allocation2 + $0x1418] sm:$0xff] %v3555
    %4277 = vst.msk [vmem:[#allocation2 + $0x1420] sm:$0xff] %vm3636, %v3556
    %4278 = vst [vmem:[#allocation2 + $0x1428] sm:$0xff] %v3557
    %4279 = vst [vmem:[#allocation2 + $0x1430] sm:$0xff] %v3558
    %4280 = vst [vmem:[#allocation2 + $0x1438] sm:$0xff] %v3559
    %4281 = vst [vmem:[#allocation2 + $0x1440] sm:$0xff] %v3560
    %4282 = vst.msk [vmem:[#allocation2 + $0x1448] sm:$0xff] %vm3636, %v3561
    %4283 = vst [vmem:[#allocation2 + $0x1450] sm:$0xff] %v3562
    %4284 = vst [vmem:[#allocation2 + $0x1458] sm:$0xff] %v3563
    %4285 = vst [vmem:[#allocation2 + $0x1460] sm:$0xff] %v3564
    %4286 = vst [vmem:[#allocation2 + $0x1468] sm:$0xff] %v3565
    %4287 = vst.msk [vmem:[#allocation2 + $0x1470] sm:$0xff] %vm3636, %v3566
    %4288 = vst [vmem:[#allocation2 + $0x1478] sm:$0xff] %v3567
    %4289 = vst [vmem:[#allocation2 + $0x1480] sm:$0xff] %v3568
    %4290 = vst [vmem:[#allocation2 + $0x1488] sm:$0xff] %v3569
    %4291 = vst [vmem:[#allocation2 + $0x1490] sm:$0xff] %v3570
    %4292 = vst.msk [vmem:[#allocation2 + $0x1498] sm:$0xff] %vm3636, %v3571
    %4293 = vst [vmem:[#allocation2 + $0x14a0] sm:$0xff] %v3572
    %4294 = vst [vmem:[#allocation2 + $0x14a8] sm:$0xff] %v3573
    %4295 = vst [vmem:[#allocation2 + $0x14b0] sm:$0xff] %v3574
    %4296 = vst [vmem:[#allocation2 + $0x14b8] sm:$0xff] %v3575
    %4297 = vst.msk [vmem:[#allocation2 + $0x14c0] sm:$0xff] %vm3636, %v3576
    %4298 = vst [vmem:[#allocation2 + $0x14c8] sm:$0xff] %v3577
    %4299 = vst [vmem:[#allocation2 + $0x14d0] sm:$0xff] %v3578
    %4300 = vst [vmem:[#allocation2 + $0x14d8] sm:$0xff] %v3579
    %4301 = vst [vmem:[#allocation2 + $0x14e0] sm:$0xff] %v3580
    %4302 = vst.msk [vmem:[#allocation2 + $0x14e8] sm:$0xff] %vm3636, %v3581
    %4303 = vst [vmem:[#allocation2 + $0x14f0] sm:$0xff] %v3582
    %4304 = vst [vmem:[#allocation2 + $0x14f8] sm:$0xff] %v3583
    %4305 = vst [vmem:[#allocation2 + $0x1500] sm:$0xff] %v3584
    %4306 = vst [vmem:[#allocation2 + $0x1508] sm:$0xff] %v3585
    %4307 = vst.msk [vmem:[#allocation2 + $0x1510] sm:$0xff] %vm3636, %v3586
    %4308 = vst [vmem:[#allocation2 + $0x1518] sm:$0xff] %v3587
    %4309 = vst [vmem:[#allocation2 + $0x1520] sm:$0xff] %v3588
    %4310 = vst [vmem:[#allocation2 + $0x1528] sm:$0xff] %v3589
    %4311 = vst [vmem:[#allocation2 + $0x1530] sm:$0xff] %v3590
    %4312 = vst.msk [vmem:[#allocation2 + $0x1538] sm:$0xff] %vm3636, %v3591
    %4313 = vst [vmem:[#allocation2 + $0x1540] sm:$0xff] %v3592
    %4314 = vst [vmem:[#allocation2 + $0x1548] sm:$0xff] %v3593
    %4315 = vst [vmem:[#allocation2 + $0x1550] sm:$0xff] %v3594
    %4316 = vst [vmem:[#allocation2 + $0x1558] sm:$0xff] %v3595
    %4317 = vst.msk [vmem:[#allocation2 + $0x1560] sm:$0xff] %vm3636, %v3596
    %4318 = vst [vmem:[#allocation2 + $0x1568] sm:$0xff] %v3597
    %4319 = vst [vmem:[#allocation2 + $0x1570] sm:$0xff] %v3598
    %4320 = vst [vmem:[#allocation2 + $0x1578] sm:$0xff] %v3599
    %4321 = vst [vmem:[#allocation2 + $0x1580] sm:$0xff] %v3600
    %4322 = vst.msk [vmem:[#allocation2 + $0x1588] sm:$0xff] %vm3636, %v3601
    %4323 = vst [vmem:[#allocation2 + $0x1590] sm:$0xff] %v3602
    %4324 = vst [vmem:[#allocation2 + $0x1598] sm:$0xff] %v3603
    %4325 = vst [vmem:[#allocation2 + $0x15a0] sm:$0xff] %v3604
    %4326 = vst [vmem:[#allocation2 + $0x15a8] sm:$0xff] %v3605
    %4327 = vst.msk [vmem:[#allocation2 + $0x15b0] sm:$0xff] %vm3636, %v3606
    %4328 = vst [vmem:[#allocation2 + $0x15b8] sm:$0xff] %v3607
    %4329 = vst [vmem:[#allocation2 + $0x15c0] sm:$0xff] %v3608
    %4330 = vst [vmem:[#allocation2 + $0x15c8] sm:$0xff] %v3609
    %4331 = vst [vmem:[#allocation2 + $0x15d0] sm:$0xff] %v3610
    %4332 = vst.msk [vmem:[#allocation2 + $0x15d8] sm:$0xff] %vm3636, %v3611
    %4333 = vst [vmem:[#allocation2 + $0x15e0] sm:$0xff] %v3612
    %4334 = vst [vmem:[#allocation2 + $0x15e8] sm:$0xff] %v3613
    %4335 = vst [vmem:[#allocation2 + $0x15f0] sm:$0xff] %v3614
    %4336 = vst [vmem:[#allocation2 + $0x15f8] sm:$0xff] %v3615
    %4337 = vst.msk [vmem:[#allocation2 + $0x1600] sm:$0xff] %vm3636, %v3616
    %4338 = vst [vmem:[#allocation2 + $0x1608] sm:$0xff] %v3617
    %4339 = vst [vmem:[#allocation2 + $0x1610] sm:$0xff] %v3618
    %4340 = vst [vmem:[#allocation2 + $0x1618] sm:$0xff] %v3619
    %4341 = vst [vmem:[#allocation2 + $0x1620] sm:$0xff] %v3620
    %4342 = vst.msk [vmem:[#allocation2 + $0x1628] sm:$0xff] %vm3636, %v3621
    %4343 = vst [vmem:[#allocation2 + $0x1630] sm:$0xff] %v3622
    %4344 = vst [vmem:[#allocation2 + $0x1638] sm:$0xff] %v3623
    %4345 = vst [vmem:[#allocation2 + $0x1640] sm:$0xff] %v3624
    %4346 = vst [vmem:[#allocation2 + $0x1648] sm:$0xff] %v3625
    %4347 = vst.msk [vmem:[#allocation2 + $0x1650] sm:$0xff] %vm3636, %v3626
    %4348 = vst [vmem:[#allocation2 + $0x1658] sm:$0xff] %v3627
    %4349 = vst [vmem:[#allocation2 + $0x1660] sm:$0xff] %v3628
    %4350 = vst [vmem:[#allocation2 + $0x1668] sm:$0xff] %v3629
    %4351 = vst [vmem:[#allocation2 + $0x1670] sm:$0xff] %v3630
    %4352 = vst.msk [vmem:[#allocation2 + $0x1678] sm:$0xff] %vm3636, %v3631
    %v4353 = vld [vmem:[#allocation2] sm:$0xff]
    %v4354 = vld [vmem:[#allocation2 + $0x8] sm:$0xff]
    %v4355 = vld [vmem:[#allocation2 + $0x10] sm:$0xff]
    %v4356 = vld [vmem:[#allocation2 + $0x18] sm:$0xff]
    %v4357 = vld [vmem:[#allocation2 + $0x20] sm:$0xff]
    %v4358 = vld [vmem:[#allocation2 + $0x28] sm:$0xff]
    %v4359 = vld [vmem:[#allocation2 + $0x30] sm:$0xff]
    %v4360 = vld [vmem:[#allocation2 + $0x38] sm:$0xff]
    %v4361 = vld [vmem:[#allocation2 + $0x40] sm:$0xff]
    %v4362 = vld [vmem:[#allocation2 + $0x48] sm:$0xff]
    %v4363 = vld [vmem:[#allocation2 + $0x50] sm:$0xff]
    %v4364 = vld [vmem:[#allocation2 + $0x58] sm:$0xff]
    %v4365 = vld [vmem:[#allocation2 + $0x60] sm:$0xff]
    %v4366 = vld [vmem:[#allocation2 + $0x68] sm:$0xff]
    %v4367 = vld [vmem:[#allocation2 + $0x70] sm:$0xff]
    %v4368 = vld [vmem:[#allocation2 + $0x78] sm:$0xff]
    %v4369 = vld [vmem:[#allocation2 + $0x80] sm:$0xff]
    %v4370 = vld [vmem:[#allocation2 + $0x88] sm:$0xff]
    %v4371 = vld [vmem:[#allocation2 + $0x90] sm:$0xff]
    %v4372 = vld [vmem:[#allocation2 + $0x98] sm:$0xff]
    %v4373 = vld [vmem:[#allocation2 + $0xa0] sm:$0xff]
    %v4374 = vld [vmem:[#allocation2 + $0xa8] sm:$0xff]
    %v4375 = vld [vmem:[#allocation2 + $0xb0] sm:$0xff]
    %v4376 = vld [vmem:[#allocation2 + $0xb8] sm:$0xff]
    %v4377 = vld [vmem:[#allocation2 + $0xc0] sm:$0xff]
    %v4378 = vld [vmem:[#allocation2 + $0xc8] sm:$0xff]
    %v4379 = vld [vmem:[#allocation2 + $0xd0] sm:$0xff]
    %v4380 = vld [vmem:[#allocation2 + $0xd8] sm:$0xff]
    %v4381 = vld [vmem:[#allocation2 + $0xe0] sm:$0xff]
    %v4382 = vld [vmem:[#allocation2 + $0xe8] sm:$0xff]
    %v4383 = vld [vmem:[#allocation2 + $0xf0] sm:$0xff]
    %v4384 = vld [vmem:[#allocation2 + $0xf8] sm:$0xff]
    %v4385 = vld [vmem:[#allocation2 + $0x100] sm:$0xff]
    %v4386 = vld [vmem:[#allocation2 + $0x108] sm:$0xff]
    %v4387 = vld [vmem:[#allocation2 + $0x110] sm:$0xff]
    %v4388 = vld [vmem:[#allocation2 + $0x118] sm:$0xff]
    %v4389 = vld [vmem:[#allocation2 + $0x120] sm:$0xff]
    %v4390 = vld [vmem:[#allocation2 + $0x128] sm:$0xff]
    %v4391 = vld [vmem:[#allocation2 + $0x130] sm:$0xff]
    %v4392 = vld [vmem:[#allocation2 + $0x138] sm:$0xff]
    %v4393 = vld [vmem:[#allocation2 + $0x140] sm:$0xff]
    %v4394 = vld [vmem:[#allocation2 + $0x148] sm:$0xff]
    %v4395 = vld [vmem:[#allocation2 + $0x150] sm:$0xff]
    %v4396 = vld [vmem:[#allocation2 + $0x158] sm:$0xff]
    %v4397 = vld [vmem:[#allocation2 + $0x160] sm:$0xff]
    %v4398 = vld [vmem:[#allocation2 + $0x168] sm:$0xff]
    %v4399 = vld [vmem:[#allocation2 + $0x170] sm:$0xff]
    %v4400 = vld [vmem:[#allocation2 + $0x178] sm:$0xff]
    %v4401 = vld [vmem:[#allocation2 + $0x180] sm:$0xff]
    %v4402 = vld [vmem:[#allocation2 + $0x188] sm:$0xff]
    %v4403 = vld [vmem:[#allocation2 + $0x190] sm:$0xff]
    %v4404 = vld [vmem:[#allocation2 + $0x198] sm:$0xff]
    %v4405 = vld [vmem:[#allocation2 + $0x1a0] sm:$0xff]
    %v4406 = vld [vmem:[#allocation2 + $0x1a8] sm:$0xff]
    %v4407 = vld [vmem:[#allocation2 + $0x1b0] sm:$0xff]
    %v4408 = vld [vmem:[#allocation2 + $0x1b8] sm:$0xff]
    %v4409 = vld [vmem:[#allocation2 + $0x1c0] sm:$0xff]
    %v4410 = vld [vmem:[#allocation2 + $0x1c8] sm:$0xff]
    %v4411 = vld [vmem:[#allocation2 + $0x1d0] sm:$0xff]
    %v4412 = vld [vmem:[#allocation2 + $0x1d8] sm:$0xff]
    %v4413 = vld [vmem:[#allocation2 + $0x1e0] sm:$0xff]
    %v4414 = vld [vmem:[#allocation2 + $0x1e8] sm:$0xff]
    %v4415 = vld [vmem:[#allocation2 + $0x1f0] sm:$0xff]
    %v4416 = vld [vmem:[#allocation2 + $0x1f8] sm:$0xff]
    %v4417 = vld [vmem:[#allocation2 + $0x200] sm:$0xff]
    %v4418 = vld [vmem:[#allocation2 + $0x208] sm:$0xff]
    %v4419 = vld [vmem:[#allocation2 + $0x210] sm:$0xff]
    %v4420 = vld [vmem:[#allocation2 + $0x218] sm:$0xff]
    %v4421 = vld [vmem:[#allocation2 + $0x220] sm:$0xff]
    %v4422 = vld [vmem:[#allocation2 + $0x228] sm:$0xff]
    %v4423 = vld [vmem:[#allocation2 + $0x230] sm:$0xff]
    %v4424 = vld [vmem:[#allocation2 + $0x238] sm:$0xff]
    %v4425 = vld [vmem:[#allocation2 + $0x240] sm:$0xff]
    %v4426 = vld [vmem:[#allocation2 + $0x248] sm:$0xff]
    %v4427 = vld [vmem:[#allocation2 + $0x250] sm:$0xff]
    %v4428 = vld [vmem:[#allocation2 + $0x258] sm:$0xff]
    %v4429 = vld [vmem:[#allocation2 + $0x260] sm:$0xff]
    %v4430 = vld [vmem:[#allocation2 + $0x268] sm:$0xff]
    %v4431 = vld [vmem:[#allocation2 + $0x270] sm:$0xff]
    %v4432 = vld [vmem:[#allocation2 + $0x278] sm:$0xff]
    %v4433 = vld [vmem:[#allocation2 + $0x280] sm:$0xff]
    %v4434 = vld [vmem:[#allocation2 + $0x288] sm:$0xff]
    %v4435 = vld [vmem:[#allocation2 + $0x290] sm:$0xff]
    %v4436 = vld [vmem:[#allocation2 + $0x298] sm:$0xff]
    %v4437 = vld [vmem:[#allocation2 + $0x2a0] sm:$0xff]
    %v4438 = vld [vmem:[#allocation2 + $0x2a8] sm:$0xff]
    %v4439 = vld [vmem:[#allocation2 + $0x2b0] sm:$0xff]
    %v4440 = vld [vmem:[#allocation2 + $0x2b8] sm:$0xff]
    %v4441 = vld [vmem:[#allocation2 + $0x2c0] sm:$0xff]
    %v4442 = vld [vmem:[#allocation2 + $0x2c8] sm:$0xff]
    %v4443 = vld [vmem:[#allocation2 + $0x2d0] sm:$0xff]
    %v4444 = vld [vmem:[#allocation2 + $0x2d8] sm:$0xff]
    %v4445 = vld [vmem:[#allocation2 + $0x2e0] sm:$0xff]
    %v4446 = vld [vmem:[#allocation2 + $0x2e8] sm:$0xff]
    %v4447 = vld [vmem:[#allocation2 + $0x2f0] sm:$0xff]
    %v4448 = vld [vmem:[#allocation2 + $0x2f8] sm:$0xff]
    %v4449 = vld [vmem:[#allocation2 + $0x300] sm:$0xff]
    %v4450 = vld [vmem:[#allocation2 + $0x308] sm:$0xff]
    %v4451 = vld [vmem:[#allocation2 + $0x310] sm:$0xff]
    %v4452 = vld [vmem:[#allocation2 + $0x318] sm:$0xff]
    %v4453 = vld [vmem:[#allocation2 + $0x320] sm:$0xff]
    %v4454 = vld [vmem:[#allocation2 + $0x328] sm:$0xff]
    %v4455 = vld [vmem:[#allocation2 + $0x330] sm:$0xff]
    %v4456 = vld [vmem:[#allocation2 + $0x338] sm:$0xff]
    %v4457 = vld [vmem:[#allocation2 + $0x340] sm:$0xff]
    %v4458 = vld [vmem:[#allocation2 + $0x348] sm:$0xff]
    %v4459 = vld [vmem:[#allocation2 + $0x350] sm:$0xff]
    %v4460 = vld [vmem:[#allocation2 + $0x358] sm:$0xff]
    %v4461 = vld [vmem:[#allocation2 + $0x360] sm:$0xff]
    %v4462 = vld [vmem:[#allocation2 + $0x368] sm:$0xff]
    %v4463 = vld [vmem:[#allocation2 + $0x370] sm:$0xff]
    %v4464 = vld [vmem:[#allocation2 + $0x378] sm:$0xff]
    %v4465 = vld [vmem:[#allocation2 + $0x380] sm:$0xff]
    %v4466 = vld [vmem:[#allocation2 + $0x388] sm:$0xff]
    %v4467 = vld [vmem:[#allocation2 + $0x390] sm:$0xff]
    %v4468 = vld [vmem:[#allocation2 + $0x398] sm:$0xff]
    %v4469 = vld [vmem:[#allocation2 + $0x3a0] sm:$0xff]
    %v4470 = vld [vmem:[#allocation2 + $0x3a8] sm:$0xff]
    %v4471 = vld [vmem:[#allocation2 + $0x3b0] sm:$0xff]
    %v4472 = vld [vmem:[#allocation2 + $0x3b8] sm:$0xff]
    %v4473 = vld [vmem:[#allocation2 + $0x3c0] sm:$0xff]
    %v4474 = vld [vmem:[#allocation2 + $0x3c8] sm:$0xff]
    %v4475 = vld [vmem:[#allocation2 + $0x3d0] sm:$0xff]
    %v4476 = vld [vmem:[#allocation2 + $0x3d8] sm:$0xff]
    %v4477 = vld [vmem:[#allocation2 + $0x3e0] sm:$0xff]
    %v4478 = vld [vmem:[#allocation2 + $0x3e8] sm:$0xff]
    %v4479 = vld [vmem:[#allocation2 + $0x3f0] sm:$0xff]
    %v4480 = vld [vmem:[#allocation2 + $0x3f8] sm:$0xff]
    %v4481 = vld [vmem:[#allocation2 + $0x400] sm:$0xff]
    %v4482 = vld [vmem:[#allocation2 + $0x408] sm:$0xff]
    %v4483 = vld [vmem:[#allocation2 + $0x410] sm:$0xff]
    %v4484 = vld [vmem:[#allocation2 + $0x418] sm:$0xff]
    %v4485 = vld [vmem:[#allocation2 + $0x420] sm:$0xff]
    %v4486 = vld [vmem:[#allocation2 + $0x428] sm:$0xff]
    %v4487 = vld [vmem:[#allocation2 + $0x430] sm:$0xff]
    %v4488 = vld [vmem:[#allocation2 + $0x438] sm:$0xff]
    %v4489 = vld [vmem:[#allocation2 + $0x440] sm:$0xff]
    %v4490 = vld [vmem:[#allocation2 + $0x448] sm:$0xff]
    %v4491 = vld [vmem:[#allocation2 + $0x450] sm:$0xff]
    %v4492 = vld [vmem:[#allocation2 + $0x458] sm:$0xff]
    %v4493 = vld [vmem:[#allocation2 + $0x460] sm:$0xff]
    %v4494 = vld [vmem:[#allocation2 + $0x468] sm:$0xff]
    %v4495 = vld [vmem:[#allocation2 + $0x470] sm:$0xff]
    %v4496 = vld [vmem:[#allocation2 + $0x478] sm:$0xff]
    %v4497 = vld [vmem:[#allocation2 + $0x480] sm:$0xff]
    %v4498 = vld [vmem:[#allocation2 + $0x488] sm:$0xff]
    %v4499 = vld [vmem:[#allocation2 + $0x490] sm:$0xff]
    %v4500 = vld [vmem:[#allocation2 + $0x498] sm:$0xff]
    %v4501 = vld [vmem:[#allocation2 + $0x4a0] sm:$0xff]
    %v4502 = vld [vmem:[#allocation2 + $0x4a8] sm:$0xff]
    %v4503 = vld [vmem:[#allocation2 + $0x4b0] sm:$0xff]
    %v4504 = vld [vmem:[#allocation2 + $0x4b8] sm:$0xff]
    %v4505 = vld [vmem:[#allocation2 + $0x4c0] sm:$0xff]
    %v4506 = vld [vmem:[#allocation2 + $0x4c8] sm:$0xff]
    %v4507 = vld [vmem:[#allocation2 + $0x4d0] sm:$0xff]
    %v4508 = vld [vmem:[#allocation2 + $0x4d8] sm:$0xff]
    %v4509 = vld [vmem:[#allocation2 + $0x4e0] sm:$0xff]
    %v4510 = vld [vmem:[#allocation2 + $0x4e8] sm:$0xff]
    %v4511 = vld [vmem:[#allocation2 + $0x4f0] sm:$0xff]
    %v4512 = vld [vmem:[#allocation2 + $0x4f8] sm:$0xff]
    %v4513 = vld [vmem:[#allocation2 + $0x500] sm:$0xff]
    %v4514 = vld [vmem:[#allocation2 + $0x508] sm:$0xff]
    %v4515 = vld [vmem:[#allocation2 + $0x510] sm:$0xff]
    %v4516 = vld [vmem:[#allocation2 + $0x518] sm:$0xff]
    %v4517 = vld [vmem:[#allocation2 + $0x520] sm:$0xff]
    %v4518 = vld [vmem:[#allocation2 + $0x528] sm:$0xff]
    %v4519 = vld [vmem:[#allocation2 + $0x530] sm:$0xff]
    %v4520 = vld [vmem:[#allocation2 + $0x538] sm:$0xff]
    %v4521 = vld [vmem:[#allocation2 + $0x540] sm:$0xff]
    %v4522 = vld [vmem:[#allocation2 + $0x548] sm:$0xff]
    %v4523 = vld [vmem:[#allocation2 + $0x550] sm:$0xff]
    %v4524 = vld [vmem:[#allocation2 + $0x558] sm:$0xff]
    %v4525 = vld [vmem:[#allocation2 + $0x560] sm:$0xff]
    %v4526 = vld [vmem:[#allocation2 + $0x568] sm:$0xff]
    %v4527 = vld [vmem:[#allocation2 + $0x570] sm:$0xff]
    %v4528 = vld [vmem:[#allocation2 + $0x578] sm:$0xff]
    %v4529 = vld [vmem:[#allocation2 + $0x580] sm:$0xff]
    %v4530 = vld [vmem:[#allocation2 + $0x588] sm:$0xff]
    %v4531 = vld [vmem:[#allocation2 + $0x590] sm:$0xff]
    %v4532 = vld [vmem:[#allocation2 + $0x598] sm:$0xff]
    %v4533 = vld [vmem:[#allocation2 + $0x5a0] sm:$0xff]
    %v4534 = vld [vmem:[#allocation2 + $0x5a8] sm:$0xff]
    %v4535 = vld [vmem:[#allocation2 + $0x5b0] sm:$0xff]
    %v4536 = vld [vmem:[#allocation2 + $0x5b8] sm:$0xff]
    %v4537 = vld [vmem:[#allocation2 + $0x5c0] sm:$0xff]
    %v4538 = vld [vmem:[#allocation2 + $0x5c8] sm:$0xff]
    %v4539 = vld [vmem:[#allocation2 + $0x5d0] sm:$0xff]
    %v4540 = vld [vmem:[#allocation2 + $0x5d8] sm:$0xff]
    %v4541 = vld [vmem:[#allocation2 + $0x5e0] sm:$0xff]
    %v4542 = vld [vmem:[#allocation2 + $0x5e8] sm:$0xff]
    %v4543 = vld [vmem:[#allocation2 + $0x5f0] sm:$0xff]
    %v4544 = vld [vmem:[#allocation2 + $0x5f8] sm:$0xff]
    %v4545 = vld [vmem:[#allocation2 + $0x600] sm:$0xff]
    %v4546 = vld [vmem:[#allocation2 + $0x608] sm:$0xff]
    %v4547 = vld [vmem:[#allocation2 + $0x610] sm:$0xff]
    %v4548 = vld [vmem:[#allocation2 + $0x618] sm:$0xff]
    %v4549 = vld [vmem:[#allocation2 + $0x620] sm:$0xff]
    %v4550 = vld [vmem:[#allocation2 + $0x628] sm:$0xff]
    %v4551 = vld [vmem:[#allocation2 + $0x630] sm:$0xff]
    %v4552 = vld [vmem:[#allocation2 + $0x638] sm:$0xff]
    %v4553 = vld [vmem:[#allocation2 + $0x640] sm:$0xff]
    %v4554 = vld [vmem:[#allocation2 + $0x648] sm:$0xff]
    %v4555 = vld [vmem:[#allocation2 + $0x650] sm:$0xff]
    %v4556 = vld [vmem:[#allocation2 + $0x658] sm:$0xff]
    %v4557 = vld [vmem:[#allocation2 + $0x660] sm:$0xff]
    %v4558 = vld [vmem:[#allocation2 + $0x668] sm:$0xff]
    %v4559 = vld [vmem:[#allocation2 + $0x670] sm:$0xff]
    %v4560 = vld [vmem:[#allocation2 + $0x678] sm:$0xff]
    %v4561 = vld [vmem:[#allocation2 + $0x680] sm:$0xff]
    %v4562 = vld [vmem:[#allocation2 + $0x688] sm:$0xff]
    %v4563 = vld [vmem:[#allocation2 + $0x690] sm:$0xff]
    %v4564 = vld [vmem:[#allocation2 + $0x698] sm:$0xff]
    %v4565 = vld [vmem:[#allocation2 + $0x6a0] sm:$0xff]
    %v4566 = vld [vmem:[#allocation2 + $0x6a8] sm:$0xff]
    %v4567 = vld [vmem:[#allocation2 + $0x6b0] sm:$0xff]
    %v4568 = vld [vmem:[#allocation2 + $0x6b8] sm:$0xff]
    %v4569 = vld [vmem:[#allocation2 + $0x6c0] sm:$0xff]
    %v4570 = vld [vmem:[#allocation2 + $0x6c8] sm:$0xff]
    %v4571 = vld [vmem:[#allocation2 + $0x6d0] sm:$0xff]
    %v4572 = vld [vmem:[#allocation2 + $0x6d8] sm:$0xff]
    %v4573 = vld [vmem:[#allocation2 + $0x6e0] sm:$0xff]
    %v4574 = vld [vmem:[#allocation2 + $0x6e8] sm:$0xff]
    %v4575 = vld [vmem:[#allocation2 + $0x6f0] sm:$0xff]
    %v4576 = vld [vmem:[#allocation2 + $0x6f8] sm:$0xff]
    %v4577 = vld [vmem:[#allocation2 + $0x700] sm:$0xff]
    %v4578 = vld [vmem:[#allocation2 + $0x708] sm:$0xff]
    %v4579 = vld [vmem:[#allocation2 + $0x710] sm:$0xff]
    %v4580 = vld [vmem:[#allocation2 + $0x718] sm:$0xff]
    %v4581 = vld [vmem:[#allocation2 + $0x720] sm:$0xff]
    %v4582 = vld [vmem:[#allocation2 + $0x728] sm:$0xff]
    %v4583 = vld [vmem:[#allocation2 + $0x730] sm:$0xff]
    %v4584 = vld [vmem:[#allocation2 + $0x738] sm:$0xff]
    %v4585 = vld [vmem:[#allocation2 + $0x740] sm:$0xff]
    %v4586 = vld [vmem:[#allocation2 + $0x748] sm:$0xff]
    %v4587 = vld [vmem:[#allocation2 + $0x750] sm:$0xff]
    %v4588 = vld [vmem:[#allocation2 + $0x758] sm:$0xff]
    %v4589 = vld [vmem:[#allocation2 + $0x760] sm:$0xff]
    %v4590 = vld [vmem:[#allocation2 + $0x768] sm:$0xff]
    %v4591 = vld [vmem:[#allocation2 + $0x770] sm:$0xff]
    %v4592 = vld [vmem:[#allocation2 + $0x778] sm:$0xff]
    %v4593 = vld [vmem:[#allocation2 + $0x780] sm:$0xff]
    %v4594 = vld [vmem:[#allocation2 + $0x788] sm:$0xff]
    %v4595 = vld [vmem:[#allocation2 + $0x790] sm:$0xff]
    %v4596 = vld [vmem:[#allocation2 + $0x798] sm:$0xff]
    %v4597 = vld [vmem:[#allocation2 + $0x7a0] sm:$0xff]
    %v4598 = vld [vmem:[#allocation2 + $0x7a8] sm:$0xff]
    %v4599 = vld [vmem:[#allocation2 + $0x7b0] sm:$0xff]
    %v4600 = vld [vmem:[#allocation2 + $0x7b8] sm:$0xff]
    %v4601 = vld [vmem:[#allocation2 + $0x7c0] sm:$0xff]
    %v4602 = vld [vmem:[#allocation2 + $0x7c8] sm:$0xff]
    %v4603 = vld [vmem:[#allocation2 + $0x7d0] sm:$0xff]
    %v4604 = vld [vmem:[#allocation2 + $0x7d8] sm:$0xff]
    %v4605 = vld [vmem:[#allocation2 + $0x7e0] sm:$0xff]
    %v4606 = vld [vmem:[#allocation2 + $0x7e8] sm:$0xff]
    %v4607 = vld [vmem:[#allocation2 + $0x7f0] sm:$0xff]
    %v4608 = vld [vmem:[#allocation2 + $0x7f8] sm:$0xff]
    %v4609 = vld [vmem:[#allocation2 + $0x800] sm:$0xff]
    %v4610 = vld [vmem:[#allocation2 + $0x808] sm:$0xff]
    %v4611 = vld [vmem:[#allocation2 + $0x810] sm:$0xff]
    %v4612 = vld [vmem:[#allocation2 + $0x818] sm:$0xff]
    %v4613 = vld [vmem:[#allocation2 + $0x820] sm:$0xff]
    %v4614 = vld [vmem:[#allocation2 + $0x828] sm:$0xff]
    %v4615 = vld [vmem:[#allocation2 + $0x830] sm:$0xff]
    %v4616 = vld [vmem:[#allocation2 + $0x838] sm:$0xff]
    %v4617 = vld [vmem:[#allocation2 + $0x840] sm:$0xff]
    %v4618 = vld [vmem:[#allocation2 + $0x848] sm:$0xff]
    %v4619 = vld [vmem:[#allocation2 + $0x850] sm:$0xff]
    %v4620 = vld [vmem:[#allocation2 + $0x858] sm:$0xff]
    %v4621 = vld [vmem:[#allocation2 + $0x860] sm:$0xff]
    %v4622 = vld [vmem:[#allocation2 + $0x868] sm:$0xff]
    %v4623 = vld [vmem:[#allocation2 + $0x870] sm:$0xff]
    %v4624 = vld [vmem:[#allocation2 + $0x878] sm:$0xff]
    %v4625 = vld [vmem:[#allocation2 + $0x880] sm:$0xff]
    %v4626 = vld [vmem:[#allocation2 + $0x888] sm:$0xff]
    %v4627 = vld [vmem:[#allocation2 + $0x890] sm:$0xff]
    %v4628 = vld [vmem:[#allocation2 + $0x898] sm:$0xff]
    %v4629 = vld [vmem:[#allocation2 + $0x8a0] sm:$0xff]
    %v4630 = vld [vmem:[#allocation2 + $0x8a8] sm:$0xff]
    %v4631 = vld [vmem:[#allocation2 + $0x8b0] sm:$0xff]
    %v4632 = vld [vmem:[#allocation2 + $0x8b8] sm:$0xff]
    %v4633 = vld [vmem:[#allocation2 + $0x8c0] sm:$0xff]
    %v4634 = vld [vmem:[#allocation2 + $0x8c8] sm:$0xff]
    %v4635 = vld [vmem:[#allocation2 + $0x8d0] sm:$0xff]
    %v4636 = vld [vmem:[#allocation2 + $0x8d8] sm:$0xff]
    %v4637 = vld [vmem:[#allocation2 + $0x8e0] sm:$0xff]
    %v4638 = vld [vmem:[#allocation2 + $0x8e8] sm:$0xff]
    %v4639 = vld [vmem:[#allocation2 + $0x8f0] sm:$0xff]
    %v4640 = vld [vmem:[#allocation2 + $0x8f8] sm:$0xff]
    %v4641 = vld [vmem:[#allocation2 + $0x900] sm:$0xff]
    %v4642 = vld [vmem:[#allocation2 + $0x908] sm:$0xff]
    %v4643 = vld [vmem:[#allocation2 + $0x910] sm:$0xff]
    %v4644 = vld [vmem:[#allocation2 + $0x918] sm:$0xff]
    %v4645 = vld [vmem:[#allocation2 + $0x920] sm:$0xff]
    %v4646 = vld [vmem:[#allocation2 + $0x928] sm:$0xff]
    %v4647 = vld [vmem:[#allocation2 + $0x930] sm:$0xff]
    %v4648 = vld [vmem:[#allocation2 + $0x938] sm:$0xff]
    %v4649 = vld [vmem:[#allocation2 + $0x940] sm:$0xff]
    %v4650 = vld [vmem:[#allocation2 + $0x948] sm:$0xff]
    %v4651 = vld [vmem:[#allocation2 + $0x950] sm:$0xff]
    %v4652 = vld [vmem:[#allocation2 + $0x958] sm:$0xff]
    %v4653 = vld [vmem:[#allocation2 + $0x960] sm:$0xff]
    %v4654 = vld [vmem:[#allocation2 + $0x968] sm:$0xff]
    %v4655 = vld [vmem:[#allocation2 + $0x970] sm:$0xff]
    %v4656 = vld [vmem:[#allocation2 + $0x978] sm:$0xff]
    %v4657 = vld [vmem:[#allocation2 + $0x980] sm:$0xff]
    %v4658 = vld [vmem:[#allocation2 + $0x988] sm:$0xff]
    %v4659 = vld [vmem:[#allocation2 + $0x990] sm:$0xff]
    %v4660 = vld [vmem:[#allocation2 + $0x998] sm:$0xff]
    %v4661 = vld [vmem:[#allocation2 + $0x9a0] sm:$0xff]
    %v4662 = vld [vmem:[#allocation2 + $0x9a8] sm:$0xff]
    %v4663 = vld [vmem:[#allocation2 + $0x9b0] sm:$0xff]
    %v4664 = vld [vmem:[#allocation2 + $0x9b8] sm:$0xff]
    %v4665 = vld [vmem:[#allocation2 + $0x9c0] sm:$0xff]
    %v4666 = vld [vmem:[#allocation2 + $0x9c8] sm:$0xff]
    %v4667 = vld [vmem:[#allocation2 + $0x9d0] sm:$0xff]
    %v4668 = vld [vmem:[#allocation2 + $0x9d8] sm:$0xff]
    %v4669 = vld [vmem:[#allocation2 + $0x9e0] sm:$0xff]
    %v4670 = vld [vmem:[#allocation2 + $0x9e8] sm:$0xff]
    %v4671 = vld [vmem:[#allocation2 + $0x9f0] sm:$0xff]
    %v4672 = vld [vmem:[#allocation2 + $0x9f8] sm:$0xff]
    %v4673 = vld [vmem:[#allocation2 + $0xa00] sm:$0xff]
    %v4674 = vld [vmem:[#allocation2 + $0xa08] sm:$0xff]
    %v4675 = vld [vmem:[#allocation2 + $0xa10] sm:$0xff]
    %v4676 = vld [vmem:[#allocation2 + $0xa18] sm:$0xff]
    %v4677 = vld [vmem:[#allocation2 + $0xa20] sm:$0xff]
    %v4678 = vld [vmem:[#allocation2 + $0xa28] sm:$0xff]
    %v4679 = vld [vmem:[#allocation2 + $0xa30] sm:$0xff]
    %v4680 = vld [vmem:[#allocation2 + $0xa38] sm:$0xff]
    %v4681 = vld [vmem:[#allocation2 + $0xa40] sm:$0xff]
    %v4682 = vld [vmem:[#allocation2 + $0xa48] sm:$0xff]
    %v4683 = vld [vmem:[#allocation2 + $0xa50] sm:$0xff]
    %v4684 = vld [vmem:[#allocation2 + $0xa58] sm:$0xff]
    %v4685 = vld [vmem:[#allocation2 + $0xa60] sm:$0xff]
    %v4686 = vld [vmem:[#allocation2 + $0xa68] sm:$0xff]
    %v4687 = vld [vmem:[#allocation2 + $0xa70] sm:$0xff]
    %v4688 = vld [vmem:[#allocation2 + $0xa78] sm:$0xff]
    %v4689 = vld [vmem:[#allocation2 + $0xa80] sm:$0xff]
    %v4690 = vld [vmem:[#allocation2 + $0xa88] sm:$0xff]
    %v4691 = vld [vmem:[#allocation2 + $0xa90] sm:$0xff]
    %v4692 = vld [vmem:[#allocation2 + $0xa98] sm:$0xff]
    %v4693 = vld [vmem:[#allocation2 + $0xaa0] sm:$0xff]
    %v4694 = vld [vmem:[#allocation2 + $0xaa8] sm:$0xff]
    %v4695 = vld [vmem:[#allocation2 + $0xab0] sm:$0xff]
    %v4696 = vld [vmem:[#allocation2 + $0xab8] sm:$0xff]
    %v4697 = vld [vmem:[#allocation2 + $0xac0] sm:$0xff]
    %v4698 = vld [vmem:[#allocation2 + $0xac8] sm:$0xff]
    %v4699 = vld [vmem:[#allocation2 + $0xad0] sm:$0xff]
    %v4700 = vld [vmem:[#allocation2 + $0xad8] sm:$0xff]
    %v4701 = vld [vmem:[#allocation2 + $0xae0] sm:$0xff]
    %v4702 = vld [vmem:[#allocation2 + $0xae8] sm:$0xff]
    %v4703 = vld [vmem:[#allocation2 + $0xaf0] sm:$0xff]
    %v4704 = vld [vmem:[#allocation2 + $0xaf8] sm:$0xff]
    %v4705 = vld [vmem:[#allocation2 + $0xb00] sm:$0xff]
    %v4706 = vld [vmem:[#allocation2 + $0xb08] sm:$0xff]
    %v4707 = vld [vmem:[#allocation2 + $0xb10] sm:$0xff]
    %v4708 = vld [vmem:[#allocation2 + $0xb18] sm:$0xff]
    %v4709 = vld [vmem:[#allocation2 + $0xb20] sm:$0xff]
    %v4710 = vld [vmem:[#allocation2 + $0xb28] sm:$0xff]
    %v4711 = vld [vmem:[#allocation2 + $0xb30] sm:$0xff]
    %v4712 = vld [vmem:[#allocation2 + $0xb38] sm:$0xff]
    %v4713 = vld [vmem:[#allocation2 + $0xb40] sm:$0xff]
    %v4714 = vld [vmem:[#allocation2 + $0xb48] sm:$0xff]
    %v4715 = vld [vmem:[#allocation2 + $0xb50] sm:$0xff]
    %v4716 = vld [vmem:[#allocation2 + $0xb58] sm:$0xff]
    %v4717 = vld [vmem:[#allocation2 + $0xb60] sm:$0xff]
    %v4718 = vld [vmem:[#allocation2 + $0xb68] sm:$0xff]
    %v4719 = vld [vmem:[#allocation2 + $0xb70] sm:$0xff]
    %v4720 = vld [vmem:[#allocation2 + $0xb78] sm:$0xff]
    %v4721 = vld [vmem:[#allocation2 + $0xb80] sm:$0xff]
    %v4722 = vld [vmem:[#allocation2 + $0xb88] sm:$0xff]
    %v4723 = vld [vmem:[#allocation2 + $0xb90] sm:$0xff]
    %v4724 = vld [vmem:[#allocation2 + $0xb98] sm:$0xff]
    %v4725 = vld [vmem:[#allocation2 + $0xba0] sm:$0xff]
    %v4726 = vld [vmem:[#allocation2 + $0xba8] sm:$0xff]
    %v4727 = vld [vmem:[#allocation2 + $0xbb0] sm:$0xff]
    %v4728 = vld [vmem:[#allocation2 + $0xbb8] sm:$0xff]
    %v4729 = vld [vmem:[#allocation2 + $0xbc0] sm:$0xff]
    %v4730 = vld [vmem:[#allocation2 + $0xbc8] sm:$0xff]
    %v4731 = vld [vmem:[#allocation2 + $0xbd0] sm:$0xff]
    %v4732 = vld [vmem:[#allocation2 + $0xbd8] sm:$0xff]
    %v4733 = vld [vmem:[#allocation2 + $0xbe0] sm:$0xff]
    %v4734 = vld [vmem:[#allocation2 + $0xbe8] sm:$0xff]
    %v4735 = vld [vmem:[#allocation2 + $0xbf0] sm:$0xff]
    %v4736 = vld [vmem:[#allocation2 + $0xbf8] sm:$0xff]
    %v4737 = vld [vmem:[#allocation2 + $0xc00] sm:$0xff]
    %v4738 = vld [vmem:[#allocation2 + $0xc08] sm:$0xff]
    %v4739 = vld [vmem:[#allocation2 + $0xc10] sm:$0xff]
    %v4740 = vld [vmem:[#allocation2 + $0xc18] sm:$0xff]
    %v4741 = vld [vmem:[#allocation2 + $0xc20] sm:$0xff]
    %v4742 = vld [vmem:[#allocation2 + $0xc28] sm:$0xff]
    %v4743 = vld [vmem:[#allocation2 + $0xc30] sm:$0xff]
    %v4744 = vld [vmem:[#allocation2 + $0xc38] sm:$0xff]
    %v4745 = vld [vmem:[#allocation2 + $0xc40] sm:$0xff]
    %v4746 = vld [vmem:[#allocation2 + $0xc48] sm:$0xff]
    %v4747 = vld [vmem:[#allocation2 + $0xc50] sm:$0xff]
    %v4748 = vld [vmem:[#allocation2 + $0xc58] sm:$0xff]
    %v4749 = vld [vmem:[#allocation2 + $0xc60] sm:$0xff]
    %v4750 = vld [vmem:[#allocation2 + $0xc68] sm:$0xff]
    %v4751 = vld [vmem:[#allocation2 + $0xc70] sm:$0xff]
    %v4752 = vld [vmem:[#allocation2 + $0xc78] sm:$0xff]
    %v4753 = vld [vmem:[#allocation2 + $0xc80] sm:$0xff]
    %v4754 = vld [vmem:[#allocation2 + $0xc88] sm:$0xff]
    %v4755 = vld [vmem:[#allocation2 + $0xc90] sm:$0xff]
    %v4756 = vld [vmem:[#allocation2 + $0xc98] sm:$0xff]
    %v4757 = vld [vmem:[#allocation2 + $0xca0] sm:$0xff]
    %v4758 = vld [vmem:[#allocation2 + $0xca8] sm:$0xff]
    %v4759 = vld [vmem:[#allocation2 + $0xcb0] sm:$0xff]
    %v4760 = vld [vmem:[#allocation2 + $0xcb8] sm:$0xff]
    %v4761 = vld [vmem:[#allocation2 + $0xcc0] sm:$0xff]
    %v4762 = vld [vmem:[#allocation2 + $0xcc8] sm:$0xff]
    %v4763 = vld [vmem:[#allocation2 + $0xcd0] sm:$0xff]
    %v4764 = vld [vmem:[#allocation2 + $0xcd8] sm:$0xff]
    %v4765 = vld [vmem:[#allocation2 + $0xce0] sm:$0xff]
    %v4766 = vld [vmem:[#allocation2 + $0xce8] sm:$0xff]
    %v4767 = vld [vmem:[#allocation2 + $0xcf0] sm:$0xff]
    %v4768 = vld [vmem:[#allocation2 + $0xcf8] sm:$0xff]
    %v4769 = vld [vmem:[#allocation2 + $0xd00] sm:$0xff]
    %v4770 = vld [vmem:[#allocation2 + $0xd08] sm:$0xff]
    %v4771 = vld [vmem:[#allocation2 + $0xd10] sm:$0xff]
    %v4772 = vld [vmem:[#allocation2 + $0xd18] sm:$0xff]
    %v4773 = vld [vmem:[#allocation2 + $0xd20] sm:$0xff]
    %v4774 = vld [vmem:[#allocation2 + $0xd28] sm:$0xff]
    %v4775 = vld [vmem:[#allocation2 + $0xd30] sm:$0xff]
    %v4776 = vld [vmem:[#allocation2 + $0xd38] sm:$0xff]
    %v4777 = vld [vmem:[#allocation2 + $0xd40] sm:$0xff]
    %v4778 = vld [vmem:[#allocation2 + $0xd48] sm:$0xff]
    %v4779 = vld [vmem:[#allocation2 + $0xd50] sm:$0xff]
    %v4780 = vld [vmem:[#allocation2 + $0xd58] sm:$0xff]
    %v4781 = vld [vmem:[#allocation2 + $0xd60] sm:$0xff]
    %v4782 = vld [vmem:[#allocation2 + $0xd68] sm:$0xff]
    %v4783 = vld [vmem:[#allocation2 + $0xd70] sm:$0xff]
    %v4784 = vld [vmem:[#allocation2 + $0xd78] sm:$0xff]
    %v4785 = vld [vmem:[#allocation2 + $0xd80] sm:$0xff]
    %v4786 = vld [vmem:[#allocation2 + $0xd88] sm:$0xff]
    %v4787 = vld [vmem:[#allocation2 + $0xd90] sm:$0xff]
    %v4788 = vld [vmem:[#allocation2 + $0xd98] sm:$0xff]
    %v4789 = vld [vmem:[#allocation2 + $0xda0] sm:$0xff]
    %v4790 = vld [vmem:[#allocation2 + $0xda8] sm:$0xff]
    %v4791 = vld [vmem:[#allocation2 + $0xdb0] sm:$0xff]
    %v4792 = vld [vmem:[#allocation2 + $0xdb8] sm:$0xff]
    %v4793 = vld [vmem:[#allocation2 + $0xdc0] sm:$0xff]
    %v4794 = vld [vmem:[#allocation2 + $0xdc8] sm:$0xff]
    %v4795 = vld [vmem:[#allocation2 + $0xdd0] sm:$0xff]
    %v4796 = vld [vmem:[#allocation2 + $0xdd8] sm:$0xff]
    %v4797 = vld [vmem:[#allocation2 + $0xde0] sm:$0xff]
    %v4798 = vld [vmem:[#allocation2 + $0xde8] sm:$0xff]
    %v4799 = vld [vmem:[#allocation2 + $0xdf0] sm:$0xff]
    %v4800 = vld [vmem:[#allocation2 + $0xdf8] sm:$0xff]
    %v4801 = vld [vmem:[#allocation2 + $0xe00] sm:$0xff]
    %v4802 = vld [vmem:[#allocation2 + $0xe08] sm:$0xff]
    %v4803 = vld [vmem:[#allocation2 + $0xe10] sm:$0xff]
    %v4804 = vld [vmem:[#allocation2 + $0xe18] sm:$0xff]
    %v4805 = vld [vmem:[#allocation2 + $0xe20] sm:$0xff]
    %v4806 = vld [vmem:[#allocation2 + $0xe28] sm:$0xff]
    %v4807 = vld [vmem:[#allocation2 + $0xe30] sm:$0xff]
    %v4808 = vld [vmem:[#allocation2 + $0xe38] sm:$0xff]
    %v4809 = vld [vmem:[#allocation2 + $0xe40] sm:$0xff]
    %v4810 = vld [vmem:[#allocation2 + $0xe48] sm:$0xff]
    %v4811 = vld [vmem:[#allocation2 + $0xe50] sm:$0xff]
    %v4812 = vld [vmem:[#allocation2 + $0xe58] sm:$0xff]
    %v4813 = vld [vmem:[#allocation2 + $0xe60] sm:$0xff]
    %v4814 = vld [vmem:[#allocation2 + $0xe68] sm:$0xff]
    %v4815 = vld [vmem:[#allocation2 + $0xe70] sm:$0xff]
    %v4816 = vld [vmem:[#allocation2 + $0xe78] sm:$0xff]
    %v4817 = vld [vmem:[#allocation2 + $0xe80] sm:$0xff]
    %v4818 = vld [vmem:[#allocation2 + $0xe88] sm:$0xff]
    %v4819 = vld [vmem:[#allocation2 + $0xe90] sm:$0xff]
    %v4820 = vld [vmem:[#allocation2 + $0xe98] sm:$0xff]
    %v4821 = vld [vmem:[#allocation2 + $0xea0] sm:$0xff]
    %v4822 = vld [vmem:[#allocation2 + $0xea8] sm:$0xff]
    %v4823 = vld [vmem:[#allocation2 + $0xeb0] sm:$0xff]
    %v4824 = vld [vmem:[#allocation2 + $0xeb8] sm:$0xff]
    %v4825 = vld [vmem:[#allocation2 + $0xec0] sm:$0xff]
    %v4826 = vld [vmem:[#allocation2 + $0xec8] sm:$0xff]
    %v4827 = vld [vmem:[#allocation2 + $0xed0] sm:$0xff]
    %v4828 = vld [vmem:[#allocation2 + $0xed8] sm:$0xff]
    %v4829 = vld [vmem:[#allocation2 + $0xee0] sm:$0xff]
    %v4830 = vld [vmem:[#allocation2 + $0xee8] sm:$0xff]
    %v4831 = vld [vmem:[#allocation2 + $0xef0] sm:$0xff]
    %v4832 = vld [vmem:[#allocation2 + $0xef8] sm:$0xff]
    %v4833 = vld [vmem:[#allocation2 + $0xf00] sm:$0xff]
    %v4834 = vld [vmem:[#allocation2 + $0xf08] sm:$0xff]
    %v4835 = vld [vmem:[#allocation2 + $0xf10] sm:$0xff]
    %v4836 = vld [vmem:[#allocation2 + $0xf18] sm:$0xff]
    %v4837 = vld [vmem:[#allocation2 + $0xf20] sm:$0xff]
    %v4838 = vld [vmem:[#allocation2 + $0xf28] sm:$0xff]
    %v4839 = vld [vmem:[#allocation2 + $0xf30] sm:$0xff]
    %v4840 = vld [vmem:[#allocation2 + $0xf38] sm:$0xff]
    %v4841 = vld [vmem:[#allocation2 + $0xf40] sm:$0xff]
    %v4842 = vld [vmem:[#allocation2 + $0xf48] sm:$0xff]
    %v4843 = vld [vmem:[#allocation2 + $0xf50] sm:$0xff]
    %v4844 = vld [vmem:[#allocation2 + $0xf58] sm:$0xff]
    %v4845 = vld [vmem:[#allocation2 + $0xf60] sm:$0xff]
    %v4846 = vld [vmem:[#allocation2 + $0xf68] sm:$0xff]
    %v4847 = vld [vmem:[#allocation2 + $0xf70] sm:$0xff]
    %v4848 = vld [vmem:[#allocation2 + $0xf78] sm:$0xff]
    %v4849 = vld [vmem:[#allocation2 + $0xf80] sm:$0xff]
    %v4850 = vld [vmem:[#allocation2 + $0xf88] sm:$0xff]
    %v4851 = vld [vmem:[#allocation2 + $0xf90] sm:$0xff]
    %v4852 = vld [vmem:[#allocation2 + $0xf98] sm:$0xff]
    %v4853 = vld [vmem:[#allocation2 + $0xfa0] sm:$0xff]
    %v4854 = vld [vmem:[#allocation2 + $0xfa8] sm:$0xff]
    %v4855 = vld [vmem:[#allocation2 + $0xfb0] sm:$0xff]
    %v4856 = vld [vmem:[#allocation2 + $0xfb8] sm:$0xff]
    %v4857 = vld [vmem:[#allocation2 + $0xfc0] sm:$0xff]
    %v4858 = vld [vmem:[#allocation2 + $0xfc8] sm:$0xff]
    %v4859 = vld [vmem:[#allocation2 + $0xfd0] sm:$0xff]
    %v4860 = vld [vmem:[#allocation2 + $0xfd8] sm:$0xff]
    %v4861 = vld [vmem:[#allocation2 + $0xfe0] sm:$0xff]
    %v4862 = vld [vmem:[#allocation2 + $0xfe8] sm:$0xff]
    %v4863 = vld [vmem:[#allocation2 + $0xff0] sm:$0xff]
    %v4864 = vld [vmem:[#allocation2 + $0xff8] sm:$0xff]
    %v4865 = vld [vmem:[#allocation2 + $0x1000] sm:$0xff]
    %v4866 = vld [vmem:[#allocation2 + $0x1008] sm:$0xff]
    %v4867 = vld [vmem:[#allocation2 + $0x1010] sm:$0xff]
    %v4868 = vld [vmem:[#allocation2 + $0x1018] sm:$0xff]
    %v4869 = vld [vmem:[#allocation2 + $0x1020] sm:$0xff]
    %v4870 = vld [vmem:[#allocation2 + $0x1028] sm:$0xff]
    %v4871 = vld [vmem:[#allocation2 + $0x1030] sm:$0xff]
    %v4872 = vld [vmem:[#allocation2 + $0x1038] sm:$0xff]
    %v4873 = vld [vmem:[#allocation2 + $0x1040] sm:$0xff]
    %v4874 = vld [vmem:[#allocation2 + $0x1048] sm:$0xff]
    %v4875 = vld [vmem:[#allocation2 + $0x1050] sm:$0xff]
    %v4876 = vld [vmem:[#allocation2 + $0x1058] sm:$0xff]
    %v4877 = vld [vmem:[#allocation2 + $0x1060] sm:$0xff]
    %v4878 = vld [vmem:[#allocation2 + $0x1068] sm:$0xff]
    %v4879 = vld [vmem:[#allocation2 + $0x1070] sm:$0xff]
    %v4880 = vld [vmem:[#allocation2 + $0x1078] sm:$0xff]
    %v4881 = vld [vmem:[#allocation2 + $0x1080] sm:$0xff]
    %v4882 = vld [vmem:[#allocation2 + $0x1088] sm:$0xff]
    %v4883 = vld [vmem:[#allocation2 + $0x1090] sm:$0xff]
    %v4884 = vld [vmem:[#allocation2 + $0x1098] sm:$0xff]
    %v4885 = vld [vmem:[#allocation2 + $0x10a0] sm:$0xff]
    %v4886 = vld [vmem:[#allocation2 + $0x10a8] sm:$0xff]
    %v4887 = vld [vmem:[#allocation2 + $0x10b0] sm:$0xff]
    %v4888 = vld [vmem:[#allocation2 + $0x10b8] sm:$0xff]
    %v4889 = vld [vmem:[#allocation2 + $0x10c0] sm:$0xff]
    %v4890 = vld [vmem:[#allocation2 + $0x10c8] sm:$0xff]
    %v4891 = vld [vmem:[#allocation2 + $0x10d0] sm:$0xff]
    %v4892 = vld [vmem:[#allocation2 + $0x10d8] sm:$0xff]
    %v4893 = vld [vmem:[#allocation2 + $0x10e0] sm:$0xff]
    %v4894 = vld [vmem:[#allocation2 + $0x10e8] sm:$0xff]
    %v4895 = vld [vmem:[#allocation2 + $0x10f0] sm:$0xff]
    %v4896 = vld [vmem:[#allocation2 + $0x10f8] sm:$0xff]
    %v4897 = vld [vmem:[#allocation2 + $0x1100] sm:$0xff]
    %v4898 = vld [vmem:[#allocation2 + $0x1108] sm:$0xff]
    %v4899 = vld [vmem:[#allocation2 + $0x1110] sm:$0xff]
    %v4900 = vld [vmem:[#allocation2 + $0x1118] sm:$0xff]
    %v4901 = vld [vmem:[#allocation2 + $0x1120] sm:$0xff]
    %v4902 = vld [vmem:[#allocation2 + $0x1128] sm:$0xff]
    %v4903 = vld [vmem:[#allocation2 + $0x1130] sm:$0xff]
    %v4904 = vld [vmem:[#allocation2 + $0x1138] sm:$0xff]
    %v4905 = vld [vmem:[#allocation2 + $0x1140] sm:$0xff]
    %v4906 = vld [vmem:[#allocation2 + $0x1148] sm:$0xff]
    %v4907 = vld [vmem:[#allocation2 + $0x1150] sm:$0xff]
    %v4908 = vld [vmem:[#allocation2 + $0x1158] sm:$0xff]
    %v4909 = vld [vmem:[#allocation2 + $0x1160] sm:$0xff]
    %v4910 = vld [vmem:[#allocation2 + $0x1168] sm:$0xff]
    %v4911 = vld [vmem:[#allocation2 + $0x1170] sm:$0xff]
    %v4912 = vld [vmem:[#allocation2 + $0x1178] sm:$0xff]
    %v4913 = vld [vmem:[#allocation2 + $0x1180] sm:$0xff]
    %v4914 = vld [vmem:[#allocation2 + $0x1188] sm:$0xff]
    %v4915 = vld [vmem:[#allocation2 + $0x1190] sm:$0xff]
    %v4916 = vld [vmem:[#allocation2 + $0x1198] sm:$0xff]
    %v4917 = vld [vmem:[#allocation2 + $0x11a0] sm:$0xff]
    %v4918 = vld [vmem:[#allocation2 + $0x11a8] sm:$0xff]
    %v4919 = vld [vmem:[#allocation2 + $0x11b0] sm:$0xff]
    %v4920 = vld [vmem:[#allocation2 + $0x11b8] sm:$0xff]
    %v4921 = vld [vmem:[#allocation2 + $0x11c0] sm:$0xff]
    %v4922 = vld [vmem:[#allocation2 + $0x11c8] sm:$0xff]
    %v4923 = vld [vmem:[#allocation2 + $0x11d0] sm:$0xff]
    %v4924 = vld [vmem:[#allocation2 + $0x11d8] sm:$0xff]
    %v4925 = vld [vmem:[#allocation2 + $0x11e0] sm:$0xff]
    %v4926 = vld [vmem:[#allocation2 + $0x11e8] sm:$0xff]
    %v4927 = vld [vmem:[#allocation2 + $0x11f0] sm:$0xff]
    %v4928 = vld [vmem:[#allocation2 + $0x11f8] sm:$0xff]
    %v4929 = vld [vmem:[#allocation2 + $0x1200] sm:$0xff]
    %v4930 = vld [vmem:[#allocation2 + $0x1208] sm:$0xff]
    %v4931 = vld [vmem:[#allocation2 + $0x1210] sm:$0xff]
    %v4932 = vld [vmem:[#allocation2 + $0x1218] sm:$0xff]
    %v4933 = vld [vmem:[#allocation2 + $0x1220] sm:$0xff]
    %v4934 = vld [vmem:[#allocation2 + $0x1228] sm:$0xff]
    %v4935 = vld [vmem:[#allocation2 + $0x1230] sm:$0xff]
    %v4936 = vld [vmem:[#allocation2 + $0x1238] sm:$0xff]
    %v4937 = vld [vmem:[#allocation2 + $0x1240] sm:$0xff]
    %v4938 = vld [vmem:[#allocation2 + $0x1248] sm:$0xff]
    %v4939 = vld [vmem:[#allocation2 + $0x1250] sm:$0xff]
    %v4940 = vld [vmem:[#allocation2 + $0x1258] sm:$0xff]
    %v4941 = vld [vmem:[#allocation2 + $0x1260] sm:$0xff]
    %v4942 = vld [vmem:[#allocation2 + $0x1268] sm:$0xff]
    %v4943 = vld [vmem:[#allocation2 + $0x1270] sm:$0xff]
    %v4944 = vld [vmem:[#allocation2 + $0x1278] sm:$0xff]
    %v4945 = vld [vmem:[#allocation2 + $0x1280] sm:$0xff]
    %v4946 = vld [vmem:[#allocation2 + $0x1288] sm:$0xff]
    %v4947 = vld [vmem:[#allocation2 + $0x1290] sm:$0xff]
    %v4948 = vld [vmem:[#allocation2 + $0x1298] sm:$0xff]
    %v4949 = vld [vmem:[#allocation2 + $0x12a0] sm:$0xff]
    %v4950 = vld [vmem:[#allocation2 + $0x12a8] sm:$0xff]
    %v4951 = vld [vmem:[#allocation2 + $0x12b0] sm:$0xff]
    %v4952 = vld [vmem:[#allocation2 + $0x12b8] sm:$0xff]
    %v4953 = vld [vmem:[#allocation2 + $0x12c0] sm:$0xff]
    %v4954 = vld [vmem:[#allocation2 + $0x12c8] sm:$0xff]
    %v4955 = vld [vmem:[#allocation2 + $0x12d0] sm:$0xff]
    %v4956 = vld [vmem:[#allocation2 + $0x12d8] sm:$0xff]
    %v4957 = vld [vmem:[#allocation2 + $0x12e0] sm:$0xff]
    %v4958 = vld [vmem:[#allocation2 + $0x12e8] sm:$0xff]
    %v4959 = vld [vmem:[#allocation2 + $0x12f0] sm:$0xff]
    %v4960 = vld [vmem:[#allocation2 + $0x12f8] sm:$0xff]
    %v4961 = vld [vmem:[#allocation2 + $0x1300] sm:$0xff]
    %v4962 = vld [vmem:[#allocation2 + $0x1308] sm:$0xff]
    %v4963 = vld [vmem:[#allocation2 + $0x1310] sm:$0xff]
    %v4964 = vld [vmem:[#allocation2 + $0x1318] sm:$0xff]
    %v4965 = vld [vmem:[#allocation2 + $0x1320] sm:$0xff]
    %v4966 = vld [vmem:[#allocation2 + $0x1328] sm:$0xff]
    %v4967 = vld [vmem:[#allocation2 + $0x1330] sm:$0xff]
    %v4968 = vld [vmem:[#allocation2 + $0x1338] sm:$0xff]
    %v4969 = vld [vmem:[#allocation2 + $0x1340] sm:$0xff]
    %v4970 = vld [vmem:[#allocation2 + $0x1348] sm:$0xff]
    %v4971 = vld [vmem:[#allocation2 + $0x1350] sm:$0xff]
    %v4972 = vld [vmem:[#allocation2 + $0x1358] sm:$0xff]
    %v4973 = vld [vmem:[#allocation2 + $0x1360] sm:$0xff]
    %v4974 = vld [vmem:[#allocation2 + $0x1368] sm:$0xff]
    %v4975 = vld [vmem:[#allocation2 + $0x1370] sm:$0xff]
    %v4976 = vld [vmem:[#allocation2 + $0x1378] sm:$0xff]
    %v4977 = vld [vmem:[#allocation2 + $0x1380] sm:$0xff]
    %v4978 = vld [vmem:[#allocation2 + $0x1388] sm:$0xff]
    %v4979 = vld [vmem:[#allocation2 + $0x1390] sm:$0xff]
    %v4980 = vld [vmem:[#allocation2 + $0x1398] sm:$0xff]
    %v4981 = vld [vmem:[#allocation2 + $0x13a0] sm:$0xff]
    %v4982 = vld [vmem:[#allocation2 + $0x13a8] sm:$0xff]
    %v4983 = vld [vmem:[#allocation2 + $0x13b0] sm:$0xff]
    %v4984 = vld [vmem:[#allocation2 + $0x13b8] sm:$0xff]
    %v4985 = vld [vmem:[#allocation2 + $0x13c0] sm:$0xff]
    %v4986 = vld [vmem:[#allocation2 + $0x13c8] sm:$0xff]
    %v4987 = vld [vmem:[#allocation2 + $0x13d0] sm:$0xff]
    %v4988 = vld [vmem:[#allocation2 + $0x13d8] sm:$0xff]
    %v4989 = vld [vmem:[#allocation2 + $0x13e0] sm:$0xff]
    %v4990 = vld [vmem:[#allocation2 + $0x13e8] sm:$0xff]
    %v4991 = vld [vmem:[#allocation2 + $0x13f0] sm:$0xff]
    %v4992 = vld [vmem:[#allocation2 + $0x13f8] sm:$0xff]
    %v4993 = vld [vmem:[#allocation2 + $0x1400] sm:$0xff]
    %v4994 = vld [vmem:[#allocation2 + $0x1408] sm:$0xff]
    %v4995 = vld [vmem:[#allocation2 + $0x1410] sm:$0xff]
    %v4996 = vld [vmem:[#allocation2 + $0x1418] sm:$0xff]
    %v4997 = vld [vmem:[#allocation2 + $0x1420] sm:$0xff]
    %v4998 = vld [vmem:[#allocation2 + $0x1428] sm:$0xff]
    %v4999 = vld [vmem:[#allocation2 + $0x1430] sm:$0xff]
    %v5000 = vld [vmem:[#allocation2 + $0x1438] sm:$0xff]
    %v5001 = vld [vmem:[#allocation2 + $0x1440] sm:$0xff]
    %v5002 = vld [vmem:[#allocation2 + $0x1448] sm:$0xff]
    %v5003 = vld [vmem:[#allocation2 + $0x1450] sm:$0xff]
    %v5004 = vld [vmem:[#allocation2 + $0x1458] sm:$0xff]
    %v5005 = vld [vmem:[#allocation2 + $0x1460] sm:$0xff]
    %v5006 = vld [vmem:[#allocation2 + $0x1468] sm:$0xff]
    %v5007 = vld [vmem:[#allocation2 + $0x1470] sm:$0xff]
    %v5008 = vld [vmem:[#allocation2 + $0x1478] sm:$0xff]
    %v5009 = vld [vmem:[#allocation2 + $0x1480] sm:$0xff]
    %v5010 = vld [vmem:[#allocation2 + $0x1488] sm:$0xff]
    %v5011 = vld [vmem:[#allocation2 + $0x1490] sm:$0xff]
    %v5012 = vld [vmem:[#allocation2 + $0x1498] sm:$0xff]
    %v5013 = vld [vmem:[#allocation2 + $0x14a0] sm:$0xff]
    %v5014 = vld [vmem:[#allocation2 + $0x14a8] sm:$0xff]
    %v5015 = vld [vmem:[#allocation2 + $0x14b0] sm:$0xff]
    %v5016 = vld [vmem:[#allocation2 + $0x14b8] sm:$0xff]
    %v5017 = vld [vmem:[#allocation2 + $0x14c0] sm:$0xff]
    %v5018 = vld [vmem:[#allocation2 + $0x14c8] sm:$0xff]
    %v5019 = vld [vmem:[#allocation2 + $0x14d0] sm:$0xff]
    %v5020 = vld [vmem:[#allocation2 + $0x14d8] sm:$0xff]
    %v5021 = vld [vmem:[#allocation2 + $0x14e0] sm:$0xff]
    %v5022 = vld [vmem:[#allocation2 + $0x14e8] sm:$0xff]
    %v5023 = vld [vmem:[#allocation2 + $0x14f0] sm:$0xff]
    %v5024 = vld [vmem:[#allocation2 + $0x14f8] sm:$0xff]
    %v5025 = vld [vmem:[#allocation2 + $0x1500] sm:$0xff]
    %v5026 = vld [vmem:[#allocation2 + $0x1508] sm:$0xff]
    %v5027 = vld [vmem:[#allocation2 + $0x1510] sm:$0xff]
    %v5028 = vld [vmem:[#allocation2 + $0x1518] sm:$0xff]
    %v5029 = vld [vmem:[#allocation2 + $0x1520] sm:$0xff]
    %v5030 = vld [vmem:[#allocation2 + $0x1528] sm:$0xff]
    %v5031 = vld [vmem:[#allocation2 + $0x1530] sm:$0xff]
    %v5032 = vld [vmem:[#allocation2 + $0x1538] sm:$0xff]
    %v5033 = vld [vmem:[#allocation2 + $0x1540] sm:$0xff]
    %v5034 = vld [vmem:[#allocation2 + $0x1548] sm:$0xff]
    %v5035 = vld [vmem:[#allocation2 + $0x1550] sm:$0xff]
    %v5036 = vld [vmem:[#allocation2 + $0x1558] sm:$0xff]
    %v5037 = vld [vmem:[#allocation2 + $0x1560] sm:$0xff]
    %v5038 = vld [vmem:[#allocation2 + $0x1568] sm:$0xff]
    %v5039 = vld [vmem:[#allocation2 + $0x1570] sm:$0xff]
    %v5040 = vld [vmem:[#allocation2 + $0x1578] sm:$0xff]
    %v5041 = vld [vmem:[#allocation2 + $0x1580] sm:$0xff]
    %v5042 = vld [vmem:[#allocation2 + $0x1588] sm:$0xff]
    %v5043 = vld [vmem:[#allocation2 + $0x1590] sm:$0xff]
    %v5044 = vld [vmem:[#allocation2 + $0x1598] sm:$0xff]
    %v5045 = vld [vmem:[#allocation2 + $0x15a0] sm:$0xff]
    %v5046 = vld [vmem:[#allocation2 + $0x15a8] sm:$0xff]
    %v5047 = vld [vmem:[#allocation2 + $0x15b0] sm:$0xff]
    %v5048 = vld [vmem:[#allocation2 + $0x15b8] sm:$0xff]
    %v5049 = vld [vmem:[#allocation2 + $0x15c0] sm:$0xff]
    %v5050 = vld [vmem:[#allocation2 + $0x15c8] sm:$0xff]
    %v5051 = vld [vmem:[#allocation2 + $0x15d0] sm:$0xff]
    %v5052 = vld [vmem:[#allocation2 + $0x15d8] sm:$0xff]
    %v5053 = vld [vmem:[#allocation2 + $0x15e0] sm:$0xff]
    %v5054 = vld [vmem:[#allocation2 + $0x15e8] sm:$0xff]
    %v5055 = vld [vmem:[#allocation2 + $0x15f0] sm:$0xff]
    %v5056 = vld [vmem:[#allocation2 + $0x15f8] sm:$0xff]
    %v5057 = vld [vmem:[#allocation2 + $0x1600] sm:$0xff]
    %v5058 = vld [vmem:[#allocation2 + $0x1608] sm:$0xff]
    %v5059 = vld [vmem:[#allocation2 + $0x1610] sm:$0xff]
    %v5060 = vld [vmem:[#allocation2 + $0x1618] sm:$0xff]
    %v5061 = vld [vmem:[#allocation2 + $0x1620] sm:$0xff]
    %v5062 = vld [vmem:[#allocation2 + $0x1628] sm:$0xff]
    %v5063 = vld [vmem:[#allocation2 + $0x1630] sm:$0xff]
    %v5064 = vld [vmem:[#allocation2 + $0x1638] sm:$0xff]
    %v5065 = vld [vmem:[#allocation2 + $0x1640] sm:$0xff]
    %v5066 = vld [vmem:[#allocation2 + $0x1648] sm:$0xff]
    %v5067 = vld [vmem:[#allocation2 + $0x1650] sm:$0xff]
    %v5068 = vld [vmem:[#allocation2 + $0x1658] sm:$0xff]
    %v5069 = vld [vmem:[#allocation2 + $0x1660] sm:$0xff]
    %v5070 = vld [vmem:[#allocation2 + $0x1668] sm:$0xff]
    %v5071 = vld [vmem:[#allocation2 + $0x1670] sm:$0xff]
    %v5072 = vld [vmem:[#allocation2 + $0x1678] sm:$0xff]
    %v5073 = vld [vmem:[%s3] sm:$0xff]
    %v5074 = vld [vmem:[%s3 + $0x8] sm:$0xff]
    %v5075 = vld [vmem:[%s3 + $0x10] sm:$0xff]
    %v5076 = vld [vmem:[%s3 + $0x18] sm:$0xff]
    %v5077 = vld [vmem:[%s3 + $0x20] sm:$0xff]
    %v5078 = vld [vmem:[%s3 + $0x28] sm:$0xff]
    %v5079 = vld [vmem:[%s3 + $0x30] sm:$0xff]
    %v5080 = vld [vmem:[%s3 + $0x38] sm:$0xff]
    %v5081 = vld [vmem:[%s3 + $0x40] sm:$0xff]
    %v5082 = vld [vmem:[%s3 + $0x48] sm:$0xff]
    %v5083 = vld [vmem:[%s3 + $0x50] sm:$0xff]
    %v5084 = vld [vmem:[%s3 + $0x58] sm:$0xff]
    %v5085 = vld [vmem:[%s3 + $0x60] sm:$0xff]
    %v5086 = vld [vmem:[%s3 + $0x68] sm:$0xff]
    %v5087 = vld [vmem:[%s3 + $0x70] sm:$0xff]
    %v5088 = vld [vmem:[%s3 + $0x78] sm:$0xff]
    %v5089 = vld [vmem:[%s3 + $0x80] sm:$0xff]
    %v5090 = vld [vmem:[%s3 + $0x88] sm:$0xff]
    %v5091 = vld [vmem:[%s3 + $0x90] sm:$0xff]
    %v5092 = vld [vmem:[%s3 + $0x98] sm:$0xff]
    %v5093 = vld [vmem:[%s3 + $0xa0] sm:$0xff]
    %v5094 = vld [vmem:[%s3 + $0xa8] sm:$0xff]
    %v5095 = vld [vmem:[%s3 + $0xb0] sm:$0xff]
    %v5096 = vld [vmem:[%s3 + $0xb8] sm:$0xff]
    %v5097 = vld [vmem:[%s3 + $0xc0] sm:$0xff]
    %v5098 = vld [vmem:[%s3 + $0xc8] sm:$0xff]
    %v5099 = vld [vmem:[%s3 + $0xd0] sm:$0xff]
    %v5100 = vld [vmem:[%s3 + $0xd8] sm:$0xff]
    %v5101 = vld [vmem:[%s3 + $0xe0] sm:$0xff]
    %v5102 = vld [vmem:[%s3 + $0xe8] sm:$0xff]
    %v5103 = vld [vmem:[%s3 + $0xf0] sm:$0xff]
    %v5104 = vld [vmem:[%s3 + $0xf8] sm:$0xff]
    %v5105 = vld [vmem:[%s3 + $0x100] sm:$0xff]
    %v5106 = vld [vmem:[%s3 + $0x108] sm:$0xff]
    %v5107 = vld [vmem:[%s3 + $0x110] sm:$0xff]
    %v5108 = vld [vmem:[%s3 + $0x118] sm:$0xff]
    %v5109 = vld [vmem:[%s3 + $0x120] sm:$0xff]
    %v5110 = vld [vmem:[%s3 + $0x128] sm:$0xff]
    %v5111 = vld [vmem:[%s3 + $0x130] sm:$0xff]
    %v5112 = vld [vmem:[%s3 + $0x138] sm:$0xff]
    %v5113 = vld [vmem:[%s3 + $0x140] sm:$0xff]
    %v5114 = vld [vmem:[%s3 + $0x148] sm:$0xff]
    %v5115 = vld [vmem:[%s3 + $0x150] sm:$0xff]
    %v5116 = vld [vmem:[%s3 + $0x158] sm:$0xff]
    %v5117 = vld [vmem:[%s3 + $0x160] sm:$0xff]
    %v5118 = vld [vmem:[%s3 + $0x168] sm:$0xff]
    %v5119 = vld [vmem:[%s3 + $0x170] sm:$0xff]
    %v5120 = vld [vmem:[%s3 + $0x178] sm:$0xff]
    %v5121 = vld [vmem:[%s3 + $0x180] sm:$0xff]
    %v5122 = vld [vmem:[%s3 + $0x188] sm:$0xff]
    %v5123 = vld [vmem:[%s3 + $0x190] sm:$0xff]
    %v5124 = vld [vmem:[%s3 + $0x198] sm:$0xff]
    %v5125 = vld [vmem:[%s3 + $0x1a0] sm:$0xff]
    %v5126 = vld [vmem:[%s3 + $0x1a8] sm:$0xff]
    %v5127 = vld [vmem:[%s3 + $0x1b0] sm:$0xff]
    %v5128 = vld [vmem:[%s3 + $0x1b8] sm:$0xff]
    %v5129 = vld [vmem:[%s3 + $0x1c0] sm:$0xff]
    %v5130 = vld [vmem:[%s3 + $0x1c8] sm:$0xff]
    %v5131 = vld [vmem:[%s3 + $0x1d0] sm:$0xff]
    %v5132 = vld [vmem:[%s3 + $0x1d8] sm:$0xff]
    %v5133 = vld [vmem:[%s3 + $0x1e0] sm:$0xff]
    %v5134 = vld [vmem:[%s3 + $0x1e8] sm:$0xff]
    %v5135 = vld [vmem:[%s3 + $0x1f0] sm:$0xff]
    %v5136 = vld [vmem:[%s3 + $0x1f8] sm:$0xff]
    %v5137 = vld [vmem:[%s3 + $0x200] sm:$0xff]
    %v5138 = vld [vmem:[%s3 + $0x208] sm:$0xff]
    %v5139 = vld [vmem:[%s3 + $0x210] sm:$0xff]
    %v5140 = vld [vmem:[%s3 + $0x218] sm:$0xff]
    %v5141 = vld [vmem:[%s3 + $0x220] sm:$0xff]
    %v5142 = vld [vmem:[%s3 + $0x228] sm:$0xff]
    %v5143 = vld [vmem:[%s3 + $0x230] sm:$0xff]
    %v5144 = vld [vmem:[%s3 + $0x238] sm:$0xff]
    %v5145 = vld [vmem:[%s4] sm:$0x1]
    %v5147 = vperm.slane %v5145, 0
    %v5150 = vsel %vm3636, %v4357, 0
    %v5153 = vsel %vm3636, %v4362, 0
    %v5156 = vsel %vm3636, %v4367, 0
    %v5159 = vsel %vm3636, %v4372, 0
    %v5162 = vsel %vm3636, %v4377, 0
    %v5165 = vsel %vm3636, %v4382, 0
    %v5168 = vsel %vm3636, %v4387, 0
    %v5171 = vsel %vm3636, %v4392, 0
    %v5174 = vsel %vm3636, %v4397, 0
    %v5177 = vsel %vm3636, %v4402, 0
    %v5180 = vsel %vm3636, %v4407, 0
    %v5183 = vsel %vm3636, %v4412, 0
    %v5186 = vsel %vm3636, %v4417, 0
    %v5189 = vsel %vm3636, %v4422, 0
    %v5192 = vsel %vm3636, %v4427, 0
    %v5195 = vsel %vm3636, %v4432, 0
    %v5198 = vsel %vm3636, %v4437, 0
    %v5201 = vsel %vm3636, %v4442, 0
    %v5204 = vsel %vm3636, %v4447, 0
    %v5207 = vsel %vm3636, %v4452, 0
    %v5210 = vsel %vm3636, %v4457, 0
    %v5213 = vsel %vm3636, %v4462, 0
    %v5216 = vsel %vm3636, %v4467, 0
    %v5219 = vsel %vm3636, %v4472, 0
    %v5222 = vsel %vm3636, %v4477, 0
    %v5225 = vsel %vm3636, %v4482, 0
    %v5228 = vsel %vm3636, %v4487, 0
    %v5231 = vsel %vm3636, %v4492, 0
    %v5234 = vsel %vm3636, %v4497, 0
    %v5237 = vsel %vm3636, %v4502, 0
    %v5240 = vsel %vm3636, %v4507, 0
    %v5243 = vsel %vm3636, %v4512, 0
    %v5246 = vsel %vm3636, %v4517, 0
    %v5249 = vsel %vm3636, %v4522, 0
    %v5252 = vsel %vm3636, %v4527, 0
    %v5255 = vsel %vm3636, %v4532, 0
    %v5258 = vsel %vm3636, %v4537, 0
    %v5261 = vsel %vm3636, %v4542, 0
    %v5264 = vsel %vm3636, %v4547, 0
    %v5267 = vsel %vm3636, %v4552, 0
    %v5270 = vsel %vm3636, %v4557, 0
    %v5273 = vsel %vm3636, %v4562, 0
    %v5276 = vsel %vm3636, %v4567, 0
    %v5279 = vsel %vm3636, %v4572, 0
    %v5282 = vsel %vm3636, %v4577, 0
    %v5285 = vsel %vm3636, %v4582, 0
    %v5288 = vsel %vm3636, %v4587, 0
    %v5291 = vsel %vm3636, %v4592, 0
    %v5294 = vsel %vm3636, %v4597, 0
    %v5297 = vsel %vm3636, %v4602, 0
    %v5300 = vsel %vm3636, %v4607, 0
    %v5303 = vsel %vm3636, %v4612, 0
    %v5306 = vsel %vm3636, %v4617, 0
    %v5309 = vsel %vm3636, %v4622, 0
    %v5312 = vsel %vm3636, %v4627, 0
    %v5315 = vsel %vm3636, %v4632, 0
    %v5318 = vsel %vm3636, %v4637, 0
    %v5321 = vsel %vm3636, %v4642, 0
    %v5324 = vsel %vm3636, %v4647, 0
    %v5327 = vsel %vm3636, %v4652, 0
    %v5330 = vsel %vm3636, %v4657, 0
    %v5333 = vsel %vm3636, %v4662, 0
    %v5336 = vsel %vm3636, %v4667, 0
    %v5339 = vsel %vm3636, %v4672, 0
    %v5342 = vsel %vm3636, %v4677, 0
    %v5345 = vsel %vm3636, %v4682, 0
    %v5348 = vsel %vm3636, %v4687, 0
    %v5351 = vsel %vm3636, %v4692, 0
    %v5354 = vsel %vm3636, %v4697, 0
    %v5357 = vsel %vm3636, %v4702, 0
    %v5360 = vsel %vm3636, %v4707, 0
    %v5363 = vsel %vm3636, %v4712, 0
    %v5366 = vsel %vm3636, %v4717, 0
    %v5369 = vsel %vm3636, %v4722, 0
    %v5372 = vsel %vm3636, %v4727, 0
    %v5375 = vsel %vm3636, %v4732, 0
    %v5378 = vsel %vm3636, %v4737, 0
    %v5381 = vsel %vm3636, %v4742, 0
    %v5384 = vsel %vm3636, %v4747, 0
    %v5387 = vsel %vm3636, %v4752, 0
    %v5390 = vsel %vm3636, %v4757, 0
    %v5393 = vsel %vm3636, %v4762, 0
    %v5396 = vsel %vm3636, %v4767, 0
    %v5399 = vsel %vm3636, %v4772, 0
    %v5402 = vsel %vm3636, %v4777, 0
    %v5405 = vsel %vm3636, %v4782, 0
    %v5408 = vsel %vm3636, %v4787, 0
    %v5411 = vsel %vm3636, %v4792, 0
    %v5414 = vsel %vm3636, %v4797, 0
    %v5417 = vsel %vm3636, %v4802, 0
    %v5420 = vsel %vm3636, %v4807, 0
    %v5423 = vsel %vm3636, %v4812, 0
    %v5426 = vsel %vm3636, %v4817, 0
    %v5429 = vsel %vm3636, %v4822, 0
    %v5432 = vsel %vm3636, %v4827, 0
    %v5435 = vsel %vm3636, %v4832, 0
    %v5438 = vsel %vm3636, %v4837, 0
    %v5441 = vsel %vm3636, %v4842, 0
    %v5444 = vsel %vm3636, %v4847, 0
    %v5447 = vsel %vm3636, %v4852, 0
    %v5450 = vsel %vm3636, %v4857, 0
    %v5453 = vsel %vm3636, %v4862, 0
    %v5456 = vsel %vm3636, %v4867, 0
    %v5459 = vsel %vm3636, %v4872, 0
    %v5462 = vsel %vm3636, %v4877, 0
    %v5465 = vsel %vm3636, %v4882, 0
    %v5468 = vsel %vm3636, %v4887, 0
    %v5471 = vsel %vm3636, %v4892, 0
    %v5474 = vsel %vm3636, %v4897, 0
    %v5477 = vsel %vm3636, %v4902, 0
    %v5480 = vsel %vm3636, %v4907, 0
    %v5483 = vsel %vm3636, %v4912, 0
    %v5486 = vsel %vm3636, %v4917, 0
    %v5489 = vsel %vm3636, %v4922, 0
    %v5492 = vsel %vm3636, %v4927, 0
    %v5495 = vsel %vm3636, %v4932, 0
    %v5498 = vsel %vm3636, %v4937, 0
    %v5501 = vsel %vm3636, %v4942, 0
    %v5504 = vsel %vm3636, %v4947, 0
    %v5507 = vsel %vm3636, %v4952, 0
    %v5510 = vsel %vm3636, %v4957, 0
    %v5513 = vsel %vm3636, %v4962, 0
    %v5516 = vsel %vm3636, %v4967, 0
    %v5519 = vsel %vm3636, %v4972, 0
    %v5522 = vsel %vm3636, %v4977, 0
    %v5525 = vsel %vm3636, %v4982, 0
    %v5528 = vsel %vm3636, %v4987, 0
    %v5531 = vsel %vm3636, %v4992, 0
    %v5534 = vsel %vm3636, %v4997, 0
    %v5537 = vsel %vm3636, %v5002, 0
    %v5540 = vsel %vm3636, %v5007, 0
    %v5543 = vsel %vm3636, %v5012, 0
    %v5546 = vsel %vm3636, %v5017, 0
    %v5549 = vsel %vm3636, %v5022, 0
    %v5552 = vsel %vm3636, %v5027, 0
    %v5555 = vsel %vm3636, %v5032, 0
    %v5558 = vsel %vm3636, %v5037, 0
    %v5561 = vsel %vm3636, %v5042, 0
    %v5564 = vsel %vm3636, %v5047, 0
    %v5567 = vsel %vm3636, %v5052, 0
    %v5570 = vsel %vm3636, %v5057, 0
    %v5573 = vsel %vm3636, %v5062, 0
    %v5576 = vsel %vm3636, %v5067, 0
    %v5579 = vsel %vm3636, %v5072, 0
    %5581 = vmatpush.msra.mxu0 %v5088
    %5582 = vmatpush.msra.mxu0 %v5087
    %5583 = vmatpush.msra.mxu0 %v5086
    %5584 = vmatpush.msra.mxu0 %v5085
    %5585 = vmatpush.msra.mxu0 %v5084
    %5586 = vmatpush.msra.mxu0 %v5083
    %5587 = vmatpush.msra.mxu0 %v5082
    %5588 = vmatpush.msra.mxu0 %v5081
    %5589 = vmatpush.msra.mxu0 %v5080
    %5590 = vmatpush.msra.mxu0 %v5079
    %5591 = vmatpush.msra.mxu0 %v5078
    %5592 = vmatpush.msra.mxu0 %v5077
    %5593 = vmatpush.msra.mxu0 %v5076
    %5594 = vmatpush.msra.mxu0 %v5075
    %5595 = vmatpush.msra.mxu0 %v5074
    %5596 = vmatpush.msra.mxu0 %v5073
    %5597 = vmatmul.f32.gmra.mxu0 %v4353
    %v5598 = vpop.f32.mrf.mxu0
    %v5599 = vadd.f32 %v5147, %v5598
    %5600 = vmatmul.f32.gmra.mxu0 %v4358
    %v5601 = vpop.f32.mrf.mxu0
    %v5602 = vadd.f32 %v5147, %v5601
    %5603 = vmatmul.f32.gmra.mxu0 %v4363
    %v5604 = vpop.f32.mrf.mxu0
    %v5605 = vadd.f32 %v5147, %v5604
    %5606 = vmatmul.f32.gmra.mxu0 %v4368
    %v5607 = vpop.f32.mrf.mxu0
    %v5608 = vadd.f32 %v5147, %v5607
    %5609 = vmatmul.f32.gmra.mxu0 %v4373
    %v5610 = vpop.f32.mrf.mxu0
    %v5611 = vadd.f32 %v5147, %v5610
    %5612 = vmatmul.f32.gmra.mxu0 %v4378
    %v5613 = vpop.f32.mrf.mxu0
    %v5614 = vadd.f32 %v5147, %v5613
    %5615 = vmatmul.f32.gmra.mxu0 %v4383
    %v5616 = vpop.f32.mrf.mxu0
    %v5617 = vadd.f32 %v5147, %v5616
    %5618 = vmatmul.f32.gmra.mxu0 %v4388
    %v5619 = vpop.f32.mrf.mxu0
    %v5620 = vadd.f32 %v5147, %v5619
    %5621 = vmatmul.f32.gmra.mxu0 %v4393
    %v5622 = vpop.f32.mrf.mxu0
    %v5623 = vadd.f32 %v5147, %v5622
    %5624 = vmatmul.f32.gmra.mxu0 %v4398
    %v5625 = vpop.f32.mrf.mxu0
    %v5626 = vadd.f32 %v5147, %v5625
    %5627 = vmatmul.f32.gmra.mxu0 %v4403
    %v5628 = vpop.f32.mrf.mxu0
    %v5629 = vadd.f32 %v5147, %v5628
    %5630 = vmatmul.f32.gmra.mxu0 %v4408
    %v5631 = vpop.f32.mrf.mxu0
    %v5632 = vadd.f32 %v5147, %v5631
    %5633 = vmatmul.f32.gmra.mxu0 %v4413
    %v5634 = vpop.f32.mrf.mxu0
    %v5635 = vadd.f32 %v5147, %v5634
    %5636 = vmatmul.f32.gmra.mxu0 %v4418
    %v5637 = vpop.f32.mrf.mxu0
    %v5638 = vadd.f32 %v5147, %v5637
    %5639 = vmatmul.f32.gmra.mxu0 %v4423
    %v5640 = vpop.f32.mrf.mxu0
    %v5641 = vadd.f32 %v5147, %v5640
    %5642 = vmatmul.f32.gmra.mxu0 %v4428
    %v5643 = vpop.f32.mrf.mxu0
    %v5644 = vadd.f32 %v5147, %v5643
    %5645 = vmatmul.f32.gmra.mxu0 %v4433
    %v5646 = vpop.f32.mrf.mxu0
    %v5647 = vadd.f32 %v5147, %v5646
    %5648 = vmatmul.f32.gmra.mxu0 %v4438
    %v5649 = vpop.f32.mrf.mxu0
    %v5650 = vadd.f32 %v5147, %v5649
    %5651 = vmatmul.f32.gmra.mxu0 %v4443
    %v5652 = vpop.f32.mrf.mxu0
    %v5653 = vadd.f32 %v5147, %v5652
    %5654 = vmatmul.f32.gmra.mxu0 %v4448
    %v5655 = vpop.f32.mrf.mxu0
    %v5656 = vadd.f32 %v5147, %v5655
    %5657 = vmatmul.f32.gmra.mxu0 %v4453
    %v5658 = vpop.f32.mrf.mxu0
    %v5659 = vadd.f32 %v5147, %v5658
    %5660 = vmatmul.f32.gmra.mxu0 %v4458
    %v5661 = vpop.f32.mrf.mxu0
    %v5662 = vadd.f32 %v5147, %v5661
    %5663 = vmatmul.f32.gmra.mxu0 %v4463
    %v5664 = vpop.f32.mrf.mxu0
    %v5665 = vadd.f32 %v5147, %v5664
    %5666 = vmatmul.f32.gmra.mxu0 %v4468
    %v5667 = vpop.f32.mrf.mxu0
    %v5668 = vadd.f32 %v5147, %v5667
    %5669 = vmatmul.f32.gmra.mxu0 %v4473
    %v5670 = vpop.f32.mrf.mxu0
    %v5671 = vadd.f32 %v5147, %v5670
    %5672 = vmatmul.f32.gmra.mxu0 %v4478
    %v5673 = vpop.f32.mrf.mxu0
    %v5674 = vadd.f32 %v5147, %v5673
    %5675 = vmatmul.f32.gmra.mxu0 %v4483
    %v5676 = vpop.f32.mrf.mxu0
    %v5677 = vadd.f32 %v5147, %v5676
    %5678 = vmatmul.f32.gmra.mxu0 %v4488
    %v5679 = vpop.f32.mrf.mxu0
    %v5680 = vadd.f32 %v5147, %v5679
    %5681 = vmatmul.f32.gmra.mxu0 %v4493
    %v5682 = vpop.f32.mrf.mxu0
    %v5683 = vadd.f32 %v5147, %v5682
    %5684 = vmatmul.f32.gmra.mxu0 %v4498
    %v5685 = vpop.f32.mrf.mxu0
    %v5686 = vadd.f32 %v5147, %v5685
    %5687 = vmatmul.f32.gmra.mxu0 %v4503
    %v5688 = vpop.f32.mrf.mxu0
    %v5689 = vadd.f32 %v5147, %v5688
    %5690 = vmatmul.f32.gmra.mxu0 %v4508
    %v5691 = vpop.f32.mrf.mxu0
    %v5692 = vadd.f32 %v5147, %v5691
    %5693 = vmatmul.f32.gmra.mxu0 %v4513
    %v5694 = vpop.f32.mrf.mxu0
    %v5695 = vadd.f32 %v5147, %v5694
    %5696 = vmatmul.f32.gmra.mxu0 %v4518
    %v5697 = vpop.f32.mrf.mxu0
    %v5698 = vadd.f32 %v5147, %v5697
    %5699 = vmatmul.f32.gmra.mxu0 %v4523
    %v5700 = vpop.f32.mrf.mxu0
    %v5701 = vadd.f32 %v5147, %v5700
    %5702 = vmatmul.f32.gmra.mxu0 %v4528
    %v5703 = vpop.f32.mrf.mxu0
    %v5704 = vadd.f32 %v5147, %v5703
    %5705 = vmatmul.f32.gmra.mxu0 %v4533
    %v5706 = vpop.f32.mrf.mxu0
    %v5707 = vadd.f32 %v5147, %v5706
    %5708 = vmatmul.f32.gmra.mxu0 %v4538
    %v5709 = vpop.f32.mrf.mxu0
    %v5710 = vadd.f32 %v5147, %v5709
    %5711 = vmatmul.f32.gmra.mxu0 %v4543
    %v5712 = vpop.f32.mrf.mxu0
    %v5713 = vadd.f32 %v5147, %v5712
    %5714 = vmatmul.f32.gmra.mxu0 %v4548
    %v5715 = vpop.f32.mrf.mxu0
    %v5716 = vadd.f32 %v5147, %v5715
    %5717 = vmatmul.f32.gmra.mxu0 %v4553
    %v5718 = vpop.f32.mrf.mxu0
    %v5719 = vadd.f32 %v5147, %v5718
    %5720 = vmatmul.f32.gmra.mxu0 %v4558
    %v5721 = vpop.f32.mrf.mxu0
    %v5722 = vadd.f32 %v5147, %v5721
    %5723 = vmatmul.f32.gmra.mxu0 %v4563
    %v5724 = vpop.f32.mrf.mxu0
    %v5725 = vadd.f32 %v5147, %v5724
    %5726 = vmatmul.f32.gmra.mxu0 %v4568
    %v5727 = vpop.f32.mrf.mxu0
    %v5728 = vadd.f32 %v5147, %v5727
    %5729 = vmatmul.f32.gmra.mxu0 %v4573
    %v5730 = vpop.f32.mrf.mxu0
    %v5731 = vadd.f32 %v5147, %v5730
    %5732 = vmatmul.f32.gmra.mxu0 %v4578
    %v5733 = vpop.f32.mrf.mxu0
    %v5734 = vadd.f32 %v5147, %v5733
    %5735 = vmatmul.f32.gmra.mxu0 %v4583
    %v5736 = vpop.f32.mrf.mxu0
    %v5737 = vadd.f32 %v5147, %v5736
    %5738 = vmatmul.f32.gmra.mxu0 %v4588
    %v5739 = vpop.f32.mrf.mxu0
    %v5740 = vadd.f32 %v5147, %v5739
    %5741 = vmatmul.f32.gmra.mxu0 %v4593
    %v5742 = vpop.f32.mrf.mxu0
    %v5743 = vadd.f32 %v5147, %v5742
    %5744 = vmatmul.f32.gmra.mxu0 %v4598
    %v5745 = vpop.f32.mrf.mxu0
    %v5746 = vadd.f32 %v5147, %v5745
    %5747 = vmatmul.f32.gmra.mxu0 %v4603
    %v5748 = vpop.f32.mrf.mxu0
    %v5749 = vadd.f32 %v5147, %v5748
    %5750 = vmatmul.f32.gmra.mxu0 %v4608
    %v5751 = vpop.f32.mrf.mxu0
    %v5752 = vadd.f32 %v5147, %v5751
    %5753 = vmatmul.f32.gmra.mxu0 %v4613
    %v5754 = vpop.f32.mrf.mxu0
    %v5755 = vadd.f32 %v5147, %v5754
    %5756 = vmatmul.f32.gmra.mxu0 %v4618
    %v5757 = vpop.f32.mrf.mxu0
    %v5758 = vadd.f32 %v5147, %v5757
    %5759 = vmatmul.f32.gmra.mxu0 %v4623
    %v5760 = vpop.f32.mrf.mxu0
    %v5761 = vadd.f32 %v5147, %v5760
    %5762 = vmatmul.f32.gmra.mxu0 %v4628
    %v5763 = vpop.f32.mrf.mxu0
    %v5764 = vadd.f32 %v5147, %v5763
    %5765 = vmatmul.f32.gmra.mxu0 %v4633
    %v5766 = vpop.f32.mrf.mxu0
    %v5767 = vadd.f32 %v5147, %v5766
    %5768 = vmatmul.f32.gmra.mxu0 %v4638
    %v5769 = vpop.f32.mrf.mxu0
    %v5770 = vadd.f32 %v5147, %v5769
    %5771 = vmatmul.f32.gmra.mxu0 %v4643
    %v5772 = vpop.f32.mrf.mxu0
    %v5773 = vadd.f32 %v5147, %v5772
    %5774 = vmatmul.f32.gmra.mxu0 %v4648
    %v5775 = vpop.f32.mrf.mxu0
    %v5776 = vadd.f32 %v5147, %v5775
    %5777 = vmatmul.f32.gmra.mxu0 %v4653
    %v5778 = vpop.f32.mrf.mxu0
    %v5779 = vadd.f32 %v5147, %v5778
    %5780 = vmatmul.f32.gmra.mxu0 %v4658
    %v5781 = vpop.f32.mrf.mxu0
    %v5782 = vadd.f32 %v5147, %v5781
    %5783 = vmatmul.f32.gmra.mxu0 %v4663
    %v5784 = vpop.f32.mrf.mxu0
    %v5785 = vadd.f32 %v5147, %v5784
    %5786 = vmatmul.f32.gmra.mxu0 %v4668
    %v5787 = vpop.f32.mrf.mxu0
    %v5788 = vadd.f32 %v5147, %v5787
    %5789 = vmatmul.f32.gmra.mxu0 %v4673
    %v5790 = vpop.f32.mrf.mxu0
    %v5791 = vadd.f32 %v5147, %v5790
    %5792 = vmatmul.f32.gmra.mxu0 %v4678
    %v5793 = vpop.f32.mrf.mxu0
    %v5794 = vadd.f32 %v5147, %v5793
    %5795 = vmatmul.f32.gmra.mxu0 %v4683
    %v5796 = vpop.f32.mrf.mxu0
    %v5797 = vadd.f32 %v5147, %v5796
    %5798 = vmatmul.f32.gmra.mxu0 %v4688
    %v5799 = vpop.f32.mrf.mxu0
    %v5800 = vadd.f32 %v5147, %v5799
    %5801 = vmatmul.f32.gmra.mxu0 %v4693
    %v5802 = vpop.f32.mrf.mxu0
    %v5803 = vadd.f32 %v5147, %v5802
    %5804 = vmatmul.f32.gmra.mxu0 %v4698
    %v5805 = vpop.f32.mrf.mxu0
    %v5806 = vadd.f32 %v5147, %v5805
    %5807 = vmatmul.f32.gmra.mxu0 %v4703
    %v5808 = vpop.f32.mrf.mxu0
    %v5809 = vadd.f32 %v5147, %v5808
    %5810 = vmatmul.f32.gmra.mxu0 %v4708
    %v5811 = vpop.f32.mrf.mxu0
    %v5812 = vadd.f32 %v5147, %v5811
    %5813 = vmatmul.f32.gmra.mxu0 %v4713
    %v5814 = vpop.f32.mrf.mxu0
    %v5815 = vadd.f32 %v5147, %v5814
    %5816 = vmatmul.f32.gmra.mxu0 %v4718
    %v5817 = vpop.f32.mrf.mxu0
    %v5818 = vadd.f32 %v5147, %v5817
    %5819 = vmatmul.f32.gmra.mxu0 %v4723
    %v5820 = vpop.f32.mrf.mxu0
    %v5821 = vadd.f32 %v5147, %v5820
    %5822 = vmatmul.f32.gmra.mxu0 %v4728
    %v5823 = vpop.f32.mrf.mxu0
    %v5824 = vadd.f32 %v5147, %v5823
    %5825 = vmatmul.f32.gmra.mxu0 %v4733
    %v5826 = vpop.f32.mrf.mxu0
    %v5827 = vadd.f32 %v5147, %v5826
    %5828 = vmatmul.f32.gmra.mxu0 %v4738
    %v5829 = vpop.f32.mrf.mxu0
    %v5830 = vadd.f32 %v5147, %v5829
    %5831 = vmatmul.f32.gmra.mxu0 %v4743
    %v5832 = vpop.f32.mrf.mxu0
    %v5833 = vadd.f32 %v5147, %v5832
    %5834 = vmatmul.f32.gmra.mxu0 %v4748
    %v5835 = vpop.f32.mrf.mxu0
    %v5836 = vadd.f32 %v5147, %v5835
    %5837 = vmatmul.f32.gmra.mxu0 %v4753
    %v5838 = vpop.f32.mrf.mxu0
    %v5839 = vadd.f32 %v5147, %v5838
    %5840 = vmatmul.f32.gmra.mxu0 %v4758
    %v5841 = vpop.f32.mrf.mxu0
    %v5842 = vadd.f32 %v5147, %v5841
    %5843 = vmatmul.f32.gmra.mxu0 %v4763
    %v5844 = vpop.f32.mrf.mxu0
    %v5845 = vadd.f32 %v5147, %v5844
    %5846 = vmatmul.f32.gmra.mxu0 %v4768
    %v5847 = vpop.f32.mrf.mxu0
    %v5848 = vadd.f32 %v5147, %v5847
    %5849 = vmatmul.f32.gmra.mxu0 %v4773
    %v5850 = vpop.f32.mrf.mxu0
    %v5851 = vadd.f32 %v5147, %v5850
    %5852 = vmatmul.f32.gmra.mxu0 %v4778
    %v5853 = vpop.f32.mrf.mxu0
    %v5854 = vadd.f32 %v5147, %v5853
    %5855 = vmatmul.f32.gmra.mxu0 %v4783
    %v5856 = vpop.f32.mrf.mxu0
    %v5857 = vadd.f32 %v5147, %v5856
    %5858 = vmatmul.f32.gmra.mxu0 %v4788
    %v5859 = vpop.f32.mrf.mxu0
    %v5860 = vadd.f32 %v5147, %v5859
    %5861 = vmatmul.f32.gmra.mxu0 %v4793
    %v5862 = vpop.f32.mrf.mxu0
    %v5863 = vadd.f32 %v5147, %v5862
    %5864 = vmatmul.f32.gmra.mxu0 %v4798
    %v5865 = vpop.f32.mrf.mxu0
    %v5866 = vadd.f32 %v5147, %v5865
    %5867 = vmatmul.f32.gmra.mxu0 %v4803
    %v5868 = vpop.f32.mrf.mxu0
    %v5869 = vadd.f32 %v5147, %v5868
    %5870 = vmatmul.f32.gmra.mxu0 %v4808
    %v5871 = vpop.f32.mrf.mxu0
    %v5872 = vadd.f32 %v5147, %v5871
    %5873 = vmatmul.f32.gmra.mxu0 %v4813
    %v5874 = vpop.f32.mrf.mxu0
    %v5875 = vadd.f32 %v5147, %v5874
    %5876 = vmatmul.f32.gmra.mxu0 %v4818
    %v5877 = vpop.f32.mrf.mxu0
    %v5878 = vadd.f32 %v5147, %v5877
    %5879 = vmatmul.f32.gmra.mxu0 %v4823
    %v5880 = vpop.f32.mrf.mxu0
    %v5881 = vadd.f32 %v5147, %v5880
    %5882 = vmatmul.f32.gmra.mxu0 %v4828
    %v5883 = vpop.f32.mrf.mxu0
    %v5884 = vadd.f32 %v5147, %v5883
    %5885 = vmatmul.f32.gmra.mxu0 %v4833
    %v5886 = vpop.f32.mrf.mxu0
    %v5887 = vadd.f32 %v5147, %v5886
    %5888 = vmatmul.f32.gmra.mxu0 %v4838
    %v5889 = vpop.f32.mrf.mxu0
    %v5890 = vadd.f32 %v5147, %v5889
    %5891 = vmatmul.f32.gmra.mxu0 %v4843
    %v5892 = vpop.f32.mrf.mxu0
    %v5893 = vadd.f32 %v5147, %v5892
    %5894 = vmatmul.f32.gmra.mxu0 %v4848
    %v5895 = vpop.f32.mrf.mxu0
    %v5896 = vadd.f32 %v5147, %v5895
    %5897 = vmatmul.f32.gmra.mxu0 %v4853
    %v5898 = vpop.f32.mrf.mxu0
    %v5899 = vadd.f32 %v5147, %v5898
    %5900 = vmatmul.f32.gmra.mxu0 %v4858
    %v5901 = vpop.f32.mrf.mxu0
    %v5902 = vadd.f32 %v5147, %v5901
    %5903 = vmatmul.f32.gmra.mxu0 %v4863
    %v5904 = vpop.f32.mrf.mxu0
    %v5905 = vadd.f32 %v5147, %v5904
    %5906 = vmatmul.f32.gmra.mxu0 %v4868
    %v5907 = vpop.f32.mrf.mxu0
    %v5908 = vadd.f32 %v5147, %v5907
    %5909 = vmatmul.f32.gmra.mxu0 %v4873
    %v5910 = vpop.f32.mrf.mxu0
    %v5911 = vadd.f32 %v5147, %v5910
    %5912 = vmatmul.f32.gmra.mxu0 %v4878
    %v5913 = vpop.f32.mrf.mxu0
    %v5914 = vadd.f32 %v5147, %v5913
    %5915 = vmatmul.f32.gmra.mxu0 %v4883
    %v5916 = vpop.f32.mrf.mxu0
    %v5917 = vadd.f32 %v5147, %v5916
    %5918 = vmatmul.f32.gmra.mxu0 %v4888
    %v5919 = vpop.f32.mrf.mxu0
    %v5920 = vadd.f32 %v5147, %v5919
    %5921 = vmatmul.f32.gmra.mxu0 %v4893
    %v5922 = vpop.f32.mrf.mxu0
    %v5923 = vadd.f32 %v5147, %v5922
    %5924 = vmatmul.f32.gmra.mxu0 %v4898
    %v5925 = vpop.f32.mrf.mxu0
    %v5926 = vadd.f32 %v5147, %v5925
    %5927 = vmatmul.f32.gmra.mxu0 %v4903
    %v5928 = vpop.f32.mrf.mxu0
    %v5929 = vadd.f32 %v5147, %v5928
    %5930 = vmatmul.f32.gmra.mxu0 %v4908
    %v5931 = vpop.f32.mrf.mxu0
    %v5932 = vadd.f32 %v5147, %v5931
    %5933 = vmatmul.f32.gmra.mxu0 %v4913
    %v5934 = vpop.f32.mrf.mxu0
    %v5935 = vadd.f32 %v5147, %v5934
    %5936 = vmatmul.f32.gmra.mxu0 %v4918
    %v5937 = vpop.f32.mrf.mxu0
    %v5938 = vadd.f32 %v5147, %v5937
    %5939 = vmatmul.f32.gmra.mxu0 %v4923
    %v5940 = vpop.f32.mrf.mxu0
    %v5941 = vadd.f32 %v5147, %v5940
    %5942 = vmatmul.f32.gmra.mxu0 %v4928
    %v5943 = vpop.f32.mrf.mxu0
    %v5944 = vadd.f32 %v5147, %v5943
    %5945 = vmatmul.f32.gmra.mxu0 %v4933
    %v5946 = vpop.f32.mrf.mxu0
    %v5947 = vadd.f32 %v5147, %v5946
    %5948 = vmatmul.f32.gmra.mxu0 %v4938
    %v5949 = vpop.f32.mrf.mxu0
    %v5950 = vadd.f32 %v5147, %v5949
    %5951 = vmatmul.f32.gmra.mxu0 %v4943
    %v5952 = vpop.f32.mrf.mxu0
    %v5953 = vadd.f32 %v5147, %v5952
    %5954 = vmatmul.f32.gmra.mxu0 %v4948
    %v5955 = vpop.f32.mrf.mxu0
    %v5956 = vadd.f32 %v5147, %v5955
    %5957 = vmatmul.f32.gmra.mxu0 %v4953
    %v5958 = vpop.f32.mrf.mxu0
    %v5959 = vadd.f32 %v5147, %v5958
    %5960 = vmatmul.f32.gmra.mxu0 %v4958
    %v5961 = vpop.f32.mrf.mxu0
    %v5962 = vadd.f32 %v5147, %v5961
    %5963 = vmatmul.f32.gmra.mxu0 %v4963
    %v5964 = vpop.f32.mrf.mxu0
    %v5965 = vadd.f32 %v5147, %v5964
    %5966 = vmatmul.f32.gmra.mxu0 %v4968
    %v5967 = vpop.f32.mrf.mxu0
    %v5968 = vadd.f32 %v5147, %v5967
    %5969 = vmatmul.f32.gmra.mxu0 %v4973
    %v5970 = vpop.f32.mrf.mxu0
    %v5971 = vadd.f32 %v5147, %v5970
    %5972 = vmatmul.f32.gmra.mxu0 %v4978
    %v5973 = vpop.f32.mrf.mxu0
    %v5974 = vadd.f32 %v5147, %v5973
    %5975 = vmatmul.f32.gmra.mxu0 %v4983
    %v5976 = vpop.f32.mrf.mxu0
    %v5977 = vadd.f32 %v5147, %v5976
    %5978 = vmatmul.f32.gmra.mxu0 %v4988
    %v5979 = vpop.f32.mrf.mxu0
    %v5980 = vadd.f32 %v5147, %v5979
    %5981 = vmatmul.f32.gmra.mxu0 %v4993
    %v5982 = vpop.f32.mrf.mxu0
    %v5983 = vadd.f32 %v5147, %v5982
    %5984 = vmatmul.f32.gmra.mxu0 %v4998
    %v5985 = vpop.f32.mrf.mxu0
    %v5986 = vadd.f32 %v5147, %v5985
    %5987 = vmatmul.f32.gmra.mxu0 %v5003
    %v5988 = vpop.f32.mrf.mxu0
    %v5989 = vadd.f32 %v5147, %v5988
    %5990 = vmatmul.f32.gmra.mxu0 %v5008
    %v5991 = vpop.f32.mrf.mxu0
    %v5992 = vadd.f32 %v5147, %v5991
    %5993 = vmatmul.f32.gmra.mxu0 %v5013
    %v5994 = vpop.f32.mrf.mxu0
    %v5995 = vadd.f32 %v5147, %v5994
    %5996 = vmatmul.f32.gmra.mxu0 %v5018
    %v5997 = vpop.f32.mrf.mxu0
    %v5998 = vadd.f32 %v5147, %v5997
    %5999 = vmatmul.f32.gmra.mxu0 %v5023
    %v6000 = vpop.f32.mrf.mxu0
    %v6001 = vadd.f32 %v5147, %v6000
    %6002 = vmatmul.f32.gmra.mxu0 %v5028
    %v6003 = vpop.f32.mrf.mxu0
    %v6004 = vadd.f32 %v5147, %v6003
    %6005 = vmatmul.f32.gmra.mxu0 %v5033
    %v6006 = vpop.f32.mrf.mxu0
    %v6007 = vadd.f32 %v5147, %v6006
    %6008 = vmatmul.f32.gmra.mxu0 %v5038
    %v6009 = vpop.f32.mrf.mxu0
    %v6010 = vadd.f32 %v5147, %v6009
    %6011 = vmatmul.f32.gmra.mxu0 %v5043
    %v6012 = vpop.f32.mrf.mxu0
    %v6013 = vadd.f32 %v5147, %v6012
    %6014 = vmatmul.f32.gmra.mxu0 %v5048
    %v6015 = vpop.f32.mrf.mxu0
    %v6016 = vadd.f32 %v5147, %v6015
    %6017 = vmatmul.f32.gmra.mxu0 %v5053
    %v6018 = vpop.f32.mrf.mxu0
    %v6019 = vadd.f32 %v5147, %v6018
    %6020 = vmatmul.f32.gmra.mxu0 %v5058
    %v6021 = vpop.f32.mrf.mxu0
    %v6022 = vadd.f32 %v5147, %v6021
    %6023 = vmatmul.f32.gmra.mxu0 %v5063
    %v6024 = vpop.f32.mrf.mxu0
    %v6025 = vadd.f32 %v5147, %v6024
    %6026 = vmatmul.f32.gmra.mxu0 %v5068
    %v6027 = vpop.f32.mrf.mxu0
    %v6028 = vadd.f32 %v5147, %v6027
    %6029 = vdwg.mxu0
    %6030 = vmatpush.msra.mxu0 %v5104
    %6031 = vmatpush.msra.mxu0 %v5103
    %6032 = vmatpush.msra.mxu0 %v5102
    %6033 = vmatpush.msra.mxu0 %v5101
    %6034 = vmatpush.msra.mxu0 %v5100
    %6035 = vmatpush.msra.mxu0 %v5099
    %6036 = vmatpush.msra.mxu0 %v5098
    %6037 = vmatpush.msra.mxu0 %v5097
    %6038 = vmatpush.msra.mxu0 %v5096
    %6039 = vmatpush.msra.mxu0 %v5095
    %6040 = vmatpush.msra.mxu0 %v5094
    %6041 = vmatpush.msra.mxu0 %v5093
    %6042 = vmatpush.msra.mxu0 %v5092
    %6043 = vmatpush.msra.mxu0 %v5091
    %6044 = vmatpush.msra.mxu0 %v5090
    %6045 = vmatpush.msra.mxu0 %v5089
    %6046 = vmatmul.f32.gmra.mxu0 %v4354
    %v6047 = vpop.f32.mrf.mxu0
    %v6048 = vadd.f32 %v5599, %v6047
    %6049 = vmatmul.f32.gmra.mxu0 %v4359
    %v6050 = vpop.f32.mrf.mxu0
    %v6051 = vadd.f32 %v5602, %v6050
    %6052 = vmatmul.f32.gmra.mxu0 %v4364
    %v6053 = vpop.f32.mrf.mxu0
    %v6054 = vadd.f32 %v5605, %v6053
    %6055 = vmatmul.f32.gmra.mxu0 %v4369
    %v6056 = vpop.f32.mrf.mxu0
    %v6057 = vadd.f32 %v5608, %v6056
    %6058 = vmatmul.f32.gmra.mxu0 %v4374
    %v6059 = vpop.f32.mrf.mxu0
    %v6060 = vadd.f32 %v5611, %v6059
    %6061 = vmatmul.f32.gmra.mxu0 %v4379
    %v6062 = vpop.f32.mrf.mxu0
    %v6063 = vadd.f32 %v5614, %v6062
    %6064 = vmatmul.f32.gmra.mxu0 %v4384
    %v6065 = vpop.f32.mrf.mxu0
    %v6066 = vadd.f32 %v5617, %v6065
    %6067 = vmatmul.f32.gmra.mxu0 %v4389
    %v6068 = vpop.f32.mrf.mxu0
    %v6069 = vadd.f32 %v5620, %v6068
    %6070 = vmatmul.f32.gmra.mxu0 %v4394
    %v6071 = vpop.f32.mrf.mxu0
    %v6072 = vadd.f32 %v5623, %v6071
    %6073 = vmatmul.f32.gmra.mxu0 %v4399
    %v6074 = vpop.f32.mrf.mxu0
    %v6075 = vadd.f32 %v5626, %v6074
    %6076 = vmatmul.f32.gmra.mxu0 %v4404
    %v6077 = vpop.f32.mrf.mxu0
    %v6078 = vadd.f32 %v5629, %v6077
    %6079 = vmatmul.f32.gmra.mxu0 %v4409
    %v6080 = vpop.f32.mrf.mxu0
    %v6081 = vadd.f32 %v5632, %v6080
    %6082 = vmatmul.f32.gmra.mxu0 %v4414
    %v6083 = vpop.f32.mrf.mxu0
    %v6084 = vadd.f32 %v5635, %v6083
    %6085 = vmatmul.f32.gmra.mxu0 %v4419
    %v6086 = vpop.f32.mrf.mxu0
    %v6087 = vadd.f32 %v5638, %v6086
    %6088 = vmatmul.f32.gmra.mxu0 %v4424
    %v6089 = vpop.f32.mrf.mxu0
    %v6090 = vadd.f32 %v5641, %v6089
    %6091 = vmatmul.f32.gmra.mxu0 %v4429
    %v6092 = vpop.f32.mrf.mxu0
    %v6093 = vadd.f32 %v5644, %v6092
    %6094 = vmatmul.f32.gmra.mxu0 %v4434
    %v6095 = vpop.f32.mrf.mxu0
    %v6096 = vadd.f32 %v5647, %v6095
    %6097 = vmatmul.f32.gmra.mxu0 %v4439
    %v6098 = vpop.f32.mrf.mxu0
    %v6099 = vadd.f32 %v5650, %v6098
    %6100 = vmatmul.f32.gmra.mxu0 %v4444
    %v6101 = vpop.f32.mrf.mxu0
    %v6102 = vadd.f32 %v5653, %v6101
    %6103 = vmatmul.f32.gmra.mxu0 %v4449
    %v6104 = vpop.f32.mrf.mxu0
    %v6105 = vadd.f32 %v5656, %v6104
    %6106 = vmatmul.f32.gmra.mxu0 %v4454
    %v6107 = vpop.f32.mrf.mxu0
    %v6108 = vadd.f32 %v5659, %v6107
    %6109 = vmatmul.f32.gmra.mxu0 %v4459
    %v6110 = vpop.f32.mrf.mxu0
    %v6111 = vadd.f32 %v5662, %v6110
    %6112 = vmatmul.f32.gmra.mxu0 %v4464
    %v6113 = vpop.f32.mrf.mxu0
    %v6114 = vadd.f32 %v5665, %v6113
    %6115 = vmatmul.f32.gmra.mxu0 %v4469
    %v6116 = vpop.f32.mrf.mxu0
    %v6117 = vadd.f32 %v5668, %v6116
    %6118 = vmatmul.f32.gmra.mxu0 %v4474
    %v6119 = vpop.f32.mrf.mxu0
    %v6120 = vadd.f32 %v5671, %v6119
    %6121 = vmatmul.f32.gmra.mxu0 %v4479
    %v6122 = vpop.f32.mrf.mxu0
    %v6123 = vadd.f32 %v5674, %v6122
    %6124 = vmatmul.f32.gmra.mxu0 %v4484
    %v6125 = vpop.f32.mrf.mxu0
    %v6126 = vadd.f32 %v5677, %v6125
    %6127 = vmatmul.f32.gmra.mxu0 %v4489
    %v6128 = vpop.f32.mrf.mxu0
    %v6129 = vadd.f32 %v5680, %v6128
    %6130 = vmatmul.f32.gmra.mxu0 %v4494
    %v6131 = vpop.f32.mrf.mxu0
    %v6132 = vadd.f32 %v5683, %v6131
    %6133 = vmatmul.f32.gmra.mxu0 %v4499
    %v6134 = vpop.f32.mrf.mxu0
    %v6135 = vadd.f32 %v5686, %v6134
    %6136 = vmatmul.f32.gmra.mxu0 %v4504
    %v6137 = vpop.f32.mrf.mxu0
    %v6138 = vadd.f32 %v5689, %v6137
    %6139 = vmatmul.f32.gmra.mxu0 %v4509
    %v6140 = vpop.f32.mrf.mxu0
    %v6141 = vadd.f32 %v5692, %v6140
    %6142 = vmatmul.f32.gmra.mxu0 %v4514
    %v6143 = vpop.f32.mrf.mxu0
    %v6144 = vadd.f32 %v5695, %v6143
    %6145 = vmatmul.f32.gmra.mxu0 %v4519
    %v6146 = vpop.f32.mrf.mxu0
    %v6147 = vadd.f32 %v5698, %v6146
    %6148 = vmatmul.f32.gmra.mxu0 %v4524
    %v6149 = vpop.f32.mrf.mxu0
    %v6150 = vadd.f32 %v5701, %v6149
    %6151 = vmatmul.f32.gmra.mxu0 %v4529
    %v6152 = vpop.f32.mrf.mxu0
    %v6153 = vadd.f32 %v5704, %v6152
    %6154 = vmatmul.f32.gmra.mxu0 %v4534
    %v6155 = vpop.f32.mrf.mxu0
    %v6156 = vadd.f32 %v5707, %v6155
    %6157 = vmatmul.f32.gmra.mxu0 %v4539
    %v6158 = vpop.f32.mrf.mxu0
    %v6159 = vadd.f32 %v5710, %v6158
    %6160 = vmatmul.f32.gmra.mxu0 %v4544
    %v6161 = vpop.f32.mrf.mxu0
    %v6162 = vadd.f32 %v5713, %v6161
    %6163 = vmatmul.f32.gmra.mxu0 %v4549
    %v6164 = vpop.f32.mrf.mxu0
    %v6165 = vadd.f32 %v5716, %v6164
    %6166 = vmatmul.f32.gmra.mxu0 %v4554
    %v6167 = vpop.f32.mrf.mxu0
    %v6168 = vadd.f32 %v5719, %v6167
    %6169 = vmatmul.f32.gmra.mxu0 %v4559
    %v6170 = vpop.f32.mrf.mxu0
    %v6171 = vadd.f32 %v5722, %v6170
    %6172 = vmatmul.f32.gmra.mxu0 %v4564
    %v6173 = vpop.f32.mrf.mxu0
    %v6174 = vadd.f32 %v5725, %v6173
    %6175 = vmatmul.f32.gmra.mxu0 %v4569
    %v6176 = vpop.f32.mrf.mxu0
    %v6177 = vadd.f32 %v5728, %v6176
    %6178 = vmatmul.f32.gmra.mxu0 %v4574
    %v6179 = vpop.f32.mrf.mxu0
    %v6180 = vadd.f32 %v5731, %v6179
    %6181 = vmatmul.f32.gmra.mxu0 %v4579
    %v6182 = vpop.f32.mrf.mxu0
    %v6183 = vadd.f32 %v5734, %v6182
    %6184 = vmatmul.f32.gmra.mxu0 %v4584
    %v6185 = vpop.f32.mrf.mxu0
    %v6186 = vadd.f32 %v5737, %v6185
    %6187 = vmatmul.f32.gmra.mxu0 %v4589
    %v6188 = vpop.f32.mrf.mxu0
    %v6189 = vadd.f32 %v5740, %v6188
    %6190 = vmatmul.f32.gmra.mxu0 %v4594
    %v6191 = vpop.f32.mrf.mxu0
    %v6192 = vadd.f32 %v5743, %v6191
    %6193 = vmatmul.f32.gmra.mxu0 %v4599
    %v6194 = vpop.f32.mrf.mxu0
    %v6195 = vadd.f32 %v5746, %v6194
    %6196 = vmatmul.f32.gmra.mxu0 %v4604
    %v6197 = vpop.f32.mrf.mxu0
    %v6198 = vadd.f32 %v5749, %v6197
    %6199 = vmatmul.f32.gmra.mxu0 %v4609
    %v6200 = vpop.f32.mrf.mxu0
    %v6201 = vadd.f32 %v5752, %v6200
    %6202 = vmatmul.f32.gmra.mxu0 %v4614
    %v6203 = vpop.f32.mrf.mxu0
    %v6204 = vadd.f32 %v5755, %v6203
    %6205 = vmatmul.f32.gmra.mxu0 %v4619
    %v6206 = vpop.f32.mrf.mxu0
    %v6207 = vadd.f32 %v5758, %v6206
    %6208 = vmatmul.f32.gmra.mxu0 %v4624
    %v6209 = vpop.f32.mrf.mxu0
    %v6210 = vadd.f32 %v5761, %v6209
    %6211 = vmatmul.f32.gmra.mxu0 %v4629
    %v6212 = vpop.f32.mrf.mxu0
    %v6213 = vadd.f32 %v5764, %v6212
    %6214 = vmatmul.f32.gmra.mxu0 %v4634
    %v6215 = vpop.f32.mrf.mxu0
    %v6216 = vadd.f32 %v5767, %v6215
    %6217 = vmatmul.f32.gmra.mxu0 %v4639
    %v6218 = vpop.f32.mrf.mxu0
    %v6219 = vadd.f32 %v5770, %v6218
    %6220 = vmatmul.f32.gmra.mxu0 %v4644
    %v6221 = vpop.f32.mrf.mxu0
    %v6222 = vadd.f32 %v5773, %v6221
    %6223 = vmatmul.f32.gmra.mxu0 %v4649
    %v6224 = vpop.f32.mrf.mxu0
    %v6225 = vadd.f32 %v5776, %v6224
    %6226 = vmatmul.f32.gmra.mxu0 %v4654
    %v6227 = vpop.f32.mrf.mxu0
    %v6228 = vadd.f32 %v5779, %v6227
    %6229 = vmatmul.f32.gmra.mxu0 %v4659
    %v6230 = vpop.f32.mrf.mxu0
    %v6231 = vadd.f32 %v5782, %v6230
    %6232 = vmatmul.f32.gmra.mxu0 %v4664
    %v6233 = vpop.f32.mrf.mxu0
    %v6234 = vadd.f32 %v5785, %v6233
    %6235 = vmatmul.f32.gmra.mxu0 %v4669
    %v6236 = vpop.f32.mrf.mxu0
    %v6237 = vadd.f32 %v5788, %v6236
    %6238 = vmatmul.f32.gmra.mxu0 %v4674
    %v6239 = vpop.f32.mrf.mxu0
    %v6240 = vadd.f32 %v5791, %v6239
    %6241 = vmatmul.f32.gmra.mxu0 %v4679
    %v6242 = vpop.f32.mrf.mxu0
    %v6243 = vadd.f32 %v5794, %v6242
    %6244 = vmatmul.f32.gmra.mxu0 %v4684
    %v6245 = vpop.f32.mrf.mxu0
    %v6246 = vadd.f32 %v5797, %v6245
    %6247 = vmatmul.f32.gmra.mxu0 %v4689
    %v6248 = vpop.f32.mrf.mxu0
    %v6249 = vadd.f32 %v5800, %v6248
    %6250 = vmatmul.f32.gmra.mxu0 %v4694
    %v6251 = vpop.f32.mrf.mxu0
    %v6252 = vadd.f32 %v5803, %v6251
    %6253 = vmatmul.f32.gmra.mxu0 %v4699
    %v6254 = vpop.f32.mrf.mxu0
    %v6255 = vadd.f32 %v5806, %v6254
    %6256 = vmatmul.f32.gmra.mxu0 %v4704
    %v6257 = vpop.f32.mrf.mxu0
    %v6258 = vadd.f32 %v5809, %v6257
    %6259 = vmatmul.f32.gmra.mxu0 %v4709
    %v6260 = vpop.f32.mrf.mxu0
    %v6261 = vadd.f32 %v5812, %v6260
    %6262 = vmatmul.f32.gmra.mxu0 %v4714
    %v6263 = vpop.f32.mrf.mxu0
    %v6264 = vadd.f32 %v5815, %v6263
    %6265 = vmatmul.f32.gmra.mxu0 %v4719
    %v6266 = vpop.f32.mrf.mxu0
    %v6267 = vadd.f32 %v5818, %v6266
    %6268 = vmatmul.f32.gmra.mxu0 %v4724
    %v6269 = vpop.f32.mrf.mxu0
    %v6270 = vadd.f32 %v5821, %v6269
    %6271 = vmatmul.f32.gmra.mxu0 %v4729
    %v6272 = vpop.f32.mrf.mxu0
    %v6273 = vadd.f32 %v5824, %v6272
    %6274 = vmatmul.f32.gmra.mxu0 %v4734
    %v6275 = vpop.f32.mrf.mxu0
    %v6276 = vadd.f32 %v5827, %v6275
    %6277 = vmatmul.f32.gmra.mxu0 %v4739
    %v6278 = vpop.f32.mrf.mxu0
    %v6279 = vadd.f32 %v5830, %v6278
    %6280 = vmatmul.f32.gmra.mxu0 %v4744
    %v6281 = vpop.f32.mrf.mxu0
    %v6282 = vadd.f32 %v5833, %v6281
    %6283 = vmatmul.f32.gmra.mxu0 %v4749
    %v6284 = vpop.f32.mrf.mxu0
    %v6285 = vadd.f32 %v5836, %v6284
    %6286 = vmatmul.f32.gmra.mxu0 %v4754
    %v6287 = vpop.f32.mrf.mxu0
    %v6288 = vadd.f32 %v5839, %v6287
    %6289 = vmatmul.f32.gmra.mxu0 %v4759
    %v6290 = vpop.f32.mrf.mxu0
    %v6291 = vadd.f32 %v5842, %v6290
    %6292 = vmatmul.f32.gmra.mxu0 %v4764
    %v6293 = vpop.f32.mrf.mxu0
    %v6294 = vadd.f32 %v5845, %v6293
    %6295 = vmatmul.f32.gmra.mxu0 %v4769
    %v6296 = vpop.f32.mrf.mxu0
    %v6297 = vadd.f32 %v5848, %v6296
    %6298 = vmatmul.f32.gmra.mxu0 %v4774
    %v6299 = vpop.f32.mrf.mxu0
    %v6300 = vadd.f32 %v5851, %v6299
    %6301 = vmatmul.f32.gmra.mxu0 %v4779
    %v6302 = vpop.f32.mrf.mxu0
    %v6303 = vadd.f32 %v5854, %v6302
    %6304 = vmatmul.f32.gmra.mxu0 %v4784
    %v6305 = vpop.f32.mrf.mxu0
    %v6306 = vadd.f32 %v5857, %v6305
    %6307 = vmatmul.f32.gmra.mxu0 %v4789
    %v6308 = vpop.f32.mrf.mxu0
    %v6309 = vadd.f32 %v5860, %v6308
    %6310 = vmatmul.f32.gmra.mxu0 %v4794
    %v6311 = vpop.f32.mrf.mxu0
    %v6312 = vadd.f32 %v5863, %v6311
    %6313 = vmatmul.f32.gmra.mxu0 %v4799
    %v6314 = vpop.f32.mrf.mxu0
    %v6315 = vadd.f32 %v5866, %v6314
    %6316 = vmatmul.f32.gmra.mxu0 %v4804
    %v6317 = vpop.f32.mrf.mxu0
    %v6318 = vadd.f32 %v5869, %v6317
    %6319 = vmatmul.f32.gmra.mxu0 %v4809
    %v6320 = vpop.f32.mrf.mxu0
    %v6321 = vadd.f32 %v5872, %v6320
    %6322 = vmatmul.f32.gmra.mxu0 %v4814
    %v6323 = vpop.f32.mrf.mxu0
    %v6324 = vadd.f32 %v5875, %v6323
    %6325 = vmatmul.f32.gmra.mxu0 %v4819
    %v6326 = vpop.f32.mrf.mxu0
    %v6327 = vadd.f32 %v5878, %v6326
    %6328 = vmatmul.f32.gmra.mxu0 %v4824
    %v6329 = vpop.f32.mrf.mxu0
    %v6330 = vadd.f32 %v5881, %v6329
    %6331 = vmatmul.f32.gmra.mxu0 %v4829
    %v6332 = vpop.f32.mrf.mxu0
    %v6333 = vadd.f32 %v5884, %v6332
    %6334 = vmatmul.f32.gmra.mxu0 %v4834
    %v6335 = vpop.f32.mrf.mxu0
    %v6336 = vadd.f32 %v5887, %v6335
    %6337 = vmatmul.f32.gmra.mxu0 %v4839
    %v6338 = vpop.f32.mrf.mxu0
    %v6339 = vadd.f32 %v5890, %v6338
    %6340 = vmatmul.f32.gmra.mxu0 %v4844
    %v6341 = vpop.f32.mrf.mxu0
    %v6342 = vadd.f32 %v5893, %v6341
    %6343 = vmatmul.f32.gmra.mxu0 %v4849
    %v6344 = vpop.f32.mrf.mxu0
    %v6345 = vadd.f32 %v5896, %v6344
    %6346 = vmatmul.f32.gmra.mxu0 %v4854
    %v6347 = vpop.f32.mrf.mxu0
    %v6348 = vadd.f32 %v5899, %v6347
    %6349 = vmatmul.f32.gmra.mxu0 %v4859
    %v6350 = vpop.f32.mrf.mxu0
    %v6351 = vadd.f32 %v5902, %v6350
    %6352 = vmatmul.f32.gmra.mxu0 %v4864
    %v6353 = vpop.f32.mrf.mxu0
    %v6354 = vadd.f32 %v5905, %v6353
    %6355 = vmatmul.f32.gmra.mxu0 %v4869
    %v6356 = vpop.f32.mrf.mxu0
    %v6357 = vadd.f32 %v5908, %v6356
    %6358 = vmatmul.f32.gmra.mxu0 %v4874
    %v6359 = vpop.f32.mrf.mxu0
    %v6360 = vadd.f32 %v5911, %v6359
    %6361 = vmatmul.f32.gmra.mxu0 %v4879
    %v6362 = vpop.f32.mrf.mxu0
    %v6363 = vadd.f32 %v5914, %v6362
    %6364 = vmatmul.f32.gmra.mxu0 %v4884
    %v6365 = vpop.f32.mrf.mxu0
    %v6366 = vadd.f32 %v5917, %v6365
    %6367 = vmatmul.f32.gmra.mxu0 %v4889
    %v6368 = vpop.f32.mrf.mxu0
    %v6369 = vadd.f32 %v5920, %v6368
    %6370 = vmatmul.f32.gmra.mxu0 %v4894
    %v6371 = vpop.f32.mrf.mxu0
    %v6372 = vadd.f32 %v5923, %v6371
    %6373 = vmatmul.f32.gmra.mxu0 %v4899
    %v6374 = vpop.f32.mrf.mxu0
    %v6375 = vadd.f32 %v5926, %v6374
    %6376 = vmatmul.f32.gmra.mxu0 %v4904
    %v6377 = vpop.f32.mrf.mxu0
    %v6378 = vadd.f32 %v5929, %v6377
    %6379 = vmatmul.f32.gmra.mxu0 %v4909
    %v6380 = vpop.f32.mrf.mxu0
    %v6381 = vadd.f32 %v5932, %v6380
    %6382 = vmatmul.f32.gmra.mxu0 %v4914
    %v6383 = vpop.f32.mrf.mxu0
    %v6384 = vadd.f32 %v5935, %v6383
    %6385 = vmatmul.f32.gmra.mxu0 %v4919
    %v6386 = vpop.f32.mrf.mxu0
    %v6387 = vadd.f32 %v5938, %v6386
    %6388 = vmatmul.f32.gmra.mxu0 %v4924
    %v6389 = vpop.f32.mrf.mxu0
    %v6390 = vadd.f32 %v5941, %v6389
    %6391 = vmatmul.f32.gmra.mxu0 %v4929
    %v6392 = vpop.f32.mrf.mxu0
    %v6393 = vadd.f32 %v5944, %v6392
    %6394 = vmatmul.f32.gmra.mxu0 %v4934
    %v6395 = vpop.f32.mrf.mxu0
    %v6396 = vadd.f32 %v5947, %v6395
    %6397 = vmatmul.f32.gmra.mxu0 %v4939
    %v6398 = vpop.f32.mrf.mxu0
    %v6399 = vadd.f32 %v5950, %v6398
    %6400 = vmatmul.f32.gmra.mxu0 %v4944
    %v6401 = vpop.f32.mrf.mxu0
    %v6402 = vadd.f32 %v5953, %v6401
    %6403 = vmatmul.f32.gmra.mxu0 %v4949
    %v6404 = vpop.f32.mrf.mxu0
    %v6405 = vadd.f32 %v5956, %v6404
    %6406 = vmatmul.f32.gmra.mxu0 %v4954
    %v6407 = vpop.f32.mrf.mxu0
    %v6408 = vadd.f32 %v5959, %v6407
    %6409 = vmatmul.f32.gmra.mxu0 %v4959
    %v6410 = vpop.f32.mrf.mxu0
    %v6411 = vadd.f32 %v5962, %v6410
    %6412 = vmatmul.f32.gmra.mxu0 %v4964
    %v6413 = vpop.f32.mrf.mxu0
    %v6414 = vadd.f32 %v5965, %v6413
    %6415 = vmatmul.f32.gmra.mxu0 %v4969
    %v6416 = vpop.f32.mrf.mxu0
    %v6417 = vadd.f32 %v5968, %v6416
    %6418 = vmatmul.f32.gmra.mxu0 %v4974
    %v6419 = vpop.f32.mrf.mxu0
    %v6420 = vadd.f32 %v5971, %v6419
    %6421 = vmatmul.f32.gmra.mxu0 %v4979
    %v6422 = vpop.f32.mrf.mxu0
    %v6423 = vadd.f32 %v5974, %v6422
    %6424 = vmatmul.f32.gmra.mxu0 %v4984
    %v6425 = vpop.f32.mrf.mxu0
    %v6426 = vadd.f32 %v5977, %v6425
    %6427 = vmatmul.f32.gmra.mxu0 %v4989
    %v6428 = vpop.f32.mrf.mxu0
    %v6429 = vadd.f32 %v5980, %v6428
    %6430 = vmatmul.f32.gmra.mxu0 %v4994
    %v6431 = vpop.f32.mrf.mxu0
    %v6432 = vadd.f32 %v5983, %v6431
    %6433 = vmatmul.f32.gmra.mxu0 %v4999
    %v6434 = vpop.f32.mrf.mxu0
    %v6435 = vadd.f32 %v5986, %v6434
    %6436 = vmatmul.f32.gmra.mxu0 %v5004
    %v6437 = vpop.f32.mrf.mxu0
    %v6438 = vadd.f32 %v5989, %v6437
    %6439 = vmatmul.f32.gmra.mxu0 %v5009
    %v6440 = vpop.f32.mrf.mxu0
    %v6441 = vadd.f32 %v5992, %v6440
    %6442 = vmatmul.f32.gmra.mxu0 %v5014
    %v6443 = vpop.f32.mrf.mxu0
    %v6444 = vadd.f32 %v5995, %v6443
    %6445 = vmatmul.f32.gmra.mxu0 %v5019
    %v6446 = vpop.f32.mrf.mxu0
    %v6447 = vadd.f32 %v5998, %v6446
    %6448 = vmatmul.f32.gmra.mxu0 %v5024
    %v6449 = vpop.f32.mrf.mxu0
    %v6450 = vadd.f32 %v6001, %v6449
    %6451 = vmatmul.f32.gmra.mxu0 %v5029
    %v6452 = vpop.f32.mrf.mxu0
    %v6453 = vadd.f32 %v6004, %v6452
    %6454 = vmatmul.f32.gmra.mxu0 %v5034
    %v6455 = vpop.f32.mrf.mxu0
    %v6456 = vadd.f32 %v6007, %v6455
    %6457 = vmatmul.f32.gmra.mxu0 %v5039
    %v6458 = vpop.f32.mrf.mxu0
    %v6459 = vadd.f32 %v6010, %v6458
    %6460 = vmatmul.f32.gmra.mxu0 %v5044
    %v6461 = vpop.f32.mrf.mxu0
    %v6462 = vadd.f32 %v6013, %v6461
    %6463 = vmatmul.f32.gmra.mxu0 %v5049
    %v6464 = vpop.f32.mrf.mxu0
    %v6465 = vadd.f32 %v6016, %v6464
    %6466 = vmatmul.f32.gmra.mxu0 %v5054
    %v6467 = vpop.f32.mrf.mxu0
    %v6468 = vadd.f32 %v6019, %v6467
    %6469 = vmatmul.f32.gmra.mxu0 %v5059
    %v6470 = vpop.f32.mrf.mxu0
    %v6471 = vadd.f32 %v6022, %v6470
    %6472 = vmatmul.f32.gmra.mxu0 %v5064
    %v6473 = vpop.f32.mrf.mxu0
    %v6474 = vadd.f32 %v6025, %v6473
    %6475 = vmatmul.f32.gmra.mxu0 %v5069
    %v6476 = vpop.f32.mrf.mxu0
    %v6477 = vadd.f32 %v6028, %v6476
    %6478 = vdwg.mxu0
    %6479 = vmatpush.msra.mxu0 %v5120
    %6480 = vmatpush.msra.mxu0 %v5119
    %6481 = vmatpush.msra.mxu0 %v5118
    %6482 = vmatpush.msra.mxu0 %v5117
    %6483 = vmatpush.msra.mxu0 %v5116
    %6484 = vmatpush.msra.mxu0 %v5115
    %6485 = vmatpush.msra.mxu0 %v5114
    %6486 = vmatpush.msra.mxu0 %v5113
    %6487 = vmatpush.msra.mxu0 %v5112
    %6488 = vmatpush.msra.mxu0 %v5111
    %6489 = vmatpush.msra.mxu0 %v5110
    %6490 = vmatpush.msra.mxu0 %v5109
    %6491 = vmatpush.msra.mxu0 %v5108
    %6492 = vmatpush.msra.mxu0 %v5107
    %6493 = vmatpush.msra.mxu0 %v5106
    %6494 = vmatpush.msra.mxu0 %v5105
    %6495 = vmatmul.f32.gmra.mxu0 %v4355
    %v6496 = vpop.f32.mrf.mxu0
    %v6497 = vadd.f32 %v6048, %v6496
    %6498 = vmatmul.f32.gmra.mxu0 %v4360
    %v6499 = vpop.f32.mrf.mxu0
    %v6500 = vadd.f32 %v6051, %v6499
    %6501 = vmatmul.f32.gmra.mxu0 %v4365
    %v6502 = vpop.f32.mrf.mxu0
    %v6503 = vadd.f32 %v6054, %v6502
    %6504 = vmatmul.f32.gmra.mxu0 %v4370
    %v6505 = vpop.f32.mrf.mxu0
    %v6506 = vadd.f32 %v6057, %v6505
    %6507 = vmatmul.f32.gmra.mxu0 %v4375
    %v6508 = vpop.f32.mrf.mxu0
    %v6509 = vadd.f32 %v6060, %v6508
    %6510 = vmatmul.f32.gmra.mxu0 %v4380
    %v6511 = vpop.f32.mrf.mxu0
    %v6512 = vadd.f32 %v6063, %v6511
    %6513 = vmatmul.f32.gmra.mxu0 %v4385
    %v6514 = vpop.f32.mrf.mxu0
    %v6515 = vadd.f32 %v6066, %v6514
    %6516 = vmatmul.f32.gmra.mxu0 %v4390
    %v6517 = vpop.f32.mrf.mxu0
    %v6518 = vadd.f32 %v6069, %v6517
    %6519 = vmatmul.f32.gmra.mxu0 %v4395
    %v6520 = vpop.f32.mrf.mxu0
    %v6521 = vadd.f32 %v6072, %v6520
    %6522 = vmatmul.f32.gmra.mxu0 %v4400
    %v6523 = vpop.f32.mrf.mxu0
    %v6524 = vadd.f32 %v6075, %v6523
    %6525 = vmatmul.f32.gmra.mxu0 %v4405
    %v6526 = vpop.f32.mrf.mxu0
    %v6527 = vadd.f32 %v6078, %v6526
    %6528 = vmatmul.f32.gmra.mxu0 %v4410
    %v6529 = vpop.f32.mrf.mxu0
    %v6530 = vadd.f32 %v6081, %v6529
    %6531 = vmatmul.f32.gmra.mxu0 %v4415
    %v6532 = vpop.f32.mrf.mxu0
    %v6533 = vadd.f32 %v6084, %v6532
    %6534 = vmatmul.f32.gmra.mxu0 %v4420
    %v6535 = vpop.f32.mrf.mxu0
    %v6536 = vadd.f32 %v6087, %v6535
    %6537 = vmatmul.f32.gmra.mxu0 %v4425
    %v6538 = vpop.f32.mrf.mxu0
    %v6539 = vadd.f32 %v6090, %v6538
    %6540 = vmatmul.f32.gmra.mxu0 %v4430
    %v6541 = vpop.f32.mrf.mxu0
    %v6542 = vadd.f32 %v6093, %v6541
    %6543 = vmatmul.f32.gmra.mxu0 %v4435
    %v6544 = vpop.f32.mrf.mxu0
    %v6545 = vadd.f32 %v6096, %v6544
    %6546 = vmatmul.f32.gmra.mxu0 %v4440
    %v6547 = vpop.f32.mrf.mxu0
    %v6548 = vadd.f32 %v6099, %v6547
    %6549 = vmatmul.f32.gmra.mxu0 %v4445
    %v6550 = vpop.f32.mrf.mxu0
    %v6551 = vadd.f32 %v6102, %v6550
    %6552 = vmatmul.f32.gmra.mxu0 %v4450
    %v6553 = vpop.f32.mrf.mxu0
    %v6554 = vadd.f32 %v6105, %v6553
    %6555 = vmatmul.f32.gmra.mxu0 %v4455
    %v6556 = vpop.f32.mrf.mxu0
    %v6557 = vadd.f32 %v6108, %v6556
    %6558 = vmatmul.f32.gmra.mxu0 %v4460
    %v6559 = vpop.f32.mrf.mxu0
    %v6560 = vadd.f32 %v6111, %v6559
    %6561 = vmatmul.f32.gmra.mxu0 %v4465
    %v6562 = vpop.f32.mrf.mxu0
    %v6563 = vadd.f32 %v6114, %v6562
    %6564 = vmatmul.f32.gmra.mxu0 %v4470
    %v6565 = vpop.f32.mrf.mxu0
    %v6566 = vadd.f32 %v6117, %v6565
    %6567 = vmatmul.f32.gmra.mxu0 %v4475
    %v6568 = vpop.f32.mrf.mxu0
    %v6569 = vadd.f32 %v6120, %v6568
    %6570 = vmatmul.f32.gmra.mxu0 %v4480
    %v6571 = vpop.f32.mrf.mxu0
    %v6572 = vadd.f32 %v6123, %v6571
    %6573 = vmatmul.f32.gmra.mxu0 %v4485
    %v6574 = vpop.f32.mrf.mxu0
    %v6575 = vadd.f32 %v6126, %v6574
    %6576 = vmatmul.f32.gmra.mxu0 %v4490
    %v6577 = vpop.f32.mrf.mxu0
    %v6578 = vadd.f32 %v6129, %v6577
    %6579 = vmatmul.f32.gmra.mxu0 %v4495
    %v6580 = vpop.f32.mrf.mxu0
    %v6581 = vadd.f32 %v6132, %v6580
    %6582 = vmatmul.f32.gmra.mxu0 %v4500
    %v6583 = vpop.f32.mrf.mxu0
    %v6584 = vadd.f32 %v6135, %v6583
    %6585 = vmatmul.f32.gmra.mxu0 %v4505
    %v6586 = vpop.f32.mrf.mxu0
    %v6587 = vadd.f32 %v6138, %v6586
    %6588 = vmatmul.f32.gmra.mxu0 %v4510
    %v6589 = vpop.f32.mrf.mxu0
    %v6590 = vadd.f32 %v6141, %v6589
    %6591 = vmatmul.f32.gmra.mxu0 %v4515
    %v6592 = vpop.f32.mrf.mxu0
    %v6593 = vadd.f32 %v6144, %v6592
    %6594 = vmatmul.f32.gmra.mxu0 %v4520
    %v6595 = vpop.f32.mrf.mxu0
    %v6596 = vadd.f32 %v6147, %v6595
    %6597 = vmatmul.f32.gmra.mxu0 %v4525
    %v6598 = vpop.f32.mrf.mxu0
    %v6599 = vadd.f32 %v6150, %v6598
    %6600 = vmatmul.f32.gmra.mxu0 %v4530
    %v6601 = vpop.f32.mrf.mxu0
    %v6602 = vadd.f32 %v6153, %v6601
    %6603 = vmatmul.f32.gmra.mxu0 %v4535
    %v6604 = vpop.f32.mrf.mxu0
    %v6605 = vadd.f32 %v6156, %v6604
    %6606 = vmatmul.f32.gmra.mxu0 %v4540
    %v6607 = vpop.f32.mrf.mxu0
    %v6608 = vadd.f32 %v6159, %v6607
    %6609 = vmatmul.f32.gmra.mxu0 %v4545
    %v6610 = vpop.f32.mrf.mxu0
    %v6611 = vadd.f32 %v6162, %v6610
    %6612 = vmatmul.f32.gmra.mxu0 %v4550
    %v6613 = vpop.f32.mrf.mxu0
    %v6614 = vadd.f32 %v6165, %v6613
    %6615 = vmatmul.f32.gmra.mxu0 %v4555
    %v6616 = vpop.f32.mrf.mxu0
    %v6617 = vadd.f32 %v6168, %v6616
    %6618 = vmatmul.f32.gmra.mxu0 %v4560
    %v6619 = vpop.f32.mrf.mxu0
    %v6620 = vadd.f32 %v6171, %v6619
    %6621 = vmatmul.f32.gmra.mxu0 %v4565
    %v6622 = vpop.f32.mrf.mxu0
    %v6623 = vadd.f32 %v6174, %v6622
    %6624 = vmatmul.f32.gmra.mxu0 %v4570
    %v6625 = vpop.f32.mrf.mxu0
    %v6626 = vadd.f32 %v6177, %v6625
    %6627 = vmatmul.f32.gmra.mxu0 %v4575
    %v6628 = vpop.f32.mrf.mxu0
    %v6629 = vadd.f32 %v6180, %v6628
    %6630 = vmatmul.f32.gmra.mxu0 %v4580
    %v6631 = vpop.f32.mrf.mxu0
    %v6632 = vadd.f32 %v6183, %v6631
    %6633 = vmatmul.f32.gmra.mxu0 %v4585
    %v6634 = vpop.f32.mrf.mxu0
    %v6635 = vadd.f32 %v6186, %v6634
    %6636 = vmatmul.f32.gmra.mxu0 %v4590
    %v6637 = vpop.f32.mrf.mxu0
    %v6638 = vadd.f32 %v6189, %v6637
    %6639 = vmatmul.f32.gmra.mxu0 %v4595
    %v6640 = vpop.f32.mrf.mxu0
    %v6641 = vadd.f32 %v6192, %v6640
    %6642 = vmatmul.f32.gmra.mxu0 %v4600
    %v6643 = vpop.f32.mrf.mxu0
    %v6644 = vadd.f32 %v6195, %v6643
    %6645 = vmatmul.f32.gmra.mxu0 %v4605
    %v6646 = vpop.f32.mrf.mxu0
    %v6647 = vadd.f32 %v6198, %v6646
    %6648 = vmatmul.f32.gmra.mxu0 %v4610
    %v6649 = vpop.f32.mrf.mxu0
    %v6650 = vadd.f32 %v6201, %v6649
    %6651 = vmatmul.f32.gmra.mxu0 %v4615
    %v6652 = vpop.f32.mrf.mxu0
    %v6653 = vadd.f32 %v6204, %v6652
    %6654 = vmatmul.f32.gmra.mxu0 %v4620
    %v6655 = vpop.f32.mrf.mxu0
    %v6656 = vadd.f32 %v6207, %v6655
    %6657 = vmatmul.f32.gmra.mxu0 %v4625
    %v6658 = vpop.f32.mrf.mxu0
    %v6659 = vadd.f32 %v6210, %v6658
    %6660 = vmatmul.f32.gmra.mxu0 %v4630
    %v6661 = vpop.f32.mrf.mxu0
    %v6662 = vadd.f32 %v6213, %v6661
    %6663 = vmatmul.f32.gmra.mxu0 %v4635
    %v6664 = vpop.f32.mrf.mxu0
    %v6665 = vadd.f32 %v6216, %v6664
    %6666 = vmatmul.f32.gmra.mxu0 %v4640
    %v6667 = vpop.f32.mrf.mxu0
    %v6668 = vadd.f32 %v6219, %v6667
    %6669 = vmatmul.f32.gmra.mxu0 %v4645
    %v6670 = vpop.f32.mrf.mxu0
    %v6671 = vadd.f32 %v6222, %v6670
    %6672 = vmatmul.f32.gmra.mxu0 %v4650
    %v6673 = vpop.f32.mrf.mxu0
    %v6674 = vadd.f32 %v6225, %v6673
    %6675 = vmatmul.f32.gmra.mxu0 %v4655
    %v6676 = vpop.f32.mrf.mxu0
    %v6677 = vadd.f32 %v6228, %v6676
    %6678 = vmatmul.f32.gmra.mxu0 %v4660
    %v6679 = vpop.f32.mrf.mxu0
    %v6680 = vadd.f32 %v6231, %v6679
    %6681 = vmatmul.f32.gmra.mxu0 %v4665
    %v6682 = vpop.f32.mrf.mxu0
    %v6683 = vadd.f32 %v6234, %v6682
    %6684 = vmatmul.f32.gmra.mxu0 %v4670
    %v6685 = vpop.f32.mrf.mxu0
    %v6686 = vadd.f32 %v6237, %v6685
    %6687 = vmatmul.f32.gmra.mxu0 %v4675
    %v6688 = vpop.f32.mrf.mxu0
    %v6689 = vadd.f32 %v6240, %v6688
    %6690 = vmatmul.f32.gmra.mxu0 %v4680
    %v6691 = vpop.f32.mrf.mxu0
    %v6692 = vadd.f32 %v6243, %v6691
    %6693 = vmatmul.f32.gmra.mxu0 %v4685
    %v6694 = vpop.f32.mrf.mxu0
    %v6695 = vadd.f32 %v6246, %v6694
    %6696 = vmatmul.f32.gmra.mxu0 %v4690
    %v6697 = vpop.f32.mrf.mxu0
    %v6698 = vadd.f32 %v6249, %v6697
    %6699 = vmatmul.f32.gmra.mxu0 %v4695
    %v6700 = vpop.f32.mrf.mxu0
    %v6701 = vadd.f32 %v6252, %v6700
    %6702 = vmatmul.f32.gmra.mxu0 %v4700
    %v6703 = vpop.f32.mrf.mxu0
    %v6704 = vadd.f32 %v6255, %v6703
    %6705 = vmatmul.f32.gmra.mxu0 %v4705
    %v6706 = vpop.f32.mrf.mxu0
    %v6707 = vadd.f32 %v6258, %v6706
    %6708 = vmatmul.f32.gmra.mxu0 %v4710
    %v6709 = vpop.f32.mrf.mxu0
    %v6710 = vadd.f32 %v6261, %v6709
    %6711 = vmatmul.f32.gmra.mxu0 %v4715
    %v6712 = vpop.f32.mrf.mxu0
    %v6713 = vadd.f32 %v6264, %v6712
    %6714 = vmatmul.f32.gmra.mxu0 %v4720
    %v6715 = vpop.f32.mrf.mxu0
    %v6716 = vadd.f32 %v6267, %v6715
    %6717 = vmatmul.f32.gmra.mxu0 %v4725
    %v6718 = vpop.f32.mrf.mxu0
    %v6719 = vadd.f32 %v6270, %v6718
    %6720 = vmatmul.f32.gmra.mxu0 %v4730
    %v6721 = vpop.f32.mrf.mxu0
    %v6722 = vadd.f32 %v6273, %v6721
    %6723 = vmatmul.f32.gmra.mxu0 %v4735
    %v6724 = vpop.f32.mrf.mxu0
    %v6725 = vadd.f32 %v6276, %v6724
    %6726 = vmatmul.f32.gmra.mxu0 %v4740
    %v6727 = vpop.f32.mrf.mxu0
    %v6728 = vadd.f32 %v6279, %v6727
    %6729 = vmatmul.f32.gmra.mxu0 %v4745
    %v6730 = vpop.f32.mrf.mxu0
    %v6731 = vadd.f32 %v6282, %v6730
    %6732 = vmatmul.f32.gmra.mxu0 %v4750
    %v6733 = vpop.f32.mrf.mxu0
    %v6734 = vadd.f32 %v6285, %v6733
    %6735 = vmatmul.f32.gmra.mxu0 %v4755
    %v6736 = vpop.f32.mrf.mxu0
    %v6737 = vadd.f32 %v6288, %v6736
    %6738 = vmatmul.f32.gmra.mxu0 %v4760
    %v6739 = vpop.f32.mrf.mxu0
    %v6740 = vadd.f32 %v6291, %v6739
    %6741 = vmatmul.f32.gmra.mxu0 %v4765
    %v6742 = vpop.f32.mrf.mxu0
    %v6743 = vadd.f32 %v6294, %v6742
    %6744 = vmatmul.f32.gmra.mxu0 %v4770
    %v6745 = vpop.f32.mrf.mxu0
    %v6746 = vadd.f32 %v6297, %v6745
    %6747 = vmatmul.f32.gmra.mxu0 %v4775
    %v6748 = vpop.f32.mrf.mxu0
    %v6749 = vadd.f32 %v6300, %v6748
    %6750 = vmatmul.f32.gmra.mxu0 %v4780
    %v6751 = vpop.f32.mrf.mxu0
    %v6752 = vadd.f32 %v6303, %v6751
    %6753 = vmatmul.f32.gmra.mxu0 %v4785
    %v6754 = vpop.f32.mrf.mxu0
    %v6755 = vadd.f32 %v6306, %v6754
    %6756 = vmatmul.f32.gmra.mxu0 %v4790
    %v6757 = vpop.f32.mrf.mxu0
    %v6758 = vadd.f32 %v6309, %v6757
    %6759 = vmatmul.f32.gmra.mxu0 %v4795
    %v6760 = vpop.f32.mrf.mxu0
    %v6761 = vadd.f32 %v6312, %v6760
    %6762 = vmatmul.f32.gmra.mxu0 %v4800
    %v6763 = vpop.f32.mrf.mxu0
    %v6764 = vadd.f32 %v6315, %v6763
    %6765 = vmatmul.f32.gmra.mxu0 %v4805
    %v6766 = vpop.f32.mrf.mxu0
    %v6767 = vadd.f32 %v6318, %v6766
    %6768 = vmatmul.f32.gmra.mxu0 %v4810
    %v6769 = vpop.f32.mrf.mxu0
    %v6770 = vadd.f32 %v6321, %v6769
    %6771 = vmatmul.f32.gmra.mxu0 %v4815
    %v6772 = vpop.f32.mrf.mxu0
    %v6773 = vadd.f32 %v6324, %v6772
    %6774 = vmatmul.f32.gmra.mxu0 %v4820
    %v6775 = vpop.f32.mrf.mxu0
    %v6776 = vadd.f32 %v6327, %v6775
    %6777 = vmatmul.f32.gmra.mxu0 %v4825
    %v6778 = vpop.f32.mrf.mxu0
    %v6779 = vadd.f32 %v6330, %v6778
    %6780 = vmatmul.f32.gmra.mxu0 %v4830
    %v6781 = vpop.f32.mrf.mxu0
    %v6782 = vadd.f32 %v6333, %v6781
    %6783 = vmatmul.f32.gmra.mxu0 %v4835
    %v6784 = vpop.f32.mrf.mxu0
    %v6785 = vadd.f32 %v6336, %v6784
    %6786 = vmatmul.f32.gmra.mxu0 %v4840
    %v6787 = vpop.f32.mrf.mxu0
    %v6788 = vadd.f32 %v6339, %v6787
    %6789 = vmatmul.f32.gmra.mxu0 %v4845
    %v6790 = vpop.f32.mrf.mxu0
    %v6791 = vadd.f32 %v6342, %v6790
    %6792 = vmatmul.f32.gmra.mxu0 %v4850
    %v6793 = vpop.f32.mrf.mxu0
    %v6794 = vadd.f32 %v6345, %v6793
    %6795 = vmatmul.f32.gmra.mxu0 %v4855
    %v6796 = vpop.f32.mrf.mxu0
    %v6797 = vadd.f32 %v6348, %v6796
    %6798 = vmatmul.f32.gmra.mxu0 %v4860
    %v6799 = vpop.f32.mrf.mxu0
    %v6800 = vadd.f32 %v6351, %v6799
    %6801 = vmatmul.f32.gmra.mxu0 %v4865
    %v6802 = vpop.f32.mrf.mxu0
    %v6803 = vadd.f32 %v6354, %v6802
    %6804 = vmatmul.f32.gmra.mxu0 %v4870
    %v6805 = vpop.f32.mrf.mxu0
    %v6806 = vadd.f32 %v6357, %v6805
    %6807 = vmatmul.f32.gmra.mxu0 %v4875
    %v6808 = vpop.f32.mrf.mxu0
    %v6809 = vadd.f32 %v6360, %v6808
    %6810 = vmatmul.f32.gmra.mxu0 %v4880
    %v6811 = vpop.f32.mrf.mxu0
    %v6812 = vadd.f32 %v6363, %v6811
    %6813 = vmatmul.f32.gmra.mxu0 %v4885
    %v6814 = vpop.f32.mrf.mxu0
    %v6815 = vadd.f32 %v6366, %v6814
    %6816 = vmatmul.f32.gmra.mxu0 %v4890
    %v6817 = vpop.f32.mrf.mxu0
    %v6818 = vadd.f32 %v6369, %v6817
    %6819 = vmatmul.f32.gmra.mxu0 %v4895
    %v6820 = vpop.f32.mrf.mxu0
    %v6821 = vadd.f32 %v6372, %v6820
    %6822 = vmatmul.f32.gmra.mxu0 %v4900
    %v6823 = vpop.f32.mrf.mxu0
    %v6824 = vadd.f32 %v6375, %v6823
    %6825 = vmatmul.f32.gmra.mxu0 %v4905
    %v6826 = vpop.f32.mrf.mxu0
    %v6827 = vadd.f32 %v6378, %v6826
    %6828 = vmatmul.f32.gmra.mxu0 %v4910
    %v6829 = vpop.f32.mrf.mxu0
    %v6830 = vadd.f32 %v6381, %v6829
    %6831 = vmatmul.f32.gmra.mxu0 %v4915
    %v6832 = vpop.f32.mrf.mxu0
    %v6833 = vadd.f32 %v6384, %v6832
    %6834 = vmatmul.f32.gmra.mxu0 %v4920
    %v6835 = vpop.f32.mrf.mxu0
    %v6836 = vadd.f32 %v6387, %v6835
    %6837 = vmatmul.f32.gmra.mxu0 %v4925
    %v6838 = vpop.f32.mrf.mxu0
    %v6839 = vadd.f32 %v6390, %v6838
    %6840 = vmatmul.f32.gmra.mxu0 %v4930
    %v6841 = vpop.f32.mrf.mxu0
    %v6842 = vadd.f32 %v6393, %v6841
    %6843 = vmatmul.f32.gmra.mxu0 %v4935
    %v6844 = vpop.f32.mrf.mxu0
    %v6845 = vadd.f32 %v6396, %v6844
    %6846 = vmatmul.f32.gmra.mxu0 %v4940
    %v6847 = vpop.f32.mrf.mxu0
    %v6848 = vadd.f32 %v6399, %v6847
    %6849 = vmatmul.f32.gmra.mxu0 %v4945
    %v6850 = vpop.f32.mrf.mxu0
    %v6851 = vadd.f32 %v6402, %v6850
    %6852 = vmatmul.f32.gmra.mxu0 %v4950
    %v6853 = vpop.f32.mrf.mxu0
    %v6854 = vadd.f32 %v6405, %v6853
    %6855 = vmatmul.f32.gmra.mxu0 %v4955
    %v6856 = vpop.f32.mrf.mxu0
    %v6857 = vadd.f32 %v6408, %v6856
    %6858 = vmatmul.f32.gmra.mxu0 %v4960
    %v6859 = vpop.f32.mrf.mxu0
    %v6860 = vadd.f32 %v6411, %v6859
    %6861 = vmatmul.f32.gmra.mxu0 %v4965
    %v6862 = vpop.f32.mrf.mxu0
    %v6863 = vadd.f32 %v6414, %v6862
    %6864 = vmatmul.f32.gmra.mxu0 %v4970
    %v6865 = vpop.f32.mrf.mxu0
    %v6866 = vadd.f32 %v6417, %v6865
    %6867 = vmatmul.f32.gmra.mxu0 %v4975
    %v6868 = vpop.f32.mrf.mxu0
    %v6869 = vadd.f32 %v6420, %v6868
    %6870 = vmatmul.f32.gmra.mxu0 %v4980
    %v6871 = vpop.f32.mrf.mxu0
    %v6872 = vadd.f32 %v6423, %v6871
    %6873 = vmatmul.f32.gmra.mxu0 %v4985
    %v6874 = vpop.f32.mrf.mxu0
    %v6875 = vadd.f32 %v6426, %v6874
    %6876 = vmatmul.f32.gmra.mxu0 %v4990
    %v6877 = vpop.f32.mrf.mxu0
    %v6878 = vadd.f32 %v6429, %v6877
    %6879 = vmatmul.f32.gmra.mxu0 %v4995
    %v6880 = vpop.f32.mrf.mxu0
    %v6881 = vadd.f32 %v6432, %v6880
    %6882 = vmatmul.f32.gmra.mxu0 %v5000
    %v6883 = vpop.f32.mrf.mxu0
    %v6884 = vadd.f32 %v6435, %v6883
    %6885 = vmatmul.f32.gmra.mxu0 %v5005
    %v6886 = vpop.f32.mrf.mxu0
    %v6887 = vadd.f32 %v6438, %v6886
    %6888 = vmatmul.f32.gmra.mxu0 %v5010
    %v6889 = vpop.f32.mrf.mxu0
    %v6890 = vadd.f32 %v6441, %v6889
    %6891 = vmatmul.f32.gmra.mxu0 %v5015
    %v6892 = vpop.f32.mrf.mxu0
    %v6893 = vadd.f32 %v6444, %v6892
    %6894 = vmatmul.f32.gmra.mxu0 %v5020
    %v6895 = vpop.f32.mrf.mxu0
    %v6896 = vadd.f32 %v6447, %v6895
    %6897 = vmatmul.f32.gmra.mxu0 %v5025
    %v6898 = vpop.f32.mrf.mxu0
    %v6899 = vadd.f32 %v6450, %v6898
    %6900 = vmatmul.f32.gmra.mxu0 %v5030
    %v6901 = vpop.f32.mrf.mxu0
    %v6902 = vadd.f32 %v6453, %v6901
    %6903 = vmatmul.f32.gmra.mxu0 %v5035
    %v6904 = vpop.f32.mrf.mxu0
    %v6905 = vadd.f32 %v6456, %v6904
    %6906 = vmatmul.f32.gmra.mxu0 %v5040
    %v6907 = vpop.f32.mrf.mxu0
    %v6908 = vadd.f32 %v6459, %v6907
    %6909 = vmatmul.f32.gmra.mxu0 %v5045
    %v6910 = vpop.f32.mrf.mxu0
    %v6911 = vadd.f32 %v6462, %v6910
    %6912 = vmatmul.f32.gmra.mxu0 %v5050
    %v6913 = vpop.f32.mrf.mxu0
    %v6914 = vadd.f32 %v6465, %v6913
    %6915 = vmatmul.f32.gmra.mxu0 %v5055
    %v6916 = vpop.f32.mrf.mxu0
    %v6917 = vadd.f32 %v6468, %v6916
    %6918 = vmatmul.f32.gmra.mxu0 %v5060
    %v6919 = vpop.f32.mrf.mxu0
    %v6920 = vadd.f32 %v6471, %v6919
    %6921 = vmatmul.f32.gmra.mxu0 %v5065
    %v6922 = vpop.f32.mrf.mxu0
    %v6923 = vadd.f32 %v6474, %v6922
    %6924 = vmatmul.f32.gmra.mxu0 %v5070
    %v6925 = vpop.f32.mrf.mxu0
    %v6926 = vadd.f32 %v6477, %v6925
    %6927 = vdwg.mxu0
    %6928 = vmatpush.msra.mxu0 %v5136
    %6929 = vmatpush.msra.mxu0 %v5135
    %6930 = vmatpush.msra.mxu0 %v5134
    %6931 = vmatpush.msra.mxu0 %v5133
    %6932 = vmatpush.msra.mxu0 %v5132
    %6933 = vmatpush.msra.mxu0 %v5131
    %6934 = vmatpush.msra.mxu0 %v5130
    %6935 = vmatpush.msra.mxu0 %v5129
    %6936 = vmatpush.msra.mxu0 %v5128
    %6937 = vmatpush.msra.mxu0 %v5127
    %6938 = vmatpush.msra.mxu0 %v5126
    %6939 = vmatpush.msra.mxu0 %v5125
    %6940 = vmatpush.msra.mxu0 %v5124
    %6941 = vmatpush.msra.mxu0 %v5123
    %6942 = vmatpush.msra.mxu0 %v5122
    %6943 = vmatpush.msra.mxu0 %v5121
    %6944 = vmatmul.f32.gmra.mxu0 %v4356
    %v6945 = vpop.f32.mrf.mxu0
    %v6946 = vadd.f32 %v6497, %v6945
    %6947 = vmatmul.f32.gmra.mxu0 %v4361
    %v6948 = vpop.f32.mrf.mxu0
    %v6949 = vadd.f32 %v6500, %v6948
    %6950 = vmatmul.f32.gmra.mxu0 %v4366
    %v6951 = vpop.f32.mrf.mxu0
    %v6952 = vadd.f32 %v6503, %v6951
    %6953 = vmatmul.f32.gmra.mxu0 %v4371
    %v6954 = vpop.f32.mrf.mxu0
    %v6955 = vadd.f32 %v6506, %v6954
    %6956 = vmatmul.f32.gmra.mxu0 %v4376
    %v6957 = vpop.f32.mrf.mxu0
    %v6958 = vadd.f32 %v6509, %v6957
    %6959 = vmatmul.f32.gmra.mxu0 %v4381
    %v6960 = vpop.f32.mrf.mxu0
    %v6961 = vadd.f32 %v6512, %v6960
    %6962 = vmatmul.f32.gmra.mxu0 %v4386
    %v6963 = vpop.f32.mrf.mxu0
    %v6964 = vadd.f32 %v6515, %v6963
    %6965 = vmatmul.f32.gmra.mxu0 %v4391
    %v6966 = vpop.f32.mrf.mxu0
    %v6967 = vadd.f32 %v6518, %v6966
    %6968 = vmatmul.f32.gmra.mxu0 %v4396
    %v6969 = vpop.f32.mrf.mxu0
    %v6970 = vadd.f32 %v6521, %v6969
    %6971 = vmatmul.f32.gmra.mxu0 %v4401
    %v6972 = vpop.f32.mrf.mxu0
    %v6973 = vadd.f32 %v6524, %v6972
    %6974 = vmatmul.f32.gmra.mxu0 %v4406
    %v6975 = vpop.f32.mrf.mxu0
    %v6976 = vadd.f32 %v6527, %v6975
    %6977 = vmatmul.f32.gmra.mxu0 %v4411
    %v6978 = vpop.f32.mrf.mxu0
    %v6979 = vadd.f32 %v6530, %v6978
    %6980 = vmatmul.f32.gmra.mxu0 %v4416
    %v6981 = vpop.f32.mrf.mxu0
    %v6982 = vadd.f32 %v6533, %v6981
    %6983 = vmatmul.f32.gmra.mxu0 %v4421
    %v6984 = vpop.f32.mrf.mxu0
    %v6985 = vadd.f32 %v6536, %v6984
    %6986 = vmatmul.f32.gmra.mxu0 %v4426
    %v6987 = vpop.f32.mrf.mxu0
    %v6988 = vadd.f32 %v6539, %v6987
    %6989 = vmatmul.f32.gmra.mxu0 %v4431
    %v6990 = vpop.f32.mrf.mxu0
    %v6991 = vadd.f32 %v6542, %v6990
    %6992 = vmatmul.f32.gmra.mxu0 %v4436
    %v6993 = vpop.f32.mrf.mxu0
    %v6994 = vadd.f32 %v6545, %v6993
    %6995 = vmatmul.f32.gmra.mxu0 %v4441
    %v6996 = vpop.f32.mrf.mxu0
    %v6997 = vadd.f32 %v6548, %v6996
    %6998 = vmatmul.f32.gmra.mxu0 %v4446
    %v6999 = vpop.f32.mrf.mxu0
    %v7000 = vadd.f32 %v6551, %v6999
    %7001 = vmatmul.f32.gmra.mxu0 %v4451
    %v7002 = vpop.f32.mrf.mxu0
    %v7003 = vadd.f32 %v6554, %v7002
    %7004 = vmatmul.f32.gmra.mxu0 %v4456
    %v7005 = vpop.f32.mrf.mxu0
    %v7006 = vadd.f32 %v6557, %v7005
    %7007 = vmatmul.f32.gmra.mxu0 %v4461
    %v7008 = vpop.f32.mrf.mxu0
    %v7009 = vadd.f32 %v6560, %v7008
    %7010 = vmatmul.f32.gmra.mxu0 %v4466
    %v7011 = vpop.f32.mrf.mxu0
    %v7012 = vadd.f32 %v6563, %v7011
    %7013 = vmatmul.f32.gmra.mxu0 %v4471
    %v7014 = vpop.f32.mrf.mxu0
    %v7015 = vadd.f32 %v6566, %v7014
    %7016 = vmatmul.f32.gmra.mxu0 %v4476
    %v7017 = vpop.f32.mrf.mxu0
    %v7018 = vadd.f32 %v6569, %v7017
    %7019 = vmatmul.f32.gmra.mxu0 %v4481
    %v7020 = vpop.f32.mrf.mxu0
    %v7021 = vadd.f32 %v6572, %v7020
    %7022 = vmatmul.f32.gmra.mxu0 %v4486
    %v7023 = vpop.f32.mrf.mxu0
    %v7024 = vadd.f32 %v6575, %v7023
    %7025 = vmatmul.f32.gmra.mxu0 %v4491
    %v7026 = vpop.f32.mrf.mxu0
    %v7027 = vadd.f32 %v6578, %v7026
    %7028 = vmatmul.f32.gmra.mxu0 %v4496
    %v7029 = vpop.f32.mrf.mxu0
    %v7030 = vadd.f32 %v6581, %v7029
    %7031 = vmatmul.f32.gmra.mxu0 %v4501
    %v7032 = vpop.f32.mrf.mxu0
    %v7033 = vadd.f32 %v6584, %v7032
    %7034 = vmatmul.f32.gmra.mxu0 %v4506
    %v7035 = vpop.f32.mrf.mxu0
    %v7036 = vadd.f32 %v6587, %v7035
    %7037 = vmatmul.f32.gmra.mxu0 %v4511
    %v7038 = vpop.f32.mrf.mxu0
    %v7039 = vadd.f32 %v6590, %v7038
    %7040 = vmatmul.f32.gmra.mxu0 %v4516
    %v7041 = vpop.f32.mrf.mxu0
    %v7042 = vadd.f32 %v6593, %v7041
    %7043 = vmatmul.f32.gmra.mxu0 %v4521
    %v7044 = vpop.f32.mrf.mxu0
    %v7045 = vadd.f32 %v6596, %v7044
    %7046 = vmatmul.f32.gmra.mxu0 %v4526
    %v7047 = vpop.f32.mrf.mxu0
    %v7048 = vadd.f32 %v6599, %v7047
    %7049 = vmatmul.f32.gmra.mxu0 %v4531
    %v7050 = vpop.f32.mrf.mxu0
    %v7051 = vadd.f32 %v6602, %v7050
    %7052 = vmatmul.f32.gmra.mxu0 %v4536
    %v7053 = vpop.f32.mrf.mxu0
    %v7054 = vadd.f32 %v6605, %v7053
    %7055 = vmatmul.f32.gmra.mxu0 %v4541
    %v7056 = vpop.f32.mrf.mxu0
    %v7057 = vadd.f32 %v6608, %v7056
    %7058 = vmatmul.f32.gmra.mxu0 %v4546
    %v7059 = vpop.f32.mrf.mxu0
    %v7060 = vadd.f32 %v6611, %v7059
    %7061 = vmatmul.f32.gmra.mxu0 %v4551
    %v7062 = vpop.f32.mrf.mxu0
    %v7063 = vadd.f32 %v6614, %v7062
    %7064 = vmatmul.f32.gmra.mxu0 %v4556
    %v7065 = vpop.f32.mrf.mxu0
    %v7066 = vadd.f32 %v6617, %v7065
    %7067 = vmatmul.f32.gmra.mxu0 %v4561
    %v7068 = vpop.f32.mrf.mxu0
    %v7069 = vadd.f32 %v6620, %v7068
    %7070 = vmatmul.f32.gmra.mxu0 %v4566
    %v7071 = vpop.f32.mrf.mxu0
    %v7072 = vadd.f32 %v6623, %v7071
    %7073 = vmatmul.f32.gmra.mxu0 %v4571
    %v7074 = vpop.f32.mrf.mxu0
    %v7075 = vadd.f32 %v6626, %v7074
    %7076 = vmatmul.f32.gmra.mxu0 %v4576
    %v7077 = vpop.f32.mrf.mxu0
    %v7078 = vadd.f32 %v6629, %v7077
    %7079 = vmatmul.f32.gmra.mxu0 %v4581
    %v7080 = vpop.f32.mrf.mxu0
    %v7081 = vadd.f32 %v6632, %v7080
    %7082 = vmatmul.f32.gmra.mxu0 %v4586
    %v7083 = vpop.f32.mrf.mxu0
    %v7084 = vadd.f32 %v6635, %v7083
    %7085 = vmatmul.f32.gmra.mxu0 %v4591
    %v7086 = vpop.f32.mrf.mxu0
    %v7087 = vadd.f32 %v6638, %v7086
    %7088 = vmatmul.f32.gmra.mxu0 %v4596
    %v7089 = vpop.f32.mrf.mxu0
    %v7090 = vadd.f32 %v6641, %v7089
    %7091 = vmatmul.f32.gmra.mxu0 %v4601
    %v7092 = vpop.f32.mrf.mxu0
    %v7093 = vadd.f32 %v6644, %v7092
    %7094 = vmatmul.f32.gmra.mxu0 %v4606
    %v7095 = vpop.f32.mrf.mxu0
    %v7096 = vadd.f32 %v6647, %v7095
    %7097 = vmatmul.f32.gmra.mxu0 %v4611
    %v7098 = vpop.f32.mrf.mxu0
    %v7099 = vadd.f32 %v6650, %v7098
    %7100 = vmatmul.f32.gmra.mxu0 %v4616
    %v7101 = vpop.f32.mrf.mxu0
    %v7102 = vadd.f32 %v6653, %v7101
    %7103 = vmatmul.f32.gmra.mxu0 %v4621
    %v7104 = vpop.f32.mrf.mxu0
    %v7105 = vadd.f32 %v6656, %v7104
    %7106 = vmatmul.f32.gmra.mxu0 %v4626
    %v7107 = vpop.f32.mrf.mxu0
    %v7108 = vadd.f32 %v6659, %v7107
    %7109 = vmatmul.f32.gmra.mxu0 %v4631
    %v7110 = vpop.f32.mrf.mxu0
    %v7111 = vadd.f32 %v6662, %v7110
    %7112 = vmatmul.f32.gmra.mxu0 %v4636
    %v7113 = vpop.f32.mrf.mxu0
    %v7114 = vadd.f32 %v6665, %v7113
    %7115 = vmatmul.f32.gmra.mxu0 %v4641
    %v7116 = vpop.f32.mrf.mxu0
    %v7117 = vadd.f32 %v6668, %v7116
    %7118 = vmatmul.f32.gmra.mxu0 %v4646
    %v7119 = vpop.f32.mrf.mxu0
    %v7120 = vadd.f32 %v6671, %v7119
    %7121 = vmatmul.f32.gmra.mxu0 %v4651
    %v7122 = vpop.f32.mrf.mxu0
    %v7123 = vadd.f32 %v6674, %v7122
    %7124 = vmatmul.f32.gmra.mxu0 %v4656
    %v7125 = vpop.f32.mrf.mxu0
    %v7126 = vadd.f32 %v6677, %v7125
    %7127 = vmatmul.f32.gmra.mxu0 %v4661
    %v7128 = vpop.f32.mrf.mxu0
    %v7129 = vadd.f32 %v6680, %v7128
    %7130 = vmatmul.f32.gmra.mxu0 %v4666
    %v7131 = vpop.f32.mrf.mxu0
    %v7132 = vadd.f32 %v6683, %v7131
    %7133 = vmatmul.f32.gmra.mxu0 %v4671
    %v7134 = vpop.f32.mrf.mxu0
    %v7135 = vadd.f32 %v6686, %v7134
    %7136 = vmatmul.f32.gmra.mxu0 %v4676
    %v7137 = vpop.f32.mrf.mxu0
    %v7138 = vadd.f32 %v6689, %v7137
    %7139 = vmatmul.f32.gmra.mxu0 %v4681
    %v7140 = vpop.f32.mrf.mxu0
    %v7141 = vadd.f32 %v6692, %v7140
    %7142 = vmatmul.f32.gmra.mxu0 %v4686
    %v7143 = vpop.f32.mrf.mxu0
    %v7144 = vadd.f32 %v6695, %v7143
    %7145 = vmatmul.f32.gmra.mxu0 %v4691
    %v7146 = vpop.f32.mrf.mxu0
    %v7147 = vadd.f32 %v6698, %v7146
    %7148 = vmatmul.f32.gmra.mxu0 %v4696
    %v7149 = vpop.f32.mrf.mxu0
    %v7150 = vadd.f32 %v6701, %v7149
    %7151 = vmatmul.f32.gmra.mxu0 %v4701
    %v7152 = vpop.f32.mrf.mxu0
    %v7153 = vadd.f32 %v6704, %v7152
    %7154 = vmatmul.f32.gmra.mxu0 %v4706
    %v7155 = vpop.f32.mrf.mxu0
    %v7156 = vadd.f32 %v6707, %v7155
    %7157 = vmatmul.f32.gmra.mxu0 %v4711
    %v7158 = vpop.f32.mrf.mxu0
    %v7159 = vadd.f32 %v6710, %v7158
    %7160 = vmatmul.f32.gmra.mxu0 %v4716
    %v7161 = vpop.f32.mrf.mxu0
    %v7162 = vadd.f32 %v6713, %v7161
    %7163 = vmatmul.f32.gmra.mxu0 %v4721
    %v7164 = vpop.f32.mrf.mxu0
    %v7165 = vadd.f32 %v6716, %v7164
    %7166 = vmatmul.f32.gmra.mxu0 %v4726
    %v7167 = vpop.f32.mrf.mxu0
    %v7168 = vadd.f32 %v6719, %v7167
    %7169 = vmatmul.f32.gmra.mxu0 %v4731
    %v7170 = vpop.f32.mrf.mxu0
    %v7171 = vadd.f32 %v6722, %v7170
    %7172 = vmatmul.f32.gmra.mxu0 %v4736
    %v7173 = vpop.f32.mrf.mxu0
    %v7174 = vadd.f32 %v6725, %v7173
    %7175 = vmatmul.f32.gmra.mxu0 %v4741
    %v7176 = vpop.f32.mrf.mxu0
    %v7177 = vadd.f32 %v6728, %v7176
    %7178 = vmatmul.f32.gmra.mxu0 %v4746
    %v7179 = vpop.f32.mrf.mxu0
    %v7180 = vadd.f32 %v6731, %v7179
    %7181 = vmatmul.f32.gmra.mxu0 %v4751
    %v7182 = vpop.f32.mrf.mxu0
    %v7183 = vadd.f32 %v6734, %v7182
    %7184 = vmatmul.f32.gmra.mxu0 %v4756
    %v7185 = vpop.f32.mrf.mxu0
    %v7186 = vadd.f32 %v6737, %v7185
    %7187 = vmatmul.f32.gmra.mxu0 %v4761
    %v7188 = vpop.f32.mrf.mxu0
    %v7189 = vadd.f32 %v6740, %v7188
    %7190 = vmatmul.f32.gmra.mxu0 %v4766
    %v7191 = vpop.f32.mrf.mxu0
    %v7192 = vadd.f32 %v6743, %v7191
    %7193 = vmatmul.f32.gmra.mxu0 %v4771
    %v7194 = vpop.f32.mrf.mxu0
    %v7195 = vadd.f32 %v6746, %v7194
    %7196 = vmatmul.f32.gmra.mxu0 %v4776
    %v7197 = vpop.f32.mrf.mxu0
    %v7198 = vadd.f32 %v6749, %v7197
    %7199 = vmatmul.f32.gmra.mxu0 %v4781
    %v7200 = vpop.f32.mrf.mxu0
    %v7201 = vadd.f32 %v6752, %v7200
    %7202 = vmatmul.f32.gmra.mxu0 %v4786
    %v7203 = vpop.f32.mrf.mxu0
    %v7204 = vadd.f32 %v6755, %v7203
    %7205 = vmatmul.f32.gmra.mxu0 %v4791
    %v7206 = vpop.f32.mrf.mxu0
    %v7207 = vadd.f32 %v6758, %v7206
    %7208 = vmatmul.f32.gmra.mxu0 %v4796
    %v7209 = vpop.f32.mrf.mxu0
    %v7210 = vadd.f32 %v6761, %v7209
    %7211 = vmatmul.f32.gmra.mxu0 %v4801
    %v7212 = vpop.f32.mrf.mxu0
    %v7213 = vadd.f32 %v6764, %v7212
    %7214 = vmatmul.f32.gmra.mxu0 %v4806
    %v7215 = vpop.f32.mrf.mxu0
    %v7216 = vadd.f32 %v6767, %v7215
    %7217 = vmatmul.f32.gmra.mxu0 %v4811
    %v7218 = vpop.f32.mrf.mxu0
    %v7219 = vadd.f32 %v6770, %v7218
    %7220 = vmatmul.f32.gmra.mxu0 %v4816
    %v7221 = vpop.f32.mrf.mxu0
    %v7222 = vadd.f32 %v6773, %v7221
    %7223 = vmatmul.f32.gmra.mxu0 %v4821
    %v7224 = vpop.f32.mrf.mxu0
    %v7225 = vadd.f32 %v6776, %v7224
    %7226 = vmatmul.f32.gmra.mxu0 %v4826
    %v7227 = vpop.f32.mrf.mxu0
    %v7228 = vadd.f32 %v6779, %v7227
    %7229 = vmatmul.f32.gmra.mxu0 %v4831
    %v7230 = vpop.f32.mrf.mxu0
    %v7231 = vadd.f32 %v6782, %v7230
    %7232 = vmatmul.f32.gmra.mxu0 %v4836
    %v7233 = vpop.f32.mrf.mxu0
    %v7234 = vadd.f32 %v6785, %v7233
    %7235 = vmatmul.f32.gmra.mxu0 %v4841
    %v7236 = vpop.f32.mrf.mxu0
    %v7237 = vadd.f32 %v6788, %v7236
    %7238 = vmatmul.f32.gmra.mxu0 %v4846
    %v7239 = vpop.f32.mrf.mxu0
    %v7240 = vadd.f32 %v6791, %v7239
    %7241 = vmatmul.f32.gmra.mxu0 %v4851
    %v7242 = vpop.f32.mrf.mxu0
    %v7243 = vadd.f32 %v6794, %v7242
    %7244 = vmatmul.f32.gmra.mxu0 %v4856
    %v7245 = vpop.f32.mrf.mxu0
    %v7246 = vadd.f32 %v6797, %v7245
    %7247 = vmatmul.f32.gmra.mxu0 %v4861
    %v7248 = vpop.f32.mrf.mxu0
    %v7249 = vadd.f32 %v6800, %v7248
    %7250 = vmatmul.f32.gmra.mxu0 %v4866
    %v7251 = vpop.f32.mrf.mxu0
    %v7252 = vadd.f32 %v6803, %v7251
    %7253 = vmatmul.f32.gmra.mxu0 %v4871
    %v7254 = vpop.f32.mrf.mxu0
    %v7255 = vadd.f32 %v6806, %v7254
    %7256 = vmatmul.f32.gmra.mxu0 %v4876
    %v7257 = vpop.f32.mrf.mxu0
    %v7258 = vadd.f32 %v6809, %v7257
    %7259 = vmatmul.f32.gmra.mxu0 %v4881
    %v7260 = vpop.f32.mrf.mxu0
    %v7261 = vadd.f32 %v6812, %v7260
    %7262 = vmatmul.f32.gmra.mxu0 %v4886
    %v7263 = vpop.f32.mrf.mxu0
    %v7264 = vadd.f32 %v6815, %v7263
    %7265 = vmatmul.f32.gmra.mxu0 %v4891
    %v7266 = vpop.f32.mrf.mxu0
    %v7267 = vadd.f32 %v6818, %v7266
    %7268 = vmatmul.f32.gmra.mxu0 %v4896
    %v7269 = vpop.f32.mrf.mxu0
    %v7270 = vadd.f32 %v6821, %v7269
    %7271 = vmatmul.f32.gmra.mxu0 %v4901
    %v7272 = vpop.f32.mrf.mxu0
    %v7273 = vadd.f32 %v6824, %v7272
    %7274 = vmatmul.f32.gmra.mxu0 %v4906
    %v7275 = vpop.f32.mrf.mxu0
    %v7276 = vadd.f32 %v6827, %v7275
    %7277 = vmatmul.f32.gmra.mxu0 %v4911
    %v7278 = vpop.f32.mrf.mxu0
    %v7279 = vadd.f32 %v6830, %v7278
    %7280 = vmatmul.f32.gmra.mxu0 %v4916
    %v7281 = vpop.f32.mrf.mxu0
    %v7282 = vadd.f32 %v6833, %v7281
    %7283 = vmatmul.f32.gmra.mxu0 %v4921
    %v7284 = vpop.f32.mrf.mxu0
    %v7285 = vadd.f32 %v6836, %v7284
    %7286 = vmatmul.f32.gmra.mxu0 %v4926
    %v7287 = vpop.f32.mrf.mxu0
    %v7288 = vadd.f32 %v6839, %v7287
    %7289 = vmatmul.f32.gmra.mxu0 %v4931
    %v7290 = vpop.f32.mrf.mxu0
    %v7291 = vadd.f32 %v6842, %v7290
    %7292 = vmatmul.f32.gmra.mxu0 %v4936
    %v7293 = vpop.f32.mrf.mxu0
    %v7294 = vadd.f32 %v6845, %v7293
    %7295 = vmatmul.f32.gmra.mxu0 %v4941
    %v7296 = vpop.f32.mrf.mxu0
    %v7297 = vadd.f32 %v6848, %v7296
    %7298 = vmatmul.f32.gmra.mxu0 %v4946
    %v7299 = vpop.f32.mrf.mxu0
    %v7300 = vadd.f32 %v6851, %v7299
    %7301 = vmatmul.f32.gmra.mxu0 %v4951
    %v7302 = vpop.f32.mrf.mxu0
    %v7303 = vadd.f32 %v6854, %v7302
    %7304 = vmatmul.f32.gmra.mxu0 %v4956
    %v7305 = vpop.f32.mrf.mxu0
    %v7306 = vadd.f32 %v6857, %v7305
    %7307 = vmatmul.f32.gmra.mxu0 %v4961
    %v7308 = vpop.f32.mrf.mxu0
    %v7309 = vadd.f32 %v6860, %v7308
    %7310 = vmatmul.f32.gmra.mxu0 %v4966
    %v7311 = vpop.f32.mrf.mxu0
    %v7312 = vadd.f32 %v6863, %v7311
    %7313 = vmatmul.f32.gmra.mxu0 %v4971
    %v7314 = vpop.f32.mrf.mxu0
    %v7315 = vadd.f32 %v6866, %v7314
    %7316 = vmatmul.f32.gmra.mxu0 %v4976
    %v7317 = vpop.f32.mrf.mxu0
    %v7318 = vadd.f32 %v6869, %v7317
    %7319 = vmatmul.f32.gmra.mxu0 %v4981
    %v7320 = vpop.f32.mrf.mxu0
    %v7321 = vadd.f32 %v6872, %v7320
    %7322 = vmatmul.f32.gmra.mxu0 %v4986
    %v7323 = vpop.f32.mrf.mxu0
    %v7324 = vadd.f32 %v6875, %v7323
    %7325 = vmatmul.f32.gmra.mxu0 %v4991
    %v7326 = vpop.f32.mrf.mxu0
    %v7327 = vadd.f32 %v6878, %v7326
    %7328 = vmatmul.f32.gmra.mxu0 %v4996
    %v7329 = vpop.f32.mrf.mxu0
    %v7330 = vadd.f32 %v6881, %v7329
    %7331 = vmatmul.f32.gmra.mxu0 %v5001
    %v7332 = vpop.f32.mrf.mxu0
    %v7333 = vadd.f32 %v6884, %v7332
    %7334 = vmatmul.f32.gmra.mxu0 %v5006
    %v7335 = vpop.f32.mrf.mxu0
    %v7336 = vadd.f32 %v6887, %v7335
    %7337 = vmatmul.f32.gmra.mxu0 %v5011
    %v7338 = vpop.f32.mrf.mxu0
    %v7339 = vadd.f32 %v6890, %v7338
    %7340 = vmatmul.f32.gmra.mxu0 %v5016
    %v7341 = vpop.f32.mrf.mxu0
    %v7342 = vadd.f32 %v6893, %v7341
    %7343 = vmatmul.f32.gmra.mxu0 %v5021
    %v7344 = vpop.f32.mrf.mxu0
    %v7345 = vadd.f32 %v6896, %v7344
    %7346 = vmatmul.f32.gmra.mxu0 %v5026
    %v7347 = vpop.f32.mrf.mxu0
    %v7348 = vadd.f32 %v6899, %v7347
    %7349 = vmatmul.f32.gmra.mxu0 %v5031
    %v7350 = vpop.f32.mrf.mxu0
    %v7351 = vadd.f32 %v6902, %v7350
    %7352 = vmatmul.f32.gmra.mxu0 %v5036
    %v7353 = vpop.f32.mrf.mxu0
    %v7354 = vadd.f32 %v6905, %v7353
    %7355 = vmatmul.f32.gmra.mxu0 %v5041
    %v7356 = vpop.f32.mrf.mxu0
    %v7357 = vadd.f32 %v6908, %v7356
    %7358 = vmatmul.f32.gmra.mxu0 %v5046
    %v7359 = vpop.f32.mrf.mxu0
    %v7360 = vadd.f32 %v6911, %v7359
    %7361 = vmatmul.f32.gmra.mxu0 %v5051
    %v7362 = vpop.f32.mrf.mxu0
    %v7363 = vadd.f32 %v6914, %v7362
    %7364 = vmatmul.f32.gmra.mxu0 %v5056
    %v7365 = vpop.f32.mrf.mxu0
    %v7366 = vadd.f32 %v6917, %v7365
    %7367 = vmatmul.f32.gmra.mxu0 %v5061
    %v7368 = vpop.f32.mrf.mxu0
    %v7369 = vadd.f32 %v6920, %v7368
    %7370 = vmatmul.f32.gmra.mxu0 %v5066
    %v7371 = vpop.f32.mrf.mxu0
    %v7372 = vadd.f32 %v6923, %v7371
    %7373 = vmatmul.f32.gmra.mxu0 %v5071
    %v7374 = vpop.f32.mrf.mxu0
    %v7375 = vadd.f32 %v6926, %v7374
    %7376 = vdwg.mxu0
    %7377 = vmatpush.msra.mxu0 0.0
    %7378 = vmatpush.msra.mxu0 0.0
    %7379 = vmatpush.msra.mxu0 0.0
    %7380 = vmatpush.msra.mxu0 0.0
    %7381 = vmatpush.msra.mxu0 0.0
    %7382 = vmatpush.msra.mxu0 0.0
    %7383 = vmatpush.msra.mxu0 0.0
    %7384 = vmatpush.msra.mxu0 0.0
    %7385 = vmatpush.msra.mxu0 %v5144
    %7386 = vmatpush.msra.mxu0 %v5143
    %7387 = vmatpush.msra.mxu0 %v5142
    %7388 = vmatpush.msra.mxu0 %v5141
    %7389 = vmatpush.msra.mxu0 %v5140
    %7390 = vmatpush.msra.mxu0 %v5139
    %7391 = vmatpush.msra.mxu0 %v5138
    %7392 = vmatpush.msra.mxu0 %v5137
    %7393 = vmatmul.f32.gmra.mxu0 %v5150
    %v7394 = vpop.f32.mrf.mxu0
    %v7395 = vadd.f32 %v6946, %v7394
    %7396 = vmatmul.f32.gmra.mxu0 %v5153
    %v7397 = vpop.f32.mrf.mxu0
    %v7398 = vadd.f32 %v6949, %v7397
    %7399 = vmatmul.f32.gmra.mxu0 %v5156
    %v7400 = vpop.f32.mrf.mxu0
    %v7401 = vadd.f32 %v6952, %v7400
    %7402 = vmatmul.f32.gmra.mxu0 %v5159
    %v7403 = vpop.f32.mrf.mxu0
    %v7404 = vadd.f32 %v6955, %v7403
    %7405 = vmatmul.f32.gmra.mxu0 %v5162
    %v7406 = vpop.f32.mrf.mxu0
    %v7407 = vadd.f32 %v6958, %v7406
    %7408 = vmatmul.f32.gmra.mxu0 %v5165
    %v7409 = vpop.f32.mrf.mxu0
    %v7410 = vadd.f32 %v6961, %v7409
    %7411 = vmatmul.f32.gmra.mxu0 %v5168
    %v7412 = vpop.f32.mrf.mxu0
    %v7413 = vadd.f32 %v6964, %v7412
    %7414 = vmatmul.f32.gmra.mxu0 %v5171
    %v7415 = vpop.f32.mrf.mxu0
    %v7416 = vadd.f32 %v6967, %v7415
    %7417 = vmatmul.f32.gmra.mxu0 %v5174
    %v7418 = vpop.f32.mrf.mxu0
    %v7419 = vadd.f32 %v6970, %v7418
    %7420 = vmatmul.f32.gmra.mxu0 %v5177
    %v7421 = vpop.f32.mrf.mxu0
    %v7422 = vadd.f32 %v6973, %v7421
    %7423 = vmatmul.f32.gmra.mxu0 %v5180
    %v7424 = vpop.f32.mrf.mxu0
    %v7425 = vadd.f32 %v6976, %v7424
    %7426 = vmatmul.f32.gmra.mxu0 %v5183
    %v7427 = vpop.f32.mrf.mxu0
    %v7428 = vadd.f32 %v6979, %v7427
    %7429 = vmatmul.f32.gmra.mxu0 %v5186
    %v7430 = vpop.f32.mrf.mxu0
    %v7431 = vadd.f32 %v6982, %v7430
    %7432 = vmatmul.f32.gmra.mxu0 %v5189
    %v7433 = vpop.f32.mrf.mxu0
    %v7434 = vadd.f32 %v6985, %v7433
    %7435 = vmatmul.f32.gmra.mxu0 %v5192
    %v7436 = vpop.f32.mrf.mxu0
    %v7437 = vadd.f32 %v6988, %v7436
    %7438 = vmatmul.f32.gmra.mxu0 %v5195
    %v7439 = vpop.f32.mrf.mxu0
    %v7440 = vadd.f32 %v6991, %v7439
    %7441 = vmatmul.f32.gmra.mxu0 %v5198
    %v7442 = vpop.f32.mrf.mxu0
    %v7443 = vadd.f32 %v6994, %v7442
    %7444 = vmatmul.f32.gmra.mxu0 %v5201
    %v7445 = vpop.f32.mrf.mxu0
    %v7446 = vadd.f32 %v6997, %v7445
    %7447 = vmatmul.f32.gmra.mxu0 %v5204
    %v7448 = vpop.f32.mrf.mxu0
    %v7449 = vadd.f32 %v7000, %v7448
    %7450 = vmatmul.f32.gmra.mxu0 %v5207
    %v7451 = vpop.f32.mrf.mxu0
    %v7452 = vadd.f32 %v7003, %v7451
    %7453 = vmatmul.f32.gmra.mxu0 %v5210
    %v7454 = vpop.f32.mrf.mxu0
    %v7455 = vadd.f32 %v7006, %v7454
    %7456 = vmatmul.f32.gmra.mxu0 %v5213
    %v7457 = vpop.f32.mrf.mxu0
    %v7458 = vadd.f32 %v7009, %v7457
    %7459 = vmatmul.f32.gmra.mxu0 %v5216
    %v7460 = vpop.f32.mrf.mxu0
    %v7461 = vadd.f32 %v7012, %v7460
    %7462 = vmatmul.f32.gmra.mxu0 %v5219
    %v7463 = vpop.f32.mrf.mxu0
    %v7464 = vadd.f32 %v7015, %v7463
    %7465 = vmatmul.f32.gmra.mxu0 %v5222
    %v7466 = vpop.f32.mrf.mxu0
    %v7467 = vadd.f32 %v7018, %v7466
    %7468 = vmatmul.f32.gmra.mxu0 %v5225
    %v7469 = vpop.f32.mrf.mxu0
    %v7470 = vadd.f32 %v7021, %v7469
    %7471 = vmatmul.f32.gmra.mxu0 %v5228
    %v7472 = vpop.f32.mrf.mxu0
    %v7473 = vadd.f32 %v7024, %v7472
    %7474 = vmatmul.f32.gmra.mxu0 %v5231
    %v7475 = vpop.f32.mrf.mxu0
    %v7476 = vadd.f32 %v7027, %v7475
    %7477 = vmatmul.f32.gmra.mxu0 %v5234
    %v7478 = vpop.f32.mrf.mxu0
    %v7479 = vadd.f32 %v7030, %v7478
    %7480 = vmatmul.f32.gmra.mxu0 %v5237
    %v7481 = vpop.f32.mrf.mxu0
    %v7482 = vadd.f32 %v7033, %v7481
    %7483 = vmatmul.f32.gmra.mxu0 %v5240
    %v7484 = vpop.f32.mrf.mxu0
    %v7485 = vadd.f32 %v7036, %v7484
    %7486 = vmatmul.f32.gmra.mxu0 %v5243
    %v7487 = vpop.f32.mrf.mxu0
    %v7488 = vadd.f32 %v7039, %v7487
    %7489 = vmatmul.f32.gmra.mxu0 %v5246
    %v7490 = vpop.f32.mrf.mxu0
    %v7491 = vadd.f32 %v7042, %v7490
    %7492 = vmatmul.f32.gmra.mxu0 %v5249
    %v7493 = vpop.f32.mrf.mxu0
    %v7494 = vadd.f32 %v7045, %v7493
    %7495 = vmatmul.f32.gmra.mxu0 %v5252
    %v7496 = vpop.f32.mrf.mxu0
    %v7497 = vadd.f32 %v7048, %v7496
    %7498 = vmatmul.f32.gmra.mxu0 %v5255
    %v7499 = vpop.f32.mrf.mxu0
    %v7500 = vadd.f32 %v7051, %v7499
    %7501 = vmatmul.f32.gmra.mxu0 %v5258
    %v7502 = vpop.f32.mrf.mxu0
    %v7503 = vadd.f32 %v7054, %v7502
    %7504 = vmatmul.f32.gmra.mxu0 %v5261
    %v7505 = vpop.f32.mrf.mxu0
    %v7506 = vadd.f32 %v7057, %v7505
    %7507 = vmatmul.f32.gmra.mxu0 %v5264
    %v7508 = vpop.f32.mrf.mxu0
    %v7509 = vadd.f32 %v7060, %v7508
    %7510 = vmatmul.f32.gmra.mxu0 %v5267
    %v7511 = vpop.f32.mrf.mxu0
    %v7512 = vadd.f32 %v7063, %v7511
    %7513 = vmatmul.f32.gmra.mxu0 %v5270
    %v7514 = vpop.f32.mrf.mxu0
    %v7515 = vadd.f32 %v7066, %v7514
    %7516 = vmatmul.f32.gmra.mxu0 %v5273
    %v7517 = vpop.f32.mrf.mxu0
    %v7518 = vadd.f32 %v7069, %v7517
    %7519 = vmatmul.f32.gmra.mxu0 %v5276
    %v7520 = vpop.f32.mrf.mxu0
    %v7521 = vadd.f32 %v7072, %v7520
    %7522 = vmatmul.f32.gmra.mxu0 %v5279
    %v7523 = vpop.f32.mrf.mxu0
    %v7524 = vadd.f32 %v7075, %v7523
    %7525 = vmatmul.f32.gmra.mxu0 %v5282
    %v7526 = vpop.f32.mrf.mxu0
    %v7527 = vadd.f32 %v7078, %v7526
    %7528 = vmatmul.f32.gmra.mxu0 %v5285
    %v7529 = vpop.f32.mrf.mxu0
    %v7530 = vadd.f32 %v7081, %v7529
    %7531 = vmatmul.f32.gmra.mxu0 %v5288
    %v7532 = vpop.f32.mrf.mxu0
    %v7533 = vadd.f32 %v7084, %v7532
    %7534 = vmatmul.f32.gmra.mxu0 %v5291
    %v7535 = vpop.f32.mrf.mxu0
    %v7536 = vadd.f32 %v7087, %v7535
    %7537 = vmatmul.f32.gmra.mxu0 %v5294
    %v7538 = vpop.f32.mrf.mxu0
    %v7539 = vadd.f32 %v7090, %v7538
    %7540 = vmatmul.f32.gmra.mxu0 %v5297
    %v7541 = vpop.f32.mrf.mxu0
    %v7542 = vadd.f32 %v7093, %v7541
    %7543 = vmatmul.f32.gmra.mxu0 %v5300
    %v7544 = vpop.f32.mrf.mxu0
    %v7545 = vadd.f32 %v7096, %v7544
    %7546 = vmatmul.f32.gmra.mxu0 %v5303
    %v7547 = vpop.f32.mrf.mxu0
    %v7548 = vadd.f32 %v7099, %v7547
    %7549 = vmatmul.f32.gmra.mxu0 %v5306
    %v7550 = vpop.f32.mrf.mxu0
    %v7551 = vadd.f32 %v7102, %v7550
    %7552 = vmatmul.f32.gmra.mxu0 %v5309
    %v7553 = vpop.f32.mrf.mxu0
    %v7554 = vadd.f32 %v7105, %v7553
    %7555 = vmatmul.f32.gmra.mxu0 %v5312
    %v7556 = vpop.f32.mrf.mxu0
    %v7557 = vadd.f32 %v7108, %v7556
    %7558 = vmatmul.f32.gmra.mxu0 %v5315
    %v7559 = vpop.f32.mrf.mxu0
    %v7560 = vadd.f32 %v7111, %v7559
    %7561 = vmatmul.f32.gmra.mxu0 %v5318
    %v7562 = vpop.f32.mrf.mxu0
    %v7563 = vadd.f32 %v7114, %v7562
    %7564 = vmatmul.f32.gmra.mxu0 %v5321
    %v7565 = vpop.f32.mrf.mxu0
    %v7566 = vadd.f32 %v7117, %v7565
    %7567 = vmatmul.f32.gmra.mxu0 %v5324
    %v7568 = vpop.f32.mrf.mxu0
    %v7569 = vadd.f32 %v7120, %v7568
    %7570 = vmatmul.f32.gmra.mxu0 %v5327
    %v7571 = vpop.f32.mrf.mxu0
    %v7572 = vadd.f32 %v7123, %v7571
    %7573 = vmatmul.f32.gmra.mxu0 %v5330
    %v7574 = vpop.f32.mrf.mxu0
    %v7575 = vadd.f32 %v7126, %v7574
    %7576 = vmatmul.f32.gmra.mxu0 %v5333
    %v7577 = vpop.f32.mrf.mxu0
    %v7578 = vadd.f32 %v7129, %v7577
    %7579 = vmatmul.f32.gmra.mxu0 %v5336
    %v7580 = vpop.f32.mrf.mxu0
    %v7581 = vadd.f32 %v7132, %v7580
    %7582 = vmatmul.f32.gmra.mxu0 %v5339
    %v7583 = vpop.f32.mrf.mxu0
    %v7584 = vadd.f32 %v7135, %v7583
    %7585 = vmatmul.f32.gmra.mxu0 %v5342
    %v7586 = vpop.f32.mrf.mxu0
    %v7587 = vadd.f32 %v7138, %v7586
    %7588 = vmatmul.f32.gmra.mxu0 %v5345
    %v7589 = vpop.f32.mrf.mxu0
    %v7590 = vadd.f32 %v7141, %v7589
    %7591 = vmatmul.f32.gmra.mxu0 %v5348
    %v7592 = vpop.f32.mrf.mxu0
    %v7593 = vadd.f32 %v7144, %v7592
    %7594 = vmatmul.f32.gmra.mxu0 %v5351
    %v7595 = vpop.f32.mrf.mxu0
    %v7596 = vadd.f32 %v7147, %v7595
    %7597 = vmatmul.f32.gmra.mxu0 %v5354
    %v7598 = vpop.f32.mrf.mxu0
    %v7599 = vadd.f32 %v7150, %v7598
    %7600 = vmatmul.f32.gmra.mxu0 %v5357
    %v7601 = vpop.f32.mrf.mxu0
    %v7602 = vadd.f32 %v7153, %v7601
    %7603 = vmatmul.f32.gmra.mxu0 %v5360
    %v7604 = vpop.f32.mrf.mxu0
    %v7605 = vadd.f32 %v7156, %v7604
    %7606 = vmatmul.f32.gmra.mxu0 %v5363
    %v7607 = vpop.f32.mrf.mxu0
    %v7608 = vadd.f32 %v7159, %v7607
    %7609 = vmatmul.f32.gmra.mxu0 %v5366
    %v7610 = vpop.f32.mrf.mxu0
    %v7611 = vadd.f32 %v7162, %v7610
    %7612 = vmatmul.f32.gmra.mxu0 %v5369
    %v7613 = vpop.f32.mrf.mxu0
    %v7614 = vadd.f32 %v7165, %v7613
    %7615 = vmatmul.f32.gmra.mxu0 %v5372
    %v7616 = vpop.f32.mrf.mxu0
    %v7617 = vadd.f32 %v7168, %v7616
    %7618 = vmatmul.f32.gmra.mxu0 %v5375
    %v7619 = vpop.f32.mrf.mxu0
    %v7620 = vadd.f32 %v7171, %v7619
    %7621 = vmatmul.f32.gmra.mxu0 %v5378
    %v7622 = vpop.f32.mrf.mxu0
    %v7623 = vadd.f32 %v7174, %v7622
    %7624 = vmatmul.f32.gmra.mxu0 %v5381
    %v7625 = vpop.f32.mrf.mxu0
    %v7626 = vadd.f32 %v7177, %v7625
    %7627 = vmatmul.f32.gmra.mxu0 %v5384
    %v7628 = vpop.f32.mrf.mxu0
    %v7629 = vadd.f32 %v7180, %v7628
    %7630 = vmatmul.f32.gmra.mxu0 %v5387
    %v7631 = vpop.f32.mrf.mxu0
    %v7632 = vadd.f32 %v7183, %v7631
    %7633 = vmatmul.f32.gmra.mxu0 %v5390
    %v7634 = vpop.f32.mrf.mxu0
    %v7635 = vadd.f32 %v7186, %v7634
    %7636 = vmatmul.f32.gmra.mxu0 %v5393
    %v7637 = vpop.f32.mrf.mxu0
    %v7638 = vadd.f32 %v7189, %v7637
    %7639 = vmatmul.f32.gmra.mxu0 %v5396
    %v7640 = vpop.f32.mrf.mxu0
    %v7641 = vadd.f32 %v7192, %v7640
    %7642 = vmatmul.f32.gmra.mxu0 %v5399
    %v7643 = vpop.f32.mrf.mxu0
    %v7644 = vadd.f32 %v7195, %v7643
    %7645 = vmatmul.f32.gmra.mxu0 %v5402
    %v7646 = vpop.f32.mrf.mxu0
    %v7647 = vadd.f32 %v7198, %v7646
    %7648 = vmatmul.f32.gmra.mxu0 %v5405
    %v7649 = vpop.f32.mrf.mxu0
    %v7650 = vadd.f32 %v7201, %v7649
    %7651 = vmatmul.f32.gmra.mxu0 %v5408
    %v7652 = vpop.f32.mrf.mxu0
    %v7653 = vadd.f32 %v7204, %v7652
    %7654 = vmatmul.f32.gmra.mxu0 %v5411
    %v7655 = vpop.f32.mrf.mxu0
    %v7656 = vadd.f32 %v7207, %v7655
    %7657 = vmatmul.f32.gmra.mxu0 %v5414
    %v7658 = vpop.f32.mrf.mxu0
    %v7659 = vadd.f32 %v7210, %v7658
    %7660 = vmatmul.f32.gmra.mxu0 %v5417
    %v7661 = vpop.f32.mrf.mxu0
    %v7662 = vadd.f32 %v7213, %v7661
    %7663 = vmatmul.f32.gmra.mxu0 %v5420
    %v7664 = vpop.f32.mrf.mxu0
    %v7665 = vadd.f32 %v7216, %v7664
    %7666 = vmatmul.f32.gmra.mxu0 %v5423
    %v7667 = vpop.f32.mrf.mxu0
    %v7668 = vadd.f32 %v7219, %v7667
    %7669 = vmatmul.f32.gmra.mxu0 %v5426
    %v7670 = vpop.f32.mrf.mxu0
    %v7671 = vadd.f32 %v7222, %v7670
    %7672 = vmatmul.f32.gmra.mxu0 %v5429
    %v7673 = vpop.f32.mrf.mxu0
    %v7674 = vadd.f32 %v7225, %v7673
    %7675 = vmatmul.f32.gmra.mxu0 %v5432
    %v7676 = vpop.f32.mrf.mxu0
    %v7677 = vadd.f32 %v7228, %v7676
    %7678 = vmatmul.f32.gmra.mxu0 %v5435
    %v7679 = vpop.f32.mrf.mxu0
    %v7680 = vadd.f32 %v7231, %v7679
    %7681 = vmatmul.f32.gmra.mxu0 %v5438
    %v7682 = vpop.f32.mrf.mxu0
    %v7683 = vadd.f32 %v7234, %v7682
    %7684 = vmatmul.f32.gmra.mxu0 %v5441
    %v7685 = vpop.f32.mrf.mxu0
    %v7686 = vadd.f32 %v7237, %v7685
    %7687 = vmatmul.f32.gmra.mxu0 %v5444
    %v7688 = vpop.f32.mrf.mxu0
    %v7689 = vadd.f32 %v7240, %v7688
    %7690 = vmatmul.f32.gmra.mxu0 %v5447
    %v7691 = vpop.f32.mrf.mxu0
    %v7692 = vadd.f32 %v7243, %v7691
    %7693 = vmatmul.f32.gmra.mxu0 %v5450
    %v7694 = vpop.f32.mrf.mxu0
    %v7695 = vadd.f32 %v7246, %v7694
    %7696 = vmatmul.f32.gmra.mxu0 %v5453
    %v7697 = vpop.f32.mrf.mxu0
    %v7698 = vadd.f32 %v7249, %v7697
    %7699 = vmatmul.f32.gmra.mxu0 %v5456
    %v7700 = vpop.f32.mrf.mxu0
    %v7701 = vadd.f32 %v7252, %v7700
    %7702 = vmatmul.f32.gmra.mxu0 %v5459
    %v7703 = vpop.f32.mrf.mxu0
    %v7704 = vadd.f32 %v7255, %v7703
    %7705 = vmatmul.f32.gmra.mxu0 %v5462
    %v7706 = vpop.f32.mrf.mxu0
    %v7707 = vadd.f32 %v7258, %v7706
    %7708 = vmatmul.f32.gmra.mxu0 %v5465
    %v7709 = vpop.f32.mrf.mxu0
    %v7710 = vadd.f32 %v7261, %v7709
    %7711 = vmatmul.f32.gmra.mxu0 %v5468
    %v7712 = vpop.f32.mrf.mxu0
    %v7713 = vadd.f32 %v7264, %v7712
    %7714 = vmatmul.f32.gmra.mxu0 %v5471
    %v7715 = vpop.f32.mrf.mxu0
    %v7716 = vadd.f32 %v7267, %v7715
    %7717 = vmatmul.f32.gmra.mxu0 %v5474
    %v7718 = vpop.f32.mrf.mxu0
    %v7719 = vadd.f32 %v7270, %v7718
    %7720 = vmatmul.f32.gmra.mxu0 %v5477
    %v7721 = vpop.f32.mrf.mxu0
    %v7722 = vadd.f32 %v7273, %v7721
    %7723 = vmatmul.f32.gmra.mxu0 %v5480
    %v7724 = vpop.f32.mrf.mxu0
    %v7725 = vadd.f32 %v7276, %v7724
    %7726 = vmatmul.f32.gmra.mxu0 %v5483
    %v7727 = vpop.f32.mrf.mxu0
    %v7728 = vadd.f32 %v7279, %v7727
    %7729 = vmatmul.f32.gmra.mxu0 %v5486
    %v7730 = vpop.f32.mrf.mxu0
    %v7731 = vadd.f32 %v7282, %v7730
    %7732 = vmatmul.f32.gmra.mxu0 %v5489
    %v7733 = vpop.f32.mrf.mxu0
    %v7734 = vadd.f32 %v7285, %v7733
    %7735 = vmatmul.f32.gmra.mxu0 %v5492
    %v7736 = vpop.f32.mrf.mxu0
    %v7737 = vadd.f32 %v7288, %v7736
    %7738 = vmatmul.f32.gmra.mxu0 %v5495
    %v7739 = vpop.f32.mrf.mxu0
    %v7740 = vadd.f32 %v7291, %v7739
    %7741 = vmatmul.f32.gmra.mxu0 %v5498
    %v7742 = vpop.f32.mrf.mxu0
    %v7743 = vadd.f32 %v7294, %v7742
    %7744 = vmatmul.f32.gmra.mxu0 %v5501
    %v7745 = vpop.f32.mrf.mxu0
    %v7746 = vadd.f32 %v7297, %v7745
    %7747 = vmatmul.f32.gmra.mxu0 %v5504
    %v7748 = vpop.f32.mrf.mxu0
    %v7749 = vadd.f32 %v7300, %v7748
    %7750 = vmatmul.f32.gmra.mxu0 %v5507
    %v7751 = vpop.f32.mrf.mxu0
    %v7752 = vadd.f32 %v7303, %v7751
    %7753 = vmatmul.f32.gmra.mxu0 %v5510
    %v7754 = vpop.f32.mrf.mxu0
    %v7755 = vadd.f32 %v7306, %v7754
    %7756 = vmatmul.f32.gmra.mxu0 %v5513
    %v7757 = vpop.f32.mrf.mxu0
    %v7758 = vadd.f32 %v7309, %v7757
    %7759 = vmatmul.f32.gmra.mxu0 %v5516
    %v7760 = vpop.f32.mrf.mxu0
    %v7761 = vadd.f32 %v7312, %v7760
    %7762 = vmatmul.f32.gmra.mxu0 %v5519
    %v7763 = vpop.f32.mrf.mxu0
    %v7764 = vadd.f32 %v7315, %v7763
    %7765 = vmatmul.f32.gmra.mxu0 %v5522
    %v7766 = vpop.f32.mrf.mxu0
    %v7767 = vadd.f32 %v7318, %v7766
    %7768 = vmatmul.f32.gmra.mxu0 %v5525
    %v7769 = vpop.f32.mrf.mxu0
    %v7770 = vadd.f32 %v7321, %v7769
    %7771 = vmatmul.f32.gmra.mxu0 %v5528
    %v7772 = vpop.f32.mrf.mxu0
    %v7773 = vadd.f32 %v7324, %v7772
    %7774 = vmatmul.f32.gmra.mxu0 %v5531
    %v7775 = vpop.f32.mrf.mxu0
    %v7776 = vadd.f32 %v7327, %v7775
    %7777 = vmatmul.f32.gmra.mxu0 %v5534
    %v7778 = vpop.f32.mrf.mxu0
    %v7779 = vadd.f32 %v7330, %v7778
    %7780 = vmatmul.f32.gmra.mxu0 %v5537
    %v7781 = vpop.f32.mrf.mxu0
    %v7782 = vadd.f32 %v7333, %v7781
    %7783 = vmatmul.f32.gmra.mxu0 %v5540
    %v7784 = vpop.f32.mrf.mxu0
    %v7785 = vadd.f32 %v7336, %v7784
    %7786 = vmatmul.f32.gmra.mxu0 %v5543
    %v7787 = vpop.f32.mrf.mxu0
    %v7788 = vadd.f32 %v7339, %v7787
    %7789 = vmatmul.f32.gmra.mxu0 %v5546
    %v7790 = vpop.f32.mrf.mxu0
    %v7791 = vadd.f32 %v7342, %v7790
    %7792 = vmatmul.f32.gmra.mxu0 %v5549
    %v7793 = vpop.f32.mrf.mxu0
    %v7794 = vadd.f32 %v7345, %v7793
    %7795 = vmatmul.f32.gmra.mxu0 %v5552
    %v7796 = vpop.f32.mrf.mxu0
    %v7797 = vadd.f32 %v7348, %v7796
    %7798 = vmatmul.f32.gmra.mxu0 %v5555
    %v7799 = vpop.f32.mrf.mxu0
    %v7800 = vadd.f32 %v7351, %v7799
    %7801 = vmatmul.f32.gmra.mxu0 %v5558
    %v7802 = vpop.f32.mrf.mxu0
    %v7803 = vadd.f32 %v7354, %v7802
    %7804 = vmatmul.f32.gmra.mxu0 %v5561
    %v7805 = vpop.f32.mrf.mxu0
    %v7806 = vadd.f32 %v7357, %v7805
    %7807 = vmatmul.f32.gmra.mxu0 %v5564
    %v7808 = vpop.f32.mrf.mxu0
    %v7809 = vadd.f32 %v7360, %v7808
    %7810 = vmatmul.f32.gmra.mxu0 %v5567
    %v7811 = vpop.f32.mrf.mxu0
    %v7812 = vadd.f32 %v7363, %v7811
    %7813 = vmatmul.f32.gmra.mxu0 %v5570
    %v7814 = vpop.f32.mrf.mxu0
    %v7815 = vadd.f32 %v7366, %v7814
    %7816 = vmatmul.f32.gmra.mxu0 %v5573
    %v7817 = vpop.f32.mrf.mxu0
    %v7818 = vadd.f32 %v7369, %v7817
    %7819 = vmatmul.f32.gmra.mxu0 %v5576
    %v7820 = vpop.f32.mrf.mxu0
    %v7821 = vadd.f32 %v7372, %v7820
    %7822 = vmatmul.f32.gmra.mxu0 %v5579
    %v7823 = vpop.f32.mrf.mxu0
    %v7824 = vadd.f32 %v7375, %v7823
    %7825 = vdwg.mxu0
    %v7826 = vmax.f32 %v7395, 0.0
    %v7827 = vmax.f32 %v7398, 0.0
    %v7828 = vmax.f32 %v7401, 0.0
    %v7829 = vmax.f32 %v7404, 0.0
    %v7830 = vmax.f32 %v7407, 0.0
    %v7831 = vmax.f32 %v7410, 0.0
    %v7832 = vmax.f32 %v7413, 0.0
    %v7833 = vmax.f32 %v7416, 0.0
    %v7834 = vmax.f32 %v7419, 0.0
    %v7835 = vmax.f32 %v7422, 0.0
    %v7836 = vmax.f32 %v7425, 0.0
    %v7837 = vmax.f32 %v7428, 0.0
    %v7838 = vmax.f32 %v7431, 0.0
    %v7839 = vmax.f32 %v7434, 0.0
    %v7840 = vmax.f32 %v7437, 0.0
    %v7841 = vmax.f32 %v7440, 0.0
    %v7842 = vmax.f32 %v7443, 0.0
    %v7843 = vmax.f32 %v7446, 0.0
    %v7844 = vmax.f32 %v7449, 0.0
    %v7845 = vmax.f32 %v7452, 0.0
    %v7846 = vmax.f32 %v7455, 0.0
    %v7847 = vmax.f32 %v7458, 0.0
    %v7848 = vmax.f32 %v7461, 0.0
    %v7849 = vmax.f32 %v7464, 0.0
    %v7850 = vmax.f32 %v7467, 0.0
    %v7851 = vmax.f32 %v7470, 0.0
    %v7852 = vmax.f32 %v7473, 0.0
    %v7853 = vmax.f32 %v7476, 0.0
    %v7854 = vmax.f32 %v7479, 0.0
    %v7855 = vmax.f32 %v7482, 0.0
    %v7856 = vmax.f32 %v7485, 0.0
    %v7857 = vmax.f32 %v7488, 0.0
    %v7858 = vmax.f32 %v7491, 0.0
    %v7859 = vmax.f32 %v7494, 0.0
    %v7860 = vmax.f32 %v7497, 0.0
    %v7861 = vmax.f32 %v7500, 0.0
    %v7862 = vmax.f32 %v7503, 0.0
    %v7863 = vmax.f32 %v7506, 0.0
    %v7864 = vmax.f32 %v7509, 0.0
    %v7865 = vmax.f32 %v7512, 0.0
    %v7866 = vmax.f32 %v7515, 0.0
    %v7867 = vmax.f32 %v7518, 0.0
    %v7868 = vmax.f32 %v7521, 0.0
    %v7869 = vmax.f32 %v7524, 0.0
    %v7870 = vmax.f32 %v7527, 0.0
    %v7871 = vmax.f32 %v7530, 0.0
    %v7872 = vmax.f32 %v7533, 0.0
    %v7873 = vmax.f32 %v7536, 0.0
    %v7874 = vmax.f32 %v7539, 0.0
    %v7875 = vmax.f32 %v7542, 0.0
    %v7876 = vmax.f32 %v7545, 0.0
    %v7877 = vmax.f32 %v7548, 0.0
    %v7878 = vmax.f32 %v7551, 0.0
    %v7879 = vmax.f32 %v7554, 0.0
    %v7880 = vmax.f32 %v7557, 0.0
    %v7881 = vmax.f32 %v7560, 0.0
    %v7882 = vmax.f32 %v7563, 0.0
    %v7883 = vmax.f32 %v7566, 0.0
    %v7884 = vmax.f32 %v7569, 0.0
    %v7885 = vmax.f32 %v7572, 0.0
    %v7886 = vmax.f32 %v7575, 0.0
    %v7887 = vmax.f32 %v7578, 0.0
    %v7888 = vmax.f32 %v7581, 0.0
    %v7889 = vmax.f32 %v7584, 0.0
    %v7890 = vmax.f32 %v7587, 0.0
    %v7891 = vmax.f32 %v7590, 0.0
    %v7892 = vmax.f32 %v7593, 0.0
    %v7893 = vmax.f32 %v7596, 0.0
    %v7894 = vmax.f32 %v7599, 0.0
    %v7895 = vmax.f32 %v7602, 0.0
    %v7896 = vmax.f32 %v7605, 0.0
    %v7897 = vmax.f32 %v7608, 0.0
    %v7898 = vmax.f32 %v7611, 0.0
    %v7899 = vmax.f32 %v7614, 0.0
    %v7900 = vmax.f32 %v7617, 0.0
    %v7901 = vmax.f32 %v7620, 0.0
    %v7902 = vmax.f32 %v7623, 0.0
    %v7903 = vmax.f32 %v7626, 0.0
    %v7904 = vmax.f32 %v7629, 0.0
    %v7905 = vmax.f32 %v7632, 0.0
    %v7906 = vmax.f32 %v7635, 0.0
    %v7907 = vmax.f32 %v7638, 0.0
    %v7908 = vmax.f32 %v7641, 0.0
    %v7909 = vmax.f32 %v7644, 0.0
    %v7910 = vmax.f32 %v7647, 0.0
    %v7911 = vmax.f32 %v7650, 0.0
    %v7912 = vmax.f32 %v7653, 0.0
    %v7913 = vmax.f32 %v7656, 0.0
    %v7914 = vmax.f32 %v7659, 0.0
    %v7915 = vmax.f32 %v7662, 0.0
    %v7916 = vmax.f32 %v7665, 0.0
    %v7917 = vmax.f32 %v7668, 0.0
    %v7918 = vmax.f32 %v7671, 0.0
    %v7919 = vmax.f32 %v7674, 0.0
    %v7920 = vmax.f32 %v7677, 0.0
    %v7921 = vmax.f32 %v7680, 0.0
    %v7922 = vmax.f32 %v7683, 0.0
    %v7923 = vmax.f32 %v7686, 0.0
    %v7924 = vmax.f32 %v7689, 0.0
    %v7925 = vmax.f32 %v7692, 0.0
    %v7926 = vmax.f32 %v7695, 0.0
    %v7927 = vmax.f32 %v7698, 0.0
    %v7928 = vmax.f32 %v7701, 0.0
    %v7929 = vmax.f32 %v7704, 0.0
    %v7930 = vmax.f32 %v7707, 0.0
    %v7931 = vmax.f32 %v7710, 0.0
    %v7932 = vmax.f32 %v7713, 0.0
    %v7933 = vmax.f32 %v7716, 0.0
    %v7934 = vmax.f32 %v7719, 0.0
    %v7935 = vmax.f32 %v7722, 0.0
    %v7936 = vmax.f32 %v7725, 0.0
    %v7937 = vmax.f32 %v7728, 0.0
    %v7938 = vmax.f32 %v7731, 0.0
    %v7939 = vmax.f32 %v7734, 0.0
    %v7940 = vmax.f32 %v7737, 0.0
    %v7941 = vmax.f32 %v7740, 0.0
    %v7942 = vmax.f32 %v7743, 0.0
    %v7943 = vmax.f32 %v7746, 0.0
    %v7944 = vmax.f32 %v7749, 0.0
    %v7945 = vmax.f32 %v7752, 0.0
    %v7946 = vmax.f32 %v7755, 0.0
    %v7947 = vmax.f32 %v7758, 0.0
    %v7948 = vmax.f32 %v7761, 0.0
    %v7949 = vmax.f32 %v7764, 0.0
    %v7950 = vmax.f32 %v7767, 0.0
    %v7951 = vmax.f32 %v7770, 0.0
    %v7952 = vmax.f32 %v7773, 0.0
    %v7953 = vmax.f32 %v7776, 0.0
    %v7954 = vmax.f32 %v7779, 0.0
    %v7955 = vmax.f32 %v7782, 0.0
    %v7956 = vmax.f32 %v7785, 0.0
    %v7957 = vmax.f32 %v7788, 0.0
    %v7958 = vmax.f32 %v7791, 0.0
    %v7959 = vmax.f32 %v7794, 0.0
    %v7960 = vmax.f32 %v7797, 0.0
    %v7961 = vmax.f32 %v7800, 0.0
    %v7962 = vmax.f32 %v7803, 0.0
    %v7963 = vmax.f32 %v7806, 0.0
    %v7964 = vmax.f32 %v7809, 0.0
    %v7965 = vmax.f32 %v7812, 0.0
    %v7966 = vmax.f32 %v7815, 0.0
    %v7967 = vmax.f32 %v7818, 0.0
    %v7968 = vmax.f32 %v7821, 0.0
    %v7969 = vmax.f32 %v7824, 0.0
    %v7970 = vmax.f32 %v7826, %v7838
    %v7971 = vmax.f32 %v7827, %v7839
    %v7972 = vmax.f32 %v7828, %v7840
    %v7973 = vmax.f32 %v7829, %v7841
    %v7974 = vmax.f32 %v7830, %v7842
    %v7975 = vmax.f32 %v7831, %v7843
    %v7976 = vmax.f32 %v7832, %v7844
    %v7977 = vmax.f32 %v7833, %v7845
    %v7978 = vmax.f32 %v7834, %v7846
    %v7979 = vmax.f32 %v7835, %v7847
    %v7980 = vmax.f32 %v7836, %v7848
    %v7981 = vmax.f32 %v7837, %v7849
    %v7982 = vmax.f32 %v7850, %v7862
    %v7983 = vmax.f32 %v7851, %v7863
    %v7984 = vmax.f32 %v7852, %v7864
    %v7985 = vmax.f32 %v7853, %v7865
    %v7986 = vmax.f32 %v7854, %v7866
    %v7987 = vmax.f32 %v7855, %v7867
    %v7988 = vmax.f32 %v7856, %v7868
    %v7989 = vmax.f32 %v7857, %v7869
    %v7990 = vmax.f32 %v7858, %v7870
    %v7991 = vmax.f32 %v7859, %v7871
    %v7992 = vmax.f32 %v7860, %v7872
    %v7993 = vmax.f32 %v7861, %v7873
    %v7994 = vmax.f32 %v7874, %v7886
    %v7995 = vmax.f32 %v7875, %v7887
    %v7996 = vmax.f32 %v7876, %v7888
    %v7997 = vmax.f32 %v7877, %v7889
    %v7998 = vmax.f32 %v7878, %v7890
    %v7999 = vmax.f32 %v7879, %v7891
    %v8000 = vmax.f32 %v7880, %v7892
    %v8001 = vmax.f32 %v7881, %v7893
    %v8002 = vmax.f32 %v7882, %v7894
    %v8003 = vmax.f32 %v7883, %v7895
    %v8004 = vmax.f32 %v7884, %v7896
    %v8005 = vmax.f32 %v7885, %v7897
    %v8006 = vmax.f32 %v7898, %v7910
    %v8007 = vmax.f32 %v7899, %v7911
    %v8008 = vmax.f32 %v7900, %v7912
    %v8009 = vmax.f32 %v7901, %v7913
    %v8010 = vmax.f32 %v7902, %v7914
    %v8011 = vmax.f32 %v7903, %v7915
    %v8012 = vmax.f32 %v7904, %v7916
    %v8013 = vmax.f32 %v7905, %v7917
    %v8014 = vmax.f32 %v7906, %v7918
    %v8015 = vmax.f32 %v7907, %v7919
    %v8016 = vmax.f32 %v7908, %v7920
    %v8017 = vmax.f32 %v7909, %v7921
    %v8018 = vmax.f32 %v7922, %v7934
    %v8019 = vmax.f32 %v7923, %v7935
    %v8020 = vmax.f32 %v7924, %v7936
    %v8021 = vmax.f32 %v7925, %v7937
    %v8022 = vmax.f32 %v7926, %v7938
    %v8023 = vmax.f32 %v7927, %v7939
    %v8024 = vmax.f32 %v7928, %v7940
    %v8025 = vmax.f32 %v7929, %v7941
    %v8026 = vmax.f32 %v7930, %v7942
    %v8027 = vmax.f32 %v7931, %v7943
    %v8028 = vmax.f32 %v7932, %v7944
    %v8029 = vmax.f32 %v7933, %v7945
    %v8030 = vmax.f32 %v7946, %v7958
    %v8031 = vmax.f32 %v7947, %v7959
    %v8032 = vmax.f32 %v7948, %v7960
    %v8033 = vmax.f32 %v7949, %v7961
    %v8034 = vmax.f32 %v7950, %v7962
    %v8035 = vmax.f32 %v7951, %v7963
    %v8036 = vmax.f32 %v7952, %v7964
    %v8037 = vmax.f32 %v7953, %v7965
    %v8038 = vmax.f32 %v7954, %v7966
    %v8039 = vmax.f32 %v7955, %v7967
    %v8040 = vmax.f32 %v7956, %v7968
    %v8041 = vmax.f32 %v7957, %v7969
    %v8042 = vmax.f32 %v7970, %v7971
    %v8043 = vmax.f32 %v7972, %v7973
    %v8044 = vmax.f32 %v7974, %v7975
    %v8045 = vmax.f32 %v7976, %v7977
    %v8046 = vmax.f32 %v7978, %v7979
    %v8047 = vmax.f32 %v7980, %v7981
    %v8048 = vmax.f32 %v7982, %v7983
    %v8049 = vmax.f32 %v7984, %v7985
    %v8050 = vmax.f32 %v7986, %v7987
    %v8051 = vmax.f32 %v7988, %v7989
    %v8052 = vmax.f32 %v7990, %v7991
    %v8053 = vmax.f32 %v7992, %v7993
    %v8054 = vmax.f32 %v7994, %v7995
    %v8055 = vmax.f32 %v7996, %v7997
    %v8056 = vmax.f32 %v7998, %v7999
    %v8057 = vmax.f32 %v8000, %v8001
    %v8058 = vmax.f32 %v8002, %v8003
    %v8059 = vmax.f32 %v8004, %v8005
    %v8060 = vmax.f32 %v8006, %v8007
    %v8061 = vmax.f32 %v8008, %v8009
    %v8062 = vmax.f32 %v8010, %v8011
    %v8063 = vmax.f32 %v8012, %v8013
    %v8064 = vmax.f32 %v8014, %v8015
    %v8065 = vmax.f32 %v8016, %v8017
    %v8066 = vmax.f32 %v8018, %v8019
    %v8067 = vmax.f32 %v8020, %v8021
    %v8068 = vmax.f32 %v8022, %v8023
    %v8069 = vmax.f32 %v8024, %v8025
    %v8070 = vmax.f32 %v8026, %v8027
    %v8071 = vmax.f32 %v8028, %v8029
    %v8072 = vmax.f32 %v8030, %v8031
    %v8073 = vmax.f32 %v8032, %v8033
    %v8074 = vmax.f32 %v8034, %v8035
    %v8075 = vmax.f32 %v8036, %v8037
    %v8076 = vmax.f32 %v8038, %v8039
    %v8077 = vmax.f32 %v8040, %v8041
    %v8078 = vld [vmem:[%s5] sm:$0x1]
    %v8080 = vperm.slane %v8078, 0
    %v8082 = vmul.f32 %v8042, %v8080
    %v8083 = vmul.f32 %v8043, %v8080
    %v8084 = vmul.f32 %v8044, %v8080
    %v8085 = vmul.f32 %v8045, %v8080
    %v8086 = vmul.f32 %v8046, %v8080
    %v8087 = vmul.f32 %v8047, %v8080
    %v8088 = vmul.f32 %v8048, %v8080
    %v8089 = vmul.f32 %v8049, %v8080
    %v8090 = vmul.f32 %v8050, %v8080
    %v8091 = vmul.f32 %v8051, %v8080
    %v8092 = vmul.f32 %v8052, %v8080
    %v8093 = vmul.f32 %v8053, %v8080
    %v8094 = vmul.f32 %v8054, %v8080
    %v8095 = vmul.f32 %v8055, %v8080
    %v8096 = vmul.f32 %v8056, %v8080
    %v8097 = vmul.f32 %v8057, %v8080
    %v8098 = vmul.f32 %v8058, %v8080
    %v8099 = vmul.f32 %v8059, %v8080
    %v8100 = vmul.f32 %v8060, %v8080
    %v8101 = vmul.f32 %v8061, %v8080
    %v8102 = vmul.f32 %v8062, %v8080
    %v8103 = vmul.f32 %v8063, %v8080
    %v8104 = vmul.f32 %v8064, %v8080
    %v8105 = vmul.f32 %v8065, %v8080
    %v8106 = vmul.f32 %v8066, %v8080
    %v8107 = vmul.f32 %v8067, %v8080
    %v8108 = vmul.f32 %v8068, %v8080
    %v8109 = vmul.f32 %v8069, %v8080
    %v8110 = vmul.f32 %v8070, %v8080
    %v8111 = vmul.f32 %v8071, %v8080
    %v8112 = vmul.f32 %v8072, %v8080
    %v8113 = vmul.f32 %v8073, %v8080
    %v8114 = vmul.f32 %v8074, %v8080
    %v8115 = vmul.f32 %v8075, %v8080
    %v8116 = vmul.f32 %v8076, %v8080
    %v8117 = vmul.f32 %v8077, %v8080
    %v8118 = vld [vmem:[%s6] sm:$0x1]
    %v8120 = vperm.slane %v8118, 0
    %v8122 = vadd.f32 %v8082, %v8120
    %v8123 = vadd.f32 %v8083, %v8120
    %v8124 = vadd.f32 %v8084, %v8120
    %v8125 = vadd.f32 %v8085, %v8120
    %v8126 = vadd.f32 %v8086, %v8120
    %v8127 = vadd.f32 %v8087, %v8120
    %v8128 = vadd.f32 %v8088, %v8120
    %v8129 = vadd.f32 %v8089, %v8120
    %v8130 = vadd.f32 %v8090, %v8120
    %v8131 = vadd.f32 %v8091, %v8120
    %v8132 = vadd.f32 %v8092, %v8120
    %v8133 = vadd.f32 %v8093, %v8120
    %v8134 = vadd.f32 %v8094, %v8120
    %v8135 = vadd.f32 %v8095, %v8120
    %v8136 = vadd.f32 %v8096, %v8120
    %v8137 = vadd.f32 %v8097, %v8120
    %v8138 = vadd.f32 %v8098, %v8120
    %v8139 = vadd.f32 %v8099, %v8120
    %v8140 = vadd.f32 %v8100, %v8120
    %v8141 = vadd.f32 %v8101, %v8120
    %v8142 = vadd.f32 %v8102, %v8120
    %v8143 = vadd.f32 %v8103, %v8120
    %v8144 = vadd.f32 %v8104, %v8120
    %v8145 = vadd.f32 %v8105, %v8120
    %v8146 = vadd.f32 %v8106, %v8120
    %v8147 = vadd.f32 %v8107, %v8120
    %v8148 = vadd.f32 %v8108, %v8120
    %v8149 = vadd.f32 %v8109, %v8120
    %v8150 = vadd.f32 %v8110, %v8120
    %v8151 = vadd.f32 %v8111, %v8120
    %v8152 = vadd.f32 %v8112, %v8120
    %v8153 = vadd.f32 %v8113, %v8120
    %v8154 = vadd.f32 %v8114, %v8120
    %v8155 = vadd.f32 %v8115, %v8120
    %v8156 = vadd.f32 %v8116, %v8120
    %v8157 = vadd.f32 %v8117, %v8120
    %8158 = vst [vmem:[#allocation3] sm:$0xff] %v8122
    %8159 = vst [vmem:[#allocation3 + $0x8] sm:$0xff] %v8123
    %8160 = vst [vmem:[#allocation3 + $0x10] sm:$0xff] %v8124
    %8161 = vst [vmem:[#allocation3 + $0x18] sm:$0xff] %v8125
    %8162 = vst [vmem:[#allocation3 + $0x20] sm:$0xff] %v8126
    %8163 = vst [vmem:[#allocation3 + $0x28] sm:$0xff] %v8127
    %8164 = vst [vmem:[#allocation3 + $0x30] sm:$0xff] %v8128
    %8165 = vst [vmem:[#allocation3 + $0x38] sm:$0xff] %v8129
    %8166 = vst [vmem:[#allocation3 + $0x40] sm:$0xff] %v8130
    %8167 = vst [vmem:[#allocation3 + $0x48] sm:$0xff] %v8131
    %8168 = vst [vmem:[#allocation3 + $0x50] sm:$0xff] %v8132
    %8169 = vst [vmem:[#allocation3 + $0x58] sm:$0xff] %v8133
    %8170 = vst [vmem:[#allocation3 + $0x60] sm:$0xff] %v8134
    %8171 = vst [vmem:[#allocation3 + $0x68] sm:$0xff] %v8135
    %8172 = vst [vmem:[#allocation3 + $0x70] sm:$0xff] %v8136
    %8173 = vst [vmem:[#allocation3 + $0x78] sm:$0xff] %v8137
    %8174 = vst [vmem:[#allocation3 + $0x80] sm:$0xff] %v8138
    %8175 = vst [vmem:[#allocation3 + $0x88] sm:$0xff] %v8139
    %8176 = vst [vmem:[#allocation3 + $0x90] sm:$0xff] %v8140
    %8177 = vst [vmem:[#allocation3 + $0x98] sm:$0xff] %v8141
    %8178 = vst [vmem:[#allocation3 + $0xa0] sm:$0xff] %v8142
    %8179 = vst [vmem:[#allocation3 + $0xa8] sm:$0xff] %v8143
    %8180 = vst [vmem:[#allocation3 + $0xb0] sm:$0xff] %v8144
    %8181 = vst [vmem:[#allocation3 + $0xb8] sm:$0xff] %v8145
    %8182 = vst [vmem:[#allocation3 + $0xc0] sm:$0xff] %v8146
    %8183 = vst [vmem:[#allocation3 + $0xc8] sm:$0xff] %v8147
    %8184 = vst [vmem:[#allocation3 + $0xd0] sm:$0xff] %v8148
    %8185 = vst [vmem:[#allocation3 + $0xd8] sm:$0xff] %v8149
    %8186 = vst [vmem:[#allocation3 + $0xe0] sm:$0xff] %v8150
    %8187 = vst [vmem:[#allocation3 + $0xe8] sm:$0xff] %v8151
    %8188 = vst [vmem:[#allocation3 + $0xf0] sm:$0xff] %v8152
    %8189 = vst [vmem:[#allocation3 + $0xf8] sm:$0xff] %v8153
    %8190 = vst [vmem:[#allocation3 + $0x100] sm:$0xff] %v8154
    %8191 = vst [vmem:[#allocation3 + $0x108] sm:$0xff] %v8155
    %8192 = vst [vmem:[#allocation3 + $0x110] sm:$0xff] %v8156
    %8193 = vst [vmem:[#allocation3 + $0x118] sm:$0xff] %v8157
    // Predicated region
    $region30: #{tpu_custom_call.1} parent=1 // pred_check
      _
    $region31: #{tpu_custom_call.1} parent=1 // pred_check_branch
      %8195 = sbr.rel (0) target = $region33
    $region32: #{tpu_custom_call.1} parent=1 // pred_region
      %8197 = vsyncadd [#allocation4], 0
      %s8198 = sshll.u32 [#allocation3], 4
      %s8199 = int_to_ptr.vmem [resolvable:$true] %s8198
      %s8200 = sshll.u32 %s7, 4
      %s8201 = int_to_ptr.hbm [resolvable:$true] %s8200
      %8206 = dma.vmem_to_hbm [thread:$0]  %s8199, 4608, %s8201, [#allocation4], 128, 128, 8
    $region33: #{tpu_custom_call.1} parent=1 // pred_fallthru
      _
    // Predicated region
    $region34: #{tpu_custom_call.1} parent=1 // pred_check
      _
    $region35: #{tpu_custom_call.1} parent=1 // pred_check_branch
      %8208 = sbr.rel (0) target = $region37
    $region36: #{tpu_custom_call.1} parent=1 // pred_region
      %8210 = dma.done [#allocation4], 4608
    $region37: #{tpu_custom_call.1} parent=1 // pred_fallthru
      _
    %8211 = vsyncpa [#allocation4], 1

</llo_original>
